<compile_context>
chip_gen: v7x
topology: tpu7x:2x2x1
jax: 0.10.0
libtpu: 0.0.40
codegen_flags: <defaults>
</compile_context>

<pallas_src>
import functools
import math

import numpy as np
import jax
import jax.numpy as jnp
from jax.experimental import pallas as pl
from jax.experimental.pallas import tpu as pltpu


# ----------------------------- configuration -------------------------------
B = 2            # batch
C = 3            # in channels
IMG = 16         # image size
P = 4            # patch size
D = 32           # embed dim
DEPTH = 2        # number of transformer blocks
NH = 4           # num heads
MLP_RATIO = 4.0
MASK_RATIO = 0.75
LN_EPS = 1e-5    # nn.LayerNorm default


# ------------------------- sincos positional embed -------------------------
def _get_1d_sincos_pos_embed_from_grid(embed_dim, pos):
    omega = np.arange(embed_dim // 2, dtype=np.float64)
    omega /= embed_dim / 2.0
    omega = 1.0 / 10000 ** omega
    pos = pos.reshape(-1)
    out = np.einsum("m,d->md", pos, omega)
    return np.concatenate([np.sin(out), np.cos(out)], axis=1)


def get_2d_sincos_pos_embed(embed_dim, grid_size, cls_token=False):
    grid_h = np.arange(grid_size, dtype=np.float32)
    grid_w = np.arange(grid_size, dtype=np.float32)
    grid = np.meshgrid(grid_w, grid_h)
    grid = np.stack(grid, axis=0).reshape([2, 1, grid_size, grid_size])
    emb_h = _get_1d_sincos_pos_embed_from_grid(embed_dim // 2, grid[0])
    emb_w = _get_1d_sincos_pos_embed_from_grid(embed_dim // 2, grid[1])
    emb = np.concatenate([emb_h, emb_w], axis=1)
    if cls_token:
        emb = np.concatenate([np.zeros([1, embed_dim]), emb], axis=0)
    return emb.astype(np.float32)


# ------------------------------ fused kernel --------------------------------
def _layernorm(x, g, b, eps=LN_EPS):
    mu = jnp.mean(x, axis=-1, keepdims=True)
    var = jnp.mean((x - mu) ** 2, axis=-1, keepdims=True)
    return (x - mu) * jax.lax.rsqrt(var + eps) * g + b


def mae_fused_kernel(
        # tensor inputs (VMEM)
        patches_ref,                       # (1, len_keep, K)  kept patches (gathered in wrapper)
        poskeep_ref,                       # (1, len_keep, D)  pos-embed rows of kept patches
        idsr_ref,                          # (1, L, 1) int32   decoder un-shuffle indices
        pe_w_ref, pe_b_ref,                # (K, D), (1, D)
        pos_cls_ref,                       # (1, D)
        cls_ref, msk_ref,                  # (1, D), (1, D)
        ln1g_ref, ln1b_ref,                # (DEPTH, 1, D)
        qw_ref, qb_ref,                    # (DEPTH, NH, D, hd), (DEPTH, NH, 1, hd)  (scale folded in)
        kw_ref, kb_ref,                    # (DEPTH, NH, D, hd), (DEPTH, NH, 1, hd)
        vw_ref, vb_ref,                    # (DEPTH, NH, D, hd), (DEPTH, NH, 1, hd)
        pw_ref, pb_ref,                    # (DEPTH, NH, hd, D), (DEPTH, 1, D)
        ln2g_ref, ln2b_ref,                # (DEPTH, 1, D)
        fc1w_ref, fc1b_ref,                # (DEPTH, D, Hid), (DEPTH, 1, Hid)
        fc2w_ref, fc2b_ref,                # (DEPTH, Hid, D), (DEPTH, 1, D)
        ng_ref, nb_ref,                    # (1, D), (1, D)
        dpos_ref,                          # (L, D)
        # output
        o_ref,                             # (1, L, D)
        # scratch
        x_ref, comb_ref,                   # (seq_pad, D), (L, D)
        *, depth, num_heads, len_keep, seq_pad):
    L, Dm = comb_ref.shape
    seq = 1 + len_keep

    # ---- patch embedding (kept rows only) + pos embed; cls prepend; zero pad ----
    emb = (jnp.dot(patches_ref[0], pe_w_ref[...],
                   preferred_element_type=jnp.float32)
           + pe_b_ref[...] + poskeep_ref[0])                       # (len_keep, D)
    x_ref[0:1, :] = cls_ref[...] + pos_cls_ref[...]
    x_ref[1:seq, :] = emb
    # Padded rows [seq:seq_pad) must be zero: they flow through LayerNorm
    # (producing finite, bias-valued garbage), are excluded from every softmax
    # key set via kmask, and are never read back.  Wasted compute, not a bug.
    x_ref[seq:seq_pad, :] = jnp.zeros((seq_pad - seq, Dm), jnp.float32)

    x = x_ref[...]                                                  # (seq_pad, D)

    # additive key mask removing padded key columns -- hoisted once for all
    # layers and all heads (JAX does not CSE broadcast_in_dim).
    key_ids = jax.lax.broadcasted_iota(jnp.int32, (num_heads, seq_pad, seq_pad), 2)
    kmask = jnp.where(key_ids < seq, 0.0, -1e30).astype(jnp.float32)

    # ---- transformer encoder blocks (unrolled; weights stay in VMEM) ----
    for d in range(depth):
        h = _layernorm(x, ln1g_ref[d], ln1b_ref[d])                 # (S, D)
        hb = jnp.broadcast_to(h[None], (num_heads, seq_pad, Dm))    # (NH, S, D)
        # head-batched q/k/v projections (no lane-offset slices, no transposes);
        # the 1/sqrt(head_dim) scale is folded into the q weights at init time.
        q = jnp.einsum("nsd,ndh->nsh", hb, qw_ref[d],
                       preferred_element_type=jnp.float32) + qb_ref[d]
        k = jnp.einsum("nsd,ndh->nsh", hb, kw_ref[d],
                       preferred_element_type=jnp.float32) + kb_ref[d]
        v = jnp.einsum("nsd,ndh->nsh", hb, vw_ref[d],
                       preferred_element_type=jnp.float32) + vb_ref[d]
        s = jnp.einsum("nqh,nkh->nqk", q, k,
                       preferred_element_type=jnp.float32) + kmask  # (NH, S, S)
        s = s - jnp.max(s, axis=-1, keepdims=True)
        p = jnp.exp(s)
        p = p * pl.reciprocal(jnp.sum(p, axis=-1, keepdims=True), approx=True)
        o = jnp.einsum("nqk,nkh->nqh", p, v,
                       preferred_element_type=jnp.float32)          # (NH, S, hd)
        # per-head output projection folded into the head reduction: no lane
        # concatenate of head outputs.
        attn = jnp.einsum("nsh,nhd->nsd", o, pw_ref[d],
                          preferred_element_type=jnp.float32).sum(axis=0)
        x = x + attn + pb_ref[d]

        h2 = _layernorm(x, ln2g_ref[d], ln2b_ref[d])
        m = jnp.dot(h2, fc1w_ref[d], preferred_element_type=jnp.float32) + fc1b_ref[d]
        # TODO(synk): PyTorch nn.GELU default is exact erf; tanh approximation here.
        m = jax.nn.gelu(m, approximate=True)
        m = jnp.dot(m, fc2w_ref[d], preferred_element_type=jnp.float32) + fc2b_ref[d]
        x = x + m

    latent = _layernorm(x, ng_ref[...], nb_ref[...])                # (seq_pad, D)

    # ---- decoder: [kept latents ; mask tokens] un-shuffled by a one-hot matmul ----
    comb_ref[...] = jnp.broadcast_to(msk_ref[...], (L, Dm))
    comb_ref[0:len_keep, :] = latent[1:1 + len_keep, :]             # drop cls row
    col = jax.lax.broadcasted_iota(jnp.int32, (L, L), 1)
    onehot = (col == jnp.broadcast_to(idsr_ref[0], (L, L))).astype(jnp.float32)
    o_ref[0] = (jnp.dot(onehot, comb_ref[...], preferred_element_type=jnp.float32)
                + dpos_ref[...])


def _build_mae_call(Bn, L, K, Dm, Hid, depth, num_heads, len_keep, seq_pad):
    hd = Dm // num_heads
    kernel = functools.partial(mae_fused_kernel, depth=depth, num_heads=num_heads,
                               len_keep=len_keep, seq_pad=seq_pad)

    def full(shape):
        return pl.BlockSpec(shape, lambda b, _n=len(shape): (0,) * _n)

    # NOTE(scaling / v7x): all DEPTH-stacked weights resident in VMEM is <0.2 MiB
    # here; at real MAE dims move depth onto an "arbitrary" grid axis (or stream
    # weights with emit_pipeline) and set vmem_limit_bytes explicitly.
    grid_spec = pltpu.PrefetchScalarGridSpec(
        num_scalar_prefetch=0,
        grid=(Bn,),
        in_specs=[
            pl.BlockSpec((1, len_keep, K), lambda b: (b, 0, 0)),    # kept patches
            pl.BlockSpec((1, len_keep, Dm), lambda b: (b, 0, 0)),   # kept pos embed
            pl.BlockSpec((1, L, 1), lambda b: (b, 0, 0)),           # ids_restore column
            full((K, Dm)), full((1, Dm)),                           # patch-embed w, b
            full((1, Dm)),                                          # pos cls
            full((1, Dm)), full((1, Dm)),                           # cls token, mask token
            full((depth, 1, Dm)), full((depth, 1, Dm)),             # ln1 g, b
            full((depth, num_heads, Dm, hd)), full((depth, num_heads, 1, hd)),  # q w, b
            full((depth, num_heads, Dm, hd)), full((depth, num_heads, 1, hd)),  # k w, b
            full((depth, num_heads, Dm, hd)), full((depth, num_heads, 1, hd)),  # v w, b
            full((depth, num_heads, hd, Dm)), full((depth, 1, Dm)),             # proj w, b
            full((depth, 1, Dm)), full((depth, 1, Dm)),             # ln2 g, b
            full((depth, Dm, Hid)), full((depth, 1, Hid)),          # fc1 w, b
            full((depth, Hid, Dm)), full((depth, 1, Dm)),           # fc2 w, b
            full((1, Dm)), full((1, Dm)),                           # final norm g, b
            full((L, Dm)),                                          # decoder pos embed
        ],
        out_specs=pl.BlockSpec((1, L, Dm), lambda b: (b, 0, 0)),
        scratch_shapes=[
            pltpu.VMEM((seq_pad, Dm), jnp.float32),  # encoder token sequence
            pltpu.VMEM((L, Dm), jnp.float32),        # [kept latents ; mask tokens]
        ],
    )

    # advisory cost estimate: helps XLA schedule the argsort / gather glue
    per_layer_flops = (3 * num_heads * 2 * seq_pad * Dm * hd       # q/k/v proj
                       + 2 * num_heads * 2 * seq_pad * seq_pad * hd  # scores + p@v
                       + num_heads * 2 * seq_pad * hd * Dm           # out proj
                       + 2 * 2 * seq_pad * Dm * Hid)                 # mlp
    flops = Bn * (2 * len_keep * K * Dm + depth * per_layer_flops + 2 * L * L * Dm)
    transcendentals = Bn * depth * (num_heads * seq_pad * seq_pad + seq_pad * Hid)
    weight_bytes = 4 * (K * Dm + 7 * Dm + L * Dm
                        + depth * (4 * Dm * Dm + 2 * Dm * Hid + Hid + 11 * Dm))
    io_bytes = 4 * Bn * (len_keep * K + len_keep * Dm + L + L * Dm)
    cost = pl.CostEstimate(flops=int(flops), transcendentals=int(transcendentals),
                           bytes_accessed=int(weight_bytes + io_bytes))

    return pl.pallas_call(
        kernel,
        out_shape=jax.ShapeDtypeStruct((Bn, L, Dm), jnp.float32),
        grid_spec=grid_spec,
        compiler_params=pltpu.CompilerParams(dimension_semantics=("parallel",)),
        cost_estimate=cost,
    )


# ------------------------------- parameters ---------------------------------
def init_params(key):
    L = (IMG // P) ** 2
    K = C * P * P
    Hid = int(D * MLP_RATIO)
    hd = D // NH

    keys = jax.random.split(key, 4 + DEPTH)
    params = {}

    # patch embed: xavier_uniform on the (D, K) flattened view (as in the module)
    a = math.sqrt(6.0 / (K + D))
    w_view = jax.random.uniform(keys[0], (D, K), jnp.float32, -a, a)
    params["pe_w"] = w_view.T                                     # (K, D)
    bnd = 1.0 / math.sqrt(K)
    params["pe_b"] = jax.random.uniform(keys[1], (1, D), jnp.float32, -bnd, bnd)

    params["cls_token"] = 0.02 * jax.random.normal(keys[2], (1, D), jnp.float32)
    params["mask_token"] = 0.02 * jax.random.normal(keys[3], (1, D), jnp.float32)

    pos = get_2d_sincos_pos_embed(D, int(math.sqrt(L)), cls_token=True)   # (L+1, D)
    params["pos_embed"] = jnp.asarray(pos)
    params["dec_pos_embed"] = jnp.asarray(pos)                            # decoder dim == D

    # per-layer weights stacked on a leading DEPTH axis; attention weights are
    # stored head-major ((NH, D, hd) / (NH, hd, D)) so the kernel never slices
    # lanes at non-128-aligned offsets.  1/sqrt(hd) is folded into the q weights.
    scale = 1.0 / math.sqrt(hd)
    acc = {k: [] for k in ["ln1_g", "ln1_b", "q_w", "q_b", "k_w", "k_b", "v_w",
                           "v_b", "proj_w", "proj_b", "ln2_g", "ln2_b",
                           "fc1_w", "fc1_b", "fc2_w", "fc2_b"]}
    for d in range(DEPTH):
        bk = jax.random.split(keys[4 + d], 4)
        acc["ln1_g"].append(jnp.ones((1, D), jnp.float32))
        acc["ln1_b"].append(jnp.zeros((1, D), jnp.float32))
        qkv_w = 0.02 * jax.random.normal(bk[0], (D, 3 * D), jnp.float32)
        q_w = qkv_w[:, 0 * D:1 * D].reshape(D, NH, hd).transpose(1, 0, 2) * scale
        k_w = qkv_w[:, 1 * D:2 * D].reshape(D, NH, hd).transpose(1, 0, 2)
        v_w = qkv_w[:, 2 * D:3 * D].reshape(D, NH, hd).transpose(1, 0, 2)
        acc["q_w"].append(q_w)
        acc["k_w"].append(k_w)
        acc["v_w"].append(v_w)
        acc["q_b"].append(jnp.zeros((NH, 1, hd), jnp.float32))   # zeros: scale fold is a no-op
        acc["k_b"].append(jnp.zeros((NH, 1, hd), jnp.float32))
        acc["v_b"].append(jnp.zeros((NH, 1, hd), jnp.float32))
        proj_w = 0.02 * jax.random.normal(bk[1], (D, D), jnp.float32)
        acc["proj_w"].append(proj_w.reshape(NH, hd, D))
        acc["proj_b"].append(jnp.zeros((1, D), jnp.float32))
        acc["ln2_g"].append(jnp.ones((1, D), jnp.float32))
        acc["ln2_b"].append(jnp.zeros((1, D), jnp.float32))
        acc["fc1_w"].append(0.02 * jax.random.normal(bk[2], (D, Hid), jnp.float32))
        acc["fc1_b"].append(jnp.zeros((1, Hid), jnp.float32))
        acc["fc2_w"].append(0.02 * jax.random.normal(bk[3], (Hid, D), jnp.float32))
        acc["fc2_b"].append(jnp.zeros((1, D), jnp.float32))
    for kk, v in acc.items():
        params[kk] = jnp.stack(v, axis=0)

    params["norm_g"] = jnp.ones((1, D), jnp.float32)
    params["norm_b"] = jnp.zeros((1, D), jnp.float32)
    return params


# ------------------------------ model forward -------------------------------
def mae_forward(params, imgs, mask_ratio, mask_key):
    Bn, Cc, H, W = imgs.shape
    Gh, Gw = H // P, W // P
    L = Gh * Gw
    K = Cc * P * P
    Hid = int(D * MLP_RATIO)
    len_keep = int(L * (1 - mask_ratio))
    seq_pad = max(8, ((1 + len_keep + 7) // 8) * 8)   # sublane-aligned sequence

    # patchify NCHW -> (B, L, C*P*P) with (c, ph, pw) flatten order (Conv2d layout)
    patches = imgs.reshape(Bn, Cc, Gh, P, Gw, P)
    patches = patches.transpose(0, 2, 4, 1, 3, 5).reshape(Bn, L, K)

    # random masking indices (glue: no Pallas sort primitive)
    noise = jax.random.uniform(mask_key, (Bn, L))
    ids_shuffle = jnp.argsort(noise, axis=1)
    ids_restore = jnp.argsort(ids_shuffle, axis=1).astype(jnp.int32)
    ids_keep = ids_shuffle[:, :len_keep].astype(jnp.int32)

    # hoisted gathers: vectorized XLA takes instead of serialized SMEM-indexed
    # row reads inside the kernel.
    patches_keep = jnp.take_along_axis(patches, ids_keep[:, :, None], axis=1)  # (B, lk, K)
    pos_pat = params["pos_embed"][1:, :]
    pos_keep = jnp.take(pos_pat, ids_keep, axis=0)                             # (B, lk, D)
    ids_restore_col = ids_restore[:, :, None]                                  # (B, L, 1)

    # TODO(synk): get_abs_pos interpolation path not implemented; at this config
    # the pos-embed grid equals the patch grid so it is the identity.
    call = _build_mae_call(Bn, L, K, D, Hid, DEPTH, NH, len_keep, seq_pad)
    pred = call(
        patches_keep, pos_keep, ids_restore_col,
        params["pe_w"], params["pe_b"],
        params["pos_embed"][:1, :],
        params["cls_token"], params["mask_token"],
        params["ln1_g"], params["ln1_b"],
        params["q_w"], params["q_b"],
        params["k_w"], params["k_b"],
        params["v_w"], params["v_b"],
        params["proj_w"], params["proj_b"],
        params["ln2_g"], params["ln2_b"],
        params["fc1_w"], params["fc1_b"],
        params["fc2_w"], params["fc2_b"],
        params["norm_g"], params["norm_b"],
        params["dec_pos_embed"][1:, :])
    return pred, ids_restore


# ----------------------------------- main ------------------------------------
if __name__ == "__main__":
    root = jax.random.PRNGKey(0)
    k_params, k_imgs, k_mask = jax.random.split(root, 3)

    params = init_params(k_params)
    imgs = jax.random.normal(k_imgs, (B, C, IMG, IMG), jnp.float32)

    fwd = jax.jit(functools.partial(mae_forward, mask_ratio=MASK_RATIO))
    pred, ids_restore = fwd(params, imgs, mask_key=k_mask)
    pred = jax.block_until_ready(pred)
    ids_restore = jax.block_until_ready(ids_restore)

    L = (IMG // P) ** 2
    assert pred.shape == (B, L, D), pred.shape
    assert ids_restore.shape == (B, L), ids_restore.shape
    assert bool(jnp.all(jnp.isfinite(pred)))
    print("KERNEL_OK")
</pallas_src>

<mosaic_0001>
module attributes {stable_mosaic.version = 11 : i64} {
  func.func @mae_fused_kernel(%arg0: i32, %arg1: memref<1x4x48xf32, #tpu.memory_space<vmem>>, %arg2: memref<1x4x32xf32, #tpu.memory_space<vmem>>, %arg3: memref<1x16x1xi32, #tpu.memory_space<vmem>>, %arg4: memref<48x32xf32, #tpu.memory_space<vmem>>, %arg5: memref<1x32xf32, #tpu.memory_space<vmem>>, %arg6: memref<1x32xf32, #tpu.memory_space<vmem>>, %arg7: memref<1x32xf32, #tpu.memory_space<vmem>>, %arg8: memref<1x32xf32, #tpu.memory_space<vmem>>, %arg9: memref<2x1x32xf32, #tpu.memory_space<vmem>>, %arg10: memref<2x1x32xf32, #tpu.memory_space<vmem>>, %arg11: memref<2x4x32x8xf32, #tpu.memory_space<vmem>>, %arg12: memref<2x4x1x8xf32, #tpu.memory_space<vmem>>, %arg13: memref<2x4x32x8xf32, #tpu.memory_space<vmem>>, %arg14: memref<2x4x1x8xf32, #tpu.memory_space<vmem>>, %arg15: memref<2x4x32x8xf32, #tpu.memory_space<vmem>>, %arg16: memref<2x4x1x8xf32, #tpu.memory_space<vmem>>, %arg17: memref<2x4x8x32xf32, #tpu.memory_space<vmem>>, %arg18: memref<2x1x32xf32, #tpu.memory_space<vmem>>, %arg19: memref<2x1x32xf32, #tpu.memory_space<vmem>>, %arg20: memref<2x1x32xf32, #tpu.memory_space<vmem>>, %arg21: memref<2x32x128xf32, #tpu.memory_space<vmem>>, %arg22: memref<2x1x128xf32, #tpu.memory_space<vmem>>, %arg23: memref<2x128x32xf32, #tpu.memory_space<vmem>>, %arg24: memref<2x1x32xf32, #tpu.memory_space<vmem>>, %arg25: memref<1x32xf32, #tpu.memory_space<vmem>>, %arg26: memref<1x32xf32, #tpu.memory_space<vmem>>, %arg27: memref<16x32xf32, #tpu.memory_space<vmem>>, %arg28: memref<1x16x32xf32, #tpu.memory_space<vmem>>, %arg29: memref<8x32xf32, #tpu.memory_space<vmem>>, %arg30: memref<16x32xf32, #tpu.memory_space<vmem>>) attributes {dimension_semantics = [#tpu.dimension_semantics<parallel>], iteration_bounds = array<i64: 2>, scalar_prefetch = 0 : i64, scratch_operands = 2 : i64, tpu.core_type = #tpu.core_type<tc>, window_params = [{transform_indices = @transform_0, window_bounds = array<i64: 1, 4, 48>}, {transform_indices = @transform_1, window_bounds = array<i64: 1, 4, 32>}, {transform_indices = @transform_2, window_bounds = array<i64: 1, 16, 1>}, {pipeline_mode = #tpu.pipeline_mode<synchronous>, transform_indices = @transform_3, window_bounds = array<i64: 48, 32>}, {pipeline_mode = #tpu.pipeline_mode<synchronous>, transform_indices = @transform_4, window_bounds = array<i64: 1, 32>}, {pipeline_mode = #tpu.pipeline_mode<synchronous>, transform_indices = @transform_5, window_bounds = array<i64: 1, 32>}, {pipeline_mode = #tpu.pipeline_mode<synchronous>, transform_indices = @transform_6, window_bounds = array<i64: 1, 32>}, {pipeline_mode = #tpu.pipeline_mode<synchronous>, transform_indices = @transform_7, window_bounds = array<i64: 1, 32>}, {pipeline_mode = #tpu.pipeline_mode<synchronous>, transform_indices = @transform_8, window_bounds = array<i64: 2, 1, 32>}, {pipeline_mode = #tpu.pipeline_mode<synchronous>, transform_indices = @transform_9, window_bounds = array<i64: 2, 1, 32>}, {pipeline_mode = #tpu.pipeline_mode<synchronous>, transform_indices = @transform_10, window_bounds = array<i64: 2, 4, 32, 8>}, {pipeline_mode = #tpu.pipeline_mode<synchronous>, transform_indices = @transform_11, window_bounds = array<i64: 2, 4, 1, 8>}, {pipeline_mode = #tpu.pipeline_mode<synchronous>, transform_indices = @transform_12, window_bounds = array<i64: 2, 4, 32, 8>}, {pipeline_mode = #tpu.pipeline_mode<synchronous>, transform_indices = @transform_13, window_bounds = array<i64: 2, 4, 1, 8>}, {pipeline_mode = #tpu.pipeline_mode<synchronous>, transform_indices = @transform_14, window_bounds = array<i64: 2, 4, 32, 8>}, {pipeline_mode = #tpu.pipeline_mode<synchronous>, transform_indices = @transform_15, window_bounds = array<i64: 2, 4, 1, 8>}, {pipeline_mode = #tpu.pipeline_mode<synchronous>, transform_indices = @transform_16, window_bounds = array<i64: 2, 4, 8, 32>}, {pipeline_mode = #tpu.pipeline_mode<synchronous>, transform_indices = @transform_17, window_bounds = array<i64: 2, 1, 32>}, {pipeline_mode = #tpu.pipeline_mode<synchronous>, transform_indices = @transform_18, window_bounds = array<i64: 2, 1, 32>}, {pipeline_mode = #tpu.pipeline_mode<synchronous>, transform_indices = @transform_19, window_bounds = array<i64: 2, 1, 32>}, {pipeline_mode = #tpu.pipeline_mode<synchronous>, transform_indices = @transform_20, window_bounds = array<i64: 2, 32, 128>}, {pipeline_mode = #tpu.pipeline_mode<synchronous>, transform_indices = @transform_21, window_bounds = array<i64: 2, 1, 128>}, {pipeline_mode = #tpu.pipeline_mode<synchronous>, transform_indices = @transform_22, window_bounds = array<i64: 2, 128, 32>}, {pipeline_mode = #tpu.pipeline_mode<synchronous>, transform_indices = @transform_23, window_bounds = array<i64: 2, 1, 32>}, {pipeline_mode = #tpu.pipeline_mode<synchronous>, transform_indices = @transform_24, window_bounds = array<i64: 1, 32>}, {pipeline_mode = #tpu.pipeline_mode<synchronous>, transform_indices = @transform_25, window_bounds = array<i64: 1, 32>}, {pipeline_mode = #tpu.pipeline_mode<synchronous>, transform_indices = @transform_26, window_bounds = array<i64: 16, 32>}, {transform_indices = @transform_27, window_bounds = array<i64: 1, 16, 32>}]} {
    %c0 = arith.constant 0 : index
    %c0_0 = arith.constant 0 : index
    %c0_1 = arith.constant 0 : index
    %0 = vector.load %arg1[%c0, %c0_0, %c0_1] : memref<1x4x48xf32, #tpu.memory_space<vmem>>, vector<1x4x48xf32>
    %1 = vector.shape_cast %0 : vector<1x4x48xf32> to vector<4x48xf32>
    %c0_2 = arith.constant 0 : index
    %c0_3 = arith.constant 0 : index
    %2 = vector.load %arg4[%c0_2, %c0_3] : memref<48x32xf32, #tpu.memory_space<vmem>>, vector<48x32xf32>
    %cst = arith.constant dense<0.000000e+00> : vector<4x32xf32>
    %3 = tpu.matmul %1, %2, %cst {dimension_numbers = #tpu.dot_dimension_numbers<[1], [0], [0], [1], [0, 0, 1, 1], [], []>} : vector<4x48xf32>, vector<48x32xf32>, vector<4x32xf32> -> vector<4x32xf32>
    %c0_4 = arith.constant 0 : index
    %c0_5 = arith.constant 0 : index
    %4 = vector.load %arg5[%c0_4, %c0_5] : memref<1x32xf32, #tpu.memory_space<vmem>>, vector<1x32xf32>
    %5 = vector.broadcast %4 : vector<1x32xf32> to vector<4x32xf32>
    %6 = arith.addf %3, %5 : vector<4x32xf32>
    %c0_6 = arith.constant 0 : index
    %c0_7 = arith.constant 0 : index
    %c0_8 = arith.constant 0 : index
    %7 = vector.load %arg2[%c0_6, %c0_7, %c0_8] : memref<1x4x32xf32, #tpu.memory_space<vmem>>, vector<1x4x32xf32>
    %8 = vector.shape_cast %7 : vector<1x4x32xf32> to vector<4x32xf32>
    %9 = arith.addf %6, %8 : vector<4x32xf32>
    %c0_9 = arith.constant 0 : index
    %c0_10 = arith.constant 0 : index
    %10 = vector.load %arg7[%c0_9, %c0_10] : memref<1x32xf32, #tpu.memory_space<vmem>>, vector<1x32xf32>
    %c0_11 = arith.constant 0 : index
    %c0_12 = arith.constant 0 : index
    %11 = vector.load %arg6[%c0_11, %c0_12] : memref<1x32xf32, #tpu.memory_space<vmem>>, vector<1x32xf32>
    %12 = arith.addf %10, %11 : vector<1x32xf32>
    %c0_13 = arith.constant 0 : index
    %c0_14 = arith.constant 0 : index
    %13 = vector.load %arg29[%c0_13, %c0_14] : memref<8x32xf32, #tpu.memory_space<vmem>>, vector<1x32xf32>
    tpu.vector_store %arg29[%c0_13, %c0_14], %12 {strides = array<i32>} : memref<8x32xf32, #tpu.memory_space<vmem>>, vector<1x32xf32>,
    %c1 = arith.constant 1 : index
    %c0_15 = arith.constant 0 : index
    %14 = vector.load %arg29[%c1, %c0_15] : memref<8x32xf32, #tpu.memory_space<vmem>>, vector<4x32xf32>
    tpu.vector_store %arg29[%c1, %c0_15], %9 {strides = array<i32>} : memref<8x32xf32, #tpu.memory_space<vmem>>, vector<4x32xf32>,
    %cst_16 = arith.constant 0.000000e+00 : f32
    %15 = vector.broadcast %cst_16 : f32 to vector<3x32xf32>
    %c5 = arith.constant 5 : index
    %c0_17 = arith.constant 0 : index
    %16 = vector.load %arg29[%c5, %c0_17] : memref<8x32xf32, #tpu.memory_space<vmem>>, vector<3x32xf32>
    tpu.vector_store %arg29[%c5, %c0_17], %15 {strides = array<i32>} : memref<8x32xf32, #tpu.memory_space<vmem>>, vector<3x32xf32>,
    %c0_18 = arith.constant 0 : index
    %c0_19 = arith.constant 0 : index
    %17 = vector.load %arg29[%c0_18, %c0_19] : memref<8x32xf32, #tpu.memory_space<vmem>>, vector<8x32xf32>
    %18 = tpu.iota {dimensions = array<i32: 2>} : vector<4x8x8xi32>
    %c5_i32 = arith.constant 5 : i32
    %19 = vector.broadcast %c5_i32 : i32 to vector<4x8x8xi32>
    %20 = arith.cmpi slt, %18, %19 : vector<4x8x8xi32>
    %cst_20 = arith.constant 0.000000e+00 : f32
    %cst_21 = arith.constant -1.000000e+30 : f32
    %21 = vector.broadcast %cst_20 : f32 to vector<4x8x8xf32>
    %22 = vector.broadcast %cst_21 : f32 to vector<4x8x8xf32>
    %23 = arith.select %20, %21, %22 : vector<4x8x8xi1>, vector<4x8x8xf32>
    %c0_22 = arith.constant 0 : index
    %c0_23 = arith.constant 0 : index
    %c0_24 = arith.constant 0 : index
    %24 = vector.load %arg9[%c0_22, %c0_23, %c0_24] : memref<2x1x32xf32, #tpu.memory_space<vmem>>, vector<1x1x32xf32>
    %25 = vector.shape_cast %24 : vector<1x1x32xf32> to vector<1x32xf32>
    %c0_25 = arith.constant 0 : index
    %c0_26 = arith.constant 0 : index
    %c0_27 = arith.constant 0 : index
    %26 = vector.load %arg10[%c0_25, %c0_26, %c0_27] : memref<2x1x32xf32, #tpu.memory_space<vmem>>, vector<1x1x32xf32>
    %27 = vector.shape_cast %26 : vector<1x1x32xf32> to vector<1x32xf32>
    %cst_28 = arith.constant dense<0.000000e+00> : vector<8xf32>
    %28 = vector.multi_reduction <add>, %17, %cst_28 [1] : vector<8x32xf32> to vector<8xf32>
    %29 = vector.shape_cast %28 : vector<8xf32> to vector<8x1xf32>
    %cst_29 = arith.constant 3.200000e+01 : f32
    %30 = vector.broadcast %cst_29 : f32 to vector<8x1xf32>
    %31 = arith.divf %29, %30 : vector<8x1xf32>
    %32 = vector.broadcast %31 : vector<8x1xf32> to vector<8x32xf32>
    %33 = arith.subf %17, %32 : vector<8x32xf32>
    %34 = arith.mulf %33, %33 : vector<8x32xf32>
    %cst_30 = arith.constant dense<0.000000e+00> : vector<8xf32>
    %35 = vector.multi_reduction <add>, %34, %cst_30 [1] : vector<8x32xf32> to vector<8xf32>
    %36 = vector.shape_cast %35 : vector<8xf32> to vector<8x1xf32>
    %cst_31 = arith.constant 3.200000e+01 : f32
    %37 = vector.broadcast %cst_31 : f32 to vector<8x1xf32>
    %38 = arith.divf %36, %37 : vector<8x1xf32>
    %39 = vector.broadcast %31 : vector<8x1xf32> to vector<8x32xf32>
    %40 = arith.subf %17, %39 : vector<8x32xf32>
    %cst_32 = arith.constant 9.99999974E-6 : f32
    %41 = vector.broadcast %cst_32 : f32 to vector<8x1xf32>
    %42 = arith.addf %38, %41 : vector<8x1xf32>
    %43 = math.rsqrt %42 : vector<8x1xf32>
    %44 = vector.broadcast %43 : vector<8x1xf32> to vector<8x32xf32>
    %45 = arith.mulf %40, %44 : vector<8x32xf32>
    %46 = vector.broadcast %25 : vector<1x32xf32> to vector<8x32xf32>
    %47 = arith.mulf %45, %46 : vector<8x32xf32>
    %48 = vector.broadcast %27 : vector<1x32xf32> to vector<8x32xf32>
    %49 = arith.addf %47, %48 : vector<8x32xf32>
    %50 = vector.shape_cast %49 : vector<8x32xf32> to vector<1x8x32xf32>
    %51 = vector.shape_cast %50 : vector<1x8x32xf32> to vector<1x8x32xf32>
    %52 = vector.broadcast %51 : vector<1x8x32xf32> to vector<4x8x32xf32>
    %c0_33 = arith.constant 0 : index
    %c0_34 = arith.constant 0 : index
    %c0_35 = arith.constant 0 : index
    %c0_36 = arith.constant 0 : index
    %53 = vector.load %arg11[%c0_33, %c0_34, %c0_35, %c0_36] : memref<2x4x32x8xf32, #tpu.memory_space<vmem>>, vector<1x4x32x8xf32>
    %54 = vector.shape_cast %53 : vector<1x4x32x8xf32> to vector<4x32x8xf32>
    "tpu.trace_start"() <{level = 10 : i32, message = "nsd,ndh->nsh"}> : () -> ()
    %cst_37 = arith.constant dense<0.000000e+00> : vector<4x8x8xf32>
    %55 = tpu.matmul %52, %54, %cst_37 {dimension_numbers = #tpu.dot_dimension_numbers<[2], [1], [1], [2], [0, 0, 0, 1, 1, 2], [0], [0]>} : vector<4x8x32xf32>, vector<4x32x8xf32>, vector<4x8x8xf32> -> vector<4x8x8xf32>
    "tpu.trace_stop"() : () -> ()
    %c0_38 = arith.constant 0 : index
    %c0_39 = arith.constant 0 : index
    %c0_40 = arith.constant 0 : index
    %c0_41 = arith.constant 0 : index
    %56 = vector.load %arg12[%c0_38, %c0_39, %c0_40, %c0_41] : memref<2x4x1x8xf32, #tpu.memory_space<vmem>>, vector<1x4x1x8xf32>
    %57 = vector.shape_cast %56 : vector<1x4x1x8xf32> to vector<4x1x8xf32>
    %58 = vector.broadcast %57 : vector<4x1x8xf32> to vector<4x8x8xf32>
    %59 = arith.addf %55, %58 : vector<4x8x8xf32>
    %c0_42 = arith.constant 0 : index
    %c0_43 = arith.constant 0 : index
    %c0_44 = arith.constant 0 : index
    %c0_45 = arith.constant 0 : index
    %60 = vector.load %arg13[%c0_42, %c0_43, %c0_44, %c0_45] : memref<2x4x32x8xf32, #tpu.memory_space<vmem>>, vector<1x4x32x8xf32>
    %61 = vector.shape_cast %60 : vector<1x4x32x8xf32> to vector<4x32x8xf32>
    "tpu.trace_start"() <{level = 10 : i32, message = "nsd,ndh->nsh"}> : () -> ()
    %cst_46 = arith.constant dense<0.000000e+00> : vector<4x8x8xf32>
    %62 = tpu.matmul %52, %61, %cst_46 {dimension_numbers = #tpu.dot_dimension_numbers<[2], [1], [1], [2], [0, 0, 0, 1, 1, 2], [0], [0]>} : vector<4x8x32xf32>, vector<4x32x8xf32>, vector<4x8x8xf32> -> vector<4x8x8xf32>
    "tpu.trace_stop"() : () -> ()
    %c0_47 = arith.constant 0 : index
    %c0_48 = arith.constant 0 : index
    %c0_49 = arith.constant 0 : index
    %c0_50 = arith.constant 0 : index
    %63 = vector.load %arg14[%c0_47, %c0_48, %c0_49, %c0_50] : memref<2x4x1x8xf32, #tpu.memory_space<vmem>>, vector<1x4x1x8xf32>
    %64 = vector.shape_cast %63 : vector<1x4x1x8xf32> to vector<4x1x8xf32>
    %65 = vector.broadcast %64 : vector<4x1x8xf32> to vector<4x8x8xf32>
    %66 = arith.addf %62, %65 : vector<4x8x8xf32>
    %c0_51 = arith.constant 0 : index
    %c0_52 = arith.constant 0 : index
    %c0_53 = arith.constant 0 : index
    %c0_54 = arith.constant 0 : index
    %67 = vector.load %arg15[%c0_51, %c0_52, %c0_53, %c0_54] : memref<2x4x32x8xf32, #tpu.memory_space<vmem>>, vector<1x4x32x8xf32>
    %68 = vector.shape_cast %67 : vector<1x4x32x8xf32> to vector<4x32x8xf32>
    "tpu.trace_start"() <{level = 10 : i32, message = "nsd,ndh->nsh"}> : () -> ()
    %cst_55 = arith.constant dense<0.000000e+00> : vector<4x8x8xf32>
    %69 = tpu.matmul %52, %68, %cst_55 {dimension_numbers = #tpu.dot_dimension_numbers<[2], [1], [1], [2], [0, 0, 0, 1, 1, 2], [0], [0]>} : vector<4x8x32xf32>, vector<4x32x8xf32>, vector<4x8x8xf32> -> vector<4x8x8xf32>
    "tpu.trace_stop"() : () -> ()
    %c0_56 = arith.constant 0 : index
    %c0_57 = arith.constant 0 : index
    %c0_58 = arith.constant 0 : index
    %c0_59 = arith.constant 0 : index
    %70 = vector.load %arg16[%c0_56, %c0_57, %c0_58, %c0_59] : memref<2x4x1x8xf32, #tpu.memory_space<vmem>>, vector<1x4x1x8xf32>
    %71 = vector.shape_cast %70 : vector<1x4x1x8xf32> to vector<4x1x8xf32>
    %72 = vector.broadcast %71 : vector<4x1x8xf32> to vector<4x8x8xf32>
    %73 = arith.addf %69, %72 : vector<4x8x8xf32>
    "tpu.trace_start"() <{level = 10 : i32, message = "nqh,nkh->nqk"}> : () -> ()
    %cst_60 = arith.constant dense<0.000000e+00> : vector<4x8x8xf32>
    %74 = tpu.matmul %59, %66, %cst_60 {dimension_numbers = #tpu.dot_dimension_numbers<[2], [2], [1], [1], [0, 0, 0, 1, 1, 1], [0], [0]>} : vector<4x8x8xf32>, vector<4x8x8xf32>, vector<4x8x8xf32> -> vector<4x8x8xf32>
    "tpu.trace_stop"() : () -> ()
    %75 = arith.addf %74, %23 : vector<4x8x8xf32>
    %cst_61 = arith.constant dense<0xFF800000> : vector<4x8xf32>
    %76 = vector.multi_reduction <maximumf>, %75, %cst_61 [2] : vector<4x8x8xf32> to vector<4x8xf32>
    %77 = vector.shape_cast %76 : vector<4x8xf32> to vector<4x8x1xf32>
    %78 = vector.broadcast %77 : vector<4x8x1xf32> to vector<4x8x8xf32>
    %79 = arith.subf %75, %78 : vector<4x8x8xf32>
    %80 = math.exp %79 : vector<4x8x8xf32>
    %cst_62 = arith.constant dense<0.000000e+00> : vector<4x8xf32>
    %81 = vector.multi_reduction <add>, %80, %cst_62 [2] : vector<4x8x8xf32> to vector<4x8xf32>
    %82 = vector.shape_cast %81 : vector<4x8xf32> to vector<4x8x1xf32>
    %83 = tpu.reciprocal %82 {approx = true} : vector<4x8x1xf32> -> vector<4x8x1xf32>
    %84 = vector.broadcast %83 : vector<4x8x1xf32> to vector<4x8x8xf32>
    %85 = arith.mulf %80, %84 : vector<4x8x8xf32>
    "tpu.trace_start"() <{level = 10 : i32, message = "nqk,nkh->nqh"}> : () -> ()
    %cst_63 = arith.constant dense<0.000000e+00> : vector<4x8x8xf32>
    %86 = tpu.matmul %85, %73, %cst_63 {dimension_numbers = #tpu.dot_dimension_numbers<[2], [1], [1], [2], [0, 0, 0, 1, 1, 2], [0], [0]>} : vector<4x8x8xf32>, vector<4x8x8xf32>, vector<4x8x8xf32> -> vector<4x8x8xf32>
    "tpu.trace_stop"() : () -> ()
    %c0_64 = arith.constant 0 : index
    %c0_65 = arith.constant 0 : index
    %c0_66 = arith.constant 0 : index
    %c0_67 = arith.constant 0 : index
    %87 = vector.load %arg17[%c0_64, %c0_65, %c0_66, %c0_67] : memref<2x4x8x32xf32, #tpu.memory_space<vmem>>, vector<1x4x8x32xf32>
    %88 = vector.shape_cast %87 : vector<1x4x8x32xf32> to vector<4x8x32xf32>
    "tpu.trace_start"() <{level = 10 : i32, message = "nsh,nhd->nsd"}> : () -> ()
    %cst_68 = arith.constant dense<0.000000e+00> : vector<4x8x32xf32>
    %89 = tpu.matmul %86, %88, %cst_68 {dimension_numbers = #tpu.dot_dimension_numbers<[2], [1], [1], [2], [0, 0, 0, 1, 1, 2], [0], [0]>} : vector<4x8x8xf32>, vector<4x8x32xf32>, vector<4x8x32xf32> -> vector<4x8x32xf32>
    "tpu.trace_stop"() : () -> ()
    %cst_69 = arith.constant dense<0.000000e+00> : vector<8x32xf32>
    %90 = vector.multi_reduction <add>, %89, %cst_69 [0] : vector<4x8x32xf32> to vector<8x32xf32>
    %91 = arith.addf %17, %90 : vector<8x32xf32>
    %c0_70 = arith.constant 0 : index
    %c0_71 = arith.constant 0 : index
    %c0_72 = arith.constant 0 : index
    %92 = vector.load %arg18[%c0_70, %c0_71, %c0_72] : memref<2x1x32xf32, #tpu.memory_space<vmem>>, vector<1x1x32xf32>
    %93 = vector.shape_cast %92 : vector<1x1x32xf32> to vector<1x32xf32>
    %94 = vector.broadcast %93 : vector<1x32xf32> to vector<8x32xf32>
    %95 = arith.addf %91, %94 : vector<8x32xf32>
    %c0_73 = arith.constant 0 : index
    %c0_74 = arith.constant 0 : index
    %c0_75 = arith.constant 0 : index
    %96 = vector.load %arg19[%c0_73, %c0_74, %c0_75] : memref<2x1x32xf32, #tpu.memory_space<vmem>>, vector<1x1x32xf32>
    %97 = vector.shape_cast %96 : vector<1x1x32xf32> to vector<1x32xf32>
    %c0_76 = arith.constant 0 : index
    %c0_77 = arith.constant 0 : index
    %c0_78 = arith.constant 0 : index
    %98 = vector.load %arg20[%c0_76, %c0_77, %c0_78] : memref<2x1x32xf32, #tpu.memory_space<vmem>>, vector<1x1x32xf32>
    %99 = vector.shape_cast %98 : vector<1x1x32xf32> to vector<1x32xf32>
    %cst_79 = arith.constant dense<0.000000e+00> : vector<8xf32>
    %100 = vector.multi_reduction <add>, %95, %cst_79 [1] : vector<8x32xf32> to vector<8xf32>
    %101 = vector.shape_cast %100 : vector<8xf32> to vector<8x1xf32>
    %cst_80 = arith.constant 3.200000e+01 : f32
    %102 = vector.broadcast %cst_80 : f32 to vector<8x1xf32>
    %103 = arith.divf %101, %102 : vector<8x1xf32>
    %104 = vector.broadcast %103 : vector<8x1xf32> to vector<8x32xf32>
    %105 = arith.subf %95, %104 : vector<8x32xf32>
    %106 = arith.mulf %105, %105 : vector<8x32xf32>
    %cst_81 = arith.constant dense<0.000000e+00> : vector<8xf32>
    %107 = vector.multi_reduction <add>, %106, %cst_81 [1] : vector<8x32xf32> to vector<8xf32>
    %108 = vector.shape_cast %107 : vector<8xf32> to vector<8x1xf32>
    %cst_82 = arith.constant 3.200000e+01 : f32
    %109 = vector.broadcast %cst_82 : f32 to vector<8x1xf32>
    %110 = arith.divf %108, %109 : vector<8x1xf32>
    %111 = vector.broadcast %103 : vector<8x1xf32> to vector<8x32xf32>
    %112 = arith.subf %95, %111 : vector<8x32xf32>
    %cst_83 = arith.constant 9.99999974E-6 : f32
    %113 = vector.broadcast %cst_83 : f32 to vector<8x1xf32>
    %114 = arith.addf %110, %113 : vector<8x1xf32>
    %115 = math.rsqrt %114 : vector<8x1xf32>
    %116 = vector.broadcast %115 : vector<8x1xf32> to vector<8x32xf32>
    %117 = arith.mulf %112, %116 : vector<8x32xf32>
    %118 = vector.broadcast %97 : vector<1x32xf32> to vector<8x32xf32>
    %119 = arith.mulf %117, %118 : vector<8x32xf32>
    %120 = vector.broadcast %99 : vector<1x32xf32> to vector<8x32xf32>
    %121 = arith.addf %119, %120 : vector<8x32xf32>
    %c0_84 = arith.constant 0 : index
    %c0_85 = arith.constant 0 : index
    %c0_86 = arith.constant 0 : index
    %122 = vector.load %arg21[%c0_84, %c0_85, %c0_86] : memref<2x32x128xf32, #tpu.memory_space<vmem>>, vector<1x32x128xf32>
    %123 = vector.shape_cast %122 : vector<1x32x128xf32> to vector<32x128xf32>
    %cst_87 = arith.constant dense<0.000000e+00> : vector<8x128xf32>
    %124 = tpu.matmul %121, %123, %cst_87 {dimension_numbers = #tpu.dot_dimension_numbers<[1], [0], [0], [1], [0, 0, 1, 1], [], []>} : vector<8x32xf32>, vector<32x128xf32>, vector<8x128xf32> -> vector<8x128xf32>
    %c0_88 = arith.constant 0 : index
    %c0_89 = arith.constant 0 : index
    %c0_90 = arith.constant 0 : index
    %125 = vector.load %arg22[%c0_88, %c0_89, %c0_90] : memref<2x1x128xf32, #tpu.memory_space<vmem>>, vector<1x1x128xf32>
    %126 = vector.shape_cast %125 : vector<1x1x128xf32> to vector<1x128xf32>
    %127 = vector.broadcast %126 : vector<1x128xf32> to vector<8x128xf32>
    %128 = arith.addf %124, %127 : vector<8x128xf32>
    %129 = arith.mulf %128, %128 : vector<8x128xf32>
    %130 = arith.mulf %128, %129 : vector<8x128xf32>
    %cst_91 = arith.constant 4.471500e-02 : f32
    %131 = vector.broadcast %cst_91 : f32 to vector<8x128xf32>
    %132 = arith.mulf %131, %130 : vector<8x128xf32>
    %133 = arith.addf %128, %132 : vector<8x128xf32>
    %cst_92 = arith.constant 0.797884583 : f32
    %134 = vector.broadcast %cst_92 : f32 to vector<8x128xf32>
    %135 = arith.mulf %134, %133 : vector<8x128xf32>
    %136 = math.tanh %135 : vector<8x128xf32>
    %cst_93 = arith.constant 1.000000e+00 : f32
    %137 = vector.broadcast %cst_93 : f32 to vector<8x128xf32>
    %138 = arith.addf %137, %136 : vector<8x128xf32>
    %cst_94 = arith.constant 5.000000e-01 : f32
    %139 = vector.broadcast %cst_94 : f32 to vector<8x128xf32>
    %140 = arith.mulf %139, %138 : vector<8x128xf32>
    %141 = arith.mulf %128, %140 : vector<8x128xf32>
    %c0_95 = arith.constant 0 : index
    %c0_96 = arith.constant 0 : index
    %c0_97 = arith.constant 0 : index
    %142 = vector.load %arg23[%c0_95, %c0_96, %c0_97] : memref<2x128x32xf32, #tpu.memory_space<vmem>>, vector<1x128x32xf32>
    %143 = vector.shape_cast %142 : vector<1x128x32xf32> to vector<128x32xf32>
    %cst_98 = arith.constant dense<0.000000e+00> : vector<8x32xf32>
    %144 = tpu.matmul %141, %143, %cst_98 {dimension_numbers = #tpu.dot_dimension_numbers<[1], [0], [0], [1], [0, 0, 1, 1], [], []>} : vector<8x128xf32>, vector<128x32xf32>, vector<8x32xf32> -> vector<8x32xf32>
    %c0_99 = arith.constant 0 : index
    %c0_100 = arith.constant 0 : index
    %c0_101 = arith.constant 0 : index
    %145 = vector.load %arg24[%c0_99, %c0_100, %c0_101] : memref<2x1x32xf32, #tpu.memory_space<vmem>>, vector<1x1x32xf32>
    %146 = vector.shape_cast %145 : vector<1x1x32xf32> to vector<1x32xf32>
    %147 = vector.broadcast %146 : vector<1x32xf32> to vector<8x32xf32>
    %148 = arith.addf %144, %147 : vector<8x32xf32>
    %149 = arith.addf %95, %148 : vector<8x32xf32>
    %c1_102 = arith.constant 1 : index
    %c0_103 = arith.constant 0 : index
    %c0_104 = arith.constant 0 : index
    %150 = vector.load %arg9[%c1_102, %c0_103, %c0_104] : memref<2x1x32xf32, #tpu.memory_space<vmem>>, vector<1x1x32xf32>
    %151 = vector.shape_cast %150 : vector<1x1x32xf32> to vector<1x32xf32>
    %c1_105 = arith.constant 1 : index
    %c0_106 = arith.constant 0 : index
    %c0_107 = arith.constant 0 : index
    %152 = vector.load %arg10[%c1_105, %c0_106, %c0_107] : memref<2x1x32xf32, #tpu.memory_space<vmem>>, vector<1x1x32xf32>
    %153 = vector.shape_cast %152 : vector<1x1x32xf32> to vector<1x32xf32>
    %cst_108 = arith.constant dense<0.000000e+00> : vector<8xf32>
    %154 = vector.multi_reduction <add>, %149, %cst_108 [1] : vector<8x32xf32> to vector<8xf32>
    %155 = vector.shape_cast %154 : vector<8xf32> to vector<8x1xf32>
    %cst_109 = arith.constant 3.200000e+01 : f32
    %156 = vector.broadcast %cst_109 : f32 to vector<8x1xf32>
    %157 = arith.divf %155, %156 : vector<8x1xf32>
    %158 = vector.broadcast %157 : vector<8x1xf32> to vector<8x32xf32>
    %159 = arith.subf %149, %158 : vector<8x32xf32>
    %160 = arith.mulf %159, %159 : vector<8x32xf32>
    %cst_110 = arith.constant dense<0.000000e+00> : vector<8xf32>
    %161 = vector.multi_reduction <add>, %160, %cst_110 [1] : vector<8x32xf32> to vector<8xf32>
    %162 = vector.shape_cast %161 : vector<8xf32> to vector<8x1xf32>
    %cst_111 = arith.constant 3.200000e+01 : f32
    %163 = vector.broadcast %cst_111 : f32 to vector<8x1xf32>
    %164 = arith.divf %162, %163 : vector<8x1xf32>
    %165 = vector.broadcast %157 : vector<8x1xf32> to vector<8x32xf32>
    %166 = arith.subf %149, %165 : vector<8x32xf32>
    %cst_112 = arith.constant 9.99999974E-6 : f32
    %167 = vector.broadcast %cst_112 : f32 to vector<8x1xf32>
    %168 = arith.addf %164, %167 : vector<8x1xf32>
    %169 = math.rsqrt %168 : vector<8x1xf32>
    %170 = vector.broadcast %169 : vector<8x1xf32> to vector<8x32xf32>
    %171 = arith.mulf %166, %170 : vector<8x32xf32>
    %172 = vector.broadcast %151 : vector<1x32xf32> to vector<8x32xf32>
    %173 = arith.mulf %171, %172 : vector<8x32xf32>
    %174 = vector.broadcast %153 : vector<1x32xf32> to vector<8x32xf32>
    %175 = arith.addf %173, %174 : vector<8x32xf32>
    %176 = vector.shape_cast %175 : vector<8x32xf32> to vector<1x8x32xf32>
    %177 = vector.shape_cast %176 : vector<1x8x32xf32> to vector<1x8x32xf32>
    %178 = vector.broadcast %177 : vector<1x8x32xf32> to vector<4x8x32xf32>
    %c1_113 = arith.constant 1 : index
    %c0_114 = arith.constant 0 : index
    %c0_115 = arith.constant 0 : index
    %c0_116 = arith.constant 0 : index
    %179 = vector.load %arg11[%c1_113, %c0_114, %c0_115, %c0_116] : memref<2x4x32x8xf32, #tpu.memory_space<vmem>>, vector<1x4x32x8xf32>
    %180 = vector.shape_cast %179 : vector<1x4x32x8xf32> to vector<4x32x8xf32>
    "tpu.trace_start"() <{level = 10 : i32, message = "nsd,ndh->nsh"}> : () -> ()
    %cst_117 = arith.constant dense<0.000000e+00> : vector<4x8x8xf32>
    %181 = tpu.matmul %178, %180, %cst_117 {dimension_numbers = #tpu.dot_dimension_numbers<[2], [1], [1], [2], [0, 0, 0, 1, 1, 2], [0], [0]>} : vector<4x8x32xf32>, vector<4x32x8xf32>, vector<4x8x8xf32> -> vector<4x8x8xf32>
    "tpu.trace_stop"() : () -> ()
    %c1_118 = arith.constant 1 : index
    %c0_119 = arith.constant 0 : index
    %c0_120 = arith.constant 0 : index
    %c0_121 = arith.constant 0 : index
    %182 = vector.load %arg12[%c1_118, %c0_119, %c0_120, %c0_121] : memref<2x4x1x8xf32, #tpu.memory_space<vmem>>, vector<1x4x1x8xf32>
    %183 = vector.shape_cast %182 : vector<1x4x1x8xf32> to vector<4x1x8xf32>
    %184 = vector.broadcast %183 : vector<4x1x8xf32> to vector<4x8x8xf32>
    %185 = arith.addf %181, %184 : vector<4x8x8xf32>
    %c1_122 = arith.constant 1 : index
    %c0_123 = arith.constant 0 : index
    %c0_124 = arith.constant 0 : index
    %c0_125 = arith.constant 0 : index
    %186 = vector.load %arg13[%c1_122, %c0_123, %c0_124, %c0_125] : memref<2x4x32x8xf32, #tpu.memory_space<vmem>>, vector<1x4x32x8xf32>
    %187 = vector.shape_cast %186 : vector<1x4x32x8xf32> to vector<4x32x8xf32>
    "tpu.trace_start"() <{level = 10 : i32, message = "nsd,ndh->nsh"}> : () -> ()
    %cst_126 = arith.constant dense<0.000000e+00> : vector<4x8x8xf32>
    %188 = tpu.matmul %178, %187, %cst_126 {dimension_numbers = #tpu.dot_dimension_numbers<[2], [1], [1], [2], [0, 0, 0, 1, 1, 2], [0], [0]>} : vector<4x8x32xf32>, vector<4x32x8xf32>, vector<4x8x8xf32> -> vector<4x8x8xf32>
    "tpu.trace_stop"() : () -> ()
    %c1_127 = arith.constant 1 : index
    %c0_128 = arith.constant 0 : index
    %c0_129 = arith.constant 0 : index
    %c0_130 = arith.constant 0 : index
    %189 = vector.load %arg14[%c1_127, %c0_128, %c0_129, %c0_130] : memref<2x4x1x8xf32, #tpu.memory_space<vmem>>, vector<1x4x1x8xf32>
    %190 = vector.shape_cast %189 : vector<1x4x1x8xf32> to vector<4x1x8xf32>
    %191 = vector.broadcast %190 : vector<4x1x8xf32> to vector<4x8x8xf32>
    %192 = arith.addf %188, %191 : vector<4x8x8xf32>
    %c1_131 = arith.constant 1 : index
    %c0_132 = arith.constant 0 : index
    %c0_133 = arith.constant 0 : index
    %c0_134 = arith.constant 0 : index
    %193 = vector.load %arg15[%c1_131, %c0_132, %c0_133, %c0_134] : memref<2x4x32x8xf32, #tpu.memory_space<vmem>>, vector<1x4x32x8xf32>
    %194 = vector.shape_cast %193 : vector<1x4x32x8xf32> to vector<4x32x8xf32>
    "tpu.trace_start"() <{level = 10 : i32, message = "nsd,ndh->nsh"}> : () -> ()
    %cst_135 = arith.constant dense<0.000000e+00> : vector<4x8x8xf32>
    %195 = tpu.matmul %178, %194, %cst_135 {dimension_numbers = #tpu.dot_dimension_numbers<[2], [1], [1], [2], [0, 0, 0, 1, 1, 2], [0], [0]>} : vector<4x8x32xf32>, vector<4x32x8xf32>, vector<4x8x8xf32> -> vector<4x8x8xf32>
    "tpu.trace_stop"() : () -> ()
    %c1_136 = arith.constant 1 : index
    %c0_137 = arith.constant 0 : index
    %c0_138 = arith.constant 0 : index
    %c0_139 = arith.constant 0 : index
    %196 = vector.load %arg16[%c1_136, %c0_137, %c0_138, %c0_139] : memref<2x4x1x8xf32, #tpu.memory_space<vmem>>, vector<1x4x1x8xf32>
    %197 = vector.shape_cast %196 : vector<1x4x1x8xf32> to vector<4x1x8xf32>
    %198 = vector.broadcast %197 : vector<4x1x8xf32> to vector<4x8x8xf32>
    %199 = arith.addf %195, %198 : vector<4x8x8xf32>
    "tpu.trace_start"() <{level = 10 : i32, message = "nqh,nkh->nqk"}> : () -> ()
    %cst_140 = arith.constant dense<0.000000e+00> : vector<4x8x8xf32>
    %200 = tpu.matmul %185, %192, %cst_140 {dimension_numbers = #tpu.dot_dimension_numbers<[2], [2], [1], [1], [0, 0, 0, 1, 1, 1], [0], [0]>} : vector<4x8x8xf32>, vector<4x8x8xf32>, vector<4x8x8xf32> -> vector<4x8x8xf32>
    "tpu.trace_stop"() : () -> ()
    %201 = arith.addf %200, %23 : vector<4x8x8xf32>
    %cst_141 = arith.constant dense<0xFF800000> : vector<4x8xf32>
    %202 = vector.multi_reduction <maximumf>, %201, %cst_141 [2] : vector<4x8x8xf32> to vector<4x8xf32>
    %203 = vector.shape_cast %202 : vector<4x8xf32> to vector<4x8x1xf32>
    %204 = vector.broadcast %203 : vector<4x8x1xf32> to vector<4x8x8xf32>
    %205 = arith.subf %201, %204 : vector<4x8x8xf32>
    %206 = math.exp %205 : vector<4x8x8xf32>
    %cst_142 = arith.constant dense<0.000000e+00> : vector<4x8xf32>
    %207 = vector.multi_reduction <add>, %206, %cst_142 [2] : vector<4x8x8xf32> to vector<4x8xf32>
    %208 = vector.shape_cast %207 : vector<4x8xf32> to vector<4x8x1xf32>
    %209 = tpu.reciprocal %208 {approx = true} : vector<4x8x1xf32> -> vector<4x8x1xf32>
    %210 = vector.broadcast %209 : vector<4x8x1xf32> to vector<4x8x8xf32>
    %211 = arith.mulf %206, %210 : vector<4x8x8xf32>
    "tpu.trace_start"() <{level = 10 : i32, message = "nqk,nkh->nqh"}> : () -> ()
    %cst_143 = arith.constant dense<0.000000e+00> : vector<4x8x8xf32>
    %212 = tpu.matmul %211, %199, %cst_143 {dimension_numbers = #tpu.dot_dimension_numbers<[2], [1], [1], [2], [0, 0, 0, 1, 1, 2], [0], [0]>} : vector<4x8x8xf32>, vector<4x8x8xf32>, vector<4x8x8xf32> -> vector<4x8x8xf32>
    "tpu.trace_stop"() : () -> ()
    %c1_144 = arith.constant 1 : index
    %c0_145 = arith.constant 0 : index
    %c0_146 = arith.constant 0 : index
    %c0_147 = arith.constant 0 : index
    %213 = vector.load %arg17[%c1_144, %c0_145, %c0_146, %c0_147] : memref<2x4x8x32xf32, #tpu.memory_space<vmem>>, vector<1x4x8x32xf32>
    %214 = vector.shape_cast %213 : vector<1x4x8x32xf32> to vector<4x8x32xf32>
    "tpu.trace_start"() <{level = 10 : i32, message = "nsh,nhd->nsd"}> : () -> ()
    %cst_148 = arith.constant dense<0.000000e+00> : vector<4x8x32xf32>
    %215 = tpu.matmul %212, %214, %cst_148 {dimension_numbers = #tpu.dot_dimension_numbers<[2], [1], [1], [2], [0, 0, 0, 1, 1, 2], [0], [0]>} : vector<4x8x8xf32>, vector<4x8x32xf32>, vector<4x8x32xf32> -> vector<4x8x32xf32>
    "tpu.trace_stop"() : () -> ()
    %cst_149 = arith.constant dense<0.000000e+00> : vector<8x32xf32>
    %216 = vector.multi_reduction <add>, %215, %cst_149 [0] : vector<4x8x32xf32> to vector<8x32xf32>
    %217 = arith.addf %149, %216 : vector<8x32xf32>
    %c1_150 = arith.constant 1 : index
    %c0_151 = arith.constant 0 : index
    %c0_152 = arith.constant 0 : index
    %218 = vector.load %arg18[%c1_150, %c0_151, %c0_152] : memref<2x1x32xf32, #tpu.memory_space<vmem>>, vector<1x1x32xf32>
    %219 = vector.shape_cast %218 : vector<1x1x32xf32> to vector<1x32xf32>
    %220 = vector.broadcast %219 : vector<1x32xf32> to vector<8x32xf32>
    %221 = arith.addf %217, %220 : vector<8x32xf32>
    %c1_153 = arith.constant 1 : index
    %c0_154 = arith.constant 0 : index
    %c0_155 = arith.constant 0 : index
    %222 = vector.load %arg19[%c1_153, %c0_154, %c0_155] : memref<2x1x32xf32, #tpu.memory_space<vmem>>, vector<1x1x32xf32>
    %223 = vector.shape_cast %222 : vector<1x1x32xf32> to vector<1x32xf32>
    %c1_156 = arith.constant 1 : index
    %c0_157 = arith.constant 0 : index
    %c0_158 = arith.constant 0 : index
    %224 = vector.load %arg20[%c1_156, %c0_157, %c0_158] : memref<2x1x32xf32, #tpu.memory_space<vmem>>, vector<1x1x32xf32>
    %225 = vector.shape_cast %224 : vector<1x1x32xf32> to vector<1x32xf32>
    %cst_159 = arith.constant dense<0.000000e+00> : vector<8xf32>
    %226 = vector.multi_reduction <add>, %221, %cst_159 [1] : vector<8x32xf32> to vector<8xf32>
    %227 = vector.shape_cast %226 : vector<8xf32> to vector<8x1xf32>
    %cst_160 = arith.constant 3.200000e+01 : f32
    %228 = vector.broadcast %cst_160 : f32 to vector<8x1xf32>
    %229 = arith.divf %227, %228 : vector<8x1xf32>
    %230 = vector.broadcast %229 : vector<8x1xf32> to vector<8x32xf32>
    %231 = arith.subf %221, %230 : vector<8x32xf32>
    %232 = arith.mulf %231, %231 : vector<8x32xf32>
    %cst_161 = arith.constant dense<0.000000e+00> : vector<8xf32>
    %233 = vector.multi_reduction <add>, %232, %cst_161 [1] : vector<8x32xf32> to vector<8xf32>
    %234 = vector.shape_cast %233 : vector<8xf32> to vector<8x1xf32>
    %cst_162 = arith.constant 3.200000e+01 : f32
    %235 = vector.broadcast %cst_162 : f32 to vector<8x1xf32>
    %236 = arith.divf %234, %235 : vector<8x1xf32>
    %237 = vector.broadcast %229 : vector<8x1xf32> to vector<8x32xf32>
    %238 = arith.subf %221, %237 : vector<8x32xf32>
    %cst_163 = arith.constant 9.99999974E-6 : f32
    %239 = vector.broadcast %cst_163 : f32 to vector<8x1xf32>
    %240 = arith.addf %236, %239 : vector<8x1xf32>
    %241 = math.rsqrt %240 : vector<8x1xf32>
    %242 = vector.broadcast %241 : vector<8x1xf32> to vector<8x32xf32>
    %243 = arith.mulf %238, %242 : vector<8x32xf32>
    %244 = vector.broadcast %223 : vector<1x32xf32> to vector<8x32xf32>
    %245 = arith.mulf %243, %244 : vector<8x32xf32>
    %246 = vector.broadcast %225 : vector<1x32xf32> to vector<8x32xf32>
    %247 = arith.addf %245, %246 : vector<8x32xf32>
    %c1_164 = arith.constant 1 : index
    %c0_165 = arith.constant 0 : index
    %c0_166 = arith.constant 0 : index
    %248 = vector.load %arg21[%c1_164, %c0_165, %c0_166] : memref<2x32x128xf32, #tpu.memory_space<vmem>>, vector<1x32x128xf32>
    %249 = vector.shape_cast %248 : vector<1x32x128xf32> to vector<32x128xf32>
    %cst_167 = arith.constant dense<0.000000e+00> : vector<8x128xf32>
    %250 = tpu.matmul %247, %249, %cst_167 {dimension_numbers = #tpu.dot_dimension_numbers<[1], [0], [0], [1], [0, 0, 1, 1], [], []>} : vector<8x32xf32>, vector<32x128xf32>, vector<8x128xf32> -> vector<8x128xf32>
    %c1_168 = arith.constant 1 : index
    %c0_169 = arith.constant 0 : index
    %c0_170 = arith.constant 0 : index
    %251 = vector.load %arg22[%c1_168, %c0_169, %c0_170] : memref<2x1x128xf32, #tpu.memory_space<vmem>>, vector<1x1x128xf32>
    %252 = vector.shape_cast %251 : vector<1x1x128xf32> to vector<1x128xf32>
    %253 = vector.broadcast %252 : vector<1x128xf32> to vector<8x128xf32>
    %254 = arith.addf %250, %253 : vector<8x128xf32>
    %255 = arith.mulf %254, %254 : vector<8x128xf32>
    %256 = arith.mulf %254, %255 : vector<8x128xf32>
    %cst_171 = arith.constant 4.471500e-02 : f32
    %257 = vector.broadcast %cst_171 : f32 to vector<8x128xf32>
    %258 = arith.mulf %257, %256 : vector<8x128xf32>
    %259 = arith.addf %254, %258 : vector<8x128xf32>
    %cst_172 = arith.constant 0.797884583 : f32
    %260 = vector.broadcast %cst_172 : f32 to vector<8x128xf32>
    %261 = arith.mulf %260, %259 : vector<8x128xf32>
    %262 = math.tanh %261 : vector<8x128xf32>
    %cst_173 = arith.constant 1.000000e+00 : f32
    %263 = vector.broadcast %cst_173 : f32 to vector<8x128xf32>
    %264 = arith.addf %263, %262 : vector<8x128xf32>
    %cst_174 = arith.constant 5.000000e-01 : f32
    %265 = vector.broadcast %cst_174 : f32 to vector<8x128xf32>
    %266 = arith.mulf %265, %264 : vector<8x128xf32>
    %267 = arith.mulf %254, %266 : vector<8x128xf32>
    %c1_175 = arith.constant 1 : index
    %c0_176 = arith.constant 0 : index
    %c0_177 = arith.constant 0 : index
    %268 = vector.load %arg23[%c1_175, %c0_176, %c0_177] : memref<2x128x32xf32, #tpu.memory_space<vmem>>, vector<1x128x32xf32>
    %269 = vector.shape_cast %268 : vector<1x128x32xf32> to vector<128x32xf32>
    %cst_178 = arith.constant dense<0.000000e+00> : vector<8x32xf32>
    %270 = tpu.matmul %267, %269, %cst_178 {dimension_numbers = #tpu.dot_dimension_numbers<[1], [0], [0], [1], [0, 0, 1, 1], [], []>} : vector<8x128xf32>, vector<128x32xf32>, vector<8x32xf32> -> vector<8x32xf32>
    %c1_179 = arith.constant 1 : index
    %c0_180 = arith.constant 0 : index
    %c0_181 = arith.constant 0 : index
    %271 = vector.load %arg24[%c1_179, %c0_180, %c0_181] : memref<2x1x32xf32, #tpu.memory_space<vmem>>, vector<1x1x32xf32>
    %272 = vector.shape_cast %271 : vector<1x1x32xf32> to vector<1x32xf32>
    %273 = vector.broadcast %272 : vector<1x32xf32> to vector<8x32xf32>
    %274 = arith.addf %270, %273 : vector<8x32xf32>
    %275 = arith.addf %221, %274 : vector<8x32xf32>
    %c0_182 = arith.constant 0 : index
    %c0_183 = arith.constant 0 : index
    %276 = vector.load %arg25[%c0_182, %c0_183] : memref<1x32xf32, #tpu.memory_space<vmem>>, vector<1x32xf32>
    %c0_184 = arith.constant 0 : index
    %c0_185 = arith.constant 0 : index
    %277 = vector.load %arg26[%c0_184, %c0_185] : memref<1x32xf32, #tpu.memory_space<vmem>>, vector<1x32xf32>
    %cst_186 = arith.constant dense<0.000000e+00> : vector<8xf32>
    %278 = vector.multi_reduction <add>, %275, %cst_186 [1] : vector<8x32xf32> to vector<8xf32>
    %279 = vector.shape_cast %278 : vector<8xf32> to vector<8x1xf32>
    %cst_187 = arith.constant 3.200000e+01 : f32
    %280 = vector.broadcast %cst_187 : f32 to vector<8x1xf32>
    %281 = arith.divf %279, %280 : vector<8x1xf32>
    %282 = vector.broadcast %281 : vector<8x1xf32> to vector<8x32xf32>
    %283 = arith.subf %275, %282 : vector<8x32xf32>
    %284 = arith.mulf %283, %283 : vector<8x32xf32>
    %cst_188 = arith.constant dense<0.000000e+00> : vector<8xf32>
    %285 = vector.multi_reduction <add>, %284, %cst_188 [1] : vector<8x32xf32> to vector<8xf32>
    %286 = vector.shape_cast %285 : vector<8xf32> to vector<8x1xf32>
    %cst_189 = arith.constant 3.200000e+01 : f32
    %287 = vector.broadcast %cst_189 : f32 to vector<8x1xf32>
    %288 = arith.divf %286, %287 : vector<8x1xf32>
    %289 = vector.broadcast %281 : vector<8x1xf32> to vector<8x32xf32>
    %290 = arith.subf %275, %289 : vector<8x32xf32>
    %cst_190 = arith.constant 9.99999974E-6 : f32
    %291 = vector.broadcast %cst_190 : f32 to vector<8x1xf32>
    %292 = arith.addf %288, %291 : vector<8x1xf32>
    %293 = math.rsqrt %292 : vector<8x1xf32>
    %294 = vector.broadcast %293 : vector<8x1xf32> to vector<8x32xf32>
    %295 = arith.mulf %290, %294 : vector<8x32xf32>
    %296 = vector.broadcast %276 : vector<1x32xf32> to vector<8x32xf32>
    %297 = arith.mulf %295, %296 : vector<8x32xf32>
    %298 = vector.broadcast %277 : vector<1x32xf32> to vector<8x32xf32>
    %299 = arith.addf %297, %298 : vector<8x32xf32>
    %c0_191 = arith.constant 0 : index
    %c0_192 = arith.constant 0 : index
    %300 = vector.load %arg8[%c0_191, %c0_192] : memref<1x32xf32, #tpu.memory_space<vmem>>, vector<1x32xf32>
    %301 = vector.shape_cast %300 : vector<1x32xf32> to vector<1x32xf32>
    %302 = vector.broadcast %301 : vector<1x32xf32> to vector<16x32xf32>
    %c0_193 = arith.constant 0 : index
    %c0_194 = arith.constant 0 : index
    %303 = vector.load %arg30[%c0_193, %c0_194] : memref<16x32xf32, #tpu.memory_space<vmem>>, vector<16x32xf32>
    tpu.vector_store %arg30[%c0_193, %c0_194], %302 {strides = array<i32>} : memref<16x32xf32, #tpu.memory_space<vmem>>, vector<16x32xf32>,
    %304 = vector.extract_strided_slice %299 {offsets = [1, 0], sizes = [4, 32], strides = [1, 1]} : vector<8x32xf32> to vector<4x32xf32>
    %c0_195 = arith.constant 0 : index
    %c0_196 = arith.constant 0 : index
    %305 = vector.load %arg30[%c0_195, %c0_196] : memref<16x32xf32, #tpu.memory_space<vmem>>, vector<4x32xf32>
    tpu.vector_store %arg30[%c0_195, %c0_196], %304 {strides = array<i32>} : memref<16x32xf32, #tpu.memory_space<vmem>>, vector<4x32xf32>,
    %306 = tpu.iota {dimensions = array<i32: 1>} : vector<16x16xi32>
    %c0_197 = arith.constant 0 : index
    %c0_198 = arith.constant 0 : index
    %c0_199 = arith.constant 0 : index
    %307 = vector.load %arg3[%c0_197, %c0_198, %c0_199] : memref<1x16x1xi32, #tpu.memory_space<vmem>>, vector<1x16x1xi32>
    %308 = vector.shape_cast %307 : vector<1x16x1xi32> to vector<16x1xi32>
    %309 = vector.shape_cast %308 : vector<16x1xi32> to vector<16x1xi32>
    %310 = vector.broadcast %309 : vector<16x1xi32> to vector<16x16xi32>
    %311 = arith.cmpi eq, %306, %310 : vector<16x16xi32>
    %312 = arith.extui %311 : vector<16x16xi1> to vector<16x16xi32>
    %313 = arith.sitofp %312 : vector<16x16xi32> to vector<16x16xf32>
    %c0_200 = arith.constant 0 : index
    %c0_201 = arith.constant 0 : index
    %314 = vector.load %arg30[%c0_200, %c0_201] : memref<16x32xf32, #tpu.memory_space<vmem>>, vector<16x32xf32>
    %cst_202 = arith.constant dense<0.000000e+00> : vector<16x32xf32>
    %315 = tpu.matmul %313, %314, %cst_202 {dimension_numbers = #tpu.dot_dimension_numbers<[1], [0], [0], [1], [0, 0, 1, 1], [], []>} : vector<16x16xf32>, vector<16x32xf32>, vector<16x32xf32> -> vector<16x32xf32>
    %c0_203 = arith.constant 0 : index
    %c0_204 = arith.constant 0 : index
    %316 = vector.load %arg27[%c0_203, %c0_204] : memref<16x32xf32, #tpu.memory_space<vmem>>, vector<16x32xf32>
    %317 = arith.addf %315, %316 : vector<16x32xf32>
    %c0_205 = arith.constant 0 : index
    %c0_206 = arith.constant 0 : index
    %c0_207 = arith.constant 0 : index
    %318 = vector.load %arg28[%c0_205, %c0_206, %c0_207] : memref<1x16x32xf32, #tpu.memory_space<vmem>>, vector<1x16x32xf32>
    %319 = vector.shape_cast %318 : vector<1x16x32xf32> to vector<16x32xf32>
    %320 = vector.shape_cast %317 : vector<16x32xf32> to vector<1x16x32xf32>
    tpu.vector_store %arg28[%c0_205, %c0_206, %c0_207], %320 {strides = array<i32>} : memref<1x16x32xf32, #tpu.memory_space<vmem>>, vector<1x16x32xf32>,
    return
  }
  func.func @transform_0(%arg0: i32) -> (i32, i32, i32) {
    %c0_i32 = arith.constant 0 : i32
    %c0_i32_0 = arith.constant 0 : i32
    %c0_i32_1 = arith.constant 0 : i32
    return %arg0, %c0_i32, %c0_i32_0 : i32, i32, i32
  }
  func.func @transform_1(%arg0: i32) -> (i32, i32, i32) {
    %c0_i32 = arith.constant 0 : i32
    %c0_i32_0 = arith.constant 0 : i32
    %c0_i32_1 = arith.constant 0 : i32
    return %arg0, %c0_i32, %c0_i32_0 : i32, i32, i32
  }
  func.func @transform_2(%arg0: i32) -> (i32, i32, i32) {
    %c0_i32 = arith.constant 0 : i32
    %c0_i32_0 = arith.constant 0 : i32
    %c0_i32_1 = arith.constant 0 : i32
    return %arg0, %c0_i32, %c0_i32_0 : i32, i32, i32
  }
  func.func @transform_3(%arg0: i32) -> (i32, i32) {
    %c0_i32 = arith.constant 0 : i32
    %c0_i32_0 = arith.constant 0 : i32
    %c0_i32_1 = arith.constant 0 : i32
    return %c0_i32, %c0_i32_0 : i32, i32
  }
  func.func @transform_4(%arg0: i32) -> (i32, i32) {
    %c0_i32 = arith.constant 0 : i32
    %c0_i32_0 = arith.constant 0 : i32
    %c0_i32_1 = arith.constant 0 : i32
    return %c0_i32, %c0_i32_0 : i32, i32
  }
  func.func @transform_5(%arg0: i32) -> (i32, i32) {
    %c0_i32 = arith.constant 0 : i32
    %c0_i32_0 = arith.constant 0 : i32
    %c0_i32_1 = arith.constant 0 : i32
    return %c0_i32, %c0_i32_0 : i32, i32
  }
  func.func @transform_6(%arg0: i32) -> (i32, i32) {
    %c0_i32 = arith.constant 0 : i32
    %c0_i32_0 = arith.constant 0 : i32
    %c0_i32_1 = arith.constant 0 : i32
    return %c0_i32, %c0_i32_0 : i32, i32
  }
  func.func @transform_7(%arg0: i32) -> (i32, i32) {
    %c0_i32 = arith.constant 0 : i32
    %c0_i32_0 = arith.constant 0 : i32
    %c0_i32_1 = arith.constant 0 : i32
    return %c0_i32, %c0_i32_0 : i32, i32
  }
  func.func @transform_8(%arg0: i32) -> (i32, i32, i32) {
    %c0_i32 = arith.constant 0 : i32
    %c0_i32_0 = arith.constant 0 : i32
    %c0_i32_1 = arith.constant 0 : i32
    %c0_i32_2 = arith.constant 0 : i32
    return %c0_i32, %c0_i32_0, %c0_i32_1 : i32, i32, i32
  }
  func.func @transform_9(%arg0: i32) -> (i32, i32, i32) {
    %c0_i32 = arith.constant 0 : i32
    %c0_i32_0 = arith.constant 0 : i32
    %c0_i32_1 = arith.constant 0 : i32
    %c0_i32_2 = arith.constant 0 : i32
    return %c0_i32, %c0_i32_0, %c0_i32_1 : i32, i32, i32
  }
  func.func @transform_10(%arg0: i32) -> (i32, i32, i32, i32) {
    %c0_i32 = arith.constant 0 : i32
    %c0_i32_0 = arith.constant 0 : i32
    %c0_i32_1 = arith.constant 0 : i32
    %c0_i32_2 = arith.constant 0 : i32
    %c0_i32_3 = arith.constant 0 : i32
    return %c0_i32, %c0_i32_0, %c0_i32_1, %c0_i32_2 : i32, i32, i32, i32
  }
  func.func @transform_11(%arg0: i32) -> (i32, i32, i32, i32) {
    %c0_i32 = arith.constant 0 : i32
    %c0_i32_0 = arith.constant 0 : i32
    %c0_i32_1 = arith.constant 0 : i32
    %c0_i32_2 = arith.constant 0 : i32
    %c0_i32_3 = arith.constant 0 : i32
    return %c0_i32, %c0_i32_0, %c0_i32_1, %c0_i32_2 : i32, i32, i32, i32
  }
  func.func @transform_12(%arg0: i32) -> (i32, i32, i32, i32) {
    %c0_i32 = arith.constant 0 : i32
    %c0_i32_0 = arith.constant 0 : i32
    %c0_i32_1 = arith.constant 0 : i32
    %c0_i32_2 = arith.constant 0 : i32
    %c0_i32_3 = arith.constant 0 : i32
    return %c0_i32, %c0_i32_0, %c0_i32_1, %c0_i32_2 : i32, i32, i32, i32
  }
  func.func @transform_13(%arg0: i32) -> (i32, i32, i32, i32) {
    %c0_i32 = arith.constant 0 : i32
    %c0_i32_0 = arith.constant 0 : i32
    %c0_i32_1 = arith.constant 0 : i32
    %c0_i32_2 = arith.constant 0 : i32
    %c0_i32_3 = arith.constant 0 : i32
    return %c0_i32, %c0_i32_0, %c0_i32_1, %c0_i32_2 : i32, i32, i32, i32
  }
  func.func @transform_14(%arg0: i32) -> (i32, i32, i32, i32) {
    %c0_i32 = arith.constant 0 : i32
    %c0_i32_0 = arith.constant 0 : i32
    %c0_i32_1 = arith.constant 0 : i32
    %c0_i32_2 = arith.constant 0 : i32
    %c0_i32_3 = arith.constant 0 : i32
    return %c0_i32, %c0_i32_0, %c0_i32_1, %c0_i32_2 : i32, i32, i32, i32
  }
  func.func @transform_15(%arg0: i32) -> (i32, i32, i32, i32) {
    %c0_i32 = arith.constant 0 : i32
    %c0_i32_0 = arith.constant 0 : i32
    %c0_i32_1 = arith.constant 0 : i32
    %c0_i32_2 = arith.constant 0 : i32
    %c0_i32_3 = arith.constant 0 : i32
    return %c0_i32, %c0_i32_0, %c0_i32_1, %c0_i32_2 : i32, i32, i32, i32
  }
  func.func @transform_16(%arg0: i32) -> (i32, i32, i32, i32) {
    %c0_i32 = arith.constant 0 : i32
    %c0_i32_0 = arith.constant 0 : i32
    %c0_i32_1 = arith.constant 0 : i32
    %c0_i32_2 = arith.constant 0 : i32
    %c0_i32_3 = arith.constant 0 : i32
    return %c0_i32, %c0_i32_0, %c0_i32_1, %c0_i32_2 : i32, i32, i32, i32
  }
  func.func @transform_17(%arg0: i32) -> (i32, i32, i32) {
    %c0_i32 = arith.constant 0 : i32
    %c0_i32_0 = arith.constant 0 : i32
    %c0_i32_1 = arith.constant 0 : i32
    %c0_i32_2 = arith.constant 0 : i32
    return %c0_i32, %c0_i32_0, %c0_i32_1 : i32, i32, i32
  }
  func.func @transform_18(%arg0: i32) -> (i32, i32, i32) {
    %c0_i32 = arith.constant 0 : i32
    %c0_i32_0 = arith.constant 0 : i32
    %c0_i32_1 = arith.constant 0 : i32
    %c0_i32_2 = arith.constant 0 : i32
    return %c0_i32, %c0_i32_0, %c0_i32_1 : i32, i32, i32
  }
  func.func @transform_19(%arg0: i32) -> (i32, i32, i32) {
    %c0_i32 = arith.constant 0 : i32
    %c0_i32_0 = arith.constant 0 : i32
    %c0_i32_1 = arith.constant 0 : i32
    %c0_i32_2 = arith.constant 0 : i32
    return %c0_i32, %c0_i32_0, %c0_i32_1 : i32, i32, i32
  }
  func.func @transform_20(%arg0: i32) -> (i32, i32, i32) {
    %c0_i32 = arith.constant 0 : i32
    %c0_i32_0 = arith.constant 0 : i32
    %c0_i32_1 = arith.constant 0 : i32
    %c0_i32_2 = arith.constant 0 : i32
    return %c0_i32, %c0_i32_0, %c0_i32_1 : i32, i32, i32
  }
  func.func @transform_21(%arg0: i32) -> (i32, i32, i32) {
    %c0_i32 = arith.constant 0 : i32
    %c0_i32_0 = arith.constant 0 : i32
    %c0_i32_1 = arith.constant 0 : i32
    %c0_i32_2 = arith.constant 0 : i32
    return %c0_i32, %c0_i32_0, %c0_i32_1 : i32, i32, i32
  }
  func.func @transform_22(%arg0: i32) -> (i32, i32, i32) {
    %c0_i32 = arith.constant 0 : i32
    %c0_i32_0 = arith.constant 0 : i32
    %c0_i32_1 = arith.constant 0 : i32
    %c0_i32_2 = arith.constant 0 : i32
    return %c0_i32, %c0_i32_0, %c0_i32_1 : i32, i32, i32
  }
  func.func @transform_23(%arg0: i32) -> (i32, i32, i32) {
    %c0_i32 = arith.constant 0 : i32
    %c0_i32_0 = arith.constant 0 : i32
    %c0_i32_1 = arith.constant 0 : i32
    %c0_i32_2 = arith.constant 0 : i32
    return %c0_i32, %c0_i32_0, %c0_i32_1 : i32, i32, i32
  }
  func.func @transform_24(%arg0: i32) -> (i32, i32) {
    %c0_i32 = arith.constant 0 : i32
    %c0_i32_0 = arith.constant 0 : i32
    %c0_i32_1 = arith.constant 0 : i32
    return %c0_i32, %c0_i32_0 : i32, i32
  }
  func.func @transform_25(%arg0: i32) -> (i32, i32) {
    %c0_i32 = arith.constant 0 : i32
    %c0_i32_0 = arith.constant 0 : i32
    %c0_i32_1 = arith.constant 0 : i32
    return %c0_i32, %c0_i32_0 : i32, i32
  }
  func.func @transform_26(%arg0: i32) -> (i32, i32) {
    %c0_i32 = arith.constant 0 : i32
    %c0_i32_0 = arith.constant 0 : i32
    %c0_i32_1 = arith.constant 0 : i32
    return %c0_i32, %c0_i32_0 : i32, i32
  }
  func.func @transform_27(%arg0: i32) -> (i32, i32, i32) {
    %c0_i32 = arith.constant 0 : i32
    %c0_i32_0 = arith.constant 0 : i32
    %c0_i32_1 = arith.constant 0 : i32
    return %arg0, %c0_i32, %c0_i32_0 : i32, i32, i32
  }
}

</mosaic_0001>

<llo_original>
// kernel: mae_forward.1
$region0: #{mae_forward.1}
  #allocation0 [shape = 'u32[]', space=smem, size = 0x4, offset = 0x4, fixed_abs, tag = 'smem constant byte address 0x4 - core index']
  #allocation1 [shape = 'u32[144,128]{1,0:T(1,128)}', space=vmem, size = 0x12000, scoped, tag = 'internal scratch']
  #allocation2 [shape = 'f32[8,32]{1,0:T(8,128)}', space=vmem, size = 0x1000, scoped, tag = 'scratch operand']
  #allocation3 [shape = 'f32[16,32]{1,0:T(8,128)}', space=vmem, size = 0x2000, scoped, tag = 'scratch operand']
  %s0 = inlined_call_operand.vmem [shape: f32[2,4,48], index: 0, kind: input, shape index: {}]
  %s1 = inlined_call_operand.vmem [shape: f32[2,4,32], index: 1, kind: input, shape index: {}]
  %s2 = inlined_call_operand.vmem [shape: s32[2,16,1], index: 2, kind: input, shape index: {}]
  %s3 = inlined_call_operand.vmem [shape: f32[48,32], index: 3, kind: input, shape index: {}]
  %s4 = inlined_call_operand.vmem [shape: f32[1,32], index: 4, kind: input, shape index: {}]
  %s5 = inlined_call_operand.vmem [shape: f32[1,32], index: 5, kind: input, shape index: {}]
  %s6 = inlined_call_operand.vmem [shape: f32[1,32], index: 6, kind: input, shape index: {}]
  %s7 = inlined_call_operand.vmem [shape: f32[1,32], index: 7, kind: input, shape index: {}]
  %s8 = inlined_call_operand.vmem [shape: f32[2,1,32], index: 8, kind: input, shape index: {}]
  %s9 = inlined_call_operand.vmem [shape: f32[2,1,32], index: 9, kind: input, shape index: {}]
  %s10 = inlined_call_operand.vmem [shape: f32[2,4,32,8], index: 10, kind: input, shape index: {}]
  %s11 = inlined_call_operand.vmem [shape: f32[2,4,1,8], index: 11, kind: input, shape index: {}]
  %s12 = inlined_call_operand.vmem [shape: f32[2,4,32,8], index: 12, kind: input, shape index: {}]
  %s13 = inlined_call_operand.vmem [shape: f32[2,4,1,8], index: 13, kind: input, shape index: {}]
  %s14 = inlined_call_operand.vmem [shape: f32[2,4,32,8], index: 14, kind: input, shape index: {}]
  %s15 = inlined_call_operand.vmem [shape: f32[2,4,1,8], index: 15, kind: input, shape index: {}]
  %s16 = inlined_call_operand.vmem [shape: f32[2,4,8,32], index: 16, kind: input, shape index: {}]
  %s17 = inlined_call_operand.vmem [shape: f32[2,1,32], index: 17, kind: input, shape index: {}]
  %s18 = inlined_call_operand.vmem [shape: f32[2,1,32], index: 18, kind: input, shape index: {}]
  %s19 = inlined_call_operand.vmem [shape: f32[2,1,32], index: 19, kind: input, shape index: {}]
  %s20 = inlined_call_operand.vmem [shape: f32[2,32,128], index: 20, kind: input, shape index: {}]
  %s21 = inlined_call_operand.vmem [shape: f32[2,1,128], index: 21, kind: input, shape index: {}]
  %s22 = inlined_call_operand.vmem [shape: f32[2,128,32], index: 22, kind: input, shape index: {}]
  %s23 = inlined_call_operand.vmem [shape: f32[2,1,32], index: 23, kind: input, shape index: {}]
  %s24 = inlined_call_operand.vmem [shape: f32[1,32], index: 24, kind: input, shape index: {}]
  %s25 = inlined_call_operand.vmem [shape: f32[1,32], index: 25, kind: input, shape index: {}]
  %s26 = inlined_call_operand.vmem [shape: f32[16,32], index: 26, kind: input, shape index: {}]
  %s27 = inlined_call_operand.hbm [shape: f32[2,16,32], index: 27, kind: output, shape index: {}]
  %s28 = sld [smem:[#allocation0]]
  $region141: #{mae_forward.1} parent=0
    _
  %s30 = ssub.s32 1, %s28
  %s31 = scalar_select 0, %s30, %s28
  $region1: #{mae_forward.1} parent=0
    #allocation4 [shape = 'u8[16384]{0}', space=vmem, size = 0x4000, scoped, tag = 'output window, operand 0']
    #allocation5 [shape = 's32[2]{0}', space=sflag, size = 0x8, scoped, tag = 'scoped memory for mae_forward.1']
    %32 = vsyncpa [#allocation5], 0
    %s33 = scalar_lea.sflag [#allocation5], 1
    %34 = vsyncpa %s33, 0
    loop: start=0, step=1, limit=4
    $region2: #{mae_forward.1} parent=1 // loop_pre_header
      _
    $region3: #{mae_forward.1} parent=1 // loop_header
      %s36 = sphi 0, %s40
      %p37 = scmp.ge.s32.totalorder %s36, 4
      %s46 = sphi 0, %s48
      %s49 = sphi 0, %s46
      %s50 = sphi 0, %s49
      %s66 = sphi 0, %s50
      %s72 = sphi 0, %s74
      %s75 = sphi 0, %s72
      %s76 = sphi 0, %s75
      %s92 = sphi 0, %s76
      %s98 = sphi 0, %s100
      %s101 = sphi 0, %s98
      %s102 = sphi 0, %s101
      %s118 = sphi 0, %s102
      %s122 = sphi 0, %s122
      %s124 = sphi 0, %s122
      %s125 = sphi 0, %s124
      %s139 = sphi 0, %s125
      %s143 = sphi 0, %s143
      %s145 = sphi 0, %s143
      %s146 = sphi 0, %s145
      %s160 = sphi 0, %s146
      %s164 = sphi 0, %s164
      %s166 = sphi 0, %s164
      %s167 = sphi 0, %s166
      %s181 = sphi 0, %s167
      %s185 = sphi 0, %s185
      %s187 = sphi 0, %s185
      %s188 = sphi 0, %s187
      %s202 = sphi 0, %s188
      %s206 = sphi 0, %s206
      %s208 = sphi 0, %s206
      %s209 = sphi 0, %s208
      %s223 = sphi 0, %s209
      %s227 = sphi 0, %s227
      %s229 = sphi 0, %s227
      %s230 = sphi 0, %s229
      %s244 = sphi 0, %s230
      %s248 = sphi 0, %s248
      %s250 = sphi 0, %s248
      %s251 = sphi 0, %s250
      %s265 = sphi 0, %s251
      %s269 = sphi 0, %s269
      %s271 = sphi 0, %s269
      %s272 = sphi 0, %s271
      %s286 = sphi 0, %s272
      %s290 = sphi 0, %s290
      %s292 = sphi 0, %s290
      %s293 = sphi 0, %s292
      %s307 = sphi 0, %s293
      %s311 = sphi 0, %s311
      %s313 = sphi 0, %s311
      %s314 = sphi 0, %s313
      %s328 = sphi 0, %s314
      %s332 = sphi 0, %s332
      %s334 = sphi 0, %s332
      %s335 = sphi 0, %s334
      %s349 = sphi 0, %s335
      %s353 = sphi 0, %s353
      %s355 = sphi 0, %s353
      %s356 = sphi 0, %s355
      %s370 = sphi 0, %s356
      %s374 = sphi 0, %s374
      %s376 = sphi 0, %s374
      %s377 = sphi 0, %s376
      %s391 = sphi 0, %s377
      %s395 = sphi 0, %s395
      %s397 = sphi 0, %s395
      %s398 = sphi 0, %s397
      %s412 = sphi 0, %s398
      %s416 = sphi 0, %s416
      %s418 = sphi 0, %s416
      %s419 = sphi 0, %s418
      %s433 = sphi 0, %s419
      %s437 = sphi 0, %s437
      %s439 = sphi 0, %s437
      %s440 = sphi 0, %s439
      %s454 = sphi 0, %s440
      %s458 = sphi 0, %s458
      %s460 = sphi 0, %s458
      %s461 = sphi 0, %s460
      %s475 = sphi 0, %s461
      %s479 = sphi 0, %s479
      %s481 = sphi 0, %s479
      %s482 = sphi 0, %s481
      %s496 = sphi 0, %s482
      %s500 = sphi 0, %s500
      %s502 = sphi 0, %s500
      %s503 = sphi 0, %s502
      %s517 = sphi 0, %s503
      %s521 = sphi 0, %s521
      %s523 = sphi 0, %s521
      %s524 = sphi 0, %s523
      %s538 = sphi 0, %s524
      %s542 = sphi 0, %s542
      %s544 = sphi 0, %s542
      %s545 = sphi 0, %s544
      %s559 = sphi 0, %s545
      %s563 = sphi 0, %s563
      %s565 = sphi 0, %s563
      %s566 = sphi 0, %s565
      %s580 = sphi 0, %s566
      %s584 = sphi 0, %s584
      %s586 = sphi 0, %s584
      %s587 = sphi 0, %s586
      %s601 = sphi 0, %s587
      %s605 = sphi 0, %s605
      %s607 = sphi 0, %s605
      %s608 = sphi 0, %s607
      %s622 = sphi 0, %s608
      %s628 = sphi 0, %s630
      %s631 = sphi 0, %s628
      %s632 = sphi 0, %s631
      %s648 = sphi 0, %s632
    $region4: #{mae_forward.1} parent=1 // loop_header_branch
      %39 = sbr.rel (%p37) target = $region8
    $region5: #{mae_forward.1} parent=1 // loop_body
      %s41 = ssub.s32 %s36, 1
      %s42 = ssub.s32 %s36, 2
      %s43 = sadd.s32 %s36, 1
      %s44 = ssub.s32 %s36, %s43
      %p45 = scmp.eq.s32.totalorder %s44, 0
      %s47 = sadd.s32 %s46, 1
      %s48 = scalar_select %p45, %s46, %s47
      %p51 = pneg %p45
      %p52 = scmp.eq.s32.totalorder %s36, 1
      %p53 = por %p51, %p52
      %p54 = scmp.ne.s32.totalorder %s46, %s49
      %p55 = scmp.eq.s32.totalorder %s36, 0
      %p56 = por %p54, %p55
      %p57 = scmp.ne.s32.totalorder %s46, %s49
      %p58 = scmp.eq.s32.totalorder %s41, 1
      %p59 = por %p57, %p58
      %p60 = scmp.ne.s32.totalorder %s49, %s50
      %p61 = scmp.eq.s32.totalorder %s41, 0
      %p62 = por %p60, %p61
      %p63 = scmp.ne.s32.totalorder %s49, %s50
      %p64 = scmp.eq.s32.totalorder %s42, 1
      %p65 = por %p63, %p64
      %p67 = scmp.ne.s32.totalorder %s50, %s66
      %p68 = scmp.eq.s32.totalorder %s42, 0
      %p69 = por %p67, %p68
      %s70 = ssub.s32 %s36, %s43
      %p71 = scmp.eq.s32.totalorder %s70, 0
      %s73 = sadd.s32 %s72, 1
      %s74 = scalar_select %p71, %s72, %s73
      %p77 = pneg %p71
      %p78 = scmp.eq.s32.totalorder %s36, 1
      %p79 = por %p77, %p78
      %p80 = scmp.ne.s32.totalorder %s72, %s75
      %p81 = scmp.eq.s32.totalorder %s36, 0
      %p82 = por %p80, %p81
      %p83 = scmp.ne.s32.totalorder %s72, %s75
      %p84 = scmp.eq.s32.totalorder %s41, 1
      %p85 = por %p83, %p84
      %p86 = scmp.ne.s32.totalorder %s75, %s76
      %p87 = scmp.eq.s32.totalorder %s41, 0
      %p88 = por %p86, %p87
      %p89 = scmp.ne.s32.totalorder %s75, %s76
      %p90 = scmp.eq.s32.totalorder %s42, 1
      %p91 = por %p89, %p90
      %p93 = scmp.ne.s32.totalorder %s76, %s92
      %p94 = scmp.eq.s32.totalorder %s42, 0
      %p95 = por %p93, %p94
      %s96 = ssub.s32 %s36, %s43
      %p97 = scmp.eq.s32.totalorder %s96, 0
      %s99 = sadd.s32 %s98, 1
      %s100 = scalar_select %p97, %s98, %s99
      %p103 = pneg %p97
      %p104 = scmp.eq.s32.totalorder %s36, 1
      %p105 = por %p103, %p104
      %p106 = scmp.ne.s32.totalorder %s98, %s101
      %p107 = scmp.eq.s32.totalorder %s36, 0
      %p108 = por %p106, %p107
      %p109 = scmp.ne.s32.totalorder %s98, %s101
      %p110 = scmp.eq.s32.totalorder %s41, 1
      %p111 = por %p109, %p110
      %p112 = scmp.ne.s32.totalorder %s101, %s102
      %p113 = scmp.eq.s32.totalorder %s41, 0
      %p114 = por %p112, %p113
      %p115 = scmp.ne.s32.totalorder %s101, %s102
      %p116 = scmp.eq.s32.totalorder %s42, 1
      %p117 = por %p115, %p116
      %p119 = scmp.ne.s32.totalorder %s102, %s118
      %p120 = scmp.eq.s32.totalorder %s42, 0
      %p121 = por %p119, %p120
      %s123 = sadd.s32 %s122, 1
      %p126 = scmp.eq.s32.totalorder %s36, 1
      %p127 = scmp.ne.s32.totalorder %s122, %s124
      %p128 = scmp.eq.s32.totalorder %s36, 0
      %p129 = por %p127, %p128
      %p130 = scmp.ne.s32.totalorder %s122, %s124
      %p131 = scmp.eq.s32.totalorder %s41, 1
      %p132 = por %p130, %p131
      %p133 = scmp.ne.s32.totalorder %s124, %s125
      %p134 = scmp.eq.s32.totalorder %s41, 0
      %p135 = por %p133, %p134
      %p136 = scmp.ne.s32.totalorder %s124, %s125
      %p137 = scmp.eq.s32.totalorder %s42, 1
      %p138 = por %p136, %p137
      %p140 = scmp.ne.s32.totalorder %s125, %s139
      %p141 = scmp.eq.s32.totalorder %s42, 0
      %p142 = por %p140, %p141
      %s144 = sadd.s32 %s143, 1
      %p147 = scmp.eq.s32.totalorder %s36, 1
      %p148 = scmp.ne.s32.totalorder %s143, %s145
      %p149 = scmp.eq.s32.totalorder %s36, 0
      %p150 = por %p148, %p149
      %p151 = scmp.ne.s32.totalorder %s143, %s145
      %p152 = scmp.eq.s32.totalorder %s41, 1
      %p153 = por %p151, %p152
      %p154 = scmp.ne.s32.totalorder %s145, %s146
      %p155 = scmp.eq.s32.totalorder %s41, 0
      %p156 = por %p154, %p155
      %p157 = scmp.ne.s32.totalorder %s145, %s146
      %p158 = scmp.eq.s32.totalorder %s42, 1
      %p159 = por %p157, %p158
      %p161 = scmp.ne.s32.totalorder %s146, %s160
      %p162 = scmp.eq.s32.totalorder %s42, 0
      %p163 = por %p161, %p162
      %s165 = sadd.s32 %s164, 1
      %p168 = scmp.eq.s32.totalorder %s36, 1
      %p169 = scmp.ne.s32.totalorder %s164, %s166
      %p170 = scmp.eq.s32.totalorder %s36, 0
      %p171 = por %p169, %p170
      %p172 = scmp.ne.s32.totalorder %s164, %s166
      %p173 = scmp.eq.s32.totalorder %s41, 1
      %p174 = por %p172, %p173
      %p175 = scmp.ne.s32.totalorder %s166, %s167
      %p176 = scmp.eq.s32.totalorder %s41, 0
      %p177 = por %p175, %p176
      %p178 = scmp.ne.s32.totalorder %s166, %s167
      %p179 = scmp.eq.s32.totalorder %s42, 1
      %p180 = por %p178, %p179
      %p182 = scmp.ne.s32.totalorder %s167, %s181
      %p183 = scmp.eq.s32.totalorder %s42, 0
      %p184 = por %p182, %p183
      %s186 = sadd.s32 %s185, 1
      %p189 = scmp.eq.s32.totalorder %s36, 1
      %p190 = scmp.ne.s32.totalorder %s185, %s187
      %p191 = scmp.eq.s32.totalorder %s36, 0
      %p192 = por %p190, %p191
      %p193 = scmp.ne.s32.totalorder %s185, %s187
      %p194 = scmp.eq.s32.totalorder %s41, 1
      %p195 = por %p193, %p194
      %p196 = scmp.ne.s32.totalorder %s187, %s188
      %p197 = scmp.eq.s32.totalorder %s41, 0
      %p198 = por %p196, %p197
      %p199 = scmp.ne.s32.totalorder %s187, %s188
      %p200 = scmp.eq.s32.totalorder %s42, 1
      %p201 = por %p199, %p200
      %p203 = scmp.ne.s32.totalorder %s188, %s202
      %p204 = scmp.eq.s32.totalorder %s42, 0
      %p205 = por %p203, %p204
      %s207 = sadd.s32 %s206, 1
      %p210 = scmp.eq.s32.totalorder %s36, 1
      %p211 = scmp.ne.s32.totalorder %s206, %s208
      %p212 = scmp.eq.s32.totalorder %s36, 0
      %p213 = por %p211, %p212
      %p214 = scmp.ne.s32.totalorder %s206, %s208
      %p215 = scmp.eq.s32.totalorder %s41, 1
      %p216 = por %p214, %p215
      %p217 = scmp.ne.s32.totalorder %s208, %s209
      %p218 = scmp.eq.s32.totalorder %s41, 0
      %p219 = por %p217, %p218
      %p220 = scmp.ne.s32.totalorder %s208, %s209
      %p221 = scmp.eq.s32.totalorder %s42, 1
      %p222 = por %p220, %p221
      %p224 = scmp.ne.s32.totalorder %s209, %s223
      %p225 = scmp.eq.s32.totalorder %s42, 0
      %p226 = por %p224, %p225
      %s228 = sadd.s32 %s227, 1
      %p231 = scmp.eq.s32.totalorder %s36, 1
      %p232 = scmp.ne.s32.totalorder %s227, %s229
      %p233 = scmp.eq.s32.totalorder %s36, 0
      %p234 = por %p232, %p233
      %p235 = scmp.ne.s32.totalorder %s227, %s229
      %p236 = scmp.eq.s32.totalorder %s41, 1
      %p237 = por %p235, %p236
      %p238 = scmp.ne.s32.totalorder %s229, %s230
      %p239 = scmp.eq.s32.totalorder %s41, 0
      %p240 = por %p238, %p239
      %p241 = scmp.ne.s32.totalorder %s229, %s230
      %p242 = scmp.eq.s32.totalorder %s42, 1
      %p243 = por %p241, %p242
      %p245 = scmp.ne.s32.totalorder %s230, %s244
      %p246 = scmp.eq.s32.totalorder %s42, 0
      %p247 = por %p245, %p246
      %s249 = sadd.s32 %s248, 1
      %p252 = scmp.eq.s32.totalorder %s36, 1
      %p253 = scmp.ne.s32.totalorder %s248, %s250
      %p254 = scmp.eq.s32.totalorder %s36, 0
      %p255 = por %p253, %p254
      %p256 = scmp.ne.s32.totalorder %s248, %s250
      %p257 = scmp.eq.s32.totalorder %s41, 1
      %p258 = por %p256, %p257
      %p259 = scmp.ne.s32.totalorder %s250, %s251
      %p260 = scmp.eq.s32.totalorder %s41, 0
      %p261 = por %p259, %p260
      %p262 = scmp.ne.s32.totalorder %s250, %s251
      %p263 = scmp.eq.s32.totalorder %s42, 1
      %p264 = por %p262, %p263
      %p266 = scmp.ne.s32.totalorder %s251, %s265
      %p267 = scmp.eq.s32.totalorder %s42, 0
      %p268 = por %p266, %p267
      %s270 = sadd.s32 %s269, 1
      %p273 = scmp.eq.s32.totalorder %s36, 1
      %p274 = scmp.ne.s32.totalorder %s269, %s271
      %p275 = scmp.eq.s32.totalorder %s36, 0
      %p276 = por %p274, %p275
      %p277 = scmp.ne.s32.totalorder %s269, %s271
      %p278 = scmp.eq.s32.totalorder %s41, 1
      %p279 = por %p277, %p278
      %p280 = scmp.ne.s32.totalorder %s271, %s272
      %p281 = scmp.eq.s32.totalorder %s41, 0
      %p282 = por %p280, %p281
      %p283 = scmp.ne.s32.totalorder %s271, %s272
      %p284 = scmp.eq.s32.totalorder %s42, 1
      %p285 = por %p283, %p284
      %p287 = scmp.ne.s32.totalorder %s272, %s286
      %p288 = scmp.eq.s32.totalorder %s42, 0
      %p289 = por %p287, %p288
      %s291 = sadd.s32 %s290, 1
      %p294 = scmp.eq.s32.totalorder %s36, 1
      %p295 = scmp.ne.s32.totalorder %s290, %s292
      %p296 = scmp.eq.s32.totalorder %s36, 0
      %p297 = por %p295, %p296
      %p298 = scmp.ne.s32.totalorder %s290, %s292
      %p299 = scmp.eq.s32.totalorder %s41, 1
      %p300 = por %p298, %p299
      %p301 = scmp.ne.s32.totalorder %s292, %s293
      %p302 = scmp.eq.s32.totalorder %s41, 0
      %p303 = por %p301, %p302
      %p304 = scmp.ne.s32.totalorder %s292, %s293
      %p305 = scmp.eq.s32.totalorder %s42, 1
      %p306 = por %p304, %p305
      %p308 = scmp.ne.s32.totalorder %s293, %s307
      %p309 = scmp.eq.s32.totalorder %s42, 0
      %p310 = por %p308, %p309
      %s312 = sadd.s32 %s311, 1
      %p315 = scmp.eq.s32.totalorder %s36, 1
      %p316 = scmp.ne.s32.totalorder %s311, %s313
      %p317 = scmp.eq.s32.totalorder %s36, 0
      %p318 = por %p316, %p317
      %p319 = scmp.ne.s32.totalorder %s311, %s313
      %p320 = scmp.eq.s32.totalorder %s41, 1
      %p321 = por %p319, %p320
      %p322 = scmp.ne.s32.totalorder %s313, %s314
      %p323 = scmp.eq.s32.totalorder %s41, 0
      %p324 = por %p322, %p323
      %p325 = scmp.ne.s32.totalorder %s313, %s314
      %p326 = scmp.eq.s32.totalorder %s42, 1
      %p327 = por %p325, %p326
      %p329 = scmp.ne.s32.totalorder %s314, %s328
      %p330 = scmp.eq.s32.totalorder %s42, 0
      %p331 = por %p329, %p330
      %s333 = sadd.s32 %s332, 1
      %p336 = scmp.eq.s32.totalorder %s36, 1
      %p337 = scmp.ne.s32.totalorder %s332, %s334
      %p338 = scmp.eq.s32.totalorder %s36, 0
      %p339 = por %p337, %p338
      %p340 = scmp.ne.s32.totalorder %s332, %s334
      %p341 = scmp.eq.s32.totalorder %s41, 1
      %p342 = por %p340, %p341
      %p343 = scmp.ne.s32.totalorder %s334, %s335
      %p344 = scmp.eq.s32.totalorder %s41, 0
      %p345 = por %p343, %p344
      %p346 = scmp.ne.s32.totalorder %s334, %s335
      %p347 = scmp.eq.s32.totalorder %s42, 1
      %p348 = por %p346, %p347
      %p350 = scmp.ne.s32.totalorder %s335, %s349
      %p351 = scmp.eq.s32.totalorder %s42, 0
      %p352 = por %p350, %p351
      %s354 = sadd.s32 %s353, 1
      %p357 = scmp.eq.s32.totalorder %s36, 1
      %p358 = scmp.ne.s32.totalorder %s353, %s355
      %p359 = scmp.eq.s32.totalorder %s36, 0
      %p360 = por %p358, %p359
      %p361 = scmp.ne.s32.totalorder %s353, %s355
      %p362 = scmp.eq.s32.totalorder %s41, 1
      %p363 = por %p361, %p362
      %p364 = scmp.ne.s32.totalorder %s355, %s356
      %p365 = scmp.eq.s32.totalorder %s41, 0
      %p366 = por %p364, %p365
      %p367 = scmp.ne.s32.totalorder %s355, %s356
      %p368 = scmp.eq.s32.totalorder %s42, 1
      %p369 = por %p367, %p368
      %p371 = scmp.ne.s32.totalorder %s356, %s370
      %p372 = scmp.eq.s32.totalorder %s42, 0
      %p373 = por %p371, %p372
      %s375 = sadd.s32 %s374, 1
      %p378 = scmp.eq.s32.totalorder %s36, 1
      %p379 = scmp.ne.s32.totalorder %s374, %s376
      %p380 = scmp.eq.s32.totalorder %s36, 0
      %p381 = por %p379, %p380
      %p382 = scmp.ne.s32.totalorder %s374, %s376
      %p383 = scmp.eq.s32.totalorder %s41, 1
      %p384 = por %p382, %p383
      %p385 = scmp.ne.s32.totalorder %s376, %s377
      %p386 = scmp.eq.s32.totalorder %s41, 0
      %p387 = por %p385, %p386
      %p388 = scmp.ne.s32.totalorder %s376, %s377
      %p389 = scmp.eq.s32.totalorder %s42, 1
      %p390 = por %p388, %p389
      %p392 = scmp.ne.s32.totalorder %s377, %s391
      %p393 = scmp.eq.s32.totalorder %s42, 0
      %p394 = por %p392, %p393
      %s396 = sadd.s32 %s395, 1
      %p399 = scmp.eq.s32.totalorder %s36, 1
      %p400 = scmp.ne.s32.totalorder %s395, %s397
      %p401 = scmp.eq.s32.totalorder %s36, 0
      %p402 = por %p400, %p401
      %p403 = scmp.ne.s32.totalorder %s395, %s397
      %p404 = scmp.eq.s32.totalorder %s41, 1
      %p405 = por %p403, %p404
      %p406 = scmp.ne.s32.totalorder %s397, %s398
      %p407 = scmp.eq.s32.totalorder %s41, 0
      %p408 = por %p406, %p407
      %p409 = scmp.ne.s32.totalorder %s397, %s398
      %p410 = scmp.eq.s32.totalorder %s42, 1
      %p411 = por %p409, %p410
      %p413 = scmp.ne.s32.totalorder %s398, %s412
      %p414 = scmp.eq.s32.totalorder %s42, 0
      %p415 = por %p413, %p414
      %s417 = sadd.s32 %s416, 1
      %p420 = scmp.eq.s32.totalorder %s36, 1
      %p421 = scmp.ne.s32.totalorder %s416, %s418
      %p422 = scmp.eq.s32.totalorder %s36, 0
      %p423 = por %p421, %p422
      %p424 = scmp.ne.s32.totalorder %s416, %s418
      %p425 = scmp.eq.s32.totalorder %s41, 1
      %p426 = por %p424, %p425
      %p427 = scmp.ne.s32.totalorder %s418, %s419
      %p428 = scmp.eq.s32.totalorder %s41, 0
      %p429 = por %p427, %p428
      %p430 = scmp.ne.s32.totalorder %s418, %s419
      %p431 = scmp.eq.s32.totalorder %s42, 1
      %p432 = por %p430, %p431
      %p434 = scmp.ne.s32.totalorder %s419, %s433
      %p435 = scmp.eq.s32.totalorder %s42, 0
      %p436 = por %p434, %p435
      %s438 = sadd.s32 %s437, 1
      %p441 = scmp.eq.s32.totalorder %s36, 1
      %p442 = scmp.ne.s32.totalorder %s437, %s439
      %p443 = scmp.eq.s32.totalorder %s36, 0
      %p444 = por %p442, %p443
      %p445 = scmp.ne.s32.totalorder %s437, %s439
      %p446 = scmp.eq.s32.totalorder %s41, 1
      %p447 = por %p445, %p446
      %p448 = scmp.ne.s32.totalorder %s439, %s440
      %p449 = scmp.eq.s32.totalorder %s41, 0
      %p450 = por %p448, %p449
      %p451 = scmp.ne.s32.totalorder %s439, %s440
      %p452 = scmp.eq.s32.totalorder %s42, 1
      %p453 = por %p451, %p452
      %p455 = scmp.ne.s32.totalorder %s440, %s454
      %p456 = scmp.eq.s32.totalorder %s42, 0
      %p457 = por %p455, %p456
      %s459 = sadd.s32 %s458, 1
      %p462 = scmp.eq.s32.totalorder %s36, 1
      %p463 = scmp.ne.s32.totalorder %s458, %s460
      %p464 = scmp.eq.s32.totalorder %s36, 0
      %p465 = por %p463, %p464
      %p466 = scmp.ne.s32.totalorder %s458, %s460
      %p467 = scmp.eq.s32.totalorder %s41, 1
      %p468 = por %p466, %p467
      %p469 = scmp.ne.s32.totalorder %s460, %s461
      %p470 = scmp.eq.s32.totalorder %s41, 0
      %p471 = por %p469, %p470
      %p472 = scmp.ne.s32.totalorder %s460, %s461
      %p473 = scmp.eq.s32.totalorder %s42, 1
      %p474 = por %p472, %p473
      %p476 = scmp.ne.s32.totalorder %s461, %s475
      %p477 = scmp.eq.s32.totalorder %s42, 0
      %p478 = por %p476, %p477
      %s480 = sadd.s32 %s479, 1
      %p483 = scmp.eq.s32.totalorder %s36, 1
      %p484 = scmp.ne.s32.totalorder %s479, %s481
      %p485 = scmp.eq.s32.totalorder %s36, 0
      %p486 = por %p484, %p485
      %p487 = scmp.ne.s32.totalorder %s479, %s481
      %p488 = scmp.eq.s32.totalorder %s41, 1
      %p489 = por %p487, %p488
      %p490 = scmp.ne.s32.totalorder %s481, %s482
      %p491 = scmp.eq.s32.totalorder %s41, 0
      %p492 = por %p490, %p491
      %p493 = scmp.ne.s32.totalorder %s481, %s482
      %p494 = scmp.eq.s32.totalorder %s42, 1
      %p495 = por %p493, %p494
      %p497 = scmp.ne.s32.totalorder %s482, %s496
      %p498 = scmp.eq.s32.totalorder %s42, 0
      %p499 = por %p497, %p498
      %s501 = sadd.s32 %s500, 1
      %p504 = scmp.eq.s32.totalorder %s36, 1
      %p505 = scmp.ne.s32.totalorder %s500, %s502
      %p506 = scmp.eq.s32.totalorder %s36, 0
      %p507 = por %p505, %p506
      %p508 = scmp.ne.s32.totalorder %s500, %s502
      %p509 = scmp.eq.s32.totalorder %s41, 1
      %p510 = por %p508, %p509
      %p511 = scmp.ne.s32.totalorder %s502, %s503
      %p512 = scmp.eq.s32.totalorder %s41, 0
      %p513 = por %p511, %p512
      %p514 = scmp.ne.s32.totalorder %s502, %s503
      %p515 = scmp.eq.s32.totalorder %s42, 1
      %p516 = por %p514, %p515
      %p518 = scmp.ne.s32.totalorder %s503, %s517
      %p519 = scmp.eq.s32.totalorder %s42, 0
      %p520 = por %p518, %p519
      %s522 = sadd.s32 %s521, 1
      %p525 = scmp.eq.s32.totalorder %s36, 1
      %p526 = scmp.ne.s32.totalorder %s521, %s523
      %p527 = scmp.eq.s32.totalorder %s36, 0
      %p528 = por %p526, %p527
      %p529 = scmp.ne.s32.totalorder %s521, %s523
      %p530 = scmp.eq.s32.totalorder %s41, 1
      %p531 = por %p529, %p530
      %p532 = scmp.ne.s32.totalorder %s523, %s524
      %p533 = scmp.eq.s32.totalorder %s41, 0
      %p534 = por %p532, %p533
      %p535 = scmp.ne.s32.totalorder %s523, %s524
      %p536 = scmp.eq.s32.totalorder %s42, 1
      %p537 = por %p535, %p536
      %p539 = scmp.ne.s32.totalorder %s524, %s538
      %p540 = scmp.eq.s32.totalorder %s42, 0
      %p541 = por %p539, %p540
      %s543 = sadd.s32 %s542, 1
      %p546 = scmp.eq.s32.totalorder %s36, 1
      %p547 = scmp.ne.s32.totalorder %s542, %s544
      %p548 = scmp.eq.s32.totalorder %s36, 0
      %p549 = por %p547, %p548
      %p550 = scmp.ne.s32.totalorder %s542, %s544
      %p551 = scmp.eq.s32.totalorder %s41, 1
      %p552 = por %p550, %p551
      %p553 = scmp.ne.s32.totalorder %s544, %s545
      %p554 = scmp.eq.s32.totalorder %s41, 0
      %p555 = por %p553, %p554
      %p556 = scmp.ne.s32.totalorder %s544, %s545
      %p557 = scmp.eq.s32.totalorder %s42, 1
      %p558 = por %p556, %p557
      %p560 = scmp.ne.s32.totalorder %s545, %s559
      %p561 = scmp.eq.s32.totalorder %s42, 0
      %p562 = por %p560, %p561
      %s564 = sadd.s32 %s563, 1
      %p567 = scmp.eq.s32.totalorder %s36, 1
      %p568 = scmp.ne.s32.totalorder %s563, %s565
      %p569 = scmp.eq.s32.totalorder %s36, 0
      %p570 = por %p568, %p569
      %p571 = scmp.ne.s32.totalorder %s563, %s565
      %p572 = scmp.eq.s32.totalorder %s41, 1
      %p573 = por %p571, %p572
      %p574 = scmp.ne.s32.totalorder %s565, %s566
      %p575 = scmp.eq.s32.totalorder %s41, 0
      %p576 = por %p574, %p575
      %p577 = scmp.ne.s32.totalorder %s565, %s566
      %p578 = scmp.eq.s32.totalorder %s42, 1
      %p579 = por %p577, %p578
      %p581 = scmp.ne.s32.totalorder %s566, %s580
      %p582 = scmp.eq.s32.totalorder %s42, 0
      %p583 = por %p581, %p582
      %s585 = sadd.s32 %s584, 1
      %p588 = scmp.eq.s32.totalorder %s36, 1
      %p589 = scmp.ne.s32.totalorder %s584, %s586
      %p590 = scmp.eq.s32.totalorder %s36, 0
      %p591 = por %p589, %p590
      %p592 = scmp.ne.s32.totalorder %s584, %s586
      %p593 = scmp.eq.s32.totalorder %s41, 1
      %p594 = por %p592, %p593
      %p595 = scmp.ne.s32.totalorder %s586, %s587
      %p596 = scmp.eq.s32.totalorder %s41, 0
      %p597 = por %p595, %p596
      %p598 = scmp.ne.s32.totalorder %s586, %s587
      %p599 = scmp.eq.s32.totalorder %s42, 1
      %p600 = por %p598, %p599
      %p602 = scmp.ne.s32.totalorder %s587, %s601
      %p603 = scmp.eq.s32.totalorder %s42, 0
      %p604 = por %p602, %p603
      %s606 = sadd.s32 %s605, 1
      %p609 = scmp.eq.s32.totalorder %s36, 1
      %p610 = scmp.ne.s32.totalorder %s605, %s607
      %p611 = scmp.eq.s32.totalorder %s36, 0
      %p612 = por %p610, %p611
      %p613 = scmp.ne.s32.totalorder %s605, %s607
      %p614 = scmp.eq.s32.totalorder %s41, 1
      %p615 = por %p613, %p614
      %p616 = scmp.ne.s32.totalorder %s607, %s608
      %p617 = scmp.eq.s32.totalorder %s41, 0
      %p618 = por %p616, %p617
      %p619 = scmp.ne.s32.totalorder %s607, %s608
      %p620 = scmp.eq.s32.totalorder %s42, 1
      %p621 = por %p619, %p620
      %p623 = scmp.ne.s32.totalorder %s608, %s622
      %p624 = scmp.eq.s32.totalorder %s42, 0
      %p625 = por %p623, %p624
      %s626 = ssub.s32 %s36, %s43
      %p627 = scmp.eq.s32.totalorder %s626, 0
      %s629 = sadd.s32 %s628, 1
      %s630 = scalar_select %p627, %s628, %s629
      %p633 = pneg %p627
      %p634 = scmp.eq.s32.totalorder %s36, 1
      %p635 = por %p633, %p634
      %p636 = scmp.ne.s32.totalorder %s628, %s631
      %p637 = scmp.eq.s32.totalorder %s36, 0
      %p638 = por %p636, %p637
      %p639 = scmp.ne.s32.totalorder %s628, %s631
      %p640 = scmp.eq.s32.totalorder %s41, 1
      %p641 = por %p639, %p640
      %p642 = scmp.ne.s32.totalorder %s631, %s632
      %p643 = scmp.eq.s32.totalorder %s41, 0
      %p644 = por %p642, %p643
      %p645 = scmp.ne.s32.totalorder %s631, %s632
      %p646 = scmp.eq.s32.totalorder %s42, 1
      %p647 = por %p645, %p646
      %p649 = scmp.ne.s32.totalorder %s632, %s648
      %p650 = scmp.eq.s32.totalorder %s42, 0
      %p651 = por %p649, %p650
      %p652 = scmp.le.s32.totalorder 1, %s36
      %p653 = scmp.lt.s32.totalorder %s36, 3
      %p654 = pnand %p652, %p653
      %p655 = pneg %p654
      // Predicated region
      $region9: #{mae_forward.1} parent=5 // pred_check
        _
      $region10: #{mae_forward.1} parent=5 // pred_check_branch
        %657 = sbr.rel (%p654) target = $region12
      $region11: #{mae_forward.1} parent=5 // pred_region
        %s658 = ssub.s32 %s36, 1
        // Predicated region
        $region13: #{mae_forward.1} parent=11 // pred_check
          %p659 = pneg %p135
        $region14: #{mae_forward.1} parent=11 // pred_check_branch
          %661 = sbr.rel (%p659) target = $region16
        $region15: #{mae_forward.1} parent=11 // pred_region
          _
        $region16: #{mae_forward.1} parent=11 // pred_fallthru
          _
        // Predicated region
        $region17: #{mae_forward.1} parent=11 // pred_check
          %p662 = pneg %p156
        $region18: #{mae_forward.1} parent=11 // pred_check_branch
          %664 = sbr.rel (%p662) target = $region20
        $region19: #{mae_forward.1} parent=11 // pred_region
          _
        $region20: #{mae_forward.1} parent=11 // pred_fallthru
          _
        // Predicated region
        $region21: #{mae_forward.1} parent=11 // pred_check
          %p665 = pneg %p177
        $region22: #{mae_forward.1} parent=11 // pred_check_branch
          %667 = sbr.rel (%p665) target = $region24
        $region23: #{mae_forward.1} parent=11 // pred_region
          _
        $region24: #{mae_forward.1} parent=11 // pred_fallthru
          _
        // Predicated region
        $region25: #{mae_forward.1} parent=11 // pred_check
          %p668 = pneg %p198
        $region26: #{mae_forward.1} parent=11 // pred_check_branch
          %670 = sbr.rel (%p668) target = $region28
        $region27: #{mae_forward.1} parent=11 // pred_region
          _
        $region28: #{mae_forward.1} parent=11 // pred_fallthru
          _
        // Predicated region
        $region29: #{mae_forward.1} parent=11 // pred_check
          %p671 = pneg %p219
        $region30: #{mae_forward.1} parent=11 // pred_check_branch
          %673 = sbr.rel (%p671) target = $region32
        $region31: #{mae_forward.1} parent=11 // pred_region
          _
        $region32: #{mae_forward.1} parent=11 // pred_fallthru
          _
        // Predicated region
        $region33: #{mae_forward.1} parent=11 // pred_check
          %p674 = pneg %p240
        $region34: #{mae_forward.1} parent=11 // pred_check_branch
          %676 = sbr.rel (%p674) target = $region36
        $region35: #{mae_forward.1} parent=11 // pred_region
          _
        $region36: #{mae_forward.1} parent=11 // pred_fallthru
          _
        // Predicated region
        $region37: #{mae_forward.1} parent=11 // pred_check
          %p677 = pneg %p261
        $region38: #{mae_forward.1} parent=11 // pred_check_branch
          %679 = sbr.rel (%p677) target = $region40
        $region39: #{mae_forward.1} parent=11 // pred_region
          _
        $region40: #{mae_forward.1} parent=11 // pred_fallthru
          _
        // Predicated region
        $region41: #{mae_forward.1} parent=11 // pred_check
          %p680 = pneg %p282
        $region42: #{mae_forward.1} parent=11 // pred_check_branch
          %682 = sbr.rel (%p680) target = $region44
        $region43: #{mae_forward.1} parent=11 // pred_region
          _
        $region44: #{mae_forward.1} parent=11 // pred_fallthru
          _
        // Predicated region
        $region45: #{mae_forward.1} parent=11 // pred_check
          %p683 = pneg %p303
        $region46: #{mae_forward.1} parent=11 // pred_check_branch
          %685 = sbr.rel (%p683) target = $region48
        $region47: #{mae_forward.1} parent=11 // pred_region
          _
        $region48: #{mae_forward.1} parent=11 // pred_fallthru
          _
        // Predicated region
        $region49: #{mae_forward.1} parent=11 // pred_check
          %p686 = pneg %p324
        $region50: #{mae_forward.1} parent=11 // pred_check_branch
          %688 = sbr.rel (%p686) target = $region52
        $region51: #{mae_forward.1} parent=11 // pred_region
          _
        $region52: #{mae_forward.1} parent=11 // pred_fallthru
          _
        // Predicated region
        $region53: #{mae_forward.1} parent=11 // pred_check
          %p689 = pneg %p345
        $region54: #{mae_forward.1} parent=11 // pred_check_branch
          %691 = sbr.rel (%p689) target = $region56
        $region55: #{mae_forward.1} parent=11 // pred_region
          _
        $region56: #{mae_forward.1} parent=11 // pred_fallthru
          _
        // Predicated region
        $region57: #{mae_forward.1} parent=11 // pred_check
          %p692 = pneg %p366
        $region58: #{mae_forward.1} parent=11 // pred_check_branch
          %694 = sbr.rel (%p692) target = $region60
        $region59: #{mae_forward.1} parent=11 // pred_region
          _
        $region60: #{mae_forward.1} parent=11 // pred_fallthru
          _
        // Predicated region
        $region61: #{mae_forward.1} parent=11 // pred_check
          %p695 = pneg %p387
        $region62: #{mae_forward.1} parent=11 // pred_check_branch
          %697 = sbr.rel (%p695) target = $region64
        $region63: #{mae_forward.1} parent=11 // pred_region
          _
        $region64: #{mae_forward.1} parent=11 // pred_fallthru
          _
        // Predicated region
        $region65: #{mae_forward.1} parent=11 // pred_check
          %p698 = pneg %p408
        $region66: #{mae_forward.1} parent=11 // pred_check_branch
          %700 = sbr.rel (%p698) target = $region68
        $region67: #{mae_forward.1} parent=11 // pred_region
          _
        $region68: #{mae_forward.1} parent=11 // pred_fallthru
          _
        // Predicated region
        $region69: #{mae_forward.1} parent=11 // pred_check
          %p701 = pneg %p429
        $region70: #{mae_forward.1} parent=11 // pred_check_branch
          %703 = sbr.rel (%p701) target = $region72
        $region71: #{mae_forward.1} parent=11 // pred_region
          _
        $region72: #{mae_forward.1} parent=11 // pred_fallthru
          _
        // Predicated region
        $region73: #{mae_forward.1} parent=11 // pred_check
          %p704 = pneg %p450
        $region74: #{mae_forward.1} parent=11 // pred_check_branch
          %706 = sbr.rel (%p704) target = $region76
        $region75: #{mae_forward.1} parent=11 // pred_region
          _
        $region76: #{mae_forward.1} parent=11 // pred_fallthru
          _
        // Predicated region
        $region77: #{mae_forward.1} parent=11 // pred_check
          %p707 = pneg %p471
        $region78: #{mae_forward.1} parent=11 // pred_check_branch
          %709 = sbr.rel (%p707) target = $region80
        $region79: #{mae_forward.1} parent=11 // pred_region
          _
        $region80: #{mae_forward.1} parent=11 // pred_fallthru
          _
        // Predicated region
        $region81: #{mae_forward.1} parent=11 // pred_check
          %p710 = pneg %p492
        $region82: #{mae_forward.1} parent=11 // pred_check_branch
          %712 = sbr.rel (%p710) target = $region84
        $region83: #{mae_forward.1} parent=11 // pred_region
          _
        $region84: #{mae_forward.1} parent=11 // pred_fallthru
          _
        // Predicated region
        $region85: #{mae_forward.1} parent=11 // pred_check
          %p713 = pneg %p513
        $region86: #{mae_forward.1} parent=11 // pred_check_branch
          %715 = sbr.rel (%p713) target = $region88
        $region87: #{mae_forward.1} parent=11 // pred_region
          _
        $region88: #{mae_forward.1} parent=11 // pred_fallthru
          _
        // Predicated region
        $region89: #{mae_forward.1} parent=11 // pred_check
          %p716 = pneg %p534
        $region90: #{mae_forward.1} parent=11 // pred_check_branch
          %718 = sbr.rel (%p716) target = $region92
        $region91: #{mae_forward.1} parent=11 // pred_region
          _
        $region92: #{mae_forward.1} parent=11 // pred_fallthru
          _
        // Predicated region
        $region93: #{mae_forward.1} parent=11 // pred_check
          %p719 = pneg %p555
        $region94: #{mae_forward.1} parent=11 // pred_check_branch
          %721 = sbr.rel (%p719) target = $region96
        $region95: #{mae_forward.1} parent=11 // pred_region
          _
        $region96: #{mae_forward.1} parent=11 // pred_fallthru
          _
        // Predicated region
        $region97: #{mae_forward.1} parent=11 // pred_check
          %p722 = pneg %p576
        $region98: #{mae_forward.1} parent=11 // pred_check_branch
          %724 = sbr.rel (%p722) target = $region100
        $region99: #{mae_forward.1} parent=11 // pred_region
          _
        $region100: #{mae_forward.1} parent=11 // pred_fallthru
          _
        // Predicated region
        $region101: #{mae_forward.1} parent=11 // pred_check
          %p725 = pneg %p597
        $region102: #{mae_forward.1} parent=11 // pred_check_branch
          %727 = sbr.rel (%p725) target = $region104
        $region103: #{mae_forward.1} parent=11 // pred_region
          _
        $region104: #{mae_forward.1} parent=11 // pred_fallthru
          _
        // Predicated region
        $region105: #{mae_forward.1} parent=11 // pred_check
          %p728 = pneg %p618
        $region106: #{mae_forward.1} parent=11 // pred_check_branch
          %730 = sbr.rel (%p728) target = $region108
        $region107: #{mae_forward.1} parent=11 // pred_region
          _
        $region108: #{mae_forward.1} parent=11 // pred_fallthru
          _
      $region12: #{mae_forward.1} parent=5 // pred_fallthru
        _
      %p731 = scmp.lt.s32.totalorder %s36, 2
      // Predicated region
      $region109: #{mae_forward.1} parent=5 // pred_check
        %p732 = pneg %p731
      $region110: #{mae_forward.1} parent=5 // pred_check_branch
        %734 = sbr.rel (%p732) target = $region112
      $region111: #{mae_forward.1} parent=5 // pred_region
        // Predicated region
        $region113: #{mae_forward.1} parent=111 // pred_check
          %p735 = pneg %p56
        $region114: #{mae_forward.1} parent=111 // pred_check_branch
          %737 = sbr.rel (%p735) target = $region116
        $region115: #{mae_forward.1} parent=111 // pred_region
          %p738 = scmp.lt.s32.totalorder %s36, 1
          %s739 = scalar_select %p738, %s36, 1
          %s740 = smul.addr %s739, 4
          %s741 = scalar_lea.vmem %s0, %s740
        $region116: #{mae_forward.1} parent=111 // pred_fallthru
          _
        // Predicated region
        $region117: #{mae_forward.1} parent=111 // pred_check
          %p742 = pneg %p82
        $region118: #{mae_forward.1} parent=111 // pred_check_branch
          %744 = sbr.rel (%p742) target = $region120
        $region119: #{mae_forward.1} parent=111 // pred_region
          %p745 = scmp.lt.s32.totalorder %s36, 1
          %s746 = scalar_select %p745, %s36, 1
          %s747 = smul.addr %s746, 4
          %s748 = scalar_lea.vmem %s1, %s747
        $region120: #{mae_forward.1} parent=111 // pred_fallthru
          _
        // Predicated region
        $region121: #{mae_forward.1} parent=111 // pred_check
          %p749 = pneg %p108
        $region122: #{mae_forward.1} parent=111 // pred_check_branch
          %751 = sbr.rel (%p749) target = $region124
        $region123: #{mae_forward.1} parent=111 // pred_region
          %p752 = scmp.lt.s32.totalorder %s36, 1
          %s753 = scalar_select %p752, %s36, 1
          %s754 = smul.addr %s753, 2
          %s755 = smul.addr %s754, 8
          %s756 = scalar_lea.vmem %s2, %s755
        $region124: #{mae_forward.1} parent=111 // pred_fallthru
          _
      $region112: #{mae_forward.1} parent=5 // pred_fallthru
        _
      %p757 = scmp.le.s32.totalorder 1, %s36
      %p758 = scmp.lt.s32.totalorder %s36, 3
      %p759 = pnand %p757, %p758
      %p760 = pneg %p759
      // Predicated region
      $region125: #{mae_forward.1} parent=5 // pred_check
        _
      $region126: #{mae_forward.1} parent=5 // pred_check_branch
        %762 = sbr.rel (%p759) target = $region128
      $region127: #{mae_forward.1} parent=5 // pred_region
        %s763 = ssub.s32 %s36, 1
        %p764 = scmp.lt.s32.totalorder %s41, 1
        %s765 = scalar_select %p764, %s41, 1
        %s766 = smul.addr %s765, 4
        %s767 = scalar_lea.vmem %s0, %s766
        %p768 = pneg %p62
        %p769 = pneg %p59
        %p770 = scmp.lt.s32.totalorder %s41, 1
        %s771 = scalar_select %p770, %s41, 1
        %s772 = smul.addr %s771, 4
        %s773 = scalar_lea.vmem %s1, %s772
        %p774 = pneg %p88
        %p775 = pneg %p85
        %p776 = scmp.lt.s32.totalorder %s41, 1
        %s777 = scalar_select %p776, %s41, 1
        %s778 = smul.addr %s777, 2
        %s779 = smul.addr %s778, 8
        %s780 = scalar_lea.vmem %s2, %s779
        %p781 = pneg %p114
        %p782 = pneg %p111
        %p783 = pneg %p135
        %p784 = pneg %p132
        %p785 = pneg %p156
        %p786 = pneg %p153
        %p787 = pneg %p177
        %p788 = pneg %p174
        %p789 = pneg %p198
        %p790 = pneg %p195
        %p791 = pneg %p219
        %p792 = pneg %p216
        %p793 = pneg %p240
        %p794 = pneg %p237
        %p795 = pneg %p261
        %p796 = pneg %p258
        %p797 = pneg %p282
        %p798 = pneg %p279
        %p799 = pneg %p303
        %p800 = pneg %p300
        %p801 = pneg %p324
        %p802 = pneg %p321
        %p803 = pneg %p345
        %p804 = pneg %p342
        %p805 = pneg %p366
        %p806 = pneg %p363
        %p807 = pneg %p387
        %p808 = pneg %p384
        %p809 = pneg %p408
        %p810 = pneg %p405
        %p811 = pneg %p429
        %p812 = pneg %p426
        %p813 = pneg %p450
        %p814 = pneg %p447
        %p815 = pneg %p471
        %p816 = pneg %p468
        %p817 = pneg %p492
        %p818 = pneg %p489
        %p819 = pneg %p513
        %p820 = pneg %p510
        %p821 = pneg %p534
        %p822 = pneg %p531
        %p823 = pneg %p555
        %p824 = pneg %p552
        %p825 = pneg %p576
        %p826 = pneg %p573
        %p827 = pneg %p597
        %p828 = pneg %p594
        %p829 = pneg %p618
        %p830 = pneg %p615
        %p831 = pneg %p644
        %p832 = pneg %p641
        %s833 = sand.u32 %s631, 1
        %s834 = scalar_lea.sflag [#allocation5], %s833
        %s835 = sand.u32 %s631, 1
        %s836 = smul.addr %s835, 16
        %s837 = scalar_lea.vmem [#allocation4], %s836
        %p838 = scmp.lt.s32.totalorder %s41, 1
        %s839 = scalar_select %p838, %s41, 1
        %s840 = smul.addr %s839, 4
        %s841 = scalar_lea.vmem %s0, %s840
        %p842 = scmp.lt.s32.totalorder %s41, 1
        %s843 = scalar_select %p842, %s41, 1
        %s844 = smul.addr %s843, 4
        %s845 = scalar_lea.vmem %s1, %s844
        %p846 = scmp.lt.s32.totalorder %s41, 1
        %s847 = scalar_select %p846, %s41, 1
        %s848 = smul.addr %s847, 2
        %s849 = smul.addr %s848, 8
        %s850 = scalar_lea.vmem %s2, %s849
        %v851 = vld [vmem:[%s841] sm:$0xf]
        %v852 = vld [vmem:[%s3] sm:$0xff]
        %v853 = vld [vmem:[%s3 + $0x8] sm:$0xff]
        %v854 = vld [vmem:[%s3 + $0x10] sm:$0xff]
        %v855 = vld [vmem:[%s3 + $0x18] sm:$0xff]
        %v856 = vld [vmem:[%s3 + $0x20] sm:$0xff]
        %v857 = vld [vmem:[%s3 + $0x28] sm:$0xff]
        %v858 = vld [vmem:[%s4] sm:$0x1]
        %v860 = vlaneseq
        %v861 = vshrl.u32 %v860, 7
        %v862 = vsub.s32 0, %v861
        %v863 = vrot.slane %v858, %v862
        %vm865 = vcmask 392192
        %v867 = vsel %vm865, %v851, 0
        %869 = vmatprep.subr.mxu0 0.0
        %870 = vmatpush1.msra.mxu0 %v852
        %871 = vmatprep.subr.mxu0 0.0
        %872 = vmatpush1.msra.mxu0 %v853
        %873 = vmatprep.subr.mxu0 0.0
        %874 = vmatpush1.msra.mxu0 %v854
        %875 = vmatprep.subr.mxu0 0.0
        %876 = vmatpush1.msra.mxu0 %v855
        %877 = vmatprep.subr.mxu0 0.0
        %878 = vmatpush1.msra.mxu0 %v856
        %879 = vmatprep.subr.mxu0 0.0
        %880 = vmatpush1.msra.mxu0 %v857
        %881 = vmatprep.subr.mxu0 0.0
        %882 = vmatpush1.msra.mxu0 0.0
        %883 = vmatprep.subr.mxu0 0.0
        %884 = vmatpush1.msra.mxu0 0.0
        %885 = vmatprep.subr.mxu0 0.0
        %886 = vmatpush1.msra.mxu0 0.0
        %887 = vmatprep.subr.mxu0 0.0
        %888 = vmatpush1.msra.mxu0 0.0
        %889 = vmatprep.subr.mxu0 0.0
        %890 = vmatpush1.msra.mxu0 0.0
        %891 = vmatprep.subr.mxu0 0.0
        %892 = vmatpush1.msra.mxu0 0.0
        %893 = vmatprep.subr.mxu0 0.0
        %894 = vmatpush1.msra.mxu0 0.0
        %895 = vmatprep.subr.mxu0 0.0
        %896 = vmatpush1.msra.mxu0 0.0
        %897 = vmatprep.subr.mxu0 0.0
        %898 = vmatpush1.msra.mxu0 0.0
        %899 = vmatprep.subr.mxu0 0.0
        %900 = vmatpush1.msra.mxu0 0.0
        %901 = vmatprep.subr.mxu0 0.0
        %902 = vmatpush1.msra.mxu0 0.0
        %903 = vmatprep.subr.mxu0 0.0
        %904 = vmatpush1.msra.mxu0 0.0
        %905 = vmatprep.subr.mxu0 0.0
        %906 = vmatpush1.msra.mxu0 0.0
        %907 = vmatprep.subr.mxu0 0.0
        %908 = vmatpush1.msra.mxu0 0.0
        %909 = vmatprep.subr.mxu0 0.0
        %910 = vmatpush1.msra.mxu0 0.0
        %911 = vmatprep.subr.mxu0 0.0
        %912 = vmatpush1.msra.mxu0 0.0
        %913 = vmatprep.subr.mxu0 0.0
        %914 = vmatpush1.msra.mxu0 0.0
        %915 = vmatprep.subr.mxu0 0.0
        %916 = vmatpush1.msra.mxu0 0.0
        %917 = vmatprep.subr.mxu0 0.0
        %918 = vmatpush1.msra.mxu0 0.0
        %919 = vmatprep.subr.mxu0 0.0
        %920 = vmatpush1.msra.mxu0 0.0
        %921 = vmatprep.subr.mxu0 0.0
        %922 = vmatpush1.msra.mxu0 0.0
        %923 = vmatprep.subr.mxu0 0.0
        %924 = vmatpush1.msra.mxu0 0.0
        %925 = vmatprep.subr.mxu0 0.0
        %926 = vmatpush1.msra.mxu0 0.0
        %927 = vmatprep.subr.mxu0 0.0
        %928 = vmatpush1.msra.mxu0 0.0
        %929 = vmatprep.subr.mxu0 0.0
        %930 = vmatpush1.msra.mxu0 0.0
        %931 = vmatprep.subr.mxu0 0.0
        %932 = vmatpush1.msra.mxu0 0.0
        %933 = vmatprep.mubr.f32.mxu0 0.0
        %934 = vmatmul.mubr.f32.gmra.mrb[0].mxu0 %v867
        %v935 = vpop.f32.mrb[0].mxu0
        %v936 = vadd.f32 %v863, %v935
        %v937 = vpop.f32.mrb[0].mxu0
        %938 = vdwg.mxu0
        %v939 = vld [vmem:[%s845] sm:$0xf]
        %v940 = vadd.f32 %v936, %v939
        %v941 = vld [vmem:[%s6] sm:$0x1]
        %v942 = vld [vmem:[%s5] sm:$0x1]
        %v943 = vadd.f32 %v941, %v942
        %vm944 = vcmask 253952
        %945 = vst.msk [vmem:[#allocation2] sm:$0x1] %vm944, %v943
        %vm946 = vcmask 257024
        %947 = vst.msk [vmem:[#allocation2 + $0x1] sm:$0xf] %vm946, %v940
        %vm948 = vcmask 256000
        %949 = vst.msk [vmem:[#allocation2 + $0x5] sm:$0x7] %vm948, 0.0
        %v950 = vld [vmem:[#allocation2] sm:$0xff]
        %v951 = vlaneseq
        %v952 = vand.u32 %v951, 127
        %vm953 = vcmp.lt.s32.totalorder %v952, 5
        %v954 = vsel %vm953, 0.0, -1e+30
        %v955 = vld [vmem:[%s8] sm:$0x1]
        %v956 = vld [vmem:[%s9] sm:$0x1]
        %vm957 = vcmask 261120
        %v958 = vsel %vm957, %v950, 0.0
        %959 = vadd.xlane.f32.xlu0 %v958
        %v960 = vpop.xlane.xlu0 %959
        %v961 = vrcp.pop 32.0
        %v962 = vmul.f32 %v960, %v961
        %v963 = vsub.f32 %v950, %v962
        %v964 = vmul.f32 %v963, %v963
        %v965 = vsel %vm957, %v964, 0.0
        %966 = vadd.xlane.f32.xlu0 %v965
        %v967 = vpop.xlane.xlu0 %966
        %v968 = vmul.f32 %v967, %v961
        %v969 = vadd.f32 %v968, 1e-05
        %v970 = vrsqrt.pop %v969
        %v971 = vmul.f32 %v963, %v970
        %v973 = vlaneseq
        %v974 = vshrl.u32 %v973, 7
        %v975 = vsub.s32 0, %v974
        %v976 = vrot.slane %v955, %v975
        %v978 = vmul.f32 %v971, %v976
        %v980 = vlaneseq
        %v981 = vshrl.u32 %v980, 7
        %v982 = vsub.s32 0, %v981
        %v983 = vrot.slane %v956, %v982
        %v985 = vadd.f32 %v978, %v983
        %v986 = vld [vmem:[%s10] sm:$0xff]
        %v987 = vld [vmem:[%s10 + $0x8] sm:$0xff]
        %v988 = vld [vmem:[%s10 + $0x10] sm:$0xff]
        %v989 = vld [vmem:[%s10 + $0x18] sm:$0xff]
        %v990 = vld [vmem:[%s10 + $0x20] sm:$0xff]
        %v991 = vld [vmem:[%s10 + $0x28] sm:$0xff]
        %v992 = vld [vmem:[%s10 + $0x30] sm:$0xff]
        %v993 = vld [vmem:[%s10 + $0x38] sm:$0xff]
        %v994 = vld [vmem:[%s10 + $0x40] sm:$0xff]
        %v995 = vld [vmem:[%s10 + $0x48] sm:$0xff]
        %v996 = vld [vmem:[%s10 + $0x50] sm:$0xff]
        %v997 = vld [vmem:[%s10 + $0x58] sm:$0xff]
        %v998 = vld [vmem:[%s10 + $0x60] sm:$0xff]
        %v999 = vld [vmem:[%s10 + $0x68] sm:$0xff]
        %v1000 = vld [vmem:[%s10 + $0x70] sm:$0xff]
        %v1001 = vld [vmem:[%s10 + $0x78] sm:$0xff]
        %v1002 = vld [vmem:[%s11] sm:$0x1]
        %v1003 = vld [vmem:[%s11 + $0x1] sm:$0x1]
        %v1004 = vld [vmem:[%s11 + $0x2] sm:$0x1]
        %v1005 = vld [vmem:[%s11 + $0x3] sm:$0x1]
        %v1010 = vlaneseq
        %v1011 = vshrl.u32 %v1010, 7
        %v1012 = vsub.s32 0, %v1011
        %v1013 = vrot.slane %v1002, %v1012
        %v1014 = vlaneseq
        %v1015 = vshrl.u32 %v1014, 7
        %v1016 = vsub.s32 0, %v1015
        %v1017 = vrot.slane %v1003, %v1016
        %v1018 = vlaneseq
        %v1019 = vshrl.u32 %v1018, 7
        %v1020 = vsub.s32 0, %v1019
        %v1021 = vrot.slane %v1004, %v1020
        %v1022 = vlaneseq
        %v1023 = vshrl.u32 %v1022, 7
        %v1024 = vsub.s32 0, %v1023
        %v1025 = vrot.slane %v1005, %v1024
        %v1031 = vsel %vm957, %v985, 0
        %1033 = vmatprep.subr.mxu0 0.0
        %1034 = vmatpush1.msra.mxu0 %v986
        %1035 = vmatprep.subr.mxu0 0.0
        %1036 = vmatpush1.msra.mxu0 %v987
        %1037 = vmatprep.subr.mxu0 0.0
        %1038 = vmatpush1.msra.mxu0 %v988
        %1039 = vmatprep.subr.mxu0 0.0
        %1040 = vmatpush1.msra.mxu0 %v989
        %1041 = vmatprep.subr.mxu0 0.0
        %1042 = vmatpush1.msra.mxu0 0.0
        %1043 = vmatprep.subr.mxu0 0.0
        %1044 = vmatpush1.msra.mxu0 0.0
        %1045 = vmatprep.subr.mxu0 0.0
        %1046 = vmatpush1.msra.mxu0 0.0
        %1047 = vmatprep.subr.mxu0 0.0
        %1048 = vmatpush1.msra.mxu0 0.0
        %1049 = vmatprep.subr.mxu0 0.0
        %1050 = vmatpush1.msra.mxu0 0.0
        %1051 = vmatprep.subr.mxu0 0.0
        %1052 = vmatpush1.msra.mxu0 0.0
        %1053 = vmatprep.subr.mxu0 0.0
        %1054 = vmatpush1.msra.mxu0 0.0
        %1055 = vmatprep.subr.mxu0 0.0
        %1056 = vmatpush1.msra.mxu0 0.0
        %1057 = vmatprep.subr.mxu0 0.0
        %1058 = vmatpush1.msra.mxu0 0.0
        %1059 = vmatprep.subr.mxu0 0.0
        %1060 = vmatpush1.msra.mxu0 0.0
        %1061 = vmatprep.subr.mxu0 0.0
        %1062 = vmatpush1.msra.mxu0 0.0
        %1063 = vmatprep.subr.mxu0 0.0
        %1064 = vmatpush1.msra.mxu0 0.0
        %1065 = vmatprep.subr.mxu0 0.0
        %1066 = vmatpush1.msra.mxu0 0.0
        %1067 = vmatprep.subr.mxu0 0.0
        %1068 = vmatpush1.msra.mxu0 0.0
        %1069 = vmatprep.subr.mxu0 0.0
        %1070 = vmatpush1.msra.mxu0 0.0
        %1071 = vmatprep.subr.mxu0 0.0
        %1072 = vmatpush1.msra.mxu0 0.0
        %1073 = vmatprep.subr.mxu0 0.0
        %1074 = vmatpush1.msra.mxu0 0.0
        %1075 = vmatprep.subr.mxu0 0.0
        %1076 = vmatpush1.msra.mxu0 0.0
        %1077 = vmatprep.subr.mxu0 0.0
        %1078 = vmatpush1.msra.mxu0 0.0
        %1079 = vmatprep.subr.mxu0 0.0
        %1080 = vmatpush1.msra.mxu0 0.0
        %1081 = vmatprep.subr.mxu0 0.0
        %1082 = vmatpush1.msra.mxu0 0.0
        %1083 = vmatprep.subr.mxu0 0.0
        %1084 = vmatpush1.msra.mxu0 0.0
        %1085 = vmatprep.subr.mxu0 0.0
        %1086 = vmatpush1.msra.mxu0 0.0
        %1087 = vmatprep.subr.mxu0 0.0
        %1088 = vmatpush1.msra.mxu0 0.0
        %1089 = vmatprep.subr.mxu0 0.0
        %1090 = vmatpush1.msra.mxu0 0.0
        %1091 = vmatprep.subr.mxu0 0.0
        %1092 = vmatpush1.msra.mxu0 0.0
        %1093 = vmatprep.subr.mxu0 0.0
        %1094 = vmatpush1.msra.mxu0 0.0
        %1095 = vmatprep.subr.mxu0 0.0
        %1096 = vmatpush1.msra.mxu0 0.0
        %1097 = vmatprep.mubr.f32.mxu0 0.0
        %1098 = vmatmul.mubr.f32.gmra.mrb[0].mxu0 %v1031
        %v1099 = vpop.f32.mrb[0].mxu0
        %v1100 = vadd.f32 %v1013, %v1099
        %v1101 = vpop.f32.mrb[0].mxu0
        %1102 = vdwg.mxu0
        %1103 = vmatprep.subr.mxu0 0.0
        %1104 = vmatpush1.msra.mxu0 %v990
        %1105 = vmatprep.subr.mxu0 0.0
        %1106 = vmatpush1.msra.mxu0 %v991
        %1107 = vmatprep.subr.mxu0 0.0
        %1108 = vmatpush1.msra.mxu0 %v992
        %1109 = vmatprep.subr.mxu0 0.0
        %1110 = vmatpush1.msra.mxu0 %v993
        %1111 = vmatprep.subr.mxu0 0.0
        %1112 = vmatpush1.msra.mxu0 0.0
        %1113 = vmatprep.subr.mxu0 0.0
        %1114 = vmatpush1.msra.mxu0 0.0
        %1115 = vmatprep.subr.mxu0 0.0
        %1116 = vmatpush1.msra.mxu0 0.0
        %1117 = vmatprep.subr.mxu0 0.0
        %1118 = vmatpush1.msra.mxu0 0.0
        %1119 = vmatprep.subr.mxu0 0.0
        %1120 = vmatpush1.msra.mxu0 0.0
        %1121 = vmatprep.subr.mxu0 0.0
        %1122 = vmatpush1.msra.mxu0 0.0
        %1123 = vmatprep.subr.mxu0 0.0
        %1124 = vmatpush1.msra.mxu0 0.0
        %1125 = vmatprep.subr.mxu0 0.0
        %1126 = vmatpush1.msra.mxu0 0.0
        %1127 = vmatprep.subr.mxu0 0.0
        %1128 = vmatpush1.msra.mxu0 0.0
        %1129 = vmatprep.subr.mxu0 0.0
        %1130 = vmatpush1.msra.mxu0 0.0
        %1131 = vmatprep.subr.mxu0 0.0
        %1132 = vmatpush1.msra.mxu0 0.0
        %1133 = vmatprep.subr.mxu0 0.0
        %1134 = vmatpush1.msra.mxu0 0.0
        %1135 = vmatprep.subr.mxu0 0.0
        %1136 = vmatpush1.msra.mxu0 0.0
        %1137 = vmatprep.subr.mxu0 0.0
        %1138 = vmatpush1.msra.mxu0 0.0
        %1139 = vmatprep.subr.mxu0 0.0
        %1140 = vmatpush1.msra.mxu0 0.0
        %1141 = vmatprep.subr.mxu0 0.0
        %1142 = vmatpush1.msra.mxu0 0.0
        %1143 = vmatprep.subr.mxu0 0.0
        %1144 = vmatpush1.msra.mxu0 0.0
        %1145 = vmatprep.subr.mxu0 0.0
        %1146 = vmatpush1.msra.mxu0 0.0
        %1147 = vmatprep.subr.mxu0 0.0
        %1148 = vmatpush1.msra.mxu0 0.0
        %1149 = vmatprep.subr.mxu0 0.0
        %1150 = vmatpush1.msra.mxu0 0.0
        %1151 = vmatprep.subr.mxu0 0.0
        %1152 = vmatpush1.msra.mxu0 0.0
        %1153 = vmatprep.subr.mxu0 0.0
        %1154 = vmatpush1.msra.mxu0 0.0
        %1155 = vmatprep.subr.mxu0 0.0
        %1156 = vmatpush1.msra.mxu0 0.0
        %1157 = vmatprep.subr.mxu0 0.0
        %1158 = vmatpush1.msra.mxu0 0.0
        %1159 = vmatprep.subr.mxu0 0.0
        %1160 = vmatpush1.msra.mxu0 0.0
        %1161 = vmatprep.subr.mxu0 0.0
        %1162 = vmatpush1.msra.mxu0 0.0
        %1163 = vmatprep.subr.mxu0 0.0
        %1164 = vmatpush1.msra.mxu0 0.0
        %1165 = vmatprep.subr.mxu0 0.0
        %1166 = vmatpush1.msra.mxu0 0.0
        %1167 = vmatprep.mubr.f32.mxu0 0.0
        %1168 = vmatmul.mubr.f32.gmra.mrb[0].mxu0 %v1031
        %v1169 = vpop.f32.mrb[0].mxu0
        %v1170 = vadd.f32 %v1017, %v1169
        %v1171 = vpop.f32.mrb[0].mxu0
        %1172 = vdwg.mxu0
        %1173 = vmatprep.subr.mxu0 0.0
        %1174 = vmatpush1.msra.mxu0 %v994
        %1175 = vmatprep.subr.mxu0 0.0
        %1176 = vmatpush1.msra.mxu0 %v995
        %1177 = vmatprep.subr.mxu0 0.0
        %1178 = vmatpush1.msra.mxu0 %v996
        %1179 = vmatprep.subr.mxu0 0.0
        %1180 = vmatpush1.msra.mxu0 %v997
        %1181 = vmatprep.subr.mxu0 0.0
        %1182 = vmatpush1.msra.mxu0 0.0
        %1183 = vmatprep.subr.mxu0 0.0
        %1184 = vmatpush1.msra.mxu0 0.0
        %1185 = vmatprep.subr.mxu0 0.0
        %1186 = vmatpush1.msra.mxu0 0.0
        %1187 = vmatprep.subr.mxu0 0.0
        %1188 = vmatpush1.msra.mxu0 0.0
        %1189 = vmatprep.subr.mxu0 0.0
        %1190 = vmatpush1.msra.mxu0 0.0
        %1191 = vmatprep.subr.mxu0 0.0
        %1192 = vmatpush1.msra.mxu0 0.0
        %1193 = vmatprep.subr.mxu0 0.0
        %1194 = vmatpush1.msra.mxu0 0.0
        %1195 = vmatprep.subr.mxu0 0.0
        %1196 = vmatpush1.msra.mxu0 0.0
        %1197 = vmatprep.subr.mxu0 0.0
        %1198 = vmatpush1.msra.mxu0 0.0
        %1199 = vmatprep.subr.mxu0 0.0
        %1200 = vmatpush1.msra.mxu0 0.0
        %1201 = vmatprep.subr.mxu0 0.0
        %1202 = vmatpush1.msra.mxu0 0.0
        %1203 = vmatprep.subr.mxu0 0.0
        %1204 = vmatpush1.msra.mxu0 0.0
        %1205 = vmatprep.subr.mxu0 0.0
        %1206 = vmatpush1.msra.mxu0 0.0
        %1207 = vmatprep.subr.mxu0 0.0
        %1208 = vmatpush1.msra.mxu0 0.0
        %1209 = vmatprep.subr.mxu0 0.0
        %1210 = vmatpush1.msra.mxu0 0.0
        %1211 = vmatprep.subr.mxu0 0.0
        %1212 = vmatpush1.msra.mxu0 0.0
        %1213 = vmatprep.subr.mxu0 0.0
        %1214 = vmatpush1.msra.mxu0 0.0
        %1215 = vmatprep.subr.mxu0 0.0
        %1216 = vmatpush1.msra.mxu0 0.0
        %1217 = vmatprep.subr.mxu0 0.0
        %1218 = vmatpush1.msra.mxu0 0.0
        %1219 = vmatprep.subr.mxu0 0.0
        %1220 = vmatpush1.msra.mxu0 0.0
        %1221 = vmatprep.subr.mxu0 0.0
        %1222 = vmatpush1.msra.mxu0 0.0
        %1223 = vmatprep.subr.mxu0 0.0
        %1224 = vmatpush1.msra.mxu0 0.0
        %1225 = vmatprep.subr.mxu0 0.0
        %1226 = vmatpush1.msra.mxu0 0.0
        %1227 = vmatprep.subr.mxu0 0.0
        %1228 = vmatpush1.msra.mxu0 0.0
        %1229 = vmatprep.subr.mxu0 0.0
        %1230 = vmatpush1.msra.mxu0 0.0
        %1231 = vmatprep.subr.mxu0 0.0
        %1232 = vmatpush1.msra.mxu0 0.0
        %1233 = vmatprep.subr.mxu0 0.0
        %1234 = vmatpush1.msra.mxu0 0.0
        %1235 = vmatprep.subr.mxu0 0.0
        %1236 = vmatpush1.msra.mxu0 0.0
        %1237 = vmatprep.mubr.f32.mxu0 0.0
        %1238 = vmatmul.mubr.f32.gmra.mrb[0].mxu0 %v1031
        %v1239 = vpop.f32.mrb[0].mxu0
        %v1240 = vadd.f32 %v1021, %v1239
        %v1241 = vpop.f32.mrb[0].mxu0
        %1242 = vdwg.mxu0
        %1243 = vmatprep.subr.mxu0 0.0
        %1244 = vmatpush1.msra.mxu0 %v998
        %1245 = vmatprep.subr.mxu0 0.0
        %1246 = vmatpush1.msra.mxu0 %v999
        %1247 = vmatprep.subr.mxu0 0.0
        %1248 = vmatpush1.msra.mxu0 %v1000
        %1249 = vmatprep.subr.mxu0 0.0
        %1250 = vmatpush1.msra.mxu0 %v1001
        %1251 = vmatprep.subr.mxu0 0.0
        %1252 = vmatpush1.msra.mxu0 0.0
        %1253 = vmatprep.subr.mxu0 0.0
        %1254 = vmatpush1.msra.mxu0 0.0
        %1255 = vmatprep.subr.mxu0 0.0
        %1256 = vmatpush1.msra.mxu0 0.0
        %1257 = vmatprep.subr.mxu0 0.0
        %1258 = vmatpush1.msra.mxu0 0.0
        %1259 = vmatprep.subr.mxu0 0.0
        %1260 = vmatpush1.msra.mxu0 0.0
        %1261 = vmatprep.subr.mxu0 0.0
        %1262 = vmatpush1.msra.mxu0 0.0
        %1263 = vmatprep.subr.mxu0 0.0
        %1264 = vmatpush1.msra.mxu0 0.0
        %1265 = vmatprep.subr.mxu0 0.0
        %1266 = vmatpush1.msra.mxu0 0.0
        %1267 = vmatprep.subr.mxu0 0.0
        %1268 = vmatpush1.msra.mxu0 0.0
        %1269 = vmatprep.subr.mxu0 0.0
        %1270 = vmatpush1.msra.mxu0 0.0
        %1271 = vmatprep.subr.mxu0 0.0
        %1272 = vmatpush1.msra.mxu0 0.0
        %1273 = vmatprep.subr.mxu0 0.0
        %1274 = vmatpush1.msra.mxu0 0.0
        %1275 = vmatprep.subr.mxu0 0.0
        %1276 = vmatpush1.msra.mxu0 0.0
        %1277 = vmatprep.subr.mxu0 0.0
        %1278 = vmatpush1.msra.mxu0 0.0
        %1279 = vmatprep.subr.mxu0 0.0
        %1280 = vmatpush1.msra.mxu0 0.0
        %1281 = vmatprep.subr.mxu0 0.0
        %1282 = vmatpush1.msra.mxu0 0.0
        %1283 = vmatprep.subr.mxu0 0.0
        %1284 = vmatpush1.msra.mxu0 0.0
        %1285 = vmatprep.subr.mxu0 0.0
        %1286 = vmatpush1.msra.mxu0 0.0
        %1287 = vmatprep.subr.mxu0 0.0
        %1288 = vmatpush1.msra.mxu0 0.0
        %1289 = vmatprep.subr.mxu0 0.0
        %1290 = vmatpush1.msra.mxu0 0.0
        %1291 = vmatprep.subr.mxu0 0.0
        %1292 = vmatpush1.msra.mxu0 0.0
        %1293 = vmatprep.subr.mxu0 0.0
        %1294 = vmatpush1.msra.mxu0 0.0
        %1295 = vmatprep.subr.mxu0 0.0
        %1296 = vmatpush1.msra.mxu0 0.0
        %1297 = vmatprep.subr.mxu0 0.0
        %1298 = vmatpush1.msra.mxu0 0.0
        %1299 = vmatprep.subr.mxu0 0.0
        %1300 = vmatpush1.msra.mxu0 0.0
        %1301 = vmatprep.subr.mxu0 0.0
        %1302 = vmatpush1.msra.mxu0 0.0
        %1303 = vmatprep.subr.mxu0 0.0
        %1304 = vmatpush1.msra.mxu0 0.0
        %1305 = vmatprep.subr.mxu0 0.0
        %1306 = vmatpush1.msra.mxu0 0.0
        %1307 = vmatprep.mubr.f32.mxu0 0.0
        %1308 = vmatmul.mubr.f32.gmra.mrb[0].mxu0 %v1031
        %v1309 = vpop.f32.mrb[0].mxu0
        %v1310 = vadd.f32 %v1025, %v1309
        %v1311 = vpop.f32.mrb[0].mxu0
        %1312 = vdwg.mxu0
        %v1313 = vld [vmem:[%s12] sm:$0xff]
        %v1314 = vld [vmem:[%s12 + $0x8] sm:$0xff]
        %v1315 = vld [vmem:[%s12 + $0x10] sm:$0xff]
        %v1316 = vld [vmem:[%s12 + $0x18] sm:$0xff]
        %v1317 = vld [vmem:[%s12 + $0x20] sm:$0xff]
        %v1318 = vld [vmem:[%s12 + $0x28] sm:$0xff]
        %v1319 = vld [vmem:[%s12 + $0x30] sm:$0xff]
        %v1320 = vld [vmem:[%s12 + $0x38] sm:$0xff]
        %v1321 = vld [vmem:[%s12 + $0x40] sm:$0xff]
        %v1322 = vld [vmem:[%s12 + $0x48] sm:$0xff]
        %v1323 = vld [vmem:[%s12 + $0x50] sm:$0xff]
        %v1324 = vld [vmem:[%s12 + $0x58] sm:$0xff]
        %v1325 = vld [vmem:[%s12 + $0x60] sm:$0xff]
        %v1326 = vld [vmem:[%s12 + $0x68] sm:$0xff]
        %v1327 = vld [vmem:[%s12 + $0x70] sm:$0xff]
        %v1328 = vld [vmem:[%s12 + $0x78] sm:$0xff]
        %v1329 = vld [vmem:[%s13] sm:$0x1]
        %v1330 = vld [vmem:[%s13 + $0x1] sm:$0x1]
        %v1331 = vld [vmem:[%s13 + $0x2] sm:$0x1]
        %v1332 = vld [vmem:[%s13 + $0x3] sm:$0x1]
        %v1337 = vlaneseq
        %v1338 = vshrl.u32 %v1337, 7
        %v1339 = vsub.s32 0, %v1338
        %v1340 = vrot.slane %v1329, %v1339
        %v1341 = vlaneseq
        %v1342 = vshrl.u32 %v1341, 7
        %v1343 = vsub.s32 0, %v1342
        %v1344 = vrot.slane %v1330, %v1343
        %v1345 = vlaneseq
        %v1346 = vshrl.u32 %v1345, 7
        %v1347 = vsub.s32 0, %v1346
        %v1348 = vrot.slane %v1331, %v1347
        %v1349 = vlaneseq
        %v1350 = vshrl.u32 %v1349, 7
        %v1351 = vsub.s32 0, %v1350
        %v1352 = vrot.slane %v1332, %v1351
        %1357 = vmatprep.subr.mxu0 0.0
        %1358 = vmatpush1.msra.mxu0 %v1313
        %1359 = vmatprep.subr.mxu0 0.0
        %1360 = vmatpush1.msra.mxu0 %v1314
        %1361 = vmatprep.subr.mxu0 0.0
        %1362 = vmatpush1.msra.mxu0 %v1315
        %1363 = vmatprep.subr.mxu0 0.0
        %1364 = vmatpush1.msra.mxu0 %v1316
        %1365 = vmatprep.subr.mxu0 0.0
        %1366 = vmatpush1.msra.mxu0 0.0
        %1367 = vmatprep.subr.mxu0 0.0
        %1368 = vmatpush1.msra.mxu0 0.0
        %1369 = vmatprep.subr.mxu0 0.0
        %1370 = vmatpush1.msra.mxu0 0.0
        %1371 = vmatprep.subr.mxu0 0.0
        %1372 = vmatpush1.msra.mxu0 0.0
        %1373 = vmatprep.subr.mxu0 0.0
        %1374 = vmatpush1.msra.mxu0 0.0
        %1375 = vmatprep.subr.mxu0 0.0
        %1376 = vmatpush1.msra.mxu0 0.0
        %1377 = vmatprep.subr.mxu0 0.0
        %1378 = vmatpush1.msra.mxu0 0.0
        %1379 = vmatprep.subr.mxu0 0.0
        %1380 = vmatpush1.msra.mxu0 0.0
        %1381 = vmatprep.subr.mxu0 0.0
        %1382 = vmatpush1.msra.mxu0 0.0
        %1383 = vmatprep.subr.mxu0 0.0
        %1384 = vmatpush1.msra.mxu0 0.0
        %1385 = vmatprep.subr.mxu0 0.0
        %1386 = vmatpush1.msra.mxu0 0.0
        %1387 = vmatprep.subr.mxu0 0.0
        %1388 = vmatpush1.msra.mxu0 0.0
        %1389 = vmatprep.subr.mxu0 0.0
        %1390 = vmatpush1.msra.mxu0 0.0
        %1391 = vmatprep.subr.mxu0 0.0
        %1392 = vmatpush1.msra.mxu0 0.0
        %1393 = vmatprep.subr.mxu0 0.0
        %1394 = vmatpush1.msra.mxu0 0.0
        %1395 = vmatprep.subr.mxu0 0.0
        %1396 = vmatpush1.msra.mxu0 0.0
        %1397 = vmatprep.subr.mxu0 0.0
        %1398 = vmatpush1.msra.mxu0 0.0
        %1399 = vmatprep.subr.mxu0 0.0
        %1400 = vmatpush1.msra.mxu0 0.0
        %1401 = vmatprep.subr.mxu0 0.0
        %1402 = vmatpush1.msra.mxu0 0.0
        %1403 = vmatprep.subr.mxu0 0.0
        %1404 = vmatpush1.msra.mxu0 0.0
        %1405 = vmatprep.subr.mxu0 0.0
        %1406 = vmatpush1.msra.mxu0 0.0
        %1407 = vmatprep.subr.mxu0 0.0
        %1408 = vmatpush1.msra.mxu0 0.0
        %1409 = vmatprep.subr.mxu0 0.0
        %1410 = vmatpush1.msra.mxu0 0.0
        %1411 = vmatprep.subr.mxu0 0.0
        %1412 = vmatpush1.msra.mxu0 0.0
        %1413 = vmatprep.subr.mxu0 0.0
        %1414 = vmatpush1.msra.mxu0 0.0
        %1415 = vmatprep.subr.mxu0 0.0
        %1416 = vmatpush1.msra.mxu0 0.0
        %1417 = vmatprep.subr.mxu0 0.0
        %1418 = vmatpush1.msra.mxu0 0.0
        %1419 = vmatprep.subr.mxu0 0.0
        %1420 = vmatpush1.msra.mxu0 0.0
        %1421 = vmatprep.mubr.f32.mxu0 0.0
        %1422 = vmatmul.mubr.f32.gmra.mrb[0].mxu0 %v1031
        %v1423 = vpop.f32.mrb[0].mxu0
        %v1424 = vadd.f32 %v1340, %v1423
        %v1425 = vpop.f32.mrb[0].mxu0
        %1426 = vdwg.mxu0
        %1427 = vmatprep.subr.mxu0 0.0
        %1428 = vmatpush1.msra.mxu0 %v1317
        %1429 = vmatprep.subr.mxu0 0.0
        %1430 = vmatpush1.msra.mxu0 %v1318
        %1431 = vmatprep.subr.mxu0 0.0
        %1432 = vmatpush1.msra.mxu0 %v1319
        %1433 = vmatprep.subr.mxu0 0.0
        %1434 = vmatpush1.msra.mxu0 %v1320
        %1435 = vmatprep.subr.mxu0 0.0
        %1436 = vmatpush1.msra.mxu0 0.0
        %1437 = vmatprep.subr.mxu0 0.0
        %1438 = vmatpush1.msra.mxu0 0.0
        %1439 = vmatprep.subr.mxu0 0.0
        %1440 = vmatpush1.msra.mxu0 0.0
        %1441 = vmatprep.subr.mxu0 0.0
        %1442 = vmatpush1.msra.mxu0 0.0
        %1443 = vmatprep.subr.mxu0 0.0
        %1444 = vmatpush1.msra.mxu0 0.0
        %1445 = vmatprep.subr.mxu0 0.0
        %1446 = vmatpush1.msra.mxu0 0.0
        %1447 = vmatprep.subr.mxu0 0.0
        %1448 = vmatpush1.msra.mxu0 0.0
        %1449 = vmatprep.subr.mxu0 0.0
        %1450 = vmatpush1.msra.mxu0 0.0
        %1451 = vmatprep.subr.mxu0 0.0
        %1452 = vmatpush1.msra.mxu0 0.0
        %1453 = vmatprep.subr.mxu0 0.0
        %1454 = vmatpush1.msra.mxu0 0.0
        %1455 = vmatprep.subr.mxu0 0.0
        %1456 = vmatpush1.msra.mxu0 0.0
        %1457 = vmatprep.subr.mxu0 0.0
        %1458 = vmatpush1.msra.mxu0 0.0
        %1459 = vmatprep.subr.mxu0 0.0
        %1460 = vmatpush1.msra.mxu0 0.0
        %1461 = vmatprep.subr.mxu0 0.0
        %1462 = vmatpush1.msra.mxu0 0.0
        %1463 = vmatprep.subr.mxu0 0.0
        %1464 = vmatpush1.msra.mxu0 0.0
        %1465 = vmatprep.subr.mxu0 0.0
        %1466 = vmatpush1.msra.mxu0 0.0
        %1467 = vmatprep.subr.mxu0 0.0
        %1468 = vmatpush1.msra.mxu0 0.0
        %1469 = vmatprep.subr.mxu0 0.0
        %1470 = vmatpush1.msra.mxu0 0.0
        %1471 = vmatprep.subr.mxu0 0.0
        %1472 = vmatpush1.msra.mxu0 0.0
        %1473 = vmatprep.subr.mxu0 0.0
        %1474 = vmatpush1.msra.mxu0 0.0
        %1475 = vmatprep.subr.mxu0 0.0
        %1476 = vmatpush1.msra.mxu0 0.0
        %1477 = vmatprep.subr.mxu0 0.0
        %1478 = vmatpush1.msra.mxu0 0.0
        %1479 = vmatprep.subr.mxu0 0.0
        %1480 = vmatpush1.msra.mxu0 0.0
        %1481 = vmatprep.subr.mxu0 0.0
        %1482 = vmatpush1.msra.mxu0 0.0
        %1483 = vmatprep.subr.mxu0 0.0
        %1484 = vmatpush1.msra.mxu0 0.0
        %1485 = vmatprep.subr.mxu0 0.0
        %1486 = vmatpush1.msra.mxu0 0.0
        %1487 = vmatprep.subr.mxu0 0.0
        %1488 = vmatpush1.msra.mxu0 0.0
        %1489 = vmatprep.subr.mxu0 0.0
        %1490 = vmatpush1.msra.mxu0 0.0
        %1491 = vmatprep.mubr.f32.mxu0 0.0
        %1492 = vmatmul.mubr.f32.gmra.mrb[0].mxu0 %v1031
        %v1493 = vpop.f32.mrb[0].mxu0
        %v1494 = vadd.f32 %v1344, %v1493
        %v1495 = vpop.f32.mrb[0].mxu0
        %1496 = vdwg.mxu0
        %1497 = vmatprep.subr.mxu0 0.0
        %1498 = vmatpush1.msra.mxu0 %v1321
        %1499 = vmatprep.subr.mxu0 0.0
        %1500 = vmatpush1.msra.mxu0 %v1322
        %1501 = vmatprep.subr.mxu0 0.0
        %1502 = vmatpush1.msra.mxu0 %v1323
        %1503 = vmatprep.subr.mxu0 0.0
        %1504 = vmatpush1.msra.mxu0 %v1324
        %1505 = vmatprep.subr.mxu0 0.0
        %1506 = vmatpush1.msra.mxu0 0.0
        %1507 = vmatprep.subr.mxu0 0.0
        %1508 = vmatpush1.msra.mxu0 0.0
        %1509 = vmatprep.subr.mxu0 0.0
        %1510 = vmatpush1.msra.mxu0 0.0
        %1511 = vmatprep.subr.mxu0 0.0
        %1512 = vmatpush1.msra.mxu0 0.0
        %1513 = vmatprep.subr.mxu0 0.0
        %1514 = vmatpush1.msra.mxu0 0.0
        %1515 = vmatprep.subr.mxu0 0.0
        %1516 = vmatpush1.msra.mxu0 0.0
        %1517 = vmatprep.subr.mxu0 0.0
        %1518 = vmatpush1.msra.mxu0 0.0
        %1519 = vmatprep.subr.mxu0 0.0
        %1520 = vmatpush1.msra.mxu0 0.0
        %1521 = vmatprep.subr.mxu0 0.0
        %1522 = vmatpush1.msra.mxu0 0.0
        %1523 = vmatprep.subr.mxu0 0.0
        %1524 = vmatpush1.msra.mxu0 0.0
        %1525 = vmatprep.subr.mxu0 0.0
        %1526 = vmatpush1.msra.mxu0 0.0
        %1527 = vmatprep.subr.mxu0 0.0
        %1528 = vmatpush1.msra.mxu0 0.0
        %1529 = vmatprep.subr.mxu0 0.0
        %1530 = vmatpush1.msra.mxu0 0.0
        %1531 = vmatprep.subr.mxu0 0.0
        %1532 = vmatpush1.msra.mxu0 0.0
        %1533 = vmatprep.subr.mxu0 0.0
        %1534 = vmatpush1.msra.mxu0 0.0
        %1535 = vmatprep.subr.mxu0 0.0
        %1536 = vmatpush1.msra.mxu0 0.0
        %1537 = vmatprep.subr.mxu0 0.0
        %1538 = vmatpush1.msra.mxu0 0.0
        %1539 = vmatprep.subr.mxu0 0.0
        %1540 = vmatpush1.msra.mxu0 0.0
        %1541 = vmatprep.subr.mxu0 0.0
        %1542 = vmatpush1.msra.mxu0 0.0
        %1543 = vmatprep.subr.mxu0 0.0
        %1544 = vmatpush1.msra.mxu0 0.0
        %1545 = vmatprep.subr.mxu0 0.0
        %1546 = vmatpush1.msra.mxu0 0.0
        %1547 = vmatprep.subr.mxu0 0.0
        %1548 = vmatpush1.msra.mxu0 0.0
        %1549 = vmatprep.subr.mxu0 0.0
        %1550 = vmatpush1.msra.mxu0 0.0
        %1551 = vmatprep.subr.mxu0 0.0
        %1552 = vmatpush1.msra.mxu0 0.0
        %1553 = vmatprep.subr.mxu0 0.0
        %1554 = vmatpush1.msra.mxu0 0.0
        %1555 = vmatprep.subr.mxu0 0.0
        %1556 = vmatpush1.msra.mxu0 0.0
        %1557 = vmatprep.subr.mxu0 0.0
        %1558 = vmatpush1.msra.mxu0 0.0
        %1559 = vmatprep.subr.mxu0 0.0
        %1560 = vmatpush1.msra.mxu0 0.0
        %1561 = vmatprep.mubr.f32.mxu0 0.0
        %1562 = vmatmul.mubr.f32.gmra.mrb[0].mxu0 %v1031
        %v1563 = vpop.f32.mrb[0].mxu0
        %v1564 = vadd.f32 %v1348, %v1563
        %v1565 = vpop.f32.mrb[0].mxu0
        %1566 = vdwg.mxu0
        %1567 = vmatprep.subr.mxu0 0.0
        %1568 = vmatpush1.msra.mxu0 %v1325
        %1569 = vmatprep.subr.mxu0 0.0
        %1570 = vmatpush1.msra.mxu0 %v1326
        %1571 = vmatprep.subr.mxu0 0.0
        %1572 = vmatpush1.msra.mxu0 %v1327
        %1573 = vmatprep.subr.mxu0 0.0
        %1574 = vmatpush1.msra.mxu0 %v1328
        %1575 = vmatprep.subr.mxu0 0.0
        %1576 = vmatpush1.msra.mxu0 0.0
        %1577 = vmatprep.subr.mxu0 0.0
        %1578 = vmatpush1.msra.mxu0 0.0
        %1579 = vmatprep.subr.mxu0 0.0
        %1580 = vmatpush1.msra.mxu0 0.0
        %1581 = vmatprep.subr.mxu0 0.0
        %1582 = vmatpush1.msra.mxu0 0.0
        %1583 = vmatprep.subr.mxu0 0.0
        %1584 = vmatpush1.msra.mxu0 0.0
        %1585 = vmatprep.subr.mxu0 0.0
        %1586 = vmatpush1.msra.mxu0 0.0
        %1587 = vmatprep.subr.mxu0 0.0
        %1588 = vmatpush1.msra.mxu0 0.0
        %1589 = vmatprep.subr.mxu0 0.0
        %1590 = vmatpush1.msra.mxu0 0.0
        %1591 = vmatprep.subr.mxu0 0.0
        %1592 = vmatpush1.msra.mxu0 0.0
        %1593 = vmatprep.subr.mxu0 0.0
        %1594 = vmatpush1.msra.mxu0 0.0
        %1595 = vmatprep.subr.mxu0 0.0
        %1596 = vmatpush1.msra.mxu0 0.0
        %1597 = vmatprep.subr.mxu0 0.0
        %1598 = vmatpush1.msra.mxu0 0.0
        %1599 = vmatprep.subr.mxu0 0.0
        %1600 = vmatpush1.msra.mxu0 0.0
        %1601 = vmatprep.subr.mxu0 0.0
        %1602 = vmatpush1.msra.mxu0 0.0
        %1603 = vmatprep.subr.mxu0 0.0
        %1604 = vmatpush1.msra.mxu0 0.0
        %1605 = vmatprep.subr.mxu0 0.0
        %1606 = vmatpush1.msra.mxu0 0.0
        %1607 = vmatprep.subr.mxu0 0.0
        %1608 = vmatpush1.msra.mxu0 0.0
        %1609 = vmatprep.subr.mxu0 0.0
        %1610 = vmatpush1.msra.mxu0 0.0
        %1611 = vmatprep.subr.mxu0 0.0
        %1612 = vmatpush1.msra.mxu0 0.0
        %1613 = vmatprep.subr.mxu0 0.0
        %1614 = vmatpush1.msra.mxu0 0.0
        %1615 = vmatprep.subr.mxu0 0.0
        %1616 = vmatpush1.msra.mxu0 0.0
        %1617 = vmatprep.subr.mxu0 0.0
        %1618 = vmatpush1.msra.mxu0 0.0
        %1619 = vmatprep.subr.mxu0 0.0
        %1620 = vmatpush1.msra.mxu0 0.0
        %1621 = vmatprep.subr.mxu0 0.0
        %1622 = vmatpush1.msra.mxu0 0.0
        %1623 = vmatprep.subr.mxu0 0.0
        %1624 = vmatpush1.msra.mxu0 0.0
        %1625 = vmatprep.subr.mxu0 0.0
        %1626 = vmatpush1.msra.mxu0 0.0
        %1627 = vmatprep.subr.mxu0 0.0
        %1628 = vmatpush1.msra.mxu0 0.0
        %1629 = vmatprep.subr.mxu0 0.0
        %1630 = vmatpush1.msra.mxu0 0.0
        %1631 = vmatprep.mubr.f32.mxu0 0.0
        %1632 = vmatmul.mubr.f32.gmra.mrb[0].mxu0 %v1031
        %v1633 = vpop.f32.mrb[0].mxu0
        %v1634 = vadd.f32 %v1352, %v1633
        %v1635 = vpop.f32.mrb[0].mxu0
        %1636 = vdwg.mxu0
        %v1637 = vld [vmem:[%s14] sm:$0xff]
        %v1638 = vld [vmem:[%s14 + $0x8] sm:$0xff]
        %v1639 = vld [vmem:[%s14 + $0x10] sm:$0xff]
        %v1640 = vld [vmem:[%s14 + $0x18] sm:$0xff]
        %v1641 = vld [vmem:[%s14 + $0x20] sm:$0xff]
        %v1642 = vld [vmem:[%s14 + $0x28] sm:$0xff]
        %v1643 = vld [vmem:[%s14 + $0x30] sm:$0xff]
        %v1644 = vld [vmem:[%s14 + $0x38] sm:$0xff]
        %v1645 = vld [vmem:[%s14 + $0x40] sm:$0xff]
        %v1646 = vld [vmem:[%s14 + $0x48] sm:$0xff]
        %v1647 = vld [vmem:[%s14 + $0x50] sm:$0xff]
        %v1648 = vld [vmem:[%s14 + $0x58] sm:$0xff]
        %v1649 = vld [vmem:[%s14 + $0x60] sm:$0xff]
        %v1650 = vld [vmem:[%s14 + $0x68] sm:$0xff]
        %v1651 = vld [vmem:[%s14 + $0x70] sm:$0xff]
        %v1652 = vld [vmem:[%s14 + $0x78] sm:$0xff]
        %v1653 = vld [vmem:[%s15] sm:$0x1]
        %v1654 = vld [vmem:[%s15 + $0x1] sm:$0x1]
        %v1655 = vld [vmem:[%s15 + $0x2] sm:$0x1]
        %v1656 = vld [vmem:[%s15 + $0x3] sm:$0x1]
        %v1661 = vlaneseq
        %v1662 = vshrl.u32 %v1661, 7
        %v1663 = vsub.s32 0, %v1662
        %v1664 = vrot.slane %v1653, %v1663
        %v1665 = vlaneseq
        %v1666 = vshrl.u32 %v1665, 7
        %v1667 = vsub.s32 0, %v1666
        %v1668 = vrot.slane %v1654, %v1667
        %v1669 = vlaneseq
        %v1670 = vshrl.u32 %v1669, 7
        %v1671 = vsub.s32 0, %v1670
        %v1672 = vrot.slane %v1655, %v1671
        %v1673 = vlaneseq
        %v1674 = vshrl.u32 %v1673, 7
        %v1675 = vsub.s32 0, %v1674
        %v1676 = vrot.slane %v1656, %v1675
        %1681 = vmatprep.subr.mxu0 0.0
        %1682 = vmatpush1.msra.mxu0 %v1637
        %1683 = vmatprep.subr.mxu0 0.0
        %1684 = vmatpush1.msra.mxu0 %v1638
        %1685 = vmatprep.subr.mxu0 0.0
        %1686 = vmatpush1.msra.mxu0 %v1639
        %1687 = vmatprep.subr.mxu0 0.0
        %1688 = vmatpush1.msra.mxu0 %v1640
        %1689 = vmatprep.subr.mxu0 0.0
        %1690 = vmatpush1.msra.mxu0 0.0
        %1691 = vmatprep.subr.mxu0 0.0
        %1692 = vmatpush1.msra.mxu0 0.0
        %1693 = vmatprep.subr.mxu0 0.0
        %1694 = vmatpush1.msra.mxu0 0.0
        %1695 = vmatprep.subr.mxu0 0.0
        %1696 = vmatpush1.msra.mxu0 0.0
        %1697 = vmatprep.subr.mxu0 0.0
        %1698 = vmatpush1.msra.mxu0 0.0
        %1699 = vmatprep.subr.mxu0 0.0
        %1700 = vmatpush1.msra.mxu0 0.0
        %1701 = vmatprep.subr.mxu0 0.0
        %1702 = vmatpush1.msra.mxu0 0.0
        %1703 = vmatprep.subr.mxu0 0.0
        %1704 = vmatpush1.msra.mxu0 0.0
        %1705 = vmatprep.subr.mxu0 0.0
        %1706 = vmatpush1.msra.mxu0 0.0
        %1707 = vmatprep.subr.mxu0 0.0
        %1708 = vmatpush1.msra.mxu0 0.0
        %1709 = vmatprep.subr.mxu0 0.0
        %1710 = vmatpush1.msra.mxu0 0.0
        %1711 = vmatprep.subr.mxu0 0.0
        %1712 = vmatpush1.msra.mxu0 0.0
        %1713 = vmatprep.subr.mxu0 0.0
        %1714 = vmatpush1.msra.mxu0 0.0
        %1715 = vmatprep.subr.mxu0 0.0
        %1716 = vmatpush1.msra.mxu0 0.0
        %1717 = vmatprep.subr.mxu0 0.0
        %1718 = vmatpush1.msra.mxu0 0.0
        %1719 = vmatprep.subr.mxu0 0.0
        %1720 = vmatpush1.msra.mxu0 0.0
        %1721 = vmatprep.subr.mxu0 0.0
        %1722 = vmatpush1.msra.mxu0 0.0
        %1723 = vmatprep.subr.mxu0 0.0
        %1724 = vmatpush1.msra.mxu0 0.0
        %1725 = vmatprep.subr.mxu0 0.0
        %1726 = vmatpush1.msra.mxu0 0.0
        %1727 = vmatprep.subr.mxu0 0.0
        %1728 = vmatpush1.msra.mxu0 0.0
        %1729 = vmatprep.subr.mxu0 0.0
        %1730 = vmatpush1.msra.mxu0 0.0
        %1731 = vmatprep.subr.mxu0 0.0
        %1732 = vmatpush1.msra.mxu0 0.0
        %1733 = vmatprep.subr.mxu0 0.0
        %1734 = vmatpush1.msra.mxu0 0.0
        %1735 = vmatprep.subr.mxu0 0.0
        %1736 = vmatpush1.msra.mxu0 0.0
        %1737 = vmatprep.subr.mxu0 0.0
        %1738 = vmatpush1.msra.mxu0 0.0
        %1739 = vmatprep.subr.mxu0 0.0
        %1740 = vmatpush1.msra.mxu0 0.0
        %1741 = vmatprep.subr.mxu0 0.0
        %1742 = vmatpush1.msra.mxu0 0.0
        %1743 = vmatprep.subr.mxu0 0.0
        %1744 = vmatpush1.msra.mxu0 0.0
        %1745 = vmatprep.mubr.f32.mxu0 0.0
        %1746 = vmatmul.mubr.f32.gmra.mrb[0].mxu0 %v1031
        %v1747 = vpop.f32.mrb[0].mxu0
        %v1748 = vadd.f32 %v1664, %v1747
        %v1749 = vpop.f32.mrb[0].mxu0
        %1750 = vdwg.mxu0
        %1751 = vmatprep.subr.mxu0 0.0
        %1752 = vmatpush1.msra.mxu0 %v1641
        %1753 = vmatprep.subr.mxu0 0.0
        %1754 = vmatpush1.msra.mxu0 %v1642
        %1755 = vmatprep.subr.mxu0 0.0
        %1756 = vmatpush1.msra.mxu0 %v1643
        %1757 = vmatprep.subr.mxu0 0.0
        %1758 = vmatpush1.msra.mxu0 %v1644
        %1759 = vmatprep.subr.mxu0 0.0
        %1760 = vmatpush1.msra.mxu0 0.0
        %1761 = vmatprep.subr.mxu0 0.0
        %1762 = vmatpush1.msra.mxu0 0.0
        %1763 = vmatprep.subr.mxu0 0.0
        %1764 = vmatpush1.msra.mxu0 0.0
        %1765 = vmatprep.subr.mxu0 0.0
        %1766 = vmatpush1.msra.mxu0 0.0
        %1767 = vmatprep.subr.mxu0 0.0
        %1768 = vmatpush1.msra.mxu0 0.0
        %1769 = vmatprep.subr.mxu0 0.0
        %1770 = vmatpush1.msra.mxu0 0.0
        %1771 = vmatprep.subr.mxu0 0.0
        %1772 = vmatpush1.msra.mxu0 0.0
        %1773 = vmatprep.subr.mxu0 0.0
        %1774 = vmatpush1.msra.mxu0 0.0
        %1775 = vmatprep.subr.mxu0 0.0
        %1776 = vmatpush1.msra.mxu0 0.0
        %1777 = vmatprep.subr.mxu0 0.0
        %1778 = vmatpush1.msra.mxu0 0.0
        %1779 = vmatprep.subr.mxu0 0.0
        %1780 = vmatpush1.msra.mxu0 0.0
        %1781 = vmatprep.subr.mxu0 0.0
        %1782 = vmatpush1.msra.mxu0 0.0
        %1783 = vmatprep.subr.mxu0 0.0
        %1784 = vmatpush1.msra.mxu0 0.0
        %1785 = vmatprep.subr.mxu0 0.0
        %1786 = vmatpush1.msra.mxu0 0.0
        %1787 = vmatprep.subr.mxu0 0.0
        %1788 = vmatpush1.msra.mxu0 0.0
        %1789 = vmatprep.subr.mxu0 0.0
        %1790 = vmatpush1.msra.mxu0 0.0
        %1791 = vmatprep.subr.mxu0 0.0
        %1792 = vmatpush1.msra.mxu0 0.0
        %1793 = vmatprep.subr.mxu0 0.0
        %1794 = vmatpush1.msra.mxu0 0.0
        %1795 = vmatprep.subr.mxu0 0.0
        %1796 = vmatpush1.msra.mxu0 0.0
        %1797 = vmatprep.subr.mxu0 0.0
        %1798 = vmatpush1.msra.mxu0 0.0
        %1799 = vmatprep.subr.mxu0 0.0
        %1800 = vmatpush1.msra.mxu0 0.0
        %1801 = vmatprep.subr.mxu0 0.0
        %1802 = vmatpush1.msra.mxu0 0.0
        %1803 = vmatprep.subr.mxu0 0.0
        %1804 = vmatpush1.msra.mxu0 0.0
        %1805 = vmatprep.subr.mxu0 0.0
        %1806 = vmatpush1.msra.mxu0 0.0
        %1807 = vmatprep.subr.mxu0 0.0
        %1808 = vmatpush1.msra.mxu0 0.0
        %1809 = vmatprep.subr.mxu0 0.0
        %1810 = vmatpush1.msra.mxu0 0.0
        %1811 = vmatprep.subr.mxu0 0.0
        %1812 = vmatpush1.msra.mxu0 0.0
        %1813 = vmatprep.subr.mxu0 0.0
        %1814 = vmatpush1.msra.mxu0 0.0
        %1815 = vmatprep.mubr.f32.mxu0 0.0
        %1816 = vmatmul.mubr.f32.gmra.mrb[0].mxu0 %v1031
        %v1817 = vpop.f32.mrb[0].mxu0
        %v1818 = vadd.f32 %v1668, %v1817
        %v1819 = vpop.f32.mrb[0].mxu0
        %1820 = vdwg.mxu0
        %1821 = vmatprep.subr.mxu0 0.0
        %1822 = vmatpush1.msra.mxu0 %v1645
        %1823 = vmatprep.subr.mxu0 0.0
        %1824 = vmatpush1.msra.mxu0 %v1646
        %1825 = vmatprep.subr.mxu0 0.0
        %1826 = vmatpush1.msra.mxu0 %v1647
        %1827 = vmatprep.subr.mxu0 0.0
        %1828 = vmatpush1.msra.mxu0 %v1648
        %1829 = vmatprep.subr.mxu0 0.0
        %1830 = vmatpush1.msra.mxu0 0.0
        %1831 = vmatprep.subr.mxu0 0.0
        %1832 = vmatpush1.msra.mxu0 0.0
        %1833 = vmatprep.subr.mxu0 0.0
        %1834 = vmatpush1.msra.mxu0 0.0
        %1835 = vmatprep.subr.mxu0 0.0
        %1836 = vmatpush1.msra.mxu0 0.0
        %1837 = vmatprep.subr.mxu0 0.0
        %1838 = vmatpush1.msra.mxu0 0.0
        %1839 = vmatprep.subr.mxu0 0.0
        %1840 = vmatpush1.msra.mxu0 0.0
        %1841 = vmatprep.subr.mxu0 0.0
        %1842 = vmatpush1.msra.mxu0 0.0
        %1843 = vmatprep.subr.mxu0 0.0
        %1844 = vmatpush1.msra.mxu0 0.0
        %1845 = vmatprep.subr.mxu0 0.0
        %1846 = vmatpush1.msra.mxu0 0.0
        %1847 = vmatprep.subr.mxu0 0.0
        %1848 = vmatpush1.msra.mxu0 0.0
        %1849 = vmatprep.subr.mxu0 0.0
        %1850 = vmatpush1.msra.mxu0 0.0
        %1851 = vmatprep.subr.mxu0 0.0
        %1852 = vmatpush1.msra.mxu0 0.0
        %1853 = vmatprep.subr.mxu0 0.0
        %1854 = vmatpush1.msra.mxu0 0.0
        %1855 = vmatprep.subr.mxu0 0.0
        %1856 = vmatpush1.msra.mxu0 0.0
        %1857 = vmatprep.subr.mxu0 0.0
        %1858 = vmatpush1.msra.mxu0 0.0
        %1859 = vmatprep.subr.mxu0 0.0
        %1860 = vmatpush1.msra.mxu0 0.0
        %1861 = vmatprep.subr.mxu0 0.0
        %1862 = vmatpush1.msra.mxu0 0.0
        %1863 = vmatprep.subr.mxu0 0.0
        %1864 = vmatpush1.msra.mxu0 0.0
        %1865 = vmatprep.subr.mxu0 0.0
        %1866 = vmatpush1.msra.mxu0 0.0
        %1867 = vmatprep.subr.mxu0 0.0
        %1868 = vmatpush1.msra.mxu0 0.0
        %1869 = vmatprep.subr.mxu0 0.0
        %1870 = vmatpush1.msra.mxu0 0.0
        %1871 = vmatprep.subr.mxu0 0.0
        %1872 = vmatpush1.msra.mxu0 0.0
        %1873 = vmatprep.subr.mxu0 0.0
        %1874 = vmatpush1.msra.mxu0 0.0
        %1875 = vmatprep.subr.mxu0 0.0
        %1876 = vmatpush1.msra.mxu0 0.0
        %1877 = vmatprep.subr.mxu0 0.0
        %1878 = vmatpush1.msra.mxu0 0.0
        %1879 = vmatprep.subr.mxu0 0.0
        %1880 = vmatpush1.msra.mxu0 0.0
        %1881 = vmatprep.subr.mxu0 0.0
        %1882 = vmatpush1.msra.mxu0 0.0
        %1883 = vmatprep.subr.mxu0 0.0
        %1884 = vmatpush1.msra.mxu0 0.0
        %1885 = vmatprep.mubr.f32.mxu0 0.0
        %1886 = vmatmul.mubr.f32.gmra.mrb[0].mxu0 %v1031
        %v1887 = vpop.f32.mrb[0].mxu0
        %v1888 = vadd.f32 %v1672, %v1887
        %v1889 = vpop.f32.mrb[0].mxu0
        %1890 = vdwg.mxu0
        %1891 = vmatprep.subr.mxu0 0.0
        %1892 = vmatpush1.msra.mxu0 %v1649
        %1893 = vmatprep.subr.mxu0 0.0
        %1894 = vmatpush1.msra.mxu0 %v1650
        %1895 = vmatprep.subr.mxu0 0.0
        %1896 = vmatpush1.msra.mxu0 %v1651
        %1897 = vmatprep.subr.mxu0 0.0
        %1898 = vmatpush1.msra.mxu0 %v1652
        %1899 = vmatprep.subr.mxu0 0.0
        %1900 = vmatpush1.msra.mxu0 0.0
        %1901 = vmatprep.subr.mxu0 0.0
        %1902 = vmatpush1.msra.mxu0 0.0
        %1903 = vmatprep.subr.mxu0 0.0
        %1904 = vmatpush1.msra.mxu0 0.0
        %1905 = vmatprep.subr.mxu0 0.0
        %1906 = vmatpush1.msra.mxu0 0.0
        %1907 = vmatprep.subr.mxu0 0.0
        %1908 = vmatpush1.msra.mxu0 0.0
        %1909 = vmatprep.subr.mxu0 0.0
        %1910 = vmatpush1.msra.mxu0 0.0
        %1911 = vmatprep.subr.mxu0 0.0
        %1912 = vmatpush1.msra.mxu0 0.0
        %1913 = vmatprep.subr.mxu0 0.0
        %1914 = vmatpush1.msra.mxu0 0.0
        %1915 = vmatprep.subr.mxu0 0.0
        %1916 = vmatpush1.msra.mxu0 0.0
        %1917 = vmatprep.subr.mxu0 0.0
        %1918 = vmatpush1.msra.mxu0 0.0
        %1919 = vmatprep.subr.mxu0 0.0
        %1920 = vmatpush1.msra.mxu0 0.0
        %1921 = vmatprep.subr.mxu0 0.0
        %1922 = vmatpush1.msra.mxu0 0.0
        %1923 = vmatprep.subr.mxu0 0.0
        %1924 = vmatpush1.msra.mxu0 0.0
        %1925 = vmatprep.subr.mxu0 0.0
        %1926 = vmatpush1.msra.mxu0 0.0
        %1927 = vmatprep.subr.mxu0 0.0
        %1928 = vmatpush1.msra.mxu0 0.0
        %1929 = vmatprep.subr.mxu0 0.0
        %1930 = vmatpush1.msra.mxu0 0.0
        %1931 = vmatprep.subr.mxu0 0.0
        %1932 = vmatpush1.msra.mxu0 0.0
        %1933 = vmatprep.subr.mxu0 0.0
        %1934 = vmatpush1.msra.mxu0 0.0
        %1935 = vmatprep.subr.mxu0 0.0
        %1936 = vmatpush1.msra.mxu0 0.0
        %1937 = vmatprep.subr.mxu0 0.0
        %1938 = vmatpush1.msra.mxu0 0.0
        %1939 = vmatprep.subr.mxu0 0.0
        %1940 = vmatpush1.msra.mxu0 0.0
        %1941 = vmatprep.subr.mxu0 0.0
        %1942 = vmatpush1.msra.mxu0 0.0
        %1943 = vmatprep.subr.mxu0 0.0
        %1944 = vmatpush1.msra.mxu0 0.0
        %1945 = vmatprep.subr.mxu0 0.0
        %1946 = vmatpush1.msra.mxu0 0.0
        %1947 = vmatprep.subr.mxu0 0.0
        %1948 = vmatpush1.msra.mxu0 0.0
        %1949 = vmatprep.subr.mxu0 0.0
        %1950 = vmatpush1.msra.mxu0 0.0
        %1951 = vmatprep.subr.mxu0 0.0
        %1952 = vmatpush1.msra.mxu0 0.0
        %1953 = vmatprep.subr.mxu0 0.0
        %1954 = vmatpush1.msra.mxu0 0.0
        %1955 = vmatprep.mubr.f32.mxu0 0.0
        %1956 = vmatmul.mubr.f32.gmra.mrb[0].mxu0 %v1031
        %v1957 = vpop.f32.mrb[0].mxu0
        %v1958 = vadd.f32 %v1676, %v1957
        %v1959 = vpop.f32.mrb[0].mxu0
        %1960 = vdwg.mxu0
        %vm1961 = vcmask 64512
        %v1963 = vsel %vm1961, %v1100, 0
        %v1966 = vsel %vm1961, %v1424, 0
        %1968 = vmatprep.subr.mxu0 0.0
        %1969 = vmatpush1.xpose.msra.mxu0 %v1966
        %1970 = vmatprep.subr.mxu0 0.0
        %1971 = vmatpush1.xpose.msra.mxu0 0.0
        %1972 = vmatprep.subr.mxu0 0.0
        %1973 = vmatpush1.xpose.msra.mxu0 0.0
        %1974 = vmatprep.subr.mxu0 0.0
        %1975 = vmatpush1.xpose.msra.mxu0 0.0
        %1976 = vmatprep.subr.mxu0 0.0
        %1977 = vmatpush1.xpose.msra.mxu0 0.0
        %1978 = vmatprep.subr.mxu0 0.0
        %1979 = vmatpush1.xpose.msra.mxu0 0.0
        %1980 = vmatprep.subr.mxu0 0.0
        %1981 = vmatpush1.xpose.msra.mxu0 0.0
        %1982 = vmatprep.subr.mxu0 0.0
        %1983 = vmatpush1.xpose.msra.mxu0 0.0
        %1984 = vmatprep.subr.mxu0 0.0
        %1985 = vmatpush1.xpose.msra.mxu0 0.0
        %1986 = vmatprep.subr.mxu0 0.0
        %1987 = vmatpush1.xpose.msra.mxu0 0.0
        %1988 = vmatprep.subr.mxu0 0.0
        %1989 = vmatpush1.xpose.msra.mxu0 0.0
        %1990 = vmatprep.subr.mxu0 0.0
        %1991 = vmatpush1.xpose.msra.mxu0 0.0
        %1992 = vmatprep.subr.mxu0 0.0
        %1993 = vmatpush1.xpose.msra.mxu0 0.0
        %1994 = vmatprep.subr.mxu0 0.0
        %1995 = vmatpush1.xpose.msra.mxu0 0.0
        %1996 = vmatprep.subr.mxu0 0.0
        %1997 = vmatpush1.xpose.msra.mxu0 0.0
        %1998 = vmatprep.subr.mxu0 0.0
        %1999 = vmatpush1.xpose.msra.mxu0 0.0
        %2000 = vmatprep.subr.mxu0 0.0
        %2001 = vmatpush1.xpose.msra.mxu0 0.0
        %2002 = vmatprep.subr.mxu0 0.0
        %2003 = vmatpush1.xpose.msra.mxu0 0.0
        %2004 = vmatprep.subr.mxu0 0.0
        %2005 = vmatpush1.xpose.msra.mxu0 0.0
        %2006 = vmatprep.subr.mxu0 0.0
        %2007 = vmatpush1.xpose.msra.mxu0 0.0
        %2008 = vmatprep.subr.mxu0 0.0
        %2009 = vmatpush1.xpose.msra.mxu0 0.0
        %2010 = vmatprep.subr.mxu0 0.0
        %2011 = vmatpush1.xpose.msra.mxu0 0.0
        %2012 = vmatprep.subr.mxu0 0.0
        %2013 = vmatpush1.xpose.msra.mxu0 0.0
        %2014 = vmatprep.subr.mxu0 0.0
        %2015 = vmatpush1.xpose.msra.mxu0 0.0
        %2016 = vmatprep.subr.mxu0 0.0
        %2017 = vmatpush1.xpose.msra.mxu0 0.0
        %2018 = vmatprep.subr.mxu0 0.0
        %2019 = vmatpush1.xpose.msra.mxu0 0.0
        %2020 = vmatprep.subr.mxu0 0.0
        %2021 = vmatpush1.xpose.msra.mxu0 0.0
        %2022 = vmatprep.subr.mxu0 0.0
        %2023 = vmatpush1.xpose.msra.mxu0 0.0
        %2024 = vmatprep.subr.mxu0 0.0
        %2025 = vmatpush1.xpose.msra.mxu0 0.0
        %2026 = vmatprep.subr.mxu0 0.0
        %2027 = vmatpush1.xpose.msra.mxu0 0.0
        %2028 = vmatprep.subr.mxu0 0.0
        %2029 = vmatpush1.xpose.msra.mxu0 0.0
        %2030 = vmatprep.subr.mxu0 0.0
        %2031 = vmatpush1.xpose.msra.mxu0 0.0
        %2032 = vmatprep.mubr.f32.mxu0 0.0
        %2033 = vmatmul.mubr.f32.gmra.mrb[0].mxu0 %v1963
        %v2034 = vpop.f32.mrb[0].mxu0
        %v2035 = vadd.f32 %v954, %v2034
        %v2036 = vpop.f32.mrb[0].mxu0
        %2037 = vdwg.mxu0
        %v2039 = vsel %vm1961, %v1170, 0
        %v2042 = vsel %vm1961, %v1494, 0
        %2044 = vmatprep.subr.mxu0 0.0
        %2045 = vmatpush1.xpose.msra.mxu0 %v2042
        %2046 = vmatprep.subr.mxu0 0.0
        %2047 = vmatpush1.xpose.msra.mxu0 0.0
        %2048 = vmatprep.subr.mxu0 0.0
        %2049 = vmatpush1.xpose.msra.mxu0 0.0
        %2050 = vmatprep.subr.mxu0 0.0
        %2051 = vmatpush1.xpose.msra.mxu0 0.0
        %2052 = vmatprep.subr.mxu0 0.0
        %2053 = vmatpush1.xpose.msra.mxu0 0.0
        %2054 = vmatprep.subr.mxu0 0.0
        %2055 = vmatpush1.xpose.msra.mxu0 0.0
        %2056 = vmatprep.subr.mxu0 0.0
        %2057 = vmatpush1.xpose.msra.mxu0 0.0
        %2058 = vmatprep.subr.mxu0 0.0
        %2059 = vmatpush1.xpose.msra.mxu0 0.0
        %2060 = vmatprep.subr.mxu0 0.0
        %2061 = vmatpush1.xpose.msra.mxu0 0.0
        %2062 = vmatprep.subr.mxu0 0.0
        %2063 = vmatpush1.xpose.msra.mxu0 0.0
        %2064 = vmatprep.subr.mxu0 0.0
        %2065 = vmatpush1.xpose.msra.mxu0 0.0
        %2066 = vmatprep.subr.mxu0 0.0
        %2067 = vmatpush1.xpose.msra.mxu0 0.0
        %2068 = vmatprep.subr.mxu0 0.0
        %2069 = vmatpush1.xpose.msra.mxu0 0.0
        %2070 = vmatprep.subr.mxu0 0.0
        %2071 = vmatpush1.xpose.msra.mxu0 0.0
        %2072 = vmatprep.subr.mxu0 0.0
        %2073 = vmatpush1.xpose.msra.mxu0 0.0
        %2074 = vmatprep.subr.mxu0 0.0
        %2075 = vmatpush1.xpose.msra.mxu0 0.0
        %2076 = vmatprep.subr.mxu0 0.0
        %2077 = vmatpush1.xpose.msra.mxu0 0.0
        %2078 = vmatprep.subr.mxu0 0.0
        %2079 = vmatpush1.xpose.msra.mxu0 0.0
        %2080 = vmatprep.subr.mxu0 0.0
        %2081 = vmatpush1.xpose.msra.mxu0 0.0
        %2082 = vmatprep.subr.mxu0 0.0
        %2083 = vmatpush1.xpose.msra.mxu0 0.0
        %2084 = vmatprep.subr.mxu0 0.0
        %2085 = vmatpush1.xpose.msra.mxu0 0.0
        %2086 = vmatprep.subr.mxu0 0.0
        %2087 = vmatpush1.xpose.msra.mxu0 0.0
        %2088 = vmatprep.subr.mxu0 0.0
        %2089 = vmatpush1.xpose.msra.mxu0 0.0
        %2090 = vmatprep.subr.mxu0 0.0
        %2091 = vmatpush1.xpose.msra.mxu0 0.0
        %2092 = vmatprep.subr.mxu0 0.0
        %2093 = vmatpush1.xpose.msra.mxu0 0.0
        %2094 = vmatprep.subr.mxu0 0.0
        %2095 = vmatpush1.xpose.msra.mxu0 0.0
        %2096 = vmatprep.subr.mxu0 0.0
        %2097 = vmatpush1.xpose.msra.mxu0 0.0
        %2098 = vmatprep.subr.mxu0 0.0
        %2099 = vmatpush1.xpose.msra.mxu0 0.0
        %2100 = vmatprep.subr.mxu0 0.0
        %2101 = vmatpush1.xpose.msra.mxu0 0.0
        %2102 = vmatprep.subr.mxu0 0.0
        %2103 = vmatpush1.xpose.msra.mxu0 0.0
        %2104 = vmatprep.subr.mxu0 0.0
        %2105 = vmatpush1.xpose.msra.mxu0 0.0
        %2106 = vmatprep.subr.mxu0 0.0
        %2107 = vmatpush1.xpose.msra.mxu0 0.0
        %2108 = vmatprep.mubr.f32.mxu0 0.0
        %2109 = vmatmul.mubr.f32.gmra.mrb[0].mxu0 %v2039
        %v2110 = vpop.f32.mrb[0].mxu0
        %v2111 = vadd.f32 %v954, %v2110
        %v2112 = vpop.f32.mrb[0].mxu0
        %2113 = vdwg.mxu0
        %v2115 = vsel %vm1961, %v1240, 0
        %v2118 = vsel %vm1961, %v1564, 0
        %2120 = vmatprep.subr.mxu0 0.0
        %2121 = vmatpush1.xpose.msra.mxu0 %v2118
        %2122 = vmatprep.subr.mxu0 0.0
        %2123 = vmatpush1.xpose.msra.mxu0 0.0
        %2124 = vmatprep.subr.mxu0 0.0
        %2125 = vmatpush1.xpose.msra.mxu0 0.0
        %2126 = vmatprep.subr.mxu0 0.0
        %2127 = vmatpush1.xpose.msra.mxu0 0.0
        %2128 = vmatprep.subr.mxu0 0.0
        %2129 = vmatpush1.xpose.msra.mxu0 0.0
        %2130 = vmatprep.subr.mxu0 0.0
        %2131 = vmatpush1.xpose.msra.mxu0 0.0
        %2132 = vmatprep.subr.mxu0 0.0
        %2133 = vmatpush1.xpose.msra.mxu0 0.0
        %2134 = vmatprep.subr.mxu0 0.0
        %2135 = vmatpush1.xpose.msra.mxu0 0.0
        %2136 = vmatprep.subr.mxu0 0.0
        %2137 = vmatpush1.xpose.msra.mxu0 0.0
        %2138 = vmatprep.subr.mxu0 0.0
        %2139 = vmatpush1.xpose.msra.mxu0 0.0
        %2140 = vmatprep.subr.mxu0 0.0
        %2141 = vmatpush1.xpose.msra.mxu0 0.0
        %2142 = vmatprep.subr.mxu0 0.0
        %2143 = vmatpush1.xpose.msra.mxu0 0.0
        %2144 = vmatprep.subr.mxu0 0.0
        %2145 = vmatpush1.xpose.msra.mxu0 0.0
        %2146 = vmatprep.subr.mxu0 0.0
        %2147 = vmatpush1.xpose.msra.mxu0 0.0
        %2148 = vmatprep.subr.mxu0 0.0
        %2149 = vmatpush1.xpose.msra.mxu0 0.0
        %2150 = vmatprep.subr.mxu0 0.0
        %2151 = vmatpush1.xpose.msra.mxu0 0.0
        %2152 = vmatprep.subr.mxu0 0.0
        %2153 = vmatpush1.xpose.msra.mxu0 0.0
        %2154 = vmatprep.subr.mxu0 0.0
        %2155 = vmatpush1.xpose.msra.mxu0 0.0
        %2156 = vmatprep.subr.mxu0 0.0
        %2157 = vmatpush1.xpose.msra.mxu0 0.0
        %2158 = vmatprep.subr.mxu0 0.0
        %2159 = vmatpush1.xpose.msra.mxu0 0.0
        %2160 = vmatprep.subr.mxu0 0.0
        %2161 = vmatpush1.xpose.msra.mxu0 0.0
        %2162 = vmatprep.subr.mxu0 0.0
        %2163 = vmatpush1.xpose.msra.mxu0 0.0
        %2164 = vmatprep.subr.mxu0 0.0
        %2165 = vmatpush1.xpose.msra.mxu0 0.0
        %2166 = vmatprep.subr.mxu0 0.0
        %2167 = vmatpush1.xpose.msra.mxu0 0.0
        %2168 = vmatprep.subr.mxu0 0.0
        %2169 = vmatpush1.xpose.msra.mxu0 0.0
        %2170 = vmatprep.subr.mxu0 0.0
        %2171 = vmatpush1.xpose.msra.mxu0 0.0
        %2172 = vmatprep.subr.mxu0 0.0
        %2173 = vmatpush1.xpose.msra.mxu0 0.0
        %2174 = vmatprep.subr.mxu0 0.0
        %2175 = vmatpush1.xpose.msra.mxu0 0.0
        %2176 = vmatprep.subr.mxu0 0.0
        %2177 = vmatpush1.xpose.msra.mxu0 0.0
        %2178 = vmatprep.subr.mxu0 0.0
        %2179 = vmatpush1.xpose.msra.mxu0 0.0
        %2180 = vmatprep.subr.mxu0 0.0
        %2181 = vmatpush1.xpose.msra.mxu0 0.0
        %2182 = vmatprep.subr.mxu0 0.0
        %2183 = vmatpush1.xpose.msra.mxu0 0.0
        %2184 = vmatprep.mubr.f32.mxu0 0.0
        %2185 = vmatmul.mubr.f32.gmra.mrb[0].mxu0 %v2115
        %v2186 = vpop.f32.mrb[0].mxu0
        %v2187 = vadd.f32 %v954, %v2186
        %v2188 = vpop.f32.mrb[0].mxu0
        %2189 = vdwg.mxu0
        %v2191 = vsel %vm1961, %v1310, 0
        %v2194 = vsel %vm1961, %v1634, 0
        %2196 = vmatprep.subr.mxu0 0.0
        %2197 = vmatpush1.xpose.msra.mxu0 %v2194
        %2198 = vmatprep.subr.mxu0 0.0
        %2199 = vmatpush1.xpose.msra.mxu0 0.0
        %2200 = vmatprep.subr.mxu0 0.0
        %2201 = vmatpush1.xpose.msra.mxu0 0.0
        %2202 = vmatprep.subr.mxu0 0.0
        %2203 = vmatpush1.xpose.msra.mxu0 0.0
        %2204 = vmatprep.subr.mxu0 0.0
        %2205 = vmatpush1.xpose.msra.mxu0 0.0
        %2206 = vmatprep.subr.mxu0 0.0
        %2207 = vmatpush1.xpose.msra.mxu0 0.0
        %2208 = vmatprep.subr.mxu0 0.0
        %2209 = vmatpush1.xpose.msra.mxu0 0.0
        %2210 = vmatprep.subr.mxu0 0.0
        %2211 = vmatpush1.xpose.msra.mxu0 0.0
        %2212 = vmatprep.subr.mxu0 0.0
        %2213 = vmatpush1.xpose.msra.mxu0 0.0
        %2214 = vmatprep.subr.mxu0 0.0
        %2215 = vmatpush1.xpose.msra.mxu0 0.0
        %2216 = vmatprep.subr.mxu0 0.0
        %2217 = vmatpush1.xpose.msra.mxu0 0.0
        %2218 = vmatprep.subr.mxu0 0.0
        %2219 = vmatpush1.xpose.msra.mxu0 0.0
        %2220 = vmatprep.subr.mxu0 0.0
        %2221 = vmatpush1.xpose.msra.mxu0 0.0
        %2222 = vmatprep.subr.mxu0 0.0
        %2223 = vmatpush1.xpose.msra.mxu0 0.0
        %2224 = vmatprep.subr.mxu0 0.0
        %2225 = vmatpush1.xpose.msra.mxu0 0.0
        %2226 = vmatprep.subr.mxu0 0.0
        %2227 = vmatpush1.xpose.msra.mxu0 0.0
        %2228 = vmatprep.subr.mxu0 0.0
        %2229 = vmatpush1.xpose.msra.mxu0 0.0
        %2230 = vmatprep.subr.mxu0 0.0
        %2231 = vmatpush1.xpose.msra.mxu0 0.0
        %2232 = vmatprep.subr.mxu0 0.0
        %2233 = vmatpush1.xpose.msra.mxu0 0.0
        %2234 = vmatprep.subr.mxu0 0.0
        %2235 = vmatpush1.xpose.msra.mxu0 0.0
        %2236 = vmatprep.subr.mxu0 0.0
        %2237 = vmatpush1.xpose.msra.mxu0 0.0
        %2238 = vmatprep.subr.mxu0 0.0
        %2239 = vmatpush1.xpose.msra.mxu0 0.0
        %2240 = vmatprep.subr.mxu0 0.0
        %2241 = vmatpush1.xpose.msra.mxu0 0.0
        %2242 = vmatprep.subr.mxu0 0.0
        %2243 = vmatpush1.xpose.msra.mxu0 0.0
        %2244 = vmatprep.subr.mxu0 0.0
        %2245 = vmatpush1.xpose.msra.mxu0 0.0
        %2246 = vmatprep.subr.mxu0 0.0
        %2247 = vmatpush1.xpose.msra.mxu0 0.0
        %2248 = vmatprep.subr.mxu0 0.0
        %2249 = vmatpush1.xpose.msra.mxu0 0.0
        %2250 = vmatprep.subr.mxu0 0.0
        %2251 = vmatpush1.xpose.msra.mxu0 0.0
        %2252 = vmatprep.subr.mxu0 0.0
        %2253 = vmatpush1.xpose.msra.mxu0 0.0
        %2254 = vmatprep.subr.mxu0 0.0
        %2255 = vmatpush1.xpose.msra.mxu0 0.0
        %2256 = vmatprep.subr.mxu0 0.0
        %2257 = vmatpush1.xpose.msra.mxu0 0.0
        %2258 = vmatprep.subr.mxu0 0.0
        %2259 = vmatpush1.xpose.msra.mxu0 0.0
        %2260 = vmatprep.mubr.f32.mxu0 0.0
        %2261 = vmatmul.mubr.f32.gmra.mrb[0].mxu0 %v2191
        %v2262 = vpop.f32.mrb[0].mxu0
        %v2263 = vadd.f32 %v954, %v2262
        %v2264 = vpop.f32.mrb[0].mxu0
        %2265 = vdwg.mxu0
        %v2266 = vsel %vm1961, %v2035, -inf
        %2267 = vmax.xlane.f32.xlu0 %v2266
        %v2268 = vpop.xlane.xlu0 %2267
        %v2269 = vsel %vm1961, %v2111, -inf
        %2270 = vmax.xlane.f32.xlu0 %v2269
        %v2271 = vpop.xlane.xlu0 %2270
        %v2272 = vsel %vm1961, %v2187, -inf
        %2273 = vmax.xlane.f32.xlu0 %v2272
        %v2274 = vpop.xlane.xlu0 %2273
        %v2275 = vsel %vm1961, %v2263, -inf
        %2276 = vmax.xlane.f32.xlu0 %v2275
        %v2277 = vpop.xlane.xlu0 %2276
        %v2278 = vsub.f32 %v2035, %v2268
        %v2279 = vsub.f32 %v2111, %v2271
        %v2280 = vsub.f32 %v2187, %v2274
        %v2281 = vsub.f32 %v2263, %v2277
        %v2282 = vmul.f32 %v2278, 1.442695
        %v2283 = vpow.pop %v2282
        %v2284 = vmul.f32 %v2279, 1.442695
        %v2285 = vpow.pop %v2284
        %v2286 = vmul.f32 %v2280, 1.442695
        %v2287 = vpow.pop %v2286
        %v2288 = vmul.f32 %v2281, 1.442695
        %v2289 = vpow.pop %v2288
        %v2290 = vsel %vm1961, %v2283, 0.0
        %2291 = vadd.xlane.f32.xlu0 %v2290
        %v2292 = vpop.xlane.xlu0 %2291
        %v2293 = vsel %vm1961, %v2285, 0.0
        %2294 = vadd.xlane.f32.xlu0 %v2293
        %v2295 = vpop.xlane.xlu0 %2294
        %v2296 = vsel %vm1961, %v2287, 0.0
        %2297 = vadd.xlane.f32.xlu0 %v2296
        %v2298 = vpop.xlane.xlu0 %2297
        %v2299 = vsel %vm1961, %v2289, 0.0
        %2300 = vadd.xlane.f32.xlu0 %v2299
        %v2301 = vpop.xlane.xlu0 %2300
        %v2302 = vrcp.pop %v2292
        %v2303 = vrcp.pop %v2295
        %v2304 = vrcp.pop %v2298
        %v2305 = vrcp.pop %v2301
        %v2306 = vmul.f32 %v2283, %v2302
        %v2307 = vmul.f32 %v2285, %v2303
        %v2308 = vmul.f32 %v2287, %v2304
        %v2309 = vmul.f32 %v2289, %v2305
        %v2311 = vsel %vm1961, %v2306, 0
        %2313 = vmatprep.subr.mxu0 0.0
        %2314 = vmatpush1.msra.mxu0 %v1748
        %2315 = vmatprep.subr.mxu0 0.0
        %2316 = vmatpush1.msra.mxu0 0.0
        %2317 = vmatprep.subr.mxu0 0.0
        %2318 = vmatpush1.msra.mxu0 0.0
        %2319 = vmatprep.subr.mxu0 0.0
        %2320 = vmatpush1.msra.mxu0 0.0
        %2321 = vmatprep.subr.mxu0 0.0
        %2322 = vmatpush1.msra.mxu0 0.0
        %2323 = vmatprep.subr.mxu0 0.0
        %2324 = vmatpush1.msra.mxu0 0.0
        %2325 = vmatprep.subr.mxu0 0.0
        %2326 = vmatpush1.msra.mxu0 0.0
        %2327 = vmatprep.subr.mxu0 0.0
        %2328 = vmatpush1.msra.mxu0 0.0
        %2329 = vmatprep.subr.mxu0 0.0
        %2330 = vmatpush1.msra.mxu0 0.0
        %2331 = vmatprep.subr.mxu0 0.0
        %2332 = vmatpush1.msra.mxu0 0.0
        %2333 = vmatprep.subr.mxu0 0.0
        %2334 = vmatpush1.msra.mxu0 0.0
        %2335 = vmatprep.subr.mxu0 0.0
        %2336 = vmatpush1.msra.mxu0 0.0
        %2337 = vmatprep.subr.mxu0 0.0
        %2338 = vmatpush1.msra.mxu0 0.0
        %2339 = vmatprep.subr.mxu0 0.0
        %2340 = vmatpush1.msra.mxu0 0.0
        %2341 = vmatprep.subr.mxu0 0.0
        %2342 = vmatpush1.msra.mxu0 0.0
        %2343 = vmatprep.subr.mxu0 0.0
        %2344 = vmatpush1.msra.mxu0 0.0
        %2345 = vmatprep.subr.mxu0 0.0
        %2346 = vmatpush1.msra.mxu0 0.0
        %2347 = vmatprep.subr.mxu0 0.0
        %2348 = vmatpush1.msra.mxu0 0.0
        %2349 = vmatprep.subr.mxu0 0.0
        %2350 = vmatpush1.msra.mxu0 0.0
        %2351 = vmatprep.subr.mxu0 0.0
        %2352 = vmatpush1.msra.mxu0 0.0
        %2353 = vmatprep.subr.mxu0 0.0
        %2354 = vmatpush1.msra.mxu0 0.0
        %2355 = vmatprep.subr.mxu0 0.0
        %2356 = vmatpush1.msra.mxu0 0.0
        %2357 = vmatprep.subr.mxu0 0.0
        %2358 = vmatpush1.msra.mxu0 0.0
        %2359 = vmatprep.subr.mxu0 0.0
        %2360 = vmatpush1.msra.mxu0 0.0
        %2361 = vmatprep.subr.mxu0 0.0
        %2362 = vmatpush1.msra.mxu0 0.0
        %2363 = vmatprep.subr.mxu0 0.0
        %2364 = vmatpush1.msra.mxu0 0.0
        %2365 = vmatprep.subr.mxu0 0.0
        %2366 = vmatpush1.msra.mxu0 0.0
        %2367 = vmatprep.subr.mxu0 0.0
        %2368 = vmatpush1.msra.mxu0 0.0
        %2369 = vmatprep.subr.mxu0 0.0
        %2370 = vmatpush1.msra.mxu0 0.0
        %2371 = vmatprep.subr.mxu0 0.0
        %2372 = vmatpush1.msra.mxu0 0.0
        %2373 = vmatprep.subr.mxu0 0.0
        %2374 = vmatpush1.msra.mxu0 0.0
        %2375 = vmatprep.subr.mxu0 0.0
        %2376 = vmatpush1.msra.mxu0 0.0
        %2377 = vmatprep.mubr.f32.mxu0 0.0
        %2378 = vmatmul.mubr.f32.gmra.mrb[0].mxu0 %v2311
        %v2379 = vpop.f32.mrb[0].mxu0
        %v2380 = vadd.f32 0.0, %v2379
        %v2381 = vpop.f32.mrb[0].mxu0
        %2382 = vdwg.mxu0
        %v2384 = vsel %vm1961, %v2307, 0
        %2386 = vmatprep.subr.mxu0 0.0
        %2387 = vmatpush1.msra.mxu0 %v1818
        %2388 = vmatprep.subr.mxu0 0.0
        %2389 = vmatpush1.msra.mxu0 0.0
        %2390 = vmatprep.subr.mxu0 0.0
        %2391 = vmatpush1.msra.mxu0 0.0
        %2392 = vmatprep.subr.mxu0 0.0
        %2393 = vmatpush1.msra.mxu0 0.0
        %2394 = vmatprep.subr.mxu0 0.0
        %2395 = vmatpush1.msra.mxu0 0.0
        %2396 = vmatprep.subr.mxu0 0.0
        %2397 = vmatpush1.msra.mxu0 0.0
        %2398 = vmatprep.subr.mxu0 0.0
        %2399 = vmatpush1.msra.mxu0 0.0
        %2400 = vmatprep.subr.mxu0 0.0
        %2401 = vmatpush1.msra.mxu0 0.0
        %2402 = vmatprep.subr.mxu0 0.0
        %2403 = vmatpush1.msra.mxu0 0.0
        %2404 = vmatprep.subr.mxu0 0.0
        %2405 = vmatpush1.msra.mxu0 0.0
        %2406 = vmatprep.subr.mxu0 0.0
        %2407 = vmatpush1.msra.mxu0 0.0
        %2408 = vmatprep.subr.mxu0 0.0
        %2409 = vmatpush1.msra.mxu0 0.0
        %2410 = vmatprep.subr.mxu0 0.0
        %2411 = vmatpush1.msra.mxu0 0.0
        %2412 = vmatprep.subr.mxu0 0.0
        %2413 = vmatpush1.msra.mxu0 0.0
        %2414 = vmatprep.subr.mxu0 0.0
        %2415 = vmatpush1.msra.mxu0 0.0
        %2416 = vmatprep.subr.mxu0 0.0
        %2417 = vmatpush1.msra.mxu0 0.0
        %2418 = vmatprep.subr.mxu0 0.0
        %2419 = vmatpush1.msra.mxu0 0.0
        %2420 = vmatprep.subr.mxu0 0.0
        %2421 = vmatpush1.msra.mxu0 0.0
        %2422 = vmatprep.subr.mxu0 0.0
        %2423 = vmatpush1.msra.mxu0 0.0
        %2424 = vmatprep.subr.mxu0 0.0
        %2425 = vmatpush1.msra.mxu0 0.0
        %2426 = vmatprep.subr.mxu0 0.0
        %2427 = vmatpush1.msra.mxu0 0.0
        %2428 = vmatprep.subr.mxu0 0.0
        %2429 = vmatpush1.msra.mxu0 0.0
        %2430 = vmatprep.subr.mxu0 0.0
        %2431 = vmatpush1.msra.mxu0 0.0
        %2432 = vmatprep.subr.mxu0 0.0
        %2433 = vmatpush1.msra.mxu0 0.0
        %2434 = vmatprep.subr.mxu0 0.0
        %2435 = vmatpush1.msra.mxu0 0.0
        %2436 = vmatprep.subr.mxu0 0.0
        %2437 = vmatpush1.msra.mxu0 0.0
        %2438 = vmatprep.subr.mxu0 0.0
        %2439 = vmatpush1.msra.mxu0 0.0
        %2440 = vmatprep.subr.mxu0 0.0
        %2441 = vmatpush1.msra.mxu0 0.0
        %2442 = vmatprep.subr.mxu0 0.0
        %2443 = vmatpush1.msra.mxu0 0.0
        %2444 = vmatprep.subr.mxu0 0.0
        %2445 = vmatpush1.msra.mxu0 0.0
        %2446 = vmatprep.subr.mxu0 0.0
        %2447 = vmatpush1.msra.mxu0 0.0
        %2448 = vmatprep.subr.mxu0 0.0
        %2449 = vmatpush1.msra.mxu0 0.0
        %2450 = vmatprep.mubr.f32.mxu0 0.0
        %2451 = vmatmul.mubr.f32.gmra.mrb[0].mxu0 %v2384
        %v2452 = vpop.f32.mrb[0].mxu0
        %v2453 = vadd.f32 0.0, %v2452
        %v2454 = vpop.f32.mrb[0].mxu0
        %2455 = vdwg.mxu0
        %v2457 = vsel %vm1961, %v2308, 0
        %2459 = vmatprep.subr.mxu0 0.0
        %2460 = vmatpush1.msra.mxu0 %v1888
        %2461 = vmatprep.subr.mxu0 0.0
        %2462 = vmatpush1.msra.mxu0 0.0
        %2463 = vmatprep.subr.mxu0 0.0
        %2464 = vmatpush1.msra.mxu0 0.0
        %2465 = vmatprep.subr.mxu0 0.0
        %2466 = vmatpush1.msra.mxu0 0.0
        %2467 = vmatprep.subr.mxu0 0.0
        %2468 = vmatpush1.msra.mxu0 0.0
        %2469 = vmatprep.subr.mxu0 0.0
        %2470 = vmatpush1.msra.mxu0 0.0
        %2471 = vmatprep.subr.mxu0 0.0
        %2472 = vmatpush1.msra.mxu0 0.0
        %2473 = vmatprep.subr.mxu0 0.0
        %2474 = vmatpush1.msra.mxu0 0.0
        %2475 = vmatprep.subr.mxu0 0.0
        %2476 = vmatpush1.msra.mxu0 0.0
        %2477 = vmatprep.subr.mxu0 0.0
        %2478 = vmatpush1.msra.mxu0 0.0
        %2479 = vmatprep.subr.mxu0 0.0
        %2480 = vmatpush1.msra.mxu0 0.0
        %2481 = vmatprep.subr.mxu0 0.0
        %2482 = vmatpush1.msra.mxu0 0.0
        %2483 = vmatprep.subr.mxu0 0.0
        %2484 = vmatpush1.msra.mxu0 0.0
        %2485 = vmatprep.subr.mxu0 0.0
        %2486 = vmatpush1.msra.mxu0 0.0
        %2487 = vmatprep.subr.mxu0 0.0
        %2488 = vmatpush1.msra.mxu0 0.0
        %2489 = vmatprep.subr.mxu0 0.0
        %2490 = vmatpush1.msra.mxu0 0.0
        %2491 = vmatprep.subr.mxu0 0.0
        %2492 = vmatpush1.msra.mxu0 0.0
        %2493 = vmatprep.subr.mxu0 0.0
        %2494 = vmatpush1.msra.mxu0 0.0
        %2495 = vmatprep.subr.mxu0 0.0
        %2496 = vmatpush1.msra.mxu0 0.0
        %2497 = vmatprep.subr.mxu0 0.0
        %2498 = vmatpush1.msra.mxu0 0.0
        %2499 = vmatprep.subr.mxu0 0.0
        %2500 = vmatpush1.msra.mxu0 0.0
        %2501 = vmatprep.subr.mxu0 0.0
        %2502 = vmatpush1.msra.mxu0 0.0
        %2503 = vmatprep.subr.mxu0 0.0
        %2504 = vmatpush1.msra.mxu0 0.0
        %2505 = vmatprep.subr.mxu0 0.0
        %2506 = vmatpush1.msra.mxu0 0.0
        %2507 = vmatprep.subr.mxu0 0.0
        %2508 = vmatpush1.msra.mxu0 0.0
        %2509 = vmatprep.subr.mxu0 0.0
        %2510 = vmatpush1.msra.mxu0 0.0
        %2511 = vmatprep.subr.mxu0 0.0
        %2512 = vmatpush1.msra.mxu0 0.0
        %2513 = vmatprep.subr.mxu0 0.0
        %2514 = vmatpush1.msra.mxu0 0.0
        %2515 = vmatprep.subr.mxu0 0.0
        %2516 = vmatpush1.msra.mxu0 0.0
        %2517 = vmatprep.subr.mxu0 0.0
        %2518 = vmatpush1.msra.mxu0 0.0
        %2519 = vmatprep.subr.mxu0 0.0
        %2520 = vmatpush1.msra.mxu0 0.0
        %2521 = vmatprep.subr.mxu0 0.0
        %2522 = vmatpush1.msra.mxu0 0.0
        %2523 = vmatprep.mubr.f32.mxu0 0.0
        %2524 = vmatmul.mubr.f32.gmra.mrb[0].mxu0 %v2457
        %v2525 = vpop.f32.mrb[0].mxu0
        %v2526 = vadd.f32 0.0, %v2525
        %v2527 = vpop.f32.mrb[0].mxu0
        %2528 = vdwg.mxu0
        %v2530 = vsel %vm1961, %v2309, 0
        %2532 = vmatprep.subr.mxu0 0.0
        %2533 = vmatpush1.msra.mxu0 %v1958
        %2534 = vmatprep.subr.mxu0 0.0
        %2535 = vmatpush1.msra.mxu0 0.0
        %2536 = vmatprep.subr.mxu0 0.0
        %2537 = vmatpush1.msra.mxu0 0.0
        %2538 = vmatprep.subr.mxu0 0.0
        %2539 = vmatpush1.msra.mxu0 0.0
        %2540 = vmatprep.subr.mxu0 0.0
        %2541 = vmatpush1.msra.mxu0 0.0
        %2542 = vmatprep.subr.mxu0 0.0
        %2543 = vmatpush1.msra.mxu0 0.0
        %2544 = vmatprep.subr.mxu0 0.0
        %2545 = vmatpush1.msra.mxu0 0.0
        %2546 = vmatprep.subr.mxu0 0.0
        %2547 = vmatpush1.msra.mxu0 0.0
        %2548 = vmatprep.subr.mxu0 0.0
        %2549 = vmatpush1.msra.mxu0 0.0
        %2550 = vmatprep.subr.mxu0 0.0
        %2551 = vmatpush1.msra.mxu0 0.0
        %2552 = vmatprep.subr.mxu0 0.0
        %2553 = vmatpush1.msra.mxu0 0.0
        %2554 = vmatprep.subr.mxu0 0.0
        %2555 = vmatpush1.msra.mxu0 0.0
        %2556 = vmatprep.subr.mxu0 0.0
        %2557 = vmatpush1.msra.mxu0 0.0
        %2558 = vmatprep.subr.mxu0 0.0
        %2559 = vmatpush1.msra.mxu0 0.0
        %2560 = vmatprep.subr.mxu0 0.0
        %2561 = vmatpush1.msra.mxu0 0.0
        %2562 = vmatprep.subr.mxu0 0.0
        %2563 = vmatpush1.msra.mxu0 0.0
        %2564 = vmatprep.subr.mxu0 0.0
        %2565 = vmatpush1.msra.mxu0 0.0
        %2566 = vmatprep.subr.mxu0 0.0
        %2567 = vmatpush1.msra.mxu0 0.0
        %2568 = vmatprep.subr.mxu0 0.0
        %2569 = vmatpush1.msra.mxu0 0.0
        %2570 = vmatprep.subr.mxu0 0.0
        %2571 = vmatpush1.msra.mxu0 0.0
        %2572 = vmatprep.subr.mxu0 0.0
        %2573 = vmatpush1.msra.mxu0 0.0
        %2574 = vmatprep.subr.mxu0 0.0
        %2575 = vmatpush1.msra.mxu0 0.0
        %2576 = vmatprep.subr.mxu0 0.0
        %2577 = vmatpush1.msra.mxu0 0.0
        %2578 = vmatprep.subr.mxu0 0.0
        %2579 = vmatpush1.msra.mxu0 0.0
        %2580 = vmatprep.subr.mxu0 0.0
        %2581 = vmatpush1.msra.mxu0 0.0
        %2582 = vmatprep.subr.mxu0 0.0
        %2583 = vmatpush1.msra.mxu0 0.0
        %2584 = vmatprep.subr.mxu0 0.0
        %2585 = vmatpush1.msra.mxu0 0.0
        %2586 = vmatprep.subr.mxu0 0.0
        %2587 = vmatpush1.msra.mxu0 0.0
        %2588 = vmatprep.subr.mxu0 0.0
        %2589 = vmatpush1.msra.mxu0 0.0
        %2590 = vmatprep.subr.mxu0 0.0
        %2591 = vmatpush1.msra.mxu0 0.0
        %2592 = vmatprep.subr.mxu0 0.0
        %2593 = vmatpush1.msra.mxu0 0.0
        %2594 = vmatprep.subr.mxu0 0.0
        %2595 = vmatpush1.msra.mxu0 0.0
        %2596 = vmatprep.mubr.f32.mxu0 0.0
        %2597 = vmatmul.mubr.f32.gmra.mrb[0].mxu0 %v2530
        %v2598 = vpop.f32.mrb[0].mxu0
        %v2599 = vadd.f32 0.0, %v2598
        %v2600 = vpop.f32.mrb[0].mxu0
        %2601 = vdwg.mxu0
        %v2602 = vld [vmem:[%s16] sm:$0xff]
        %v2603 = vld [vmem:[%s16 + $0x8] sm:$0xff]
        %v2604 = vld [vmem:[%s16 + $0x10] sm:$0xff]
        %v2605 = vld [vmem:[%s16 + $0x18] sm:$0xff]
        %v2607 = vsel %vm1961, %v2380, 0
        %2609 = vmatprep.subr.mxu0 0.0
        %2610 = vmatpush1.msra.mxu0 %v2602
        %2611 = vmatprep.subr.mxu0 0.0
        %2612 = vmatpush1.msra.mxu0 0.0
        %2613 = vmatprep.subr.mxu0 0.0
        %2614 = vmatpush1.msra.mxu0 0.0
        %2615 = vmatprep.subr.mxu0 0.0
        %2616 = vmatpush1.msra.mxu0 0.0
        %2617 = vmatprep.subr.mxu0 0.0
        %2618 = vmatpush1.msra.mxu0 0.0
        %2619 = vmatprep.subr.mxu0 0.0
        %2620 = vmatpush1.msra.mxu0 0.0
        %2621 = vmatprep.subr.mxu0 0.0
        %2622 = vmatpush1.msra.mxu0 0.0
        %2623 = vmatprep.subr.mxu0 0.0
        %2624 = vmatpush1.msra.mxu0 0.0
        %2625 = vmatprep.subr.mxu0 0.0
        %2626 = vmatpush1.msra.mxu0 0.0
        %2627 = vmatprep.subr.mxu0 0.0
        %2628 = vmatpush1.msra.mxu0 0.0
        %2629 = vmatprep.subr.mxu0 0.0
        %2630 = vmatpush1.msra.mxu0 0.0
        %2631 = vmatprep.subr.mxu0 0.0
        %2632 = vmatpush1.msra.mxu0 0.0
        %2633 = vmatprep.subr.mxu0 0.0
        %2634 = vmatpush1.msra.mxu0 0.0
        %2635 = vmatprep.subr.mxu0 0.0
        %2636 = vmatpush1.msra.mxu0 0.0
        %2637 = vmatprep.subr.mxu0 0.0
        %2638 = vmatpush1.msra.mxu0 0.0
        %2639 = vmatprep.subr.mxu0 0.0
        %2640 = vmatpush1.msra.mxu0 0.0
        %2641 = vmatprep.subr.mxu0 0.0
        %2642 = vmatpush1.msra.mxu0 0.0
        %2643 = vmatprep.subr.mxu0 0.0
        %2644 = vmatpush1.msra.mxu0 0.0
        %2645 = vmatprep.subr.mxu0 0.0
        %2646 = vmatpush1.msra.mxu0 0.0
        %2647 = vmatprep.subr.mxu0 0.0
        %2648 = vmatpush1.msra.mxu0 0.0
        %2649 = vmatprep.subr.mxu0 0.0
        %2650 = vmatpush1.msra.mxu0 0.0
        %2651 = vmatprep.subr.mxu0 0.0
        %2652 = vmatpush1.msra.mxu0 0.0
        %2653 = vmatprep.subr.mxu0 0.0
        %2654 = vmatpush1.msra.mxu0 0.0
        %2655 = vmatprep.subr.mxu0 0.0
        %2656 = vmatpush1.msra.mxu0 0.0
        %2657 = vmatprep.subr.mxu0 0.0
        %2658 = vmatpush1.msra.mxu0 0.0
        %2659 = vmatprep.subr.mxu0 0.0
        %2660 = vmatpush1.msra.mxu0 0.0
        %2661 = vmatprep.subr.mxu0 0.0
        %2662 = vmatpush1.msra.mxu0 0.0
        %2663 = vmatprep.subr.mxu0 0.0
        %2664 = vmatpush1.msra.mxu0 0.0
        %2665 = vmatprep.subr.mxu0 0.0
        %2666 = vmatpush1.msra.mxu0 0.0
        %2667 = vmatprep.subr.mxu0 0.0
        %2668 = vmatpush1.msra.mxu0 0.0
        %2669 = vmatprep.subr.mxu0 0.0
        %2670 = vmatpush1.msra.mxu0 0.0
        %2671 = vmatprep.subr.mxu0 0.0
        %2672 = vmatpush1.msra.mxu0 0.0
        %2673 = vmatprep.mubr.f32.mxu0 0.0
        %2674 = vmatmul.mubr.f32.gmra.mrb[0].mxu0 %v2607
        %v2675 = vpop.f32.mrb[0].mxu0
        %v2676 = vadd.f32 0.0, %v2675
        %v2677 = vpop.f32.mrb[0].mxu0
        %2678 = vdwg.mxu0
        %v2680 = vsel %vm1961, %v2453, 0
        %2682 = vmatprep.subr.mxu0 0.0
        %2683 = vmatpush1.msra.mxu0 %v2603
        %2684 = vmatprep.subr.mxu0 0.0
        %2685 = vmatpush1.msra.mxu0 0.0
        %2686 = vmatprep.subr.mxu0 0.0
        %2687 = vmatpush1.msra.mxu0 0.0
        %2688 = vmatprep.subr.mxu0 0.0
        %2689 = vmatpush1.msra.mxu0 0.0
        %2690 = vmatprep.subr.mxu0 0.0
        %2691 = vmatpush1.msra.mxu0 0.0
        %2692 = vmatprep.subr.mxu0 0.0
        %2693 = vmatpush1.msra.mxu0 0.0
        %2694 = vmatprep.subr.mxu0 0.0
        %2695 = vmatpush1.msra.mxu0 0.0
        %2696 = vmatprep.subr.mxu0 0.0
        %2697 = vmatpush1.msra.mxu0 0.0
        %2698 = vmatprep.subr.mxu0 0.0
        %2699 = vmatpush1.msra.mxu0 0.0
        %2700 = vmatprep.subr.mxu0 0.0
        %2701 = vmatpush1.msra.mxu0 0.0
        %2702 = vmatprep.subr.mxu0 0.0
        %2703 = vmatpush1.msra.mxu0 0.0
        %2704 = vmatprep.subr.mxu0 0.0
        %2705 = vmatpush1.msra.mxu0 0.0
        %2706 = vmatprep.subr.mxu0 0.0
        %2707 = vmatpush1.msra.mxu0 0.0
        %2708 = vmatprep.subr.mxu0 0.0
        %2709 = vmatpush1.msra.mxu0 0.0
        %2710 = vmatprep.subr.mxu0 0.0
        %2711 = vmatpush1.msra.mxu0 0.0
        %2712 = vmatprep.subr.mxu0 0.0
        %2713 = vmatpush1.msra.mxu0 0.0
        %2714 = vmatprep.subr.mxu0 0.0
        %2715 = vmatpush1.msra.mxu0 0.0
        %2716 = vmatprep.subr.mxu0 0.0
        %2717 = vmatpush1.msra.mxu0 0.0
        %2718 = vmatprep.subr.mxu0 0.0
        %2719 = vmatpush1.msra.mxu0 0.0
        %2720 = vmatprep.subr.mxu0 0.0
        %2721 = vmatpush1.msra.mxu0 0.0
        %2722 = vmatprep.subr.mxu0 0.0
        %2723 = vmatpush1.msra.mxu0 0.0
        %2724 = vmatprep.subr.mxu0 0.0
        %2725 = vmatpush1.msra.mxu0 0.0
        %2726 = vmatprep.subr.mxu0 0.0
        %2727 = vmatpush1.msra.mxu0 0.0
        %2728 = vmatprep.subr.mxu0 0.0
        %2729 = vmatpush1.msra.mxu0 0.0
        %2730 = vmatprep.subr.mxu0 0.0
        %2731 = vmatpush1.msra.mxu0 0.0
        %2732 = vmatprep.subr.mxu0 0.0
        %2733 = vmatpush1.msra.mxu0 0.0
        %2734 = vmatprep.subr.mxu0 0.0
        %2735 = vmatpush1.msra.mxu0 0.0
        %2736 = vmatprep.subr.mxu0 0.0
        %2737 = vmatpush1.msra.mxu0 0.0
        %2738 = vmatprep.subr.mxu0 0.0
        %2739 = vmatpush1.msra.mxu0 0.0
        %2740 = vmatprep.subr.mxu0 0.0
        %2741 = vmatpush1.msra.mxu0 0.0
        %2742 = vmatprep.subr.mxu0 0.0
        %2743 = vmatpush1.msra.mxu0 0.0
        %2744 = vmatprep.subr.mxu0 0.0
        %2745 = vmatpush1.msra.mxu0 0.0
        %2746 = vmatprep.mubr.f32.mxu0 0.0
        %2747 = vmatmul.mubr.f32.gmra.mrb[0].mxu0 %v2680
        %v2748 = vpop.f32.mrb[0].mxu0
        %v2749 = vadd.f32 0.0, %v2748
        %v2750 = vpop.f32.mrb[0].mxu0
        %2751 = vdwg.mxu0
        %v2753 = vsel %vm1961, %v2526, 0
        %2755 = vmatprep.subr.mxu0 0.0
        %2756 = vmatpush1.msra.mxu0 %v2604
        %2757 = vmatprep.subr.mxu0 0.0
        %2758 = vmatpush1.msra.mxu0 0.0
        %2759 = vmatprep.subr.mxu0 0.0
        %2760 = vmatpush1.msra.mxu0 0.0
        %2761 = vmatprep.subr.mxu0 0.0
        %2762 = vmatpush1.msra.mxu0 0.0
        %2763 = vmatprep.subr.mxu0 0.0
        %2764 = vmatpush1.msra.mxu0 0.0
        %2765 = vmatprep.subr.mxu0 0.0
        %2766 = vmatpush1.msra.mxu0 0.0
        %2767 = vmatprep.subr.mxu0 0.0
        %2768 = vmatpush1.msra.mxu0 0.0
        %2769 = vmatprep.subr.mxu0 0.0
        %2770 = vmatpush1.msra.mxu0 0.0
        %2771 = vmatprep.subr.mxu0 0.0
        %2772 = vmatpush1.msra.mxu0 0.0
        %2773 = vmatprep.subr.mxu0 0.0
        %2774 = vmatpush1.msra.mxu0 0.0
        %2775 = vmatprep.subr.mxu0 0.0
        %2776 = vmatpush1.msra.mxu0 0.0
        %2777 = vmatprep.subr.mxu0 0.0
        %2778 = vmatpush1.msra.mxu0 0.0
        %2779 = vmatprep.subr.mxu0 0.0
        %2780 = vmatpush1.msra.mxu0 0.0
        %2781 = vmatprep.subr.mxu0 0.0
        %2782 = vmatpush1.msra.mxu0 0.0
        %2783 = vmatprep.subr.mxu0 0.0
        %2784 = vmatpush1.msra.mxu0 0.0
        %2785 = vmatprep.subr.mxu0 0.0
        %2786 = vmatpush1.msra.mxu0 0.0
        %2787 = vmatprep.subr.mxu0 0.0
        %2788 = vmatpush1.msra.mxu0 0.0
        %2789 = vmatprep.subr.mxu0 0.0
        %2790 = vmatpush1.msra.mxu0 0.0
        %2791 = vmatprep.subr.mxu0 0.0
        %2792 = vmatpush1.msra.mxu0 0.0
        %2793 = vmatprep.subr.mxu0 0.0
        %2794 = vmatpush1.msra.mxu0 0.0
        %2795 = vmatprep.subr.mxu0 0.0
        %2796 = vmatpush1.msra.mxu0 0.0
        %2797 = vmatprep.subr.mxu0 0.0
        %2798 = vmatpush1.msra.mxu0 0.0
        %2799 = vmatprep.subr.mxu0 0.0
        %2800 = vmatpush1.msra.mxu0 0.0
        %2801 = vmatprep.subr.mxu0 0.0
        %2802 = vmatpush1.msra.mxu0 0.0
        %2803 = vmatprep.subr.mxu0 0.0
        %2804 = vmatpush1.msra.mxu0 0.0
        %2805 = vmatprep.subr.mxu0 0.0
        %2806 = vmatpush1.msra.mxu0 0.0
        %2807 = vmatprep.subr.mxu0 0.0
        %2808 = vmatpush1.msra.mxu0 0.0
        %2809 = vmatprep.subr.mxu0 0.0
        %2810 = vmatpush1.msra.mxu0 0.0
        %2811 = vmatprep.subr.mxu0 0.0
        %2812 = vmatpush1.msra.mxu0 0.0
        %2813 = vmatprep.subr.mxu0 0.0
        %2814 = vmatpush1.msra.mxu0 0.0
        %2815 = vmatprep.subr.mxu0 0.0
        %2816 = vmatpush1.msra.mxu0 0.0
        %2817 = vmatprep.subr.mxu0 0.0
        %2818 = vmatpush1.msra.mxu0 0.0
        %2819 = vmatprep.mubr.f32.mxu0 0.0
        %2820 = vmatmul.mubr.f32.gmra.mrb[0].mxu0 %v2753
        %v2821 = vpop.f32.mrb[0].mxu0
        %v2822 = vadd.f32 0.0, %v2821
        %v2823 = vpop.f32.mrb[0].mxu0
        %2824 = vdwg.mxu0
        %v2826 = vsel %vm1961, %v2599, 0
        %2828 = vmatprep.subr.mxu0 0.0
        %2829 = vmatpush1.msra.mxu0 %v2605
        %2830 = vmatprep.subr.mxu0 0.0
        %2831 = vmatpush1.msra.mxu0 0.0
        %2832 = vmatprep.subr.mxu0 0.0
        %2833 = vmatpush1.msra.mxu0 0.0
        %2834 = vmatprep.subr.mxu0 0.0
        %2835 = vmatpush1.msra.mxu0 0.0
        %2836 = vmatprep.subr.mxu0 0.0
        %2837 = vmatpush1.msra.mxu0 0.0
        %2838 = vmatprep.subr.mxu0 0.0
        %2839 = vmatpush1.msra.mxu0 0.0
        %2840 = vmatprep.subr.mxu0 0.0
        %2841 = vmatpush1.msra.mxu0 0.0
        %2842 = vmatprep.subr.mxu0 0.0
        %2843 = vmatpush1.msra.mxu0 0.0
        %2844 = vmatprep.subr.mxu0 0.0
        %2845 = vmatpush1.msra.mxu0 0.0
        %2846 = vmatprep.subr.mxu0 0.0
        %2847 = vmatpush1.msra.mxu0 0.0
        %2848 = vmatprep.subr.mxu0 0.0
        %2849 = vmatpush1.msra.mxu0 0.0
        %2850 = vmatprep.subr.mxu0 0.0
        %2851 = vmatpush1.msra.mxu0 0.0
        %2852 = vmatprep.subr.mxu0 0.0
        %2853 = vmatpush1.msra.mxu0 0.0
        %2854 = vmatprep.subr.mxu0 0.0
        %2855 = vmatpush1.msra.mxu0 0.0
        %2856 = vmatprep.subr.mxu0 0.0
        %2857 = vmatpush1.msra.mxu0 0.0
        %2858 = vmatprep.subr.mxu0 0.0
        %2859 = vmatpush1.msra.mxu0 0.0
        %2860 = vmatprep.subr.mxu0 0.0
        %2861 = vmatpush1.msra.mxu0 0.0
        %2862 = vmatprep.subr.mxu0 0.0
        %2863 = vmatpush1.msra.mxu0 0.0
        %2864 = vmatprep.subr.mxu0 0.0
        %2865 = vmatpush1.msra.mxu0 0.0
        %2866 = vmatprep.subr.mxu0 0.0
        %2867 = vmatpush1.msra.mxu0 0.0
        %2868 = vmatprep.subr.mxu0 0.0
        %2869 = vmatpush1.msra.mxu0 0.0
        %2870 = vmatprep.subr.mxu0 0.0
        %2871 = vmatpush1.msra.mxu0 0.0
        %2872 = vmatprep.subr.mxu0 0.0
        %2873 = vmatpush1.msra.mxu0 0.0
        %2874 = vmatprep.subr.mxu0 0.0
        %2875 = vmatpush1.msra.mxu0 0.0
        %2876 = vmatprep.subr.mxu0 0.0
        %2877 = vmatpush1.msra.mxu0 0.0
        %2878 = vmatprep.subr.mxu0 0.0
        %2879 = vmatpush1.msra.mxu0 0.0
        %2880 = vmatprep.subr.mxu0 0.0
        %2881 = vmatpush1.msra.mxu0 0.0
        %2882 = vmatprep.subr.mxu0 0.0
        %2883 = vmatpush1.msra.mxu0 0.0
        %2884 = vmatprep.subr.mxu0 0.0
        %2885 = vmatpush1.msra.mxu0 0.0
        %2886 = vmatprep.subr.mxu0 0.0
        %2887 = vmatpush1.msra.mxu0 0.0
        %2888 = vmatprep.subr.mxu0 0.0
        %2889 = vmatpush1.msra.mxu0 0.0
        %2890 = vmatprep.subr.mxu0 0.0
        %2891 = vmatpush1.msra.mxu0 0.0
        %2892 = vmatprep.mubr.f32.mxu0 0.0
        %2893 = vmatmul.mubr.f32.gmra.mrb[0].mxu0 %v2826
        %v2894 = vpop.f32.mrb[0].mxu0
        %v2895 = vadd.f32 0.0, %v2894
        %v2896 = vpop.f32.mrb[0].mxu0
        %2897 = vdwg.mxu0
        %v2898 = vsel %vm957, %v2676, 0.0
        %v2899 = vsel %vm957, %v2749, 0.0
        %v2900 = vadd.f32 %v2898, %v2899
        %v2901 = vsel %vm957, %v2822, 0.0
        %v2902 = vadd.f32 %v2900, %v2901
        %v2903 = vsel %vm957, %v2895, 0.0
        %v2904 = vadd.f32 %v2902, %v2903
        %v2905 = vadd.f32 %v950, %v2904
        %v2906 = vld [vmem:[%s17] sm:$0x1]
        %v2908 = vlaneseq
        %v2909 = vshrl.u32 %v2908, 7
        %v2910 = vsub.s32 0, %v2909
        %v2911 = vrot.slane %v2906, %v2910
        %v2913 = vadd.f32 %v2905, %v2911
        %v2914 = vld [vmem:[%s18] sm:$0x1]
        %v2915 = vld [vmem:[%s19] sm:$0x1]
        %v2916 = vsel %vm957, %v2913, 0.0
        %2917 = vadd.xlane.f32.xlu0 %v2916
        %v2918 = vpop.xlane.xlu0 %2917
        %v2919 = vmul.f32 %v2918, %v961
        %v2920 = vsub.f32 %v2913, %v2919
        %v2921 = vmul.f32 %v2920, %v2920
        %v2922 = vsel %vm957, %v2921, 0.0
        %2923 = vadd.xlane.f32.xlu0 %v2922
        %v2924 = vpop.xlane.xlu0 %2923
        %v2925 = vmul.f32 %v2924, %v961
        %v2926 = vadd.f32 %v2925, 1e-05
        %v2927 = vrsqrt.pop %v2926
        %v2928 = vmul.f32 %v2920, %v2927
        %v2930 = vlaneseq
        %v2931 = vshrl.u32 %v2930, 7
        %v2932 = vsub.s32 0, %v2931
        %v2933 = vrot.slane %v2914, %v2932
        %v2935 = vmul.f32 %v2928, %v2933
        %v2937 = vlaneseq
        %v2938 = vshrl.u32 %v2937, 7
        %v2939 = vsub.s32 0, %v2938
        %v2940 = vrot.slane %v2915, %v2939
        %v2942 = vadd.f32 %v2935, %v2940
        %v2943 = vld [vmem:[%s20] sm:$0xff]
        %v2944 = vld [vmem:[%s20 + $0x8] sm:$0xff]
        %v2945 = vld [vmem:[%s20 + $0x10] sm:$0xff]
        %v2946 = vld [vmem:[%s20 + $0x18] sm:$0xff]
        %v2947 = vld [vmem:[%s21] sm:$0x1]
        %v2949 = vlaneseq
        %v2950 = vshrl.u32 %v2949, 7
        %v2951 = vsub.s32 0, %v2950
        %v2952 = vrot.slane %v2947, %v2951
        %v2955 = vsel %vm957, %v2942, 0
        %2957 = vmatprep.subr.mxu0 0.0
        %2958 = vmatpush1.msra.mxu0 %v2943
        %2959 = vmatprep.subr.mxu0 0.0
        %2960 = vmatpush1.msra.mxu0 %v2944
        %2961 = vmatprep.subr.mxu0 0.0
        %2962 = vmatpush1.msra.mxu0 %v2945
        %2963 = vmatprep.subr.mxu0 0.0
        %2964 = vmatpush1.msra.mxu0 %v2946
        %2965 = vmatprep.subr.mxu0 0.0
        %2966 = vmatpush1.msra.mxu0 0.0
        %2967 = vmatprep.subr.mxu0 0.0
        %2968 = vmatpush1.msra.mxu0 0.0
        %2969 = vmatprep.subr.mxu0 0.0
        %2970 = vmatpush1.msra.mxu0 0.0
        %2971 = vmatprep.subr.mxu0 0.0
        %2972 = vmatpush1.msra.mxu0 0.0
        %2973 = vmatprep.subr.mxu0 0.0
        %2974 = vmatpush1.msra.mxu0 0.0
        %2975 = vmatprep.subr.mxu0 0.0
        %2976 = vmatpush1.msra.mxu0 0.0
        %2977 = vmatprep.subr.mxu0 0.0
        %2978 = vmatpush1.msra.mxu0 0.0
        %2979 = vmatprep.subr.mxu0 0.0
        %2980 = vmatpush1.msra.mxu0 0.0
        %2981 = vmatprep.subr.mxu0 0.0
        %2982 = vmatpush1.msra.mxu0 0.0
        %2983 = vmatprep.subr.mxu0 0.0
        %2984 = vmatpush1.msra.mxu0 0.0
        %2985 = vmatprep.subr.mxu0 0.0
        %2986 = vmatpush1.msra.mxu0 0.0
        %2987 = vmatprep.subr.mxu0 0.0
        %2988 = vmatpush1.msra.mxu0 0.0
        %2989 = vmatprep.subr.mxu0 0.0
        %2990 = vmatpush1.msra.mxu0 0.0
        %2991 = vmatprep.subr.mxu0 0.0
        %2992 = vmatpush1.msra.mxu0 0.0
        %2993 = vmatprep.subr.mxu0 0.0
        %2994 = vmatpush1.msra.mxu0 0.0
        %2995 = vmatprep.subr.mxu0 0.0
        %2996 = vmatpush1.msra.mxu0 0.0
        %2997 = vmatprep.subr.mxu0 0.0
        %2998 = vmatpush1.msra.mxu0 0.0
        %2999 = vmatprep.subr.mxu0 0.0
        %3000 = vmatpush1.msra.mxu0 0.0
        %3001 = vmatprep.subr.mxu0 0.0
        %3002 = vmatpush1.msra.mxu0 0.0
        %3003 = vmatprep.subr.mxu0 0.0
        %3004 = vmatpush1.msra.mxu0 0.0
        %3005 = vmatprep.subr.mxu0 0.0
        %3006 = vmatpush1.msra.mxu0 0.0
        %3007 = vmatprep.subr.mxu0 0.0
        %3008 = vmatpush1.msra.mxu0 0.0
        %3009 = vmatprep.subr.mxu0 0.0
        %3010 = vmatpush1.msra.mxu0 0.0
        %3011 = vmatprep.subr.mxu0 0.0
        %3012 = vmatpush1.msra.mxu0 0.0
        %3013 = vmatprep.subr.mxu0 0.0
        %3014 = vmatpush1.msra.mxu0 0.0
        %3015 = vmatprep.subr.mxu0 0.0
        %3016 = vmatpush1.msra.mxu0 0.0
        %3017 = vmatprep.subr.mxu0 0.0
        %3018 = vmatpush1.msra.mxu0 0.0
        %3019 = vmatprep.subr.mxu0 0.0
        %3020 = vmatpush1.msra.mxu0 0.0
        %3021 = vmatprep.mubr.f32.mxu0 0.0
        %3022 = vmatmul.mubr.f32.gmra.mrb[0].mxu0 %v2955
        %v3023 = vpop.f32.mrb[0].mxu0
        %v3024 = vadd.f32 %v2952, %v3023
        %v3025 = vpop.f32.mrb[0].mxu0
        %3026 = vdwg.mxu0
        %v3027 = vmul.f32 %v3024, %v3024
        %v3028 = vmul.f32 %v3024, %v3027
        %v3029 = vmul.f32 %v3028, 0.044715
        %v3030 = vadd.f32 %v3024, %v3029
        %v3031 = vmul.f32 %v3030, 0.7978846
        %v3032 = vtanh.pop %v3031
        %v3033 = vadd.f32 %v3032, 1.0
        %v3034 = vmul.f32 %v3033, 0.5
        %v3035 = vmul.f32 %v3024, %v3034
        %v3036 = vld [vmem:[%s22] sm:$0xff]
        %v3037 = vld [vmem:[%s22 + $0x8] sm:$0xff]
        %v3038 = vld [vmem:[%s22 + $0x10] sm:$0xff]
        %v3039 = vld [vmem:[%s22 + $0x18] sm:$0xff]
        %v3040 = vld [vmem:[%s22 + $0x20] sm:$0xff]
        %v3041 = vld [vmem:[%s22 + $0x28] sm:$0xff]
        %v3042 = vld [vmem:[%s22 + $0x30] sm:$0xff]
        %v3043 = vld [vmem:[%s22 + $0x38] sm:$0xff]
        %v3044 = vld [vmem:[%s22 + $0x40] sm:$0xff]
        %v3045 = vld [vmem:[%s22 + $0x48] sm:$0xff]
        %v3046 = vld [vmem:[%s22 + $0x50] sm:$0xff]
        %v3047 = vld [vmem:[%s22 + $0x58] sm:$0xff]
        %v3048 = vld [vmem:[%s22 + $0x60] sm:$0xff]
        %v3049 = vld [vmem:[%s22 + $0x68] sm:$0xff]
        %v3050 = vld [vmem:[%s22 + $0x70] sm:$0xff]
        %v3051 = vld [vmem:[%s22 + $0x78] sm:$0xff]
        %v3052 = vld [vmem:[%s23] sm:$0x1]
        %v3054 = vlaneseq
        %v3055 = vshrl.u32 %v3054, 7
        %v3056 = vsub.s32 0, %v3055
        %v3057 = vrot.slane %v3052, %v3056
        %3059 = vmatprep.subr.mxu0 0.0
        %3060 = vmatpush1.msra.mxu0 %v3036
        %3061 = vmatprep.subr.mxu0 0.0
        %3062 = vmatpush1.msra.mxu0 %v3037
        %3063 = vmatprep.subr.mxu0 0.0
        %3064 = vmatpush1.msra.mxu0 %v3038
        %3065 = vmatprep.subr.mxu0 0.0
        %3066 = vmatpush1.msra.mxu0 %v3039
        %3067 = vmatprep.subr.mxu0 0.0
        %3068 = vmatpush1.msra.mxu0 %v3040
        %3069 = vmatprep.subr.mxu0 0.0
        %3070 = vmatpush1.msra.mxu0 %v3041
        %3071 = vmatprep.subr.mxu0 0.0
        %3072 = vmatpush1.msra.mxu0 %v3042
        %3073 = vmatprep.subr.mxu0 0.0
        %3074 = vmatpush1.msra.mxu0 %v3043
        %3075 = vmatprep.subr.mxu0 0.0
        %3076 = vmatpush1.msra.mxu0 %v3044
        %3077 = vmatprep.subr.mxu0 0.0
        %3078 = vmatpush1.msra.mxu0 %v3045
        %3079 = vmatprep.subr.mxu0 0.0
        %3080 = vmatpush1.msra.mxu0 %v3046
        %3081 = vmatprep.subr.mxu0 0.0
        %3082 = vmatpush1.msra.mxu0 %v3047
        %3083 = vmatprep.subr.mxu0 0.0
        %3084 = vmatpush1.msra.mxu0 %v3048
        %3085 = vmatprep.subr.mxu0 0.0
        %3086 = vmatpush1.msra.mxu0 %v3049
        %3087 = vmatprep.subr.mxu0 0.0
        %3088 = vmatpush1.msra.mxu0 %v3050
        %3089 = vmatprep.subr.mxu0 0.0
        %3090 = vmatpush1.msra.mxu0 %v3051
        %3091 = vmatprep.subr.mxu0 0.0
        %3092 = vmatpush1.msra.mxu0 0.0
        %3093 = vmatprep.subr.mxu0 0.0
        %3094 = vmatpush1.msra.mxu0 0.0
        %3095 = vmatprep.subr.mxu0 0.0
        %3096 = vmatpush1.msra.mxu0 0.0
        %3097 = vmatprep.subr.mxu0 0.0
        %3098 = vmatpush1.msra.mxu0 0.0
        %3099 = vmatprep.subr.mxu0 0.0
        %3100 = vmatpush1.msra.mxu0 0.0
        %3101 = vmatprep.subr.mxu0 0.0
        %3102 = vmatpush1.msra.mxu0 0.0
        %3103 = vmatprep.subr.mxu0 0.0
        %3104 = vmatpush1.msra.mxu0 0.0
        %3105 = vmatprep.subr.mxu0 0.0
        %3106 = vmatpush1.msra.mxu0 0.0
        %3107 = vmatprep.subr.mxu0 0.0
        %3108 = vmatpush1.msra.mxu0 0.0
        %3109 = vmatprep.subr.mxu0 0.0
        %3110 = vmatpush1.msra.mxu0 0.0
        %3111 = vmatprep.subr.mxu0 0.0
        %3112 = vmatpush1.msra.mxu0 0.0
        %3113 = vmatprep.subr.mxu0 0.0
        %3114 = vmatpush1.msra.mxu0 0.0
        %3115 = vmatprep.subr.mxu0 0.0
        %3116 = vmatpush1.msra.mxu0 0.0
        %3117 = vmatprep.subr.mxu0 0.0
        %3118 = vmatpush1.msra.mxu0 0.0
        %3119 = vmatprep.subr.mxu0 0.0
        %3120 = vmatpush1.msra.mxu0 0.0
        %3121 = vmatprep.subr.mxu0 0.0
        %3122 = vmatpush1.msra.mxu0 0.0
        %3123 = vmatprep.mubr.f32.mxu0 0.0
        %3124 = vmatmul.mubr.f32.gmra.mrb[0].mxu0 %v3035
        %v3125 = vpop.f32.mrb[0].mxu0
        %v3126 = vadd.f32 %v3057, %v3125
        %v3127 = vpop.f32.mrb[0].mxu0
        %3128 = vdwg.mxu0
        %v3129 = vadd.f32 %v2913, %v3126
        %s3130 = scalar_lea.vmem %s8, 1
        %v3131 = vld [vmem:[%s3130] sm:$0x1]
        %s3132 = scalar_lea.vmem %s9, 1
        %v3133 = vld [vmem:[%s3132] sm:$0x1]
        %v3134 = vsel %vm957, %v3129, 0.0
        %3135 = vadd.xlane.f32.xlu0 %v3134
        %v3136 = vpop.xlane.xlu0 %3135
        %v3137 = vmul.f32 %v3136, %v961
        %v3138 = vsub.f32 %v3129, %v3137
        %v3139 = vmul.f32 %v3138, %v3138
        %v3140 = vsel %vm957, %v3139, 0.0
        %3141 = vadd.xlane.f32.xlu0 %v3140
        %v3142 = vpop.xlane.xlu0 %3141
        %v3143 = vmul.f32 %v3142, %v961
        %v3144 = vadd.f32 %v3143, 1e-05
        %v3145 = vrsqrt.pop %v3144
        %v3146 = vmul.f32 %v3138, %v3145
        %v3148 = vlaneseq
        %v3149 = vshrl.u32 %v3148, 7
        %v3150 = vsub.s32 0, %v3149
        %v3151 = vrot.slane %v3131, %v3150
        %v3153 = vmul.f32 %v3146, %v3151
        %v3155 = vlaneseq
        %v3156 = vshrl.u32 %v3155, 7
        %v3157 = vsub.s32 0, %v3156
        %v3158 = vrot.slane %v3133, %v3157
        %v3160 = vadd.f32 %v3153, %v3158
        %s3161 = scalar_lea.vmem %s10, 128
        %v3162 = vld [vmem:[%s3161] sm:$0xff]
        %v3163 = vld [vmem:[%s3161 + $0x8] sm:$0xff]
        %v3164 = vld [vmem:[%s3161 + $0x10] sm:$0xff]
        %v3165 = vld [vmem:[%s3161 + $0x18] sm:$0xff]
        %v3166 = vld [vmem:[%s3161 + $0x20] sm:$0xff]
        %v3167 = vld [vmem:[%s3161 + $0x28] sm:$0xff]
        %v3168 = vld [vmem:[%s3161 + $0x30] sm:$0xff]
        %v3169 = vld [vmem:[%s3161 + $0x38] sm:$0xff]
        %v3170 = vld [vmem:[%s3161 + $0x40] sm:$0xff]
        %v3171 = vld [vmem:[%s3161 + $0x48] sm:$0xff]
        %v3172 = vld [vmem:[%s3161 + $0x50] sm:$0xff]
        %v3173 = vld [vmem:[%s3161 + $0x58] sm:$0xff]
        %v3174 = vld [vmem:[%s3161 + $0x60] sm:$0xff]
        %v3175 = vld [vmem:[%s3161 + $0x68] sm:$0xff]
        %v3176 = vld [vmem:[%s3161 + $0x70] sm:$0xff]
        %v3177 = vld [vmem:[%s3161 + $0x78] sm:$0xff]
        %s3178 = scalar_lea.vmem %s11, 4
        %v3179 = vld [vmem:[%s3178] sm:$0x1]
        %v3180 = vld [vmem:[%s3178 + $0x1] sm:$0x1]
        %v3181 = vld [vmem:[%s3178 + $0x2] sm:$0x1]
        %v3182 = vld [vmem:[%s3178 + $0x3] sm:$0x1]
        %v3187 = vlaneseq
        %v3188 = vshrl.u32 %v3187, 7
        %v3189 = vsub.s32 0, %v3188
        %v3190 = vrot.slane %v3179, %v3189
        %v3191 = vlaneseq
        %v3192 = vshrl.u32 %v3191, 7
        %v3193 = vsub.s32 0, %v3192
        %v3194 = vrot.slane %v3180, %v3193
        %v3195 = vlaneseq
        %v3196 = vshrl.u32 %v3195, 7
        %v3197 = vsub.s32 0, %v3196
        %v3198 = vrot.slane %v3181, %v3197
        %v3199 = vlaneseq
        %v3200 = vshrl.u32 %v3199, 7
        %v3201 = vsub.s32 0, %v3200
        %v3202 = vrot.slane %v3182, %v3201
        %v3208 = vsel %vm957, %v3160, 0
        %3210 = vmatprep.subr.mxu0 0.0
        %3211 = vmatpush1.msra.mxu0 %v3162
        %3212 = vmatprep.subr.mxu0 0.0
        %3213 = vmatpush1.msra.mxu0 %v3163
        %3214 = vmatprep.subr.mxu0 0.0
        %3215 = vmatpush1.msra.mxu0 %v3164
        %3216 = vmatprep.subr.mxu0 0.0
        %3217 = vmatpush1.msra.mxu0 %v3165
        %3218 = vmatprep.subr.mxu0 0.0
        %3219 = vmatpush1.msra.mxu0 0.0
        %3220 = vmatprep.subr.mxu0 0.0
        %3221 = vmatpush1.msra.mxu0 0.0
        %3222 = vmatprep.subr.mxu0 0.0
        %3223 = vmatpush1.msra.mxu0 0.0
        %3224 = vmatprep.subr.mxu0 0.0
        %3225 = vmatpush1.msra.mxu0 0.0
        %3226 = vmatprep.subr.mxu0 0.0
        %3227 = vmatpush1.msra.mxu0 0.0
        %3228 = vmatprep.subr.mxu0 0.0
        %3229 = vmatpush1.msra.mxu0 0.0
        %3230 = vmatprep.subr.mxu0 0.0
        %3231 = vmatpush1.msra.mxu0 0.0
        %3232 = vmatprep.subr.mxu0 0.0
        %3233 = vmatpush1.msra.mxu0 0.0
        %3234 = vmatprep.subr.mxu0 0.0
        %3235 = vmatpush1.msra.mxu0 0.0
        %3236 = vmatprep.subr.mxu0 0.0
        %3237 = vmatpush1.msra.mxu0 0.0
        %3238 = vmatprep.subr.mxu0 0.0
        %3239 = vmatpush1.msra.mxu0 0.0
        %3240 = vmatprep.subr.mxu0 0.0
        %3241 = vmatpush1.msra.mxu0 0.0
        %3242 = vmatprep.subr.mxu0 0.0
        %3243 = vmatpush1.msra.mxu0 0.0
        %3244 = vmatprep.subr.mxu0 0.0
        %3245 = vmatpush1.msra.mxu0 0.0
        %3246 = vmatprep.subr.mxu0 0.0
        %3247 = vmatpush1.msra.mxu0 0.0
        %3248 = vmatprep.subr.mxu0 0.0
        %3249 = vmatpush1.msra.mxu0 0.0
        %3250 = vmatprep.subr.mxu0 0.0
        %3251 = vmatpush1.msra.mxu0 0.0
        %3252 = vmatprep.subr.mxu0 0.0
        %3253 = vmatpush1.msra.mxu0 0.0
        %3254 = vmatprep.subr.mxu0 0.0
        %3255 = vmatpush1.msra.mxu0 0.0
        %3256 = vmatprep.subr.mxu0 0.0
        %3257 = vmatpush1.msra.mxu0 0.0
        %3258 = vmatprep.subr.mxu0 0.0
        %3259 = vmatpush1.msra.mxu0 0.0
        %3260 = vmatprep.subr.mxu0 0.0
        %3261 = vmatpush1.msra.mxu0 0.0
        %3262 = vmatprep.subr.mxu0 0.0
        %3263 = vmatpush1.msra.mxu0 0.0
        %3264 = vmatprep.subr.mxu0 0.0
        %3265 = vmatpush1.msra.mxu0 0.0
        %3266 = vmatprep.subr.mxu0 0.0
        %3267 = vmatpush1.msra.mxu0 0.0
        %3268 = vmatprep.subr.mxu0 0.0
        %3269 = vmatpush1.msra.mxu0 0.0
        %3270 = vmatprep.subr.mxu0 0.0
        %3271 = vmatpush1.msra.mxu0 0.0
        %3272 = vmatprep.subr.mxu0 0.0
        %3273 = vmatpush1.msra.mxu0 0.0
        %3274 = vmatprep.mubr.f32.mxu0 0.0
        %3275 = vmatmul.mubr.f32.gmra.mrb[0].mxu0 %v3208
        %v3276 = vpop.f32.mrb[0].mxu0
        %v3277 = vadd.f32 %v3190, %v3276
        %v3278 = vpop.f32.mrb[0].mxu0
        %3279 = vdwg.mxu0
        %3280 = vmatprep.subr.mxu0 0.0
        %3281 = vmatpush1.msra.mxu0 %v3166
        %3282 = vmatprep.subr.mxu0 0.0
        %3283 = vmatpush1.msra.mxu0 %v3167
        %3284 = vmatprep.subr.mxu0 0.0
        %3285 = vmatpush1.msra.mxu0 %v3168
        %3286 = vmatprep.subr.mxu0 0.0
        %3287 = vmatpush1.msra.mxu0 %v3169
        %3288 = vmatprep.subr.mxu0 0.0
        %3289 = vmatpush1.msra.mxu0 0.0
        %3290 = vmatprep.subr.mxu0 0.0
        %3291 = vmatpush1.msra.mxu0 0.0
        %3292 = vmatprep.subr.mxu0 0.0
        %3293 = vmatpush1.msra.mxu0 0.0
        %3294 = vmatprep.subr.mxu0 0.0
        %3295 = vmatpush1.msra.mxu0 0.0
        %3296 = vmatprep.subr.mxu0 0.0
        %3297 = vmatpush1.msra.mxu0 0.0
        %3298 = vmatprep.subr.mxu0 0.0
        %3299 = vmatpush1.msra.mxu0 0.0
        %3300 = vmatprep.subr.mxu0 0.0
        %3301 = vmatpush1.msra.mxu0 0.0
        %3302 = vmatprep.subr.mxu0 0.0
        %3303 = vmatpush1.msra.mxu0 0.0
        %3304 = vmatprep.subr.mxu0 0.0
        %3305 = vmatpush1.msra.mxu0 0.0
        %3306 = vmatprep.subr.mxu0 0.0
        %3307 = vmatpush1.msra.mxu0 0.0
        %3308 = vmatprep.subr.mxu0 0.0
        %3309 = vmatpush1.msra.mxu0 0.0
        %3310 = vmatprep.subr.mxu0 0.0
        %3311 = vmatpush1.msra.mxu0 0.0
        %3312 = vmatprep.subr.mxu0 0.0
        %3313 = vmatpush1.msra.mxu0 0.0
        %3314 = vmatprep.subr.mxu0 0.0
        %3315 = vmatpush1.msra.mxu0 0.0
        %3316 = vmatprep.subr.mxu0 0.0
        %3317 = vmatpush1.msra.mxu0 0.0
        %3318 = vmatprep.subr.mxu0 0.0
        %3319 = vmatpush1.msra.mxu0 0.0
        %3320 = vmatprep.subr.mxu0 0.0
        %3321 = vmatpush1.msra.mxu0 0.0
        %3322 = vmatprep.subr.mxu0 0.0
        %3323 = vmatpush1.msra.mxu0 0.0
        %3324 = vmatprep.subr.mxu0 0.0
        %3325 = vmatpush1.msra.mxu0 0.0
        %3326 = vmatprep.subr.mxu0 0.0
        %3327 = vmatpush1.msra.mxu0 0.0
        %3328 = vmatprep.subr.mxu0 0.0
        %3329 = vmatpush1.msra.mxu0 0.0
        %3330 = vmatprep.subr.mxu0 0.0
        %3331 = vmatpush1.msra.mxu0 0.0
        %3332 = vmatprep.subr.mxu0 0.0
        %3333 = vmatpush1.msra.mxu0 0.0
        %3334 = vmatprep.subr.mxu0 0.0
        %3335 = vmatpush1.msra.mxu0 0.0
        %3336 = vmatprep.subr.mxu0 0.0
        %3337 = vmatpush1.msra.mxu0 0.0
        %3338 = vmatprep.subr.mxu0 0.0
        %3339 = vmatpush1.msra.mxu0 0.0
        %3340 = vmatprep.subr.mxu0 0.0
        %3341 = vmatpush1.msra.mxu0 0.0
        %3342 = vmatprep.subr.mxu0 0.0
        %3343 = vmatpush1.msra.mxu0 0.0
        %3344 = vmatprep.mubr.f32.mxu0 0.0
        %3345 = vmatmul.mubr.f32.gmra.mrb[0].mxu0 %v3208
        %v3346 = vpop.f32.mrb[0].mxu0
        %v3347 = vadd.f32 %v3194, %v3346
        %v3348 = vpop.f32.mrb[0].mxu0
        %3349 = vdwg.mxu0
        %3350 = vmatprep.subr.mxu0 0.0
        %3351 = vmatpush1.msra.mxu0 %v3170
        %3352 = vmatprep.subr.mxu0 0.0
        %3353 = vmatpush1.msra.mxu0 %v3171
        %3354 = vmatprep.subr.mxu0 0.0
        %3355 = vmatpush1.msra.mxu0 %v3172
        %3356 = vmatprep.subr.mxu0 0.0
        %3357 = vmatpush1.msra.mxu0 %v3173
        %3358 = vmatprep.subr.mxu0 0.0
        %3359 = vmatpush1.msra.mxu0 0.0
        %3360 = vmatprep.subr.mxu0 0.0
        %3361 = vmatpush1.msra.mxu0 0.0
        %3362 = vmatprep.subr.mxu0 0.0
        %3363 = vmatpush1.msra.mxu0 0.0
        %3364 = vmatprep.subr.mxu0 0.0
        %3365 = vmatpush1.msra.mxu0 0.0
        %3366 = vmatprep.subr.mxu0 0.0
        %3367 = vmatpush1.msra.mxu0 0.0
        %3368 = vmatprep.subr.mxu0 0.0
        %3369 = vmatpush1.msra.mxu0 0.0
        %3370 = vmatprep.subr.mxu0 0.0
        %3371 = vmatpush1.msra.mxu0 0.0
        %3372 = vmatprep.subr.mxu0 0.0
        %3373 = vmatpush1.msra.mxu0 0.0
        %3374 = vmatprep.subr.mxu0 0.0
        %3375 = vmatpush1.msra.mxu0 0.0
        %3376 = vmatprep.subr.mxu0 0.0
        %3377 = vmatpush1.msra.mxu0 0.0
        %3378 = vmatprep.subr.mxu0 0.0
        %3379 = vmatpush1.msra.mxu0 0.0
        %3380 = vmatprep.subr.mxu0 0.0
        %3381 = vmatpush1.msra.mxu0 0.0
        %3382 = vmatprep.subr.mxu0 0.0
        %3383 = vmatpush1.msra.mxu0 0.0
        %3384 = vmatprep.subr.mxu0 0.0
        %3385 = vmatpush1.msra.mxu0 0.0
        %3386 = vmatprep.subr.mxu0 0.0
        %3387 = vmatpush1.msra.mxu0 0.0
        %3388 = vmatprep.subr.mxu0 0.0
        %3389 = vmatpush1.msra.mxu0 0.0
        %3390 = vmatprep.subr.mxu0 0.0
        %3391 = vmatpush1.msra.mxu0 0.0
        %3392 = vmatprep.subr.mxu0 0.0
        %3393 = vmatpush1.msra.mxu0 0.0
        %3394 = vmatprep.subr.mxu0 0.0
        %3395 = vmatpush1.msra.mxu0 0.0
        %3396 = vmatprep.subr.mxu0 0.0
        %3397 = vmatpush1.msra.mxu0 0.0
        %3398 = vmatprep.subr.mxu0 0.0
        %3399 = vmatpush1.msra.mxu0 0.0
        %3400 = vmatprep.subr.mxu0 0.0
        %3401 = vmatpush1.msra.mxu0 0.0
        %3402 = vmatprep.subr.mxu0 0.0
        %3403 = vmatpush1.msra.mxu0 0.0
        %3404 = vmatprep.subr.mxu0 0.0
        %3405 = vmatpush1.msra.mxu0 0.0
        %3406 = vmatprep.subr.mxu0 0.0
        %3407 = vmatpush1.msra.mxu0 0.0
        %3408 = vmatprep.subr.mxu0 0.0
        %3409 = vmatpush1.msra.mxu0 0.0
        %3410 = vmatprep.subr.mxu0 0.0
        %3411 = vmatpush1.msra.mxu0 0.0
        %3412 = vmatprep.subr.mxu0 0.0
        %3413 = vmatpush1.msra.mxu0 0.0
        %3414 = vmatprep.mubr.f32.mxu0 0.0
        %3415 = vmatmul.mubr.f32.gmra.mrb[0].mxu0 %v3208
        %v3416 = vpop.f32.mrb[0].mxu0
        %v3417 = vadd.f32 %v3198, %v3416
        %v3418 = vpop.f32.mrb[0].mxu0
        %3419 = vdwg.mxu0
        %3420 = vmatprep.subr.mxu0 0.0
        %3421 = vmatpush1.msra.mxu0 %v3174
        %3422 = vmatprep.subr.mxu0 0.0
        %3423 = vmatpush1.msra.mxu0 %v3175
        %3424 = vmatprep.subr.mxu0 0.0
        %3425 = vmatpush1.msra.mxu0 %v3176
        %3426 = vmatprep.subr.mxu0 0.0
        %3427 = vmatpush1.msra.mxu0 %v3177
        %3428 = vmatprep.subr.mxu0 0.0
        %3429 = vmatpush1.msra.mxu0 0.0
        %3430 = vmatprep.subr.mxu0 0.0
        %3431 = vmatpush1.msra.mxu0 0.0
        %3432 = vmatprep.subr.mxu0 0.0
        %3433 = vmatpush1.msra.mxu0 0.0
        %3434 = vmatprep.subr.mxu0 0.0
        %3435 = vmatpush1.msra.mxu0 0.0
        %3436 = vmatprep.subr.mxu0 0.0
        %3437 = vmatpush1.msra.mxu0 0.0
        %3438 = vmatprep.subr.mxu0 0.0
        %3439 = vmatpush1.msra.mxu0 0.0
        %3440 = vmatprep.subr.mxu0 0.0
        %3441 = vmatpush1.msra.mxu0 0.0
        %3442 = vmatprep.subr.mxu0 0.0
        %3443 = vmatpush1.msra.mxu0 0.0
        %3444 = vmatprep.subr.mxu0 0.0
        %3445 = vmatpush1.msra.mxu0 0.0
        %3446 = vmatprep.subr.mxu0 0.0
        %3447 = vmatpush1.msra.mxu0 0.0
        %3448 = vmatprep.subr.mxu0 0.0
        %3449 = vmatpush1.msra.mxu0 0.0
        %3450 = vmatprep.subr.mxu0 0.0
        %3451 = vmatpush1.msra.mxu0 0.0
        %3452 = vmatprep.subr.mxu0 0.0
        %3453 = vmatpush1.msra.mxu0 0.0
        %3454 = vmatprep.subr.mxu0 0.0
        %3455 = vmatpush1.msra.mxu0 0.0
        %3456 = vmatprep.subr.mxu0 0.0
        %3457 = vmatpush1.msra.mxu0 0.0
        %3458 = vmatprep.subr.mxu0 0.0
        %3459 = vmatpush1.msra.mxu0 0.0
        %3460 = vmatprep.subr.mxu0 0.0
        %3461 = vmatpush1.msra.mxu0 0.0
        %3462 = vmatprep.subr.mxu0 0.0
        %3463 = vmatpush1.msra.mxu0 0.0
        %3464 = vmatprep.subr.mxu0 0.0
        %3465 = vmatpush1.msra.mxu0 0.0
        %3466 = vmatprep.subr.mxu0 0.0
        %3467 = vmatpush1.msra.mxu0 0.0
        %3468 = vmatprep.subr.mxu0 0.0
        %3469 = vmatpush1.msra.mxu0 0.0
        %3470 = vmatprep.subr.mxu0 0.0
        %3471 = vmatpush1.msra.mxu0 0.0
        %3472 = vmatprep.subr.mxu0 0.0
        %3473 = vmatpush1.msra.mxu0 0.0
        %3474 = vmatprep.subr.mxu0 0.0
        %3475 = vmatpush1.msra.mxu0 0.0
        %3476 = vmatprep.subr.mxu0 0.0
        %3477 = vmatpush1.msra.mxu0 0.0
        %3478 = vmatprep.subr.mxu0 0.0
        %3479 = vmatpush1.msra.mxu0 0.0
        %3480 = vmatprep.subr.mxu0 0.0
        %3481 = vmatpush1.msra.mxu0 0.0
        %3482 = vmatprep.subr.mxu0 0.0
        %3483 = vmatpush1.msra.mxu0 0.0
        %3484 = vmatprep.mubr.f32.mxu0 0.0
        %3485 = vmatmul.mubr.f32.gmra.mrb[0].mxu0 %v3208
        %v3486 = vpop.f32.mrb[0].mxu0
        %v3487 = vadd.f32 %v3202, %v3486
        %v3488 = vpop.f32.mrb[0].mxu0
        %3489 = vdwg.mxu0
        %s3490 = scalar_lea.vmem %s12, 128
        %v3491 = vld [vmem:[%s3490] sm:$0xff]
        %v3492 = vld [vmem:[%s3490 + $0x8] sm:$0xff]
        %v3493 = vld [vmem:[%s3490 + $0x10] sm:$0xff]
        %v3494 = vld [vmem:[%s3490 + $0x18] sm:$0xff]
        %v3495 = vld [vmem:[%s3490 + $0x20] sm:$0xff]
        %v3496 = vld [vmem:[%s3490 + $0x28] sm:$0xff]
        %v3497 = vld [vmem:[%s3490 + $0x30] sm:$0xff]
        %v3498 = vld [vmem:[%s3490 + $0x38] sm:$0xff]
        %v3499 = vld [vmem:[%s3490 + $0x40] sm:$0xff]
        %v3500 = vld [vmem:[%s3490 + $0x48] sm:$0xff]
        %v3501 = vld [vmem:[%s3490 + $0x50] sm:$0xff]
        %v3502 = vld [vmem:[%s3490 + $0x58] sm:$0xff]
        %v3503 = vld [vmem:[%s3490 + $0x60] sm:$0xff]
        %v3504 = vld [vmem:[%s3490 + $0x68] sm:$0xff]
        %v3505 = vld [vmem:[%s3490 + $0x70] sm:$0xff]
        %v3506 = vld [vmem:[%s3490 + $0x78] sm:$0xff]
        %s3507 = scalar_lea.vmem %s13, 4
        %v3508 = vld [vmem:[%s3507] sm:$0x1]
        %v3509 = vld [vmem:[%s3507 + $0x1] sm:$0x1]
        %v3510 = vld [vmem:[%s3507 + $0x2] sm:$0x1]
        %v3511 = vld [vmem:[%s3507 + $0x3] sm:$0x1]
        %v3516 = vlaneseq
        %v3517 = vshrl.u32 %v3516, 7
        %v3518 = vsub.s32 0, %v3517
        %v3519 = vrot.slane %v3508, %v3518
        %v3520 = vlaneseq
        %v3521 = vshrl.u32 %v3520, 7
        %v3522 = vsub.s32 0, %v3521
        %v3523 = vrot.slane %v3509, %v3522
        %v3524 = vlaneseq
        %v3525 = vshrl.u32 %v3524, 7
        %v3526 = vsub.s32 0, %v3525
        %v3527 = vrot.slane %v3510, %v3526
        %v3528 = vlaneseq
        %v3529 = vshrl.u32 %v3528, 7
        %v3530 = vsub.s32 0, %v3529
        %v3531 = vrot.slane %v3511, %v3530
        %3536 = vmatprep.subr.mxu0 0.0
        %3537 = vmatpush1.msra.mxu0 %v3491
        %3538 = vmatprep.subr.mxu0 0.0
        %3539 = vmatpush1.msra.mxu0 %v3492
        %3540 = vmatprep.subr.mxu0 0.0
        %3541 = vmatpush1.msra.mxu0 %v3493
        %3542 = vmatprep.subr.mxu0 0.0
        %3543 = vmatpush1.msra.mxu0 %v3494
        %3544 = vmatprep.subr.mxu0 0.0
        %3545 = vmatpush1.msra.mxu0 0.0
        %3546 = vmatprep.subr.mxu0 0.0
        %3547 = vmatpush1.msra.mxu0 0.0
        %3548 = vmatprep.subr.mxu0 0.0
        %3549 = vmatpush1.msra.mxu0 0.0
        %3550 = vmatprep.subr.mxu0 0.0
        %3551 = vmatpush1.msra.mxu0 0.0
        %3552 = vmatprep.subr.mxu0 0.0
        %3553 = vmatpush1.msra.mxu0 0.0
        %3554 = vmatprep.subr.mxu0 0.0
        %3555 = vmatpush1.msra.mxu0 0.0
        %3556 = vmatprep.subr.mxu0 0.0
        %3557 = vmatpush1.msra.mxu0 0.0
        %3558 = vmatprep.subr.mxu0 0.0
        %3559 = vmatpush1.msra.mxu0 0.0
        %3560 = vmatprep.subr.mxu0 0.0
        %3561 = vmatpush1.msra.mxu0 0.0
        %3562 = vmatprep.subr.mxu0 0.0
        %3563 = vmatpush1.msra.mxu0 0.0
        %3564 = vmatprep.subr.mxu0 0.0
        %3565 = vmatpush1.msra.mxu0 0.0
        %3566 = vmatprep.subr.mxu0 0.0
        %3567 = vmatpush1.msra.mxu0 0.0
        %3568 = vmatprep.subr.mxu0 0.0
        %3569 = vmatpush1.msra.mxu0 0.0
        %3570 = vmatprep.subr.mxu0 0.0
        %3571 = vmatpush1.msra.mxu0 0.0
        %3572 = vmatprep.subr.mxu0 0.0
        %3573 = vmatpush1.msra.mxu0 0.0
        %3574 = vmatprep.subr.mxu0 0.0
        %3575 = vmatpush1.msra.mxu0 0.0
        %3576 = vmatprep.subr.mxu0 0.0
        %3577 = vmatpush1.msra.mxu0 0.0
        %3578 = vmatprep.subr.mxu0 0.0
        %3579 = vmatpush1.msra.mxu0 0.0
        %3580 = vmatprep.subr.mxu0 0.0
        %3581 = vmatpush1.msra.mxu0 0.0
        %3582 = vmatprep.subr.mxu0 0.0
        %3583 = vmatpush1.msra.mxu0 0.0
        %3584 = vmatprep.subr.mxu0 0.0
        %3585 = vmatpush1.msra.mxu0 0.0
        %3586 = vmatprep.subr.mxu0 0.0
        %3587 = vmatpush1.msra.mxu0 0.0
        %3588 = vmatprep.subr.mxu0 0.0
        %3589 = vmatpush1.msra.mxu0 0.0
        %3590 = vmatprep.subr.mxu0 0.0
        %3591 = vmatpush1.msra.mxu0 0.0
        %3592 = vmatprep.subr.mxu0 0.0
        %3593 = vmatpush1.msra.mxu0 0.0
        %3594 = vmatprep.subr.mxu0 0.0
        %3595 = vmatpush1.msra.mxu0 0.0
        %3596 = vmatprep.subr.mxu0 0.0
        %3597 = vmatpush1.msra.mxu0 0.0
        %3598 = vmatprep.subr.mxu0 0.0
        %3599 = vmatpush1.msra.mxu0 0.0
        %3600 = vmatprep.mubr.f32.mxu0 0.0
        %3601 = vmatmul.mubr.f32.gmra.mrb[0].mxu0 %v3208
        %v3602 = vpop.f32.mrb[0].mxu0
        %v3603 = vadd.f32 %v3519, %v3602
        %v3604 = vpop.f32.mrb[0].mxu0
        %3605 = vdwg.mxu0
        %3606 = vmatprep.subr.mxu0 0.0
        %3607 = vmatpush1.msra.mxu0 %v3495
        %3608 = vmatprep.subr.mxu0 0.0
        %3609 = vmatpush1.msra.mxu0 %v3496
        %3610 = vmatprep.subr.mxu0 0.0
        %3611 = vmatpush1.msra.mxu0 %v3497
        %3612 = vmatprep.subr.mxu0 0.0
        %3613 = vmatpush1.msra.mxu0 %v3498
        %3614 = vmatprep.subr.mxu0 0.0
        %3615 = vmatpush1.msra.mxu0 0.0
        %3616 = vmatprep.subr.mxu0 0.0
        %3617 = vmatpush1.msra.mxu0 0.0
        %3618 = vmatprep.subr.mxu0 0.0
        %3619 = vmatpush1.msra.mxu0 0.0
        %3620 = vmatprep.subr.mxu0 0.0
        %3621 = vmatpush1.msra.mxu0 0.0
        %3622 = vmatprep.subr.mxu0 0.0
        %3623 = vmatpush1.msra.mxu0 0.0
        %3624 = vmatprep.subr.mxu0 0.0
        %3625 = vmatpush1.msra.mxu0 0.0
        %3626 = vmatprep.subr.mxu0 0.0
        %3627 = vmatpush1.msra.mxu0 0.0
        %3628 = vmatprep.subr.mxu0 0.0
        %3629 = vmatpush1.msra.mxu0 0.0
        %3630 = vmatprep.subr.mxu0 0.0
        %3631 = vmatpush1.msra.mxu0 0.0
        %3632 = vmatprep.subr.mxu0 0.0
        %3633 = vmatpush1.msra.mxu0 0.0
        %3634 = vmatprep.subr.mxu0 0.0
        %3635 = vmatpush1.msra.mxu0 0.0
        %3636 = vmatprep.subr.mxu0 0.0
        %3637 = vmatpush1.msra.mxu0 0.0
        %3638 = vmatprep.subr.mxu0 0.0
        %3639 = vmatpush1.msra.mxu0 0.0
        %3640 = vmatprep.subr.mxu0 0.0
        %3641 = vmatpush1.msra.mxu0 0.0
        %3642 = vmatprep.subr.mxu0 0.0
        %3643 = vmatpush1.msra.mxu0 0.0
        %3644 = vmatprep.subr.mxu0 0.0
        %3645 = vmatpush1.msra.mxu0 0.0
        %3646 = vmatprep.subr.mxu0 0.0
        %3647 = vmatpush1.msra.mxu0 0.0
        %3648 = vmatprep.subr.mxu0 0.0
        %3649 = vmatpush1.msra.mxu0 0.0
        %3650 = vmatprep.subr.mxu0 0.0
        %3651 = vmatpush1.msra.mxu0 0.0
        %3652 = vmatprep.subr.mxu0 0.0
        %3653 = vmatpush1.msra.mxu0 0.0
        %3654 = vmatprep.subr.mxu0 0.0
        %3655 = vmatpush1.msra.mxu0 0.0
        %3656 = vmatprep.subr.mxu0 0.0
        %3657 = vmatpush1.msra.mxu0 0.0
        %3658 = vmatprep.subr.mxu0 0.0
        %3659 = vmatpush1.msra.mxu0 0.0
        %3660 = vmatprep.subr.mxu0 0.0
        %3661 = vmatpush1.msra.mxu0 0.0
        %3662 = vmatprep.subr.mxu0 0.0
        %3663 = vmatpush1.msra.mxu0 0.0
        %3664 = vmatprep.subr.mxu0 0.0
        %3665 = vmatpush1.msra.mxu0 0.0
        %3666 = vmatprep.subr.mxu0 0.0
        %3667 = vmatpush1.msra.mxu0 0.0
        %3668 = vmatprep.subr.mxu0 0.0
        %3669 = vmatpush1.msra.mxu0 0.0
        %3670 = vmatprep.mubr.f32.mxu0 0.0
        %3671 = vmatmul.mubr.f32.gmra.mrb[0].mxu0 %v3208
        %v3672 = vpop.f32.mrb[0].mxu0
        %v3673 = vadd.f32 %v3523, %v3672
        %v3674 = vpop.f32.mrb[0].mxu0
        %3675 = vdwg.mxu0
        %3676 = vmatprep.subr.mxu0 0.0
        %3677 = vmatpush1.msra.mxu0 %v3499
        %3678 = vmatprep.subr.mxu0 0.0
        %3679 = vmatpush1.msra.mxu0 %v3500
        %3680 = vmatprep.subr.mxu0 0.0
        %3681 = vmatpush1.msra.mxu0 %v3501
        %3682 = vmatprep.subr.mxu0 0.0
        %3683 = vmatpush1.msra.mxu0 %v3502
        %3684 = vmatprep.subr.mxu0 0.0
        %3685 = vmatpush1.msra.mxu0 0.0
        %3686 = vmatprep.subr.mxu0 0.0
        %3687 = vmatpush1.msra.mxu0 0.0
        %3688 = vmatprep.subr.mxu0 0.0
        %3689 = vmatpush1.msra.mxu0 0.0
        %3690 = vmatprep.subr.mxu0 0.0
        %3691 = vmatpush1.msra.mxu0 0.0
        %3692 = vmatprep.subr.mxu0 0.0
        %3693 = vmatpush1.msra.mxu0 0.0
        %3694 = vmatprep.subr.mxu0 0.0
        %3695 = vmatpush1.msra.mxu0 0.0
        %3696 = vmatprep.subr.mxu0 0.0
        %3697 = vmatpush1.msra.mxu0 0.0
        %3698 = vmatprep.subr.mxu0 0.0
        %3699 = vmatpush1.msra.mxu0 0.0
        %3700 = vmatprep.subr.mxu0 0.0
        %3701 = vmatpush1.msra.mxu0 0.0
        %3702 = vmatprep.subr.mxu0 0.0
        %3703 = vmatpush1.msra.mxu0 0.0
        %3704 = vmatprep.subr.mxu0 0.0
        %3705 = vmatpush1.msra.mxu0 0.0
        %3706 = vmatprep.subr.mxu0 0.0
        %3707 = vmatpush1.msra.mxu0 0.0
        %3708 = vmatprep.subr.mxu0 0.0
        %3709 = vmatpush1.msra.mxu0 0.0
        %3710 = vmatprep.subr.mxu0 0.0
        %3711 = vmatpush1.msra.mxu0 0.0
        %3712 = vmatprep.subr.mxu0 0.0
        %3713 = vmatpush1.msra.mxu0 0.0
        %3714 = vmatprep.subr.mxu0 0.0
        %3715 = vmatpush1.msra.mxu0 0.0
        %3716 = vmatprep.subr.mxu0 0.0
        %3717 = vmatpush1.msra.mxu0 0.0
        %3718 = vmatprep.subr.mxu0 0.0
        %3719 = vmatpush1.msra.mxu0 0.0
        %3720 = vmatprep.subr.mxu0 0.0
        %3721 = vmatpush1.msra.mxu0 0.0
        %3722 = vmatprep.subr.mxu0 0.0
        %3723 = vmatpush1.msra.mxu0 0.0
        %3724 = vmatprep.subr.mxu0 0.0
        %3725 = vmatpush1.msra.mxu0 0.0
        %3726 = vmatprep.subr.mxu0 0.0
        %3727 = vmatpush1.msra.mxu0 0.0
        %3728 = vmatprep.subr.mxu0 0.0
        %3729 = vmatpush1.msra.mxu0 0.0
        %3730 = vmatprep.subr.mxu0 0.0
        %3731 = vmatpush1.msra.mxu0 0.0
        %3732 = vmatprep.subr.mxu0 0.0
        %3733 = vmatpush1.msra.mxu0 0.0
        %3734 = vmatprep.subr.mxu0 0.0
        %3735 = vmatpush1.msra.mxu0 0.0
        %3736 = vmatprep.subr.mxu0 0.0
        %3737 = vmatpush1.msra.mxu0 0.0
        %3738 = vmatprep.subr.mxu0 0.0
        %3739 = vmatpush1.msra.mxu0 0.0
        %3740 = vmatprep.mubr.f32.mxu0 0.0
        %3741 = vmatmul.mubr.f32.gmra.mrb[0].mxu0 %v3208
        %v3742 = vpop.f32.mrb[0].mxu0
        %v3743 = vadd.f32 %v3527, %v3742
        %v3744 = vpop.f32.mrb[0].mxu0
        %3745 = vdwg.mxu0
        %3746 = vmatprep.subr.mxu0 0.0
        %3747 = vmatpush1.msra.mxu0 %v3503
        %3748 = vmatprep.subr.mxu0 0.0
        %3749 = vmatpush1.msra.mxu0 %v3504
        %3750 = vmatprep.subr.mxu0 0.0
        %3751 = vmatpush1.msra.mxu0 %v3505
        %3752 = vmatprep.subr.mxu0 0.0
        %3753 = vmatpush1.msra.mxu0 %v3506
        %3754 = vmatprep.subr.mxu0 0.0
        %3755 = vmatpush1.msra.mxu0 0.0
        %3756 = vmatprep.subr.mxu0 0.0
        %3757 = vmatpush1.msra.mxu0 0.0
        %3758 = vmatprep.subr.mxu0 0.0
        %3759 = vmatpush1.msra.mxu0 0.0
        %3760 = vmatprep.subr.mxu0 0.0
        %3761 = vmatpush1.msra.mxu0 0.0
        %3762 = vmatprep.subr.mxu0 0.0
        %3763 = vmatpush1.msra.mxu0 0.0
        %3764 = vmatprep.subr.mxu0 0.0
        %3765 = vmatpush1.msra.mxu0 0.0
        %3766 = vmatprep.subr.mxu0 0.0
        %3767 = vmatpush1.msra.mxu0 0.0
        %3768 = vmatprep.subr.mxu0 0.0
        %3769 = vmatpush1.msra.mxu0 0.0
        %3770 = vmatprep.subr.mxu0 0.0
        %3771 = vmatpush1.msra.mxu0 0.0
        %3772 = vmatprep.subr.mxu0 0.0
        %3773 = vmatpush1.msra.mxu0 0.0
        %3774 = vmatprep.subr.mxu0 0.0
        %3775 = vmatpush1.msra.mxu0 0.0
        %3776 = vmatprep.subr.mxu0 0.0
        %3777 = vmatpush1.msra.mxu0 0.0
        %3778 = vmatprep.subr.mxu0 0.0
        %3779 = vmatpush1.msra.mxu0 0.0
        %3780 = vmatprep.subr.mxu0 0.0
        %3781 = vmatpush1.msra.mxu0 0.0
        %3782 = vmatprep.subr.mxu0 0.0
        %3783 = vmatpush1.msra.mxu0 0.0
        %3784 = vmatprep.subr.mxu0 0.0
        %3785 = vmatpush1.msra.mxu0 0.0
        %3786 = vmatprep.subr.mxu0 0.0
        %3787 = vmatpush1.msra.mxu0 0.0
        %3788 = vmatprep.subr.mxu0 0.0
        %3789 = vmatpush1.msra.mxu0 0.0
        %3790 = vmatprep.subr.mxu0 0.0
        %3791 = vmatpush1.msra.mxu0 0.0
        %3792 = vmatprep.subr.mxu0 0.0
        %3793 = vmatpush1.msra.mxu0 0.0
        %3794 = vmatprep.subr.mxu0 0.0
        %3795 = vmatpush1.msra.mxu0 0.0
        %3796 = vmatprep.subr.mxu0 0.0
        %3797 = vmatpush1.msra.mxu0 0.0
        %3798 = vmatprep.subr.mxu0 0.0
        %3799 = vmatpush1.msra.mxu0 0.0
        %3800 = vmatprep.subr.mxu0 0.0
        %3801 = vmatpush1.msra.mxu0 0.0
        %3802 = vmatprep.subr.mxu0 0.0
        %3803 = vmatpush1.msra.mxu0 0.0
        %3804 = vmatprep.subr.mxu0 0.0
        %3805 = vmatpush1.msra.mxu0 0.0
        %3806 = vmatprep.subr.mxu0 0.0
        %3807 = vmatpush1.msra.mxu0 0.0
        %3808 = vmatprep.subr.mxu0 0.0
        %3809 = vmatpush1.msra.mxu0 0.0
        %3810 = vmatprep.mubr.f32.mxu0 0.0
        %3811 = vmatmul.mubr.f32.gmra.mrb[0].mxu0 %v3208
        %v3812 = vpop.f32.mrb[0].mxu0
        %v3813 = vadd.f32 %v3531, %v3812
        %v3814 = vpop.f32.mrb[0].mxu0
        %3815 = vdwg.mxu0
        %s3816 = scalar_lea.vmem %s14, 128
        %v3817 = vld [vmem:[%s3816] sm:$0xff]
        %v3818 = vld [vmem:[%s3816 + $0x8] sm:$0xff]
        %v3819 = vld [vmem:[%s3816 + $0x10] sm:$0xff]
        %v3820 = vld [vmem:[%s3816 + $0x18] sm:$0xff]
        %v3821 = vld [vmem:[%s3816 + $0x20] sm:$0xff]
        %v3822 = vld [vmem:[%s3816 + $0x28] sm:$0xff]
        %v3823 = vld [vmem:[%s3816 + $0x30] sm:$0xff]
        %v3824 = vld [vmem:[%s3816 + $0x38] sm:$0xff]
        %v3825 = vld [vmem:[%s3816 + $0x40] sm:$0xff]
        %v3826 = vld [vmem:[%s3816 + $0x48] sm:$0xff]
        %v3827 = vld [vmem:[%s3816 + $0x50] sm:$0xff]
        %v3828 = vld [vmem:[%s3816 + $0x58] sm:$0xff]
        %v3829 = vld [vmem:[%s3816 + $0x60] sm:$0xff]
        %v3830 = vld [vmem:[%s3816 + $0x68] sm:$0xff]
        %v3831 = vld [vmem:[%s3816 + $0x70] sm:$0xff]
        %v3832 = vld [vmem:[%s3816 + $0x78] sm:$0xff]
        %s3833 = scalar_lea.vmem %s15, 4
        %v3834 = vld [vmem:[%s3833] sm:$0x1]
        %v3835 = vld [vmem:[%s3833 + $0x1] sm:$0x1]
        %v3836 = vld [vmem:[%s3833 + $0x2] sm:$0x1]
        %v3837 = vld [vmem:[%s3833 + $0x3] sm:$0x1]
        %v3842 = vlaneseq
        %v3843 = vshrl.u32 %v3842, 7
        %v3844 = vsub.s32 0, %v3843
        %v3845 = vrot.slane %v3834, %v3844
        %v3846 = vlaneseq
        %v3847 = vshrl.u32 %v3846, 7
        %v3848 = vsub.s32 0, %v3847
        %v3849 = vrot.slane %v3835, %v3848
        %v3850 = vlaneseq
        %v3851 = vshrl.u32 %v3850, 7
        %v3852 = vsub.s32 0, %v3851
        %v3853 = vrot.slane %v3836, %v3852
        %v3854 = vlaneseq
        %v3855 = vshrl.u32 %v3854, 7
        %v3856 = vsub.s32 0, %v3855
        %v3857 = vrot.slane %v3837, %v3856
        %3862 = vmatprep.subr.mxu0 0.0
        %3863 = vmatpush1.msra.mxu0 %v3817
        %3864 = vmatprep.subr.mxu0 0.0
        %3865 = vmatpush1.msra.mxu0 %v3818
        %3866 = vmatprep.subr.mxu0 0.0
        %3867 = vmatpush1.msra.mxu0 %v3819
        %3868 = vmatprep.subr.mxu0 0.0
        %3869 = vmatpush1.msra.mxu0 %v3820
        %3870 = vmatprep.subr.mxu0 0.0
        %3871 = vmatpush1.msra.mxu0 0.0
        %3872 = vmatprep.subr.mxu0 0.0
        %3873 = vmatpush1.msra.mxu0 0.0
        %3874 = vmatprep.subr.mxu0 0.0
        %3875 = vmatpush1.msra.mxu0 0.0
        %3876 = vmatprep.subr.mxu0 0.0
        %3877 = vmatpush1.msra.mxu0 0.0
        %3878 = vmatprep.subr.mxu0 0.0
        %3879 = vmatpush1.msra.mxu0 0.0
        %3880 = vmatprep.subr.mxu0 0.0
        %3881 = vmatpush1.msra.mxu0 0.0
        %3882 = vmatprep.subr.mxu0 0.0
        %3883 = vmatpush1.msra.mxu0 0.0
        %3884 = vmatprep.subr.mxu0 0.0
        %3885 = vmatpush1.msra.mxu0 0.0
        %3886 = vmatprep.subr.mxu0 0.0
        %3887 = vmatpush1.msra.mxu0 0.0
        %3888 = vmatprep.subr.mxu0 0.0
        %3889 = vmatpush1.msra.mxu0 0.0
        %3890 = vmatprep.subr.mxu0 0.0
        %3891 = vmatpush1.msra.mxu0 0.0
        %3892 = vmatprep.subr.mxu0 0.0
        %3893 = vmatpush1.msra.mxu0 0.0
        %3894 = vmatprep.subr.mxu0 0.0
        %3895 = vmatpush1.msra.mxu0 0.0
        %3896 = vmatprep.subr.mxu0 0.0
        %3897 = vmatpush1.msra.mxu0 0.0
        %3898 = vmatprep.subr.mxu0 0.0
        %3899 = vmatpush1.msra.mxu0 0.0
        %3900 = vmatprep.subr.mxu0 0.0
        %3901 = vmatpush1.msra.mxu0 0.0
        %3902 = vmatprep.subr.mxu0 0.0
        %3903 = vmatpush1.msra.mxu0 0.0
        %3904 = vmatprep.subr.mxu0 0.0
        %3905 = vmatpush1.msra.mxu0 0.0
        %3906 = vmatprep.subr.mxu0 0.0
        %3907 = vmatpush1.msra.mxu0 0.0
        %3908 = vmatprep.subr.mxu0 0.0
        %3909 = vmatpush1.msra.mxu0 0.0
        %3910 = vmatprep.subr.mxu0 0.0
        %3911 = vmatpush1.msra.mxu0 0.0
        %3912 = vmatprep.subr.mxu0 0.0
        %3913 = vmatpush1.msra.mxu0 0.0
        %3914 = vmatprep.subr.mxu0 0.0
        %3915 = vmatpush1.msra.mxu0 0.0
        %3916 = vmatprep.subr.mxu0 0.0
        %3917 = vmatpush1.msra.mxu0 0.0
        %3918 = vmatprep.subr.mxu0 0.0
        %3919 = vmatpush1.msra.mxu0 0.0
        %3920 = vmatprep.subr.mxu0 0.0
        %3921 = vmatpush1.msra.mxu0 0.0
        %3922 = vmatprep.subr.mxu0 0.0
        %3923 = vmatpush1.msra.mxu0 0.0
        %3924 = vmatprep.subr.mxu0 0.0
        %3925 = vmatpush1.msra.mxu0 0.0
        %3926 = vmatprep.mubr.f32.mxu0 0.0
        %3927 = vmatmul.mubr.f32.gmra.mrb[0].mxu0 %v3208
        %v3928 = vpop.f32.mrb[0].mxu0
        %v3929 = vadd.f32 %v3845, %v3928
        %v3930 = vpop.f32.mrb[0].mxu0
        %3931 = vdwg.mxu0
        %3932 = vmatprep.subr.mxu0 0.0
        %3933 = vmatpush1.msra.mxu0 %v3821
        %3934 = vmatprep.subr.mxu0 0.0
        %3935 = vmatpush1.msra.mxu0 %v3822
        %3936 = vmatprep.subr.mxu0 0.0
        %3937 = vmatpush1.msra.mxu0 %v3823
        %3938 = vmatprep.subr.mxu0 0.0
        %3939 = vmatpush1.msra.mxu0 %v3824
        %3940 = vmatprep.subr.mxu0 0.0
        %3941 = vmatpush1.msra.mxu0 0.0
        %3942 = vmatprep.subr.mxu0 0.0
        %3943 = vmatpush1.msra.mxu0 0.0
        %3944 = vmatprep.subr.mxu0 0.0
        %3945 = vmatpush1.msra.mxu0 0.0
        %3946 = vmatprep.subr.mxu0 0.0
        %3947 = vmatpush1.msra.mxu0 0.0
        %3948 = vmatprep.subr.mxu0 0.0
        %3949 = vmatpush1.msra.mxu0 0.0
        %3950 = vmatprep.subr.mxu0 0.0
        %3951 = vmatpush1.msra.mxu0 0.0
        %3952 = vmatprep.subr.mxu0 0.0
        %3953 = vmatpush1.msra.mxu0 0.0
        %3954 = vmatprep.subr.mxu0 0.0
        %3955 = vmatpush1.msra.mxu0 0.0
        %3956 = vmatprep.subr.mxu0 0.0
        %3957 = vmatpush1.msra.mxu0 0.0
        %3958 = vmatprep.subr.mxu0 0.0
        %3959 = vmatpush1.msra.mxu0 0.0
        %3960 = vmatprep.subr.mxu0 0.0
        %3961 = vmatpush1.msra.mxu0 0.0
        %3962 = vmatprep.subr.mxu0 0.0
        %3963 = vmatpush1.msra.mxu0 0.0
        %3964 = vmatprep.subr.mxu0 0.0
        %3965 = vmatpush1.msra.mxu0 0.0
        %3966 = vmatprep.subr.mxu0 0.0
        %3967 = vmatpush1.msra.mxu0 0.0
        %3968 = vmatprep.subr.mxu0 0.0
        %3969 = vmatpush1.msra.mxu0 0.0
        %3970 = vmatprep.subr.mxu0 0.0
        %3971 = vmatpush1.msra.mxu0 0.0
        %3972 = vmatprep.subr.mxu0 0.0
        %3973 = vmatpush1.msra.mxu0 0.0
        %3974 = vmatprep.subr.mxu0 0.0
        %3975 = vmatpush1.msra.mxu0 0.0
        %3976 = vmatprep.subr.mxu0 0.0
        %3977 = vmatpush1.msra.mxu0 0.0
        %3978 = vmatprep.subr.mxu0 0.0
        %3979 = vmatpush1.msra.mxu0 0.0
        %3980 = vmatprep.subr.mxu0 0.0
        %3981 = vmatpush1.msra.mxu0 0.0
        %3982 = vmatprep.subr.mxu0 0.0
        %3983 = vmatpush1.msra.mxu0 0.0
        %3984 = vmatprep.subr.mxu0 0.0
        %3985 = vmatpush1.msra.mxu0 0.0
        %3986 = vmatprep.subr.mxu0 0.0
        %3987 = vmatpush1.msra.mxu0 0.0
        %3988 = vmatprep.subr.mxu0 0.0
        %3989 = vmatpush1.msra.mxu0 0.0
        %3990 = vmatprep.subr.mxu0 0.0
        %3991 = vmatpush1.msra.mxu0 0.0
        %3992 = vmatprep.subr.mxu0 0.0
        %3993 = vmatpush1.msra.mxu0 0.0
        %3994 = vmatprep.subr.mxu0 0.0
        %3995 = vmatpush1.msra.mxu0 0.0
        %3996 = vmatprep.mubr.f32.mxu0 0.0
        %3997 = vmatmul.mubr.f32.gmra.mrb[0].mxu0 %v3208
        %v3998 = vpop.f32.mrb[0].mxu0
        %v3999 = vadd.f32 %v3849, %v3998
        %v4000 = vpop.f32.mrb[0].mxu0
        %4001 = vdwg.mxu0
        %4002 = vmatprep.subr.mxu0 0.0
        %4003 = vmatpush1.msra.mxu0 %v3825
        %4004 = vmatprep.subr.mxu0 0.0
        %4005 = vmatpush1.msra.mxu0 %v3826
        %4006 = vmatprep.subr.mxu0 0.0
        %4007 = vmatpush1.msra.mxu0 %v3827
        %4008 = vmatprep.subr.mxu0 0.0
        %4009 = vmatpush1.msra.mxu0 %v3828
        %4010 = vmatprep.subr.mxu0 0.0
        %4011 = vmatpush1.msra.mxu0 0.0
        %4012 = vmatprep.subr.mxu0 0.0
        %4013 = vmatpush1.msra.mxu0 0.0
        %4014 = vmatprep.subr.mxu0 0.0
        %4015 = vmatpush1.msra.mxu0 0.0
        %4016 = vmatprep.subr.mxu0 0.0
        %4017 = vmatpush1.msra.mxu0 0.0
        %4018 = vmatprep.subr.mxu0 0.0
        %4019 = vmatpush1.msra.mxu0 0.0
        %4020 = vmatprep.subr.mxu0 0.0
        %4021 = vmatpush1.msra.mxu0 0.0
        %4022 = vmatprep.subr.mxu0 0.0
        %4023 = vmatpush1.msra.mxu0 0.0
        %4024 = vmatprep.subr.mxu0 0.0
        %4025 = vmatpush1.msra.mxu0 0.0
        %4026 = vmatprep.subr.mxu0 0.0
        %4027 = vmatpush1.msra.mxu0 0.0
        %4028 = vmatprep.subr.mxu0 0.0
        %4029 = vmatpush1.msra.mxu0 0.0
        %4030 = vmatprep.subr.mxu0 0.0
        %4031 = vmatpush1.msra.mxu0 0.0
        %4032 = vmatprep.subr.mxu0 0.0
        %4033 = vmatpush1.msra.mxu0 0.0
        %4034 = vmatprep.subr.mxu0 0.0
        %4035 = vmatpush1.msra.mxu0 0.0
        %4036 = vmatprep.subr.mxu0 0.0
        %4037 = vmatpush1.msra.mxu0 0.0
        %4038 = vmatprep.subr.mxu0 0.0
        %4039 = vmatpush1.msra.mxu0 0.0
        %4040 = vmatprep.subr.mxu0 0.0
        %4041 = vmatpush1.msra.mxu0 0.0
        %4042 = vmatprep.subr.mxu0 0.0
        %4043 = vmatpush1.msra.mxu0 0.0
        %4044 = vmatprep.subr.mxu0 0.0
        %4045 = vmatpush1.msra.mxu0 0.0
        %4046 = vmatprep.subr.mxu0 0.0
        %4047 = vmatpush1.msra.mxu0 0.0
        %4048 = vmatprep.subr.mxu0 0.0
        %4049 = vmatpush1.msra.mxu0 0.0
        %4050 = vmatprep.subr.mxu0 0.0
        %4051 = vmatpush1.msra.mxu0 0.0
        %4052 = vmatprep.subr.mxu0 0.0
        %4053 = vmatpush1.msra.mxu0 0.0
        %4054 = vmatprep.subr.mxu0 0.0
        %4055 = vmatpush1.msra.mxu0 0.0
        %4056 = vmatprep.subr.mxu0 0.0
        %4057 = vmatpush1.msra.mxu0 0.0
        %4058 = vmatprep.subr.mxu0 0.0
        %4059 = vmatpush1.msra.mxu0 0.0
        %4060 = vmatprep.subr.mxu0 0.0
        %4061 = vmatpush1.msra.mxu0 0.0
        %4062 = vmatprep.subr.mxu0 0.0
        %4063 = vmatpush1.msra.mxu0 0.0
        %4064 = vmatprep.subr.mxu0 0.0
        %4065 = vmatpush1.msra.mxu0 0.0
        %4066 = vmatprep.mubr.f32.mxu0 0.0
        %4067 = vmatmul.mubr.f32.gmra.mrb[0].mxu0 %v3208
        %v4068 = vpop.f32.mrb[0].mxu0
        %v4069 = vadd.f32 %v3853, %v4068
        %v4070 = vpop.f32.mrb[0].mxu0
        %4071 = vdwg.mxu0
        %4072 = vmatprep.subr.mxu0 0.0
        %4073 = vmatpush1.msra.mxu0 %v3829
        %4074 = vmatprep.subr.mxu0 0.0
        %4075 = vmatpush1.msra.mxu0 %v3830
        %4076 = vmatprep.subr.mxu0 0.0
        %4077 = vmatpush1.msra.mxu0 %v3831
        %4078 = vmatprep.subr.mxu0 0.0
        %4079 = vmatpush1.msra.mxu0 %v3832
        %4080 = vmatprep.subr.mxu0 0.0
        %4081 = vmatpush1.msra.mxu0 0.0
        %4082 = vmatprep.subr.mxu0 0.0
        %4083 = vmatpush1.msra.mxu0 0.0
        %4084 = vmatprep.subr.mxu0 0.0
        %4085 = vmatpush1.msra.mxu0 0.0
        %4086 = vmatprep.subr.mxu0 0.0
        %4087 = vmatpush1.msra.mxu0 0.0
        %4088 = vmatprep.subr.mxu0 0.0
        %4089 = vmatpush1.msra.mxu0 0.0
        %4090 = vmatprep.subr.mxu0 0.0
        %4091 = vmatpush1.msra.mxu0 0.0
        %4092 = vmatprep.subr.mxu0 0.0
        %4093 = vmatpush1.msra.mxu0 0.0
        %4094 = vmatprep.subr.mxu0 0.0
        %4095 = vmatpush1.msra.mxu0 0.0
        %4096 = vmatprep.subr.mxu0 0.0
        %4097 = vmatpush1.msra.mxu0 0.0
        %4098 = vmatprep.subr.mxu0 0.0
        %4099 = vmatpush1.msra.mxu0 0.0
        %4100 = vmatprep.subr.mxu0 0.0
        %4101 = vmatpush1.msra.mxu0 0.0
        %4102 = vmatprep.subr.mxu0 0.0
        %4103 = vmatpush1.msra.mxu0 0.0
        %4104 = vmatprep.subr.mxu0 0.0
        %4105 = vmatpush1.msra.mxu0 0.0
        %4106 = vmatprep.subr.mxu0 0.0
        %4107 = vmatpush1.msra.mxu0 0.0
        %4108 = vmatprep.subr.mxu0 0.0
        %4109 = vmatpush1.msra.mxu0 0.0
        %4110 = vmatprep.subr.mxu0 0.0
        %4111 = vmatpush1.msra.mxu0 0.0
        %4112 = vmatprep.subr.mxu0 0.0
        %4113 = vmatpush1.msra.mxu0 0.0
        %4114 = vmatprep.subr.mxu0 0.0
        %4115 = vmatpush1.msra.mxu0 0.0
        %4116 = vmatprep.subr.mxu0 0.0
        %4117 = vmatpush1.msra.mxu0 0.0
        %4118 = vmatprep.subr.mxu0 0.0
        %4119 = vmatpush1.msra.mxu0 0.0
        %4120 = vmatprep.subr.mxu0 0.0
        %4121 = vmatpush1.msra.mxu0 0.0
        %4122 = vmatprep.subr.mxu0 0.0
        %4123 = vmatpush1.msra.mxu0 0.0
        %4124 = vmatprep.subr.mxu0 0.0
        %4125 = vmatpush1.msra.mxu0 0.0
        %4126 = vmatprep.subr.mxu0 0.0
        %4127 = vmatpush1.msra.mxu0 0.0
        %4128 = vmatprep.subr.mxu0 0.0
        %4129 = vmatpush1.msra.mxu0 0.0
        %4130 = vmatprep.subr.mxu0 0.0
        %4131 = vmatpush1.msra.mxu0 0.0
        %4132 = vmatprep.subr.mxu0 0.0
        %4133 = vmatpush1.msra.mxu0 0.0
        %4134 = vmatprep.subr.mxu0 0.0
        %4135 = vmatpush1.msra.mxu0 0.0
        %4136 = vmatprep.mubr.f32.mxu0 0.0
        %4137 = vmatmul.mubr.f32.gmra.mrb[0].mxu0 %v3208
        %v4138 = vpop.f32.mrb[0].mxu0
        %v4139 = vadd.f32 %v3857, %v4138
        %v4140 = vpop.f32.mrb[0].mxu0
        %4141 = vdwg.mxu0
        %v4143 = vsel %vm1961, %v3277, 0
        %v4146 = vsel %vm1961, %v3603, 0
        %4148 = vmatprep.subr.mxu0 0.0
        %4149 = vmatpush1.xpose.msra.mxu0 %v4146
        %4150 = vmatprep.subr.mxu0 0.0
        %4151 = vmatpush1.xpose.msra.mxu0 0.0
        %4152 = vmatprep.subr.mxu0 0.0
        %4153 = vmatpush1.xpose.msra.mxu0 0.0
        %4154 = vmatprep.subr.mxu0 0.0
        %4155 = vmatpush1.xpose.msra.mxu0 0.0
        %4156 = vmatprep.subr.mxu0 0.0
        %4157 = vmatpush1.xpose.msra.mxu0 0.0
        %4158 = vmatprep.subr.mxu0 0.0
        %4159 = vmatpush1.xpose.msra.mxu0 0.0
        %4160 = vmatprep.subr.mxu0 0.0
        %4161 = vmatpush1.xpose.msra.mxu0 0.0
        %4162 = vmatprep.subr.mxu0 0.0
        %4163 = vmatpush1.xpose.msra.mxu0 0.0
        %4164 = vmatprep.subr.mxu0 0.0
        %4165 = vmatpush1.xpose.msra.mxu0 0.0
        %4166 = vmatprep.subr.mxu0 0.0
        %4167 = vmatpush1.xpose.msra.mxu0 0.0
        %4168 = vmatprep.subr.mxu0 0.0
        %4169 = vmatpush1.xpose.msra.mxu0 0.0
        %4170 = vmatprep.subr.mxu0 0.0
        %4171 = vmatpush1.xpose.msra.mxu0 0.0
        %4172 = vmatprep.subr.mxu0 0.0
        %4173 = vmatpush1.xpose.msra.mxu0 0.0
        %4174 = vmatprep.subr.mxu0 0.0
        %4175 = vmatpush1.xpose.msra.mxu0 0.0
        %4176 = vmatprep.subr.mxu0 0.0
        %4177 = vmatpush1.xpose.msra.mxu0 0.0
        %4178 = vmatprep.subr.mxu0 0.0
        %4179 = vmatpush1.xpose.msra.mxu0 0.0
        %4180 = vmatprep.subr.mxu0 0.0
        %4181 = vmatpush1.xpose.msra.mxu0 0.0
        %4182 = vmatprep.subr.mxu0 0.0
        %4183 = vmatpush1.xpose.msra.mxu0 0.0
        %4184 = vmatprep.subr.mxu0 0.0
        %4185 = vmatpush1.xpose.msra.mxu0 0.0
        %4186 = vmatprep.subr.mxu0 0.0
        %4187 = vmatpush1.xpose.msra.mxu0 0.0
        %4188 = vmatprep.subr.mxu0 0.0
        %4189 = vmatpush1.xpose.msra.mxu0 0.0
        %4190 = vmatprep.subr.mxu0 0.0
        %4191 = vmatpush1.xpose.msra.mxu0 0.0
        %4192 = vmatprep.subr.mxu0 0.0
        %4193 = vmatpush1.xpose.msra.mxu0 0.0
        %4194 = vmatprep.subr.mxu0 0.0
        %4195 = vmatpush1.xpose.msra.mxu0 0.0
        %4196 = vmatprep.subr.mxu0 0.0
        %4197 = vmatpush1.xpose.msra.mxu0 0.0
        %4198 = vmatprep.subr.mxu0 0.0
        %4199 = vmatpush1.xpose.msra.mxu0 0.0
        %4200 = vmatprep.subr.mxu0 0.0
        %4201 = vmatpush1.xpose.msra.mxu0 0.0
        %4202 = vmatprep.subr.mxu0 0.0
        %4203 = vmatpush1.xpose.msra.mxu0 0.0
        %4204 = vmatprep.subr.mxu0 0.0
        %4205 = vmatpush1.xpose.msra.mxu0 0.0
        %4206 = vmatprep.subr.mxu0 0.0
        %4207 = vmatpush1.xpose.msra.mxu0 0.0
        %4208 = vmatprep.subr.mxu0 0.0
        %4209 = vmatpush1.xpose.msra.mxu0 0.0
        %4210 = vmatprep.subr.mxu0 0.0
        %4211 = vmatpush1.xpose.msra.mxu0 0.0
        %4212 = vmatprep.mubr.f32.mxu0 0.0
        %4213 = vmatmul.mubr.f32.gmra.mrb[0].mxu0 %v4143
        %v4214 = vpop.f32.mrb[0].mxu0
        %v4215 = vadd.f32 %v954, %v4214
        %v4216 = vpop.f32.mrb[0].mxu0
        %4217 = vdwg.mxu0
        %v4219 = vsel %vm1961, %v3347, 0
        %v4222 = vsel %vm1961, %v3673, 0
        %4224 = vmatprep.subr.mxu0 0.0
        %4225 = vmatpush1.xpose.msra.mxu0 %v4222
        %4226 = vmatprep.subr.mxu0 0.0
        %4227 = vmatpush1.xpose.msra.mxu0 0.0
        %4228 = vmatprep.subr.mxu0 0.0
        %4229 = vmatpush1.xpose.msra.mxu0 0.0
        %4230 = vmatprep.subr.mxu0 0.0
        %4231 = vmatpush1.xpose.msra.mxu0 0.0
        %4232 = vmatprep.subr.mxu0 0.0
        %4233 = vmatpush1.xpose.msra.mxu0 0.0
        %4234 = vmatprep.subr.mxu0 0.0
        %4235 = vmatpush1.xpose.msra.mxu0 0.0
        %4236 = vmatprep.subr.mxu0 0.0
        %4237 = vmatpush1.xpose.msra.mxu0 0.0
        %4238 = vmatprep.subr.mxu0 0.0
        %4239 = vmatpush1.xpose.msra.mxu0 0.0
        %4240 = vmatprep.subr.mxu0 0.0
        %4241 = vmatpush1.xpose.msra.mxu0 0.0
        %4242 = vmatprep.subr.mxu0 0.0
        %4243 = vmatpush1.xpose.msra.mxu0 0.0
        %4244 = vmatprep.subr.mxu0 0.0
        %4245 = vmatpush1.xpose.msra.mxu0 0.0
        %4246 = vmatprep.subr.mxu0 0.0
        %4247 = vmatpush1.xpose.msra.mxu0 0.0
        %4248 = vmatprep.subr.mxu0 0.0
        %4249 = vmatpush1.xpose.msra.mxu0 0.0
        %4250 = vmatprep.subr.mxu0 0.0
        %4251 = vmatpush1.xpose.msra.mxu0 0.0
        %4252 = vmatprep.subr.mxu0 0.0
        %4253 = vmatpush1.xpose.msra.mxu0 0.0
        %4254 = vmatprep.subr.mxu0 0.0
        %4255 = vmatpush1.xpose.msra.mxu0 0.0
        %4256 = vmatprep.subr.mxu0 0.0
        %4257 = vmatpush1.xpose.msra.mxu0 0.0
        %4258 = vmatprep.subr.mxu0 0.0
        %4259 = vmatpush1.xpose.msra.mxu0 0.0
        %4260 = vmatprep.subr.mxu0 0.0
        %4261 = vmatpush1.xpose.msra.mxu0 0.0
        %4262 = vmatprep.subr.mxu0 0.0
        %4263 = vmatpush1.xpose.msra.mxu0 0.0
        %4264 = vmatprep.subr.mxu0 0.0
        %4265 = vmatpush1.xpose.msra.mxu0 0.0
        %4266 = vmatprep.subr.mxu0 0.0
        %4267 = vmatpush1.xpose.msra.mxu0 0.0
        %4268 = vmatprep.subr.mxu0 0.0
        %4269 = vmatpush1.xpose.msra.mxu0 0.0
        %4270 = vmatprep.subr.mxu0 0.0
        %4271 = vmatpush1.xpose.msra.mxu0 0.0
        %4272 = vmatprep.subr.mxu0 0.0
        %4273 = vmatpush1.xpose.msra.mxu0 0.0
        %4274 = vmatprep.subr.mxu0 0.0
        %4275 = vmatpush1.xpose.msra.mxu0 0.0
        %4276 = vmatprep.subr.mxu0 0.0
        %4277 = vmatpush1.xpose.msra.mxu0 0.0
        %4278 = vmatprep.subr.mxu0 0.0
        %4279 = vmatpush1.xpose.msra.mxu0 0.0
        %4280 = vmatprep.subr.mxu0 0.0
        %4281 = vmatpush1.xpose.msra.mxu0 0.0
        %4282 = vmatprep.subr.mxu0 0.0
        %4283 = vmatpush1.xpose.msra.mxu0 0.0
        %4284 = vmatprep.subr.mxu0 0.0
        %4285 = vmatpush1.xpose.msra.mxu0 0.0
        %4286 = vmatprep.subr.mxu0 0.0
        %4287 = vmatpush1.xpose.msra.mxu0 0.0
        %4288 = vmatprep.mubr.f32.mxu0 0.0
        %4289 = vmatmul.mubr.f32.gmra.mrb[0].mxu0 %v4219
        %v4290 = vpop.f32.mrb[0].mxu0
        %v4291 = vadd.f32 %v954, %v4290
        %v4292 = vpop.f32.mrb[0].mxu0
        %4293 = vdwg.mxu0
        %v4295 = vsel %vm1961, %v3417, 0
        %v4298 = vsel %vm1961, %v3743, 0
        %4300 = vmatprep.subr.mxu0 0.0
        %4301 = vmatpush1.xpose.msra.mxu0 %v4298
        %4302 = vmatprep.subr.mxu0 0.0
        %4303 = vmatpush1.xpose.msra.mxu0 0.0
        %4304 = vmatprep.subr.mxu0 0.0
        %4305 = vmatpush1.xpose.msra.mxu0 0.0
        %4306 = vmatprep.subr.mxu0 0.0
        %4307 = vmatpush1.xpose.msra.mxu0 0.0
        %4308 = vmatprep.subr.mxu0 0.0
        %4309 = vmatpush1.xpose.msra.mxu0 0.0
        %4310 = vmatprep.subr.mxu0 0.0
        %4311 = vmatpush1.xpose.msra.mxu0 0.0
        %4312 = vmatprep.subr.mxu0 0.0
        %4313 = vmatpush1.xpose.msra.mxu0 0.0
        %4314 = vmatprep.subr.mxu0 0.0
        %4315 = vmatpush1.xpose.msra.mxu0 0.0
        %4316 = vmatprep.subr.mxu0 0.0
        %4317 = vmatpush1.xpose.msra.mxu0 0.0
        %4318 = vmatprep.subr.mxu0 0.0
        %4319 = vmatpush1.xpose.msra.mxu0 0.0
        %4320 = vmatprep.subr.mxu0 0.0
        %4321 = vmatpush1.xpose.msra.mxu0 0.0
        %4322 = vmatprep.subr.mxu0 0.0
        %4323 = vmatpush1.xpose.msra.mxu0 0.0
        %4324 = vmatprep.subr.mxu0 0.0
        %4325 = vmatpush1.xpose.msra.mxu0 0.0
        %4326 = vmatprep.subr.mxu0 0.0
        %4327 = vmatpush1.xpose.msra.mxu0 0.0
        %4328 = vmatprep.subr.mxu0 0.0
        %4329 = vmatpush1.xpose.msra.mxu0 0.0
        %4330 = vmatprep.subr.mxu0 0.0
        %4331 = vmatpush1.xpose.msra.mxu0 0.0
        %4332 = vmatprep.subr.mxu0 0.0
        %4333 = vmatpush1.xpose.msra.mxu0 0.0
        %4334 = vmatprep.subr.mxu0 0.0
        %4335 = vmatpush1.xpose.msra.mxu0 0.0
        %4336 = vmatprep.subr.mxu0 0.0
        %4337 = vmatpush1.xpose.msra.mxu0 0.0
        %4338 = vmatprep.subr.mxu0 0.0
        %4339 = vmatpush1.xpose.msra.mxu0 0.0
        %4340 = vmatprep.subr.mxu0 0.0
        %4341 = vmatpush1.xpose.msra.mxu0 0.0
        %4342 = vmatprep.subr.mxu0 0.0
        %4343 = vmatpush1.xpose.msra.mxu0 0.0
        %4344 = vmatprep.subr.mxu0 0.0
        %4345 = vmatpush1.xpose.msra.mxu0 0.0
        %4346 = vmatprep.subr.mxu0 0.0
        %4347 = vmatpush1.xpose.msra.mxu0 0.0
        %4348 = vmatprep.subr.mxu0 0.0
        %4349 = vmatpush1.xpose.msra.mxu0 0.0
        %4350 = vmatprep.subr.mxu0 0.0
        %4351 = vmatpush1.xpose.msra.mxu0 0.0
        %4352 = vmatprep.subr.mxu0 0.0
        %4353 = vmatpush1.xpose.msra.mxu0 0.0
        %4354 = vmatprep.subr.mxu0 0.0
        %4355 = vmatpush1.xpose.msra.mxu0 0.0
        %4356 = vmatprep.subr.mxu0 0.0
        %4357 = vmatpush1.xpose.msra.mxu0 0.0
        %4358 = vmatprep.subr.mxu0 0.0
        %4359 = vmatpush1.xpose.msra.mxu0 0.0
        %4360 = vmatprep.subr.mxu0 0.0
        %4361 = vmatpush1.xpose.msra.mxu0 0.0
        %4362 = vmatprep.subr.mxu0 0.0
        %4363 = vmatpush1.xpose.msra.mxu0 0.0
        %4364 = vmatprep.mubr.f32.mxu0 0.0
        %4365 = vmatmul.mubr.f32.gmra.mrb[0].mxu0 %v4295
        %v4366 = vpop.f32.mrb[0].mxu0
        %v4367 = vadd.f32 %v954, %v4366
        %v4368 = vpop.f32.mrb[0].mxu0
        %4369 = vdwg.mxu0
        %v4371 = vsel %vm1961, %v3487, 0
        %v4374 = vsel %vm1961, %v3813, 0
        %4376 = vmatprep.subr.mxu0 0.0
        %4377 = vmatpush1.xpose.msra.mxu0 %v4374
        %4378 = vmatprep.subr.mxu0 0.0
        %4379 = vmatpush1.xpose.msra.mxu0 0.0
        %4380 = vmatprep.subr.mxu0 0.0
        %4381 = vmatpush1.xpose.msra.mxu0 0.0
        %4382 = vmatprep.subr.mxu0 0.0
        %4383 = vmatpush1.xpose.msra.mxu0 0.0
        %4384 = vmatprep.subr.mxu0 0.0
        %4385 = vmatpush1.xpose.msra.mxu0 0.0
        %4386 = vmatprep.subr.mxu0 0.0
        %4387 = vmatpush1.xpose.msra.mxu0 0.0
        %4388 = vmatprep.subr.mxu0 0.0
        %4389 = vmatpush1.xpose.msra.mxu0 0.0
        %4390 = vmatprep.subr.mxu0 0.0
        %4391 = vmatpush1.xpose.msra.mxu0 0.0
        %4392 = vmatprep.subr.mxu0 0.0
        %4393 = vmatpush1.xpose.msra.mxu0 0.0
        %4394 = vmatprep.subr.mxu0 0.0
        %4395 = vmatpush1.xpose.msra.mxu0 0.0
        %4396 = vmatprep.subr.mxu0 0.0
        %4397 = vmatpush1.xpose.msra.mxu0 0.0
        %4398 = vmatprep.subr.mxu0 0.0
        %4399 = vmatpush1.xpose.msra.mxu0 0.0
        %4400 = vmatprep.subr.mxu0 0.0
        %4401 = vmatpush1.xpose.msra.mxu0 0.0
        %4402 = vmatprep.subr.mxu0 0.0
        %4403 = vmatpush1.xpose.msra.mxu0 0.0
        %4404 = vmatprep.subr.mxu0 0.0
        %4405 = vmatpush1.xpose.msra.mxu0 0.0
        %4406 = vmatprep.subr.mxu0 0.0
        %4407 = vmatpush1.xpose.msra.mxu0 0.0
        %4408 = vmatprep.subr.mxu0 0.0
        %4409 = vmatpush1.xpose.msra.mxu0 0.0
        %4410 = vmatprep.subr.mxu0 0.0
        %4411 = vmatpush1.xpose.msra.mxu0 0.0
        %4412 = vmatprep.subr.mxu0 0.0
        %4413 = vmatpush1.xpose.msra.mxu0 0.0
        %4414 = vmatprep.subr.mxu0 0.0
        %4415 = vmatpush1.xpose.msra.mxu0 0.0
        %4416 = vmatprep.subr.mxu0 0.0
        %4417 = vmatpush1.xpose.msra.mxu0 0.0
        %4418 = vmatprep.subr.mxu0 0.0
        %4419 = vmatpush1.xpose.msra.mxu0 0.0
        %4420 = vmatprep.subr.mxu0 0.0
        %4421 = vmatpush1.xpose.msra.mxu0 0.0
        %4422 = vmatprep.subr.mxu0 0.0
        %4423 = vmatpush1.xpose.msra.mxu0 0.0
        %4424 = vmatprep.subr.mxu0 0.0
        %4425 = vmatpush1.xpose.msra.mxu0 0.0
        %4426 = vmatprep.subr.mxu0 0.0
        %4427 = vmatpush1.xpose.msra.mxu0 0.0
        %4428 = vmatprep.subr.mxu0 0.0
        %4429 = vmatpush1.xpose.msra.mxu0 0.0
        %4430 = vmatprep.subr.mxu0 0.0
        %4431 = vmatpush1.xpose.msra.mxu0 0.0
        %4432 = vmatprep.subr.mxu0 0.0
        %4433 = vmatpush1.xpose.msra.mxu0 0.0
        %4434 = vmatprep.subr.mxu0 0.0
        %4435 = vmatpush1.xpose.msra.mxu0 0.0
        %4436 = vmatprep.subr.mxu0 0.0
        %4437 = vmatpush1.xpose.msra.mxu0 0.0
        %4438 = vmatprep.subr.mxu0 0.0
        %4439 = vmatpush1.xpose.msra.mxu0 0.0
        %4440 = vmatprep.mubr.f32.mxu0 0.0
        %4441 = vmatmul.mubr.f32.gmra.mrb[0].mxu0 %v4371
        %v4442 = vpop.f32.mrb[0].mxu0
        %v4443 = vadd.f32 %v954, %v4442
        %v4444 = vpop.f32.mrb[0].mxu0
        %4445 = vdwg.mxu0
        %v4446 = vsel %vm1961, %v4215, -inf
        %4447 = vmax.xlane.f32.xlu0 %v4446
        %v4448 = vpop.xlane.xlu0 %4447
        %v4449 = vsel %vm1961, %v4291, -inf
        %4450 = vmax.xlane.f32.xlu0 %v4449
        %v4451 = vpop.xlane.xlu0 %4450
        %v4452 = vsel %vm1961, %v4367, -inf
        %4453 = vmax.xlane.f32.xlu0 %v4452
        %v4454 = vpop.xlane.xlu0 %4453
        %v4455 = vsel %vm1961, %v4443, -inf
        %4456 = vmax.xlane.f32.xlu0 %v4455
        %v4457 = vpop.xlane.xlu0 %4456
        %v4458 = vsub.f32 %v4215, %v4448
        %v4459 = vsub.f32 %v4291, %v4451
        %v4460 = vsub.f32 %v4367, %v4454
        %v4461 = vsub.f32 %v4443, %v4457
        %v4462 = vmul.f32 %v4458, 1.442695
        %v4463 = vpow.pop %v4462
        %v4464 = vmul.f32 %v4459, 1.442695
        %v4465 = vpow.pop %v4464
        %v4466 = vmul.f32 %v4460, 1.442695
        %v4467 = vpow.pop %v4466
        %v4468 = vmul.f32 %v4461, 1.442695
        %v4469 = vpow.pop %v4468
        %v4470 = vsel %vm1961, %v4463, 0.0
        %4471 = vadd.xlane.f32.xlu0 %v4470
        %v4472 = vpop.xlane.xlu0 %4471
        %v4473 = vsel %vm1961, %v4465, 0.0
        %4474 = vadd.xlane.f32.xlu0 %v4473
        %v4475 = vpop.xlane.xlu0 %4474
        %v4476 = vsel %vm1961, %v4467, 0.0
        %4477 = vadd.xlane.f32.xlu0 %v4476
        %v4478 = vpop.xlane.xlu0 %4477
        %v4479 = vsel %vm1961, %v4469, 0.0
        %4480 = vadd.xlane.f32.xlu0 %v4479
        %v4481 = vpop.xlane.xlu0 %4480
        %v4482 = vrcp.pop %v4472
        %v4483 = vrcp.pop %v4475
        %v4484 = vrcp.pop %v4478
        %v4485 = vrcp.pop %v4481
        %v4486 = vmul.f32 %v4463, %v4482
        %v4487 = vmul.f32 %v4465, %v4483
        %v4488 = vmul.f32 %v4467, %v4484
        %v4489 = vmul.f32 %v4469, %v4485
        %v4491 = vsel %vm1961, %v4486, 0
        %4493 = vmatprep.subr.mxu0 0.0
        %4494 = vmatpush1.msra.mxu0 %v3929
        %4495 = vmatprep.subr.mxu0 0.0
        %4496 = vmatpush1.msra.mxu0 0.0
        %4497 = vmatprep.subr.mxu0 0.0
        %4498 = vmatpush1.msra.mxu0 0.0
        %4499 = vmatprep.subr.mxu0 0.0
        %4500 = vmatpush1.msra.mxu0 0.0
        %4501 = vmatprep.subr.mxu0 0.0
        %4502 = vmatpush1.msra.mxu0 0.0
        %4503 = vmatprep.subr.mxu0 0.0
        %4504 = vmatpush1.msra.mxu0 0.0
        %4505 = vmatprep.subr.mxu0 0.0
        %4506 = vmatpush1.msra.mxu0 0.0
        %4507 = vmatprep.subr.mxu0 0.0
        %4508 = vmatpush1.msra.mxu0 0.0
        %4509 = vmatprep.subr.mxu0 0.0
        %4510 = vmatpush1.msra.mxu0 0.0
        %4511 = vmatprep.subr.mxu0 0.0
        %4512 = vmatpush1.msra.mxu0 0.0
        %4513 = vmatprep.subr.mxu0 0.0
        %4514 = vmatpush1.msra.mxu0 0.0
        %4515 = vmatprep.subr.mxu0 0.0
        %4516 = vmatpush1.msra.mxu0 0.0
        %4517 = vmatprep.subr.mxu0 0.0
        %4518 = vmatpush1.msra.mxu0 0.0
        %4519 = vmatprep.subr.mxu0 0.0
        %4520 = vmatpush1.msra.mxu0 0.0
        %4521 = vmatprep.subr.mxu0 0.0
        %4522 = vmatpush1.msra.mxu0 0.0
        %4523 = vmatprep.subr.mxu0 0.0
        %4524 = vmatpush1.msra.mxu0 0.0
        %4525 = vmatprep.subr.mxu0 0.0
        %4526 = vmatpush1.msra.mxu0 0.0
        %4527 = vmatprep.subr.mxu0 0.0
        %4528 = vmatpush1.msra.mxu0 0.0
        %4529 = vmatprep.subr.mxu0 0.0
        %4530 = vmatpush1.msra.mxu0 0.0
        %4531 = vmatprep.subr.mxu0 0.0
        %4532 = vmatpush1.msra.mxu0 0.0
        %4533 = vmatprep.subr.mxu0 0.0
        %4534 = vmatpush1.msra.mxu0 0.0
        %4535 = vmatprep.subr.mxu0 0.0
        %4536 = vmatpush1.msra.mxu0 0.0
        %4537 = vmatprep.subr.mxu0 0.0
        %4538 = vmatpush1.msra.mxu0 0.0
        %4539 = vmatprep.subr.mxu0 0.0
        %4540 = vmatpush1.msra.mxu0 0.0
        %4541 = vmatprep.subr.mxu0 0.0
        %4542 = vmatpush1.msra.mxu0 0.0
        %4543 = vmatprep.subr.mxu0 0.0
        %4544 = vmatpush1.msra.mxu0 0.0
        %4545 = vmatprep.subr.mxu0 0.0
        %4546 = vmatpush1.msra.mxu0 0.0
        %4547 = vmatprep.subr.mxu0 0.0
        %4548 = vmatpush1.msra.mxu0 0.0
        %4549 = vmatprep.subr.mxu0 0.0
        %4550 = vmatpush1.msra.mxu0 0.0
        %4551 = vmatprep.subr.mxu0 0.0
        %4552 = vmatpush1.msra.mxu0 0.0
        %4553 = vmatprep.subr.mxu0 0.0
        %4554 = vmatpush1.msra.mxu0 0.0
        %4555 = vmatprep.subr.mxu0 0.0
        %4556 = vmatpush1.msra.mxu0 0.0
        %4557 = vmatprep.mubr.f32.mxu0 0.0
        %4558 = vmatmul.mubr.f32.gmra.mrb[0].mxu0 %v4491
        %v4559 = vpop.f32.mrb[0].mxu0
        %v4560 = vadd.f32 0.0, %v4559
        %v4561 = vpop.f32.mrb[0].mxu0
        %4562 = vdwg.mxu0
        %v4564 = vsel %vm1961, %v4487, 0
        %4566 = vmatprep.subr.mxu0 0.0
        %4567 = vmatpush1.msra.mxu0 %v3999
        %4568 = vmatprep.subr.mxu0 0.0
        %4569 = vmatpush1.msra.mxu0 0.0
        %4570 = vmatprep.subr.mxu0 0.0
        %4571 = vmatpush1.msra.mxu0 0.0
        %4572 = vmatprep.subr.mxu0 0.0
        %4573 = vmatpush1.msra.mxu0 0.0
        %4574 = vmatprep.subr.mxu0 0.0
        %4575 = vmatpush1.msra.mxu0 0.0
        %4576 = vmatprep.subr.mxu0 0.0
        %4577 = vmatpush1.msra.mxu0 0.0
        %4578 = vmatprep.subr.mxu0 0.0
        %4579 = vmatpush1.msra.mxu0 0.0
        %4580 = vmatprep.subr.mxu0 0.0
        %4581 = vmatpush1.msra.mxu0 0.0
        %4582 = vmatprep.subr.mxu0 0.0
        %4583 = vmatpush1.msra.mxu0 0.0
        %4584 = vmatprep.subr.mxu0 0.0
        %4585 = vmatpush1.msra.mxu0 0.0
        %4586 = vmatprep.subr.mxu0 0.0
        %4587 = vmatpush1.msra.mxu0 0.0
        %4588 = vmatprep.subr.mxu0 0.0
        %4589 = vmatpush1.msra.mxu0 0.0
        %4590 = vmatprep.subr.mxu0 0.0
        %4591 = vmatpush1.msra.mxu0 0.0
        %4592 = vmatprep.subr.mxu0 0.0
        %4593 = vmatpush1.msra.mxu0 0.0
        %4594 = vmatprep.subr.mxu0 0.0
        %4595 = vmatpush1.msra.mxu0 0.0
        %4596 = vmatprep.subr.mxu0 0.0
        %4597 = vmatpush1.msra.mxu0 0.0
        %4598 = vmatprep.subr.mxu0 0.0
        %4599 = vmatpush1.msra.mxu0 0.0
        %4600 = vmatprep.subr.mxu0 0.0
        %4601 = vmatpush1.msra.mxu0 0.0
        %4602 = vmatprep.subr.mxu0 0.0
        %4603 = vmatpush1.msra.mxu0 0.0
        %4604 = vmatprep.subr.mxu0 0.0
        %4605 = vmatpush1.msra.mxu0 0.0
        %4606 = vmatprep.subr.mxu0 0.0
        %4607 = vmatpush1.msra.mxu0 0.0
        %4608 = vmatprep.subr.mxu0 0.0
        %4609 = vmatpush1.msra.mxu0 0.0
        %4610 = vmatprep.subr.mxu0 0.0
        %4611 = vmatpush1.msra.mxu0 0.0
        %4612 = vmatprep.subr.mxu0 0.0
        %4613 = vmatpush1.msra.mxu0 0.0
        %4614 = vmatprep.subr.mxu0 0.0
        %4615 = vmatpush1.msra.mxu0 0.0
        %4616 = vmatprep.subr.mxu0 0.0
        %4617 = vmatpush1.msra.mxu0 0.0
        %4618 = vmatprep.subr.mxu0 0.0
        %4619 = vmatpush1.msra.mxu0 0.0
        %4620 = vmatprep.subr.mxu0 0.0
        %4621 = vmatpush1.msra.mxu0 0.0
        %4622 = vmatprep.subr.mxu0 0.0
        %4623 = vmatpush1.msra.mxu0 0.0
        %4624 = vmatprep.subr.mxu0 0.0
        %4625 = vmatpush1.msra.mxu0 0.0
        %4626 = vmatprep.subr.mxu0 0.0
        %4627 = vmatpush1.msra.mxu0 0.0
        %4628 = vmatprep.subr.mxu0 0.0
        %4629 = vmatpush1.msra.mxu0 0.0
        %4630 = vmatprep.mubr.f32.mxu0 0.0
        %4631 = vmatmul.mubr.f32.gmra.mrb[0].mxu0 %v4564
        %v4632 = vpop.f32.mrb[0].mxu0
        %v4633 = vadd.f32 0.0, %v4632
        %v4634 = vpop.f32.mrb[0].mxu0
        %4635 = vdwg.mxu0
        %v4637 = vsel %vm1961, %v4488, 0
        %4639 = vmatprep.subr.mxu0 0.0
        %4640 = vmatpush1.msra.mxu0 %v4069
        %4641 = vmatprep.subr.mxu0 0.0
        %4642 = vmatpush1.msra.mxu0 0.0
        %4643 = vmatprep.subr.mxu0 0.0
        %4644 = vmatpush1.msra.mxu0 0.0
        %4645 = vmatprep.subr.mxu0 0.0
        %4646 = vmatpush1.msra.mxu0 0.0
        %4647 = vmatprep.subr.mxu0 0.0
        %4648 = vmatpush1.msra.mxu0 0.0
        %4649 = vmatprep.subr.mxu0 0.0
        %4650 = vmatpush1.msra.mxu0 0.0
        %4651 = vmatprep.subr.mxu0 0.0
        %4652 = vmatpush1.msra.mxu0 0.0
        %4653 = vmatprep.subr.mxu0 0.0
        %4654 = vmatpush1.msra.mxu0 0.0
        %4655 = vmatprep.subr.mxu0 0.0
        %4656 = vmatpush1.msra.mxu0 0.0
        %4657 = vmatprep.subr.mxu0 0.0
        %4658 = vmatpush1.msra.mxu0 0.0
        %4659 = vmatprep.subr.mxu0 0.0
        %4660 = vmatpush1.msra.mxu0 0.0
        %4661 = vmatprep.subr.mxu0 0.0
        %4662 = vmatpush1.msra.mxu0 0.0
        %4663 = vmatprep.subr.mxu0 0.0
        %4664 = vmatpush1.msra.mxu0 0.0
        %4665 = vmatprep.subr.mxu0 0.0
        %4666 = vmatpush1.msra.mxu0 0.0
        %4667 = vmatprep.subr.mxu0 0.0
        %4668 = vmatpush1.msra.mxu0 0.0
        %4669 = vmatprep.subr.mxu0 0.0
        %4670 = vmatpush1.msra.mxu0 0.0
        %4671 = vmatprep.subr.mxu0 0.0
        %4672 = vmatpush1.msra.mxu0 0.0
        %4673 = vmatprep.subr.mxu0 0.0
        %4674 = vmatpush1.msra.mxu0 0.0
        %4675 = vmatprep.subr.mxu0 0.0
        %4676 = vmatpush1.msra.mxu0 0.0
        %4677 = vmatprep.subr.mxu0 0.0
        %4678 = vmatpush1.msra.mxu0 0.0
        %4679 = vmatprep.subr.mxu0 0.0
        %4680 = vmatpush1.msra.mxu0 0.0
        %4681 = vmatprep.subr.mxu0 0.0
        %4682 = vmatpush1.msra.mxu0 0.0
        %4683 = vmatprep.subr.mxu0 0.0
        %4684 = vmatpush1.msra.mxu0 0.0
        %4685 = vmatprep.subr.mxu0 0.0
        %4686 = vmatpush1.msra.mxu0 0.0
        %4687 = vmatprep.subr.mxu0 0.0
        %4688 = vmatpush1.msra.mxu0 0.0
        %4689 = vmatprep.subr.mxu0 0.0
        %4690 = vmatpush1.msra.mxu0 0.0
        %4691 = vmatprep.subr.mxu0 0.0
        %4692 = vmatpush1.msra.mxu0 0.0
        %4693 = vmatprep.subr.mxu0 0.0
        %4694 = vmatpush1.msra.mxu0 0.0
        %4695 = vmatprep.subr.mxu0 0.0
        %4696 = vmatpush1.msra.mxu0 0.0
        %4697 = vmatprep.subr.mxu0 0.0
        %4698 = vmatpush1.msra.mxu0 0.0
        %4699 = vmatprep.subr.mxu0 0.0
        %4700 = vmatpush1.msra.mxu0 0.0
        %4701 = vmatprep.subr.mxu0 0.0
        %4702 = vmatpush1.msra.mxu0 0.0
        %4703 = vmatprep.mubr.f32.mxu0 0.0
        %4704 = vmatmul.mubr.f32.gmra.mrb[0].mxu0 %v4637
        %v4705 = vpop.f32.mrb[0].mxu0
        %v4706 = vadd.f32 0.0, %v4705
        %v4707 = vpop.f32.mrb[0].mxu0
        %4708 = vdwg.mxu0
        %v4710 = vsel %vm1961, %v4489, 0
        %4712 = vmatprep.subr.mxu0 0.0
        %4713 = vmatpush1.msra.mxu0 %v4139
        %4714 = vmatprep.subr.mxu0 0.0
        %4715 = vmatpush1.msra.mxu0 0.0
        %4716 = vmatprep.subr.mxu0 0.0
        %4717 = vmatpush1.msra.mxu0 0.0
        %4718 = vmatprep.subr.mxu0 0.0
        %4719 = vmatpush1.msra.mxu0 0.0
        %4720 = vmatprep.subr.mxu0 0.0
        %4721 = vmatpush1.msra.mxu0 0.0
        %4722 = vmatprep.subr.mxu0 0.0
        %4723 = vmatpush1.msra.mxu0 0.0
        %4724 = vmatprep.subr.mxu0 0.0
        %4725 = vmatpush1.msra.mxu0 0.0
        %4726 = vmatprep.subr.mxu0 0.0
        %4727 = vmatpush1.msra.mxu0 0.0
        %4728 = vmatprep.subr.mxu0 0.0
        %4729 = vmatpush1.msra.mxu0 0.0
        %4730 = vmatprep.subr.mxu0 0.0
        %4731 = vmatpush1.msra.mxu0 0.0
        %4732 = vmatprep.subr.mxu0 0.0
        %4733 = vmatpush1.msra.mxu0 0.0
        %4734 = vmatprep.subr.mxu0 0.0
        %4735 = vmatpush1.msra.mxu0 0.0
        %4736 = vmatprep.subr.mxu0 0.0
        %4737 = vmatpush1.msra.mxu0 0.0
        %4738 = vmatprep.subr.mxu0 0.0
        %4739 = vmatpush1.msra.mxu0 0.0
        %4740 = vmatprep.subr.mxu0 0.0
        %4741 = vmatpush1.msra.mxu0 0.0
        %4742 = vmatprep.subr.mxu0 0.0
        %4743 = vmatpush1.msra.mxu0 0.0
        %4744 = vmatprep.subr.mxu0 0.0
        %4745 = vmatpush1.msra.mxu0 0.0
        %4746 = vmatprep.subr.mxu0 0.0
        %4747 = vmatpush1.msra.mxu0 0.0
        %4748 = vmatprep.subr.mxu0 0.0
        %4749 = vmatpush1.msra.mxu0 0.0
        %4750 = vmatprep.subr.mxu0 0.0
        %4751 = vmatpush1.msra.mxu0 0.0
        %4752 = vmatprep.subr.mxu0 0.0
        %4753 = vmatpush1.msra.mxu0 0.0
        %4754 = vmatprep.subr.mxu0 0.0
        %4755 = vmatpush1.msra.mxu0 0.0
        %4756 = vmatprep.subr.mxu0 0.0
        %4757 = vmatpush1.msra.mxu0 0.0
        %4758 = vmatprep.subr.mxu0 0.0
        %4759 = vmatpush1.msra.mxu0 0.0
        %4760 = vmatprep.subr.mxu0 0.0
        %4761 = vmatpush1.msra.mxu0 0.0
        %4762 = vmatprep.subr.mxu0 0.0
        %4763 = vmatpush1.msra.mxu0 0.0
        %4764 = vmatprep.subr.mxu0 0.0
        %4765 = vmatpush1.msra.mxu0 0.0
        %4766 = vmatprep.subr.mxu0 0.0
        %4767 = vmatpush1.msra.mxu0 0.0
        %4768 = vmatprep.subr.mxu0 0.0
        %4769 = vmatpush1.msra.mxu0 0.0
        %4770 = vmatprep.subr.mxu0 0.0
        %4771 = vmatpush1.msra.mxu0 0.0
        %4772 = vmatprep.subr.mxu0 0.0
        %4773 = vmatpush1.msra.mxu0 0.0
        %4774 = vmatprep.subr.mxu0 0.0
        %4775 = vmatpush1.msra.mxu0 0.0
        %4776 = vmatprep.mubr.f32.mxu0 0.0
        %4777 = vmatmul.mubr.f32.gmra.mrb[0].mxu0 %v4710
        %v4778 = vpop.f32.mrb[0].mxu0
        %v4779 = vadd.f32 0.0, %v4778
        %v4780 = vpop.f32.mrb[0].mxu0
        %4781 = vdwg.mxu0
        %s4782 = scalar_lea.vmem %s16, 32
        %v4783 = vld [vmem:[%s4782] sm:$0xff]
        %v4784 = vld [vmem:[%s4782 + $0x8] sm:$0xff]
        %v4785 = vld [vmem:[%s4782 + $0x10] sm:$0xff]
        %v4786 = vld [vmem:[%s4782 + $0x18] sm:$0xff]
        %v4788 = vsel %vm1961, %v4560, 0
        %4790 = vmatprep.subr.mxu0 0.0
        %4791 = vmatpush1.msra.mxu0 %v4783
        %4792 = vmatprep.subr.mxu0 0.0
        %4793 = vmatpush1.msra.mxu0 0.0
        %4794 = vmatprep.subr.mxu0 0.0
        %4795 = vmatpush1.msra.mxu0 0.0
        %4796 = vmatprep.subr.mxu0 0.0
        %4797 = vmatpush1.msra.mxu0 0.0
        %4798 = vmatprep.subr.mxu0 0.0
        %4799 = vmatpush1.msra.mxu0 0.0
        %4800 = vmatprep.subr.mxu0 0.0
        %4801 = vmatpush1.msra.mxu0 0.0
        %4802 = vmatprep.subr.mxu0 0.0
        %4803 = vmatpush1.msra.mxu0 0.0
        %4804 = vmatprep.subr.mxu0 0.0
        %4805 = vmatpush1.msra.mxu0 0.0
        %4806 = vmatprep.subr.mxu0 0.0
        %4807 = vmatpush1.msra.mxu0 0.0
        %4808 = vmatprep.subr.mxu0 0.0
        %4809 = vmatpush1.msra.mxu0 0.0
        %4810 = vmatprep.subr.mxu0 0.0
        %4811 = vmatpush1.msra.mxu0 0.0
        %4812 = vmatprep.subr.mxu0 0.0
        %4813 = vmatpush1.msra.mxu0 0.0
        %4814 = vmatprep.subr.mxu0 0.0
        %4815 = vmatpush1.msra.mxu0 0.0
        %4816 = vmatprep.subr.mxu0 0.0
        %4817 = vmatpush1.msra.mxu0 0.0
        %4818 = vmatprep.subr.mxu0 0.0
        %4819 = vmatpush1.msra.mxu0 0.0
        %4820 = vmatprep.subr.mxu0 0.0
        %4821 = vmatpush1.msra.mxu0 0.0
        %4822 = vmatprep.subr.mxu0 0.0
        %4823 = vmatpush1.msra.mxu0 0.0
        %4824 = vmatprep.subr.mxu0 0.0
        %4825 = vmatpush1.msra.mxu0 0.0
        %4826 = vmatprep.subr.mxu0 0.0
        %4827 = vmatpush1.msra.mxu0 0.0
        %4828 = vmatprep.subr.mxu0 0.0
        %4829 = vmatpush1.msra.mxu0 0.0
        %4830 = vmatprep.subr.mxu0 0.0
        %4831 = vmatpush1.msra.mxu0 0.0
        %4832 = vmatprep.subr.mxu0 0.0
        %4833 = vmatpush1.msra.mxu0 0.0
        %4834 = vmatprep.subr.mxu0 0.0
        %4835 = vmatpush1.msra.mxu0 0.0
        %4836 = vmatprep.subr.mxu0 0.0
        %4837 = vmatpush1.msra.mxu0 0.0
        %4838 = vmatprep.subr.mxu0 0.0
        %4839 = vmatpush1.msra.mxu0 0.0
        %4840 = vmatprep.subr.mxu0 0.0
        %4841 = vmatpush1.msra.mxu0 0.0
        %4842 = vmatprep.subr.mxu0 0.0
        %4843 = vmatpush1.msra.mxu0 0.0
        %4844 = vmatprep.subr.mxu0 0.0
        %4845 = vmatpush1.msra.mxu0 0.0
        %4846 = vmatprep.subr.mxu0 0.0
        %4847 = vmatpush1.msra.mxu0 0.0
        %4848 = vmatprep.subr.mxu0 0.0
        %4849 = vmatpush1.msra.mxu0 0.0
        %4850 = vmatprep.subr.mxu0 0.0
        %4851 = vmatpush1.msra.mxu0 0.0
        %4852 = vmatprep.subr.mxu0 0.0
        %4853 = vmatpush1.msra.mxu0 0.0
        %4854 = vmatprep.mubr.f32.mxu0 0.0
        %4855 = vmatmul.mubr.f32.gmra.mrb[0].mxu0 %v4788
        %v4856 = vpop.f32.mrb[0].mxu0
        %v4857 = vadd.f32 0.0, %v4856
        %v4858 = vpop.f32.mrb[0].mxu0
        %4859 = vdwg.mxu0
        %v4861 = vsel %vm1961, %v4633, 0
        %4863 = vmatprep.subr.mxu0 0.0
        %4864 = vmatpush1.msra.mxu0 %v4784
        %4865 = vmatprep.subr.mxu0 0.0
        %4866 = vmatpush1.msra.mxu0 0.0
        %4867 = vmatprep.subr.mxu0 0.0
        %4868 = vmatpush1.msra.mxu0 0.0
        %4869 = vmatprep.subr.mxu0 0.0
        %4870 = vmatpush1.msra.mxu0 0.0
        %4871 = vmatprep.subr.mxu0 0.0
        %4872 = vmatpush1.msra.mxu0 0.0
        %4873 = vmatprep.subr.mxu0 0.0
        %4874 = vmatpush1.msra.mxu0 0.0
        %4875 = vmatprep.subr.mxu0 0.0
        %4876 = vmatpush1.msra.mxu0 0.0
        %4877 = vmatprep.subr.mxu0 0.0
        %4878 = vmatpush1.msra.mxu0 0.0
        %4879 = vmatprep.subr.mxu0 0.0
        %4880 = vmatpush1.msra.mxu0 0.0
        %4881 = vmatprep.subr.mxu0 0.0
        %4882 = vmatpush1.msra.mxu0 0.0
        %4883 = vmatprep.subr.mxu0 0.0
        %4884 = vmatpush1.msra.mxu0 0.0
        %4885 = vmatprep.subr.mxu0 0.0
        %4886 = vmatpush1.msra.mxu0 0.0
        %4887 = vmatprep.subr.mxu0 0.0
        %4888 = vmatpush1.msra.mxu0 0.0
        %4889 = vmatprep.subr.mxu0 0.0
        %4890 = vmatpush1.msra.mxu0 0.0
        %4891 = vmatprep.subr.mxu0 0.0
        %4892 = vmatpush1.msra.mxu0 0.0
        %4893 = vmatprep.subr.mxu0 0.0
        %4894 = vmatpush1.msra.mxu0 0.0
        %4895 = vmatprep.subr.mxu0 0.0
        %4896 = vmatpush1.msra.mxu0 0.0
        %4897 = vmatprep.subr.mxu0 0.0
        %4898 = vmatpush1.msra.mxu0 0.0
        %4899 = vmatprep.subr.mxu0 0.0
        %4900 = vmatpush1.msra.mxu0 0.0
        %4901 = vmatprep.subr.mxu0 0.0
        %4902 = vmatpush1.msra.mxu0 0.0
        %4903 = vmatprep.subr.mxu0 0.0
        %4904 = vmatpush1.msra.mxu0 0.0
        %4905 = vmatprep.subr.mxu0 0.0
        %4906 = vmatpush1.msra.mxu0 0.0
        %4907 = vmatprep.subr.mxu0 0.0
        %4908 = vmatpush1.msra.mxu0 0.0
        %4909 = vmatprep.subr.mxu0 0.0
        %4910 = vmatpush1.msra.mxu0 0.0
        %4911 = vmatprep.subr.mxu0 0.0
        %4912 = vmatpush1.msra.mxu0 0.0
        %4913 = vmatprep.subr.mxu0 0.0
        %4914 = vmatpush1.msra.mxu0 0.0
        %4915 = vmatprep.subr.mxu0 0.0
        %4916 = vmatpush1.msra.mxu0 0.0
        %4917 = vmatprep.subr.mxu0 0.0
        %4918 = vmatpush1.msra.mxu0 0.0
        %4919 = vmatprep.subr.mxu0 0.0
        %4920 = vmatpush1.msra.mxu0 0.0
        %4921 = vmatprep.subr.mxu0 0.0
        %4922 = vmatpush1.msra.mxu0 0.0
        %4923 = vmatprep.subr.mxu0 0.0
        %4924 = vmatpush1.msra.mxu0 0.0
        %4925 = vmatprep.subr.mxu0 0.0
        %4926 = vmatpush1.msra.mxu0 0.0
        %4927 = vmatprep.mubr.f32.mxu0 0.0
        %4928 = vmatmul.mubr.f32.gmra.mrb[0].mxu0 %v4861
        %v4929 = vpop.f32.mrb[0].mxu0
        %v4930 = vadd.f32 0.0, %v4929
        %v4931 = vpop.f32.mrb[0].mxu0
        %4932 = vdwg.mxu0
        %v4934 = vsel %vm1961, %v4706, 0
        %4936 = vmatprep.subr.mxu0 0.0
        %4937 = vmatpush1.msra.mxu0 %v4785
        %4938 = vmatprep.subr.mxu0 0.0
        %4939 = vmatpush1.msra.mxu0 0.0
        %4940 = vmatprep.subr.mxu0 0.0
        %4941 = vmatpush1.msra.mxu0 0.0
        %4942 = vmatprep.subr.mxu0 0.0
        %4943 = vmatpush1.msra.mxu0 0.0
        %4944 = vmatprep.subr.mxu0 0.0
        %4945 = vmatpush1.msra.mxu0 0.0
        %4946 = vmatprep.subr.mxu0 0.0
        %4947 = vmatpush1.msra.mxu0 0.0
        %4948 = vmatprep.subr.mxu0 0.0
        %4949 = vmatpush1.msra.mxu0 0.0
        %4950 = vmatprep.subr.mxu0 0.0
        %4951 = vmatpush1.msra.mxu0 0.0
        %4952 = vmatprep.subr.mxu0 0.0
        %4953 = vmatpush1.msra.mxu0 0.0
        %4954 = vmatprep.subr.mxu0 0.0
        %4955 = vmatpush1.msra.mxu0 0.0
        %4956 = vmatprep.subr.mxu0 0.0
        %4957 = vmatpush1.msra.mxu0 0.0
        %4958 = vmatprep.subr.mxu0 0.0
        %4959 = vmatpush1.msra.mxu0 0.0
        %4960 = vmatprep.subr.mxu0 0.0
        %4961 = vmatpush1.msra.mxu0 0.0
        %4962 = vmatprep.subr.mxu0 0.0
        %4963 = vmatpush1.msra.mxu0 0.0
        %4964 = vmatprep.subr.mxu0 0.0
        %4965 = vmatpush1.msra.mxu0 0.0
        %4966 = vmatprep.subr.mxu0 0.0
        %4967 = vmatpush1.msra.mxu0 0.0
        %4968 = vmatprep.subr.mxu0 0.0
        %4969 = vmatpush1.msra.mxu0 0.0
        %4970 = vmatprep.subr.mxu0 0.0
        %4971 = vmatpush1.msra.mxu0 0.0
        %4972 = vmatprep.subr.mxu0 0.0
        %4973 = vmatpush1.msra.mxu0 0.0
        %4974 = vmatprep.subr.mxu0 0.0
        %4975 = vmatpush1.msra.mxu0 0.0
        %4976 = vmatprep.subr.mxu0 0.0
        %4977 = vmatpush1.msra.mxu0 0.0
        %4978 = vmatprep.subr.mxu0 0.0
        %4979 = vmatpush1.msra.mxu0 0.0
        %4980 = vmatprep.subr.mxu0 0.0
        %4981 = vmatpush1.msra.mxu0 0.0
        %4982 = vmatprep.subr.mxu0 0.0
        %4983 = vmatpush1.msra.mxu0 0.0
        %4984 = vmatprep.subr.mxu0 0.0
        %4985 = vmatpush1.msra.mxu0 0.0
        %4986 = vmatprep.subr.mxu0 0.0
        %4987 = vmatpush1.msra.mxu0 0.0
        %4988 = vmatprep.subr.mxu0 0.0
        %4989 = vmatpush1.msra.mxu0 0.0
        %4990 = vmatprep.subr.mxu0 0.0
        %4991 = vmatpush1.msra.mxu0 0.0
        %4992 = vmatprep.subr.mxu0 0.0
        %4993 = vmatpush1.msra.mxu0 0.0
        %4994 = vmatprep.subr.mxu0 0.0
        %4995 = vmatpush1.msra.mxu0 0.0
        %4996 = vmatprep.subr.mxu0 0.0
        %4997 = vmatpush1.msra.mxu0 0.0
        %4998 = vmatprep.subr.mxu0 0.0
        %4999 = vmatpush1.msra.mxu0 0.0
        %5000 = vmatprep.mubr.f32.mxu0 0.0
        %5001 = vmatmul.mubr.f32.gmra.mrb[0].mxu0 %v4934
        %v5002 = vpop.f32.mrb[0].mxu0
        %v5003 = vadd.f32 0.0, %v5002
        %v5004 = vpop.f32.mrb[0].mxu0
        %5005 = vdwg.mxu0
        %v5007 = vsel %vm1961, %v4779, 0
        %5009 = vmatprep.subr.mxu0 0.0
        %5010 = vmatpush1.msra.mxu0 %v4786
        %5011 = vmatprep.subr.mxu0 0.0
        %5012 = vmatpush1.msra.mxu0 0.0
        %5013 = vmatprep.subr.mxu0 0.0
        %5014 = vmatpush1.msra.mxu0 0.0
        %5015 = vmatprep.subr.mxu0 0.0
        %5016 = vmatpush1.msra.mxu0 0.0
        %5017 = vmatprep.subr.mxu0 0.0
        %5018 = vmatpush1.msra.mxu0 0.0
        %5019 = vmatprep.subr.mxu0 0.0
        %5020 = vmatpush1.msra.mxu0 0.0
        %5021 = vmatprep.subr.mxu0 0.0
        %5022 = vmatpush1.msra.mxu0 0.0
        %5023 = vmatprep.subr.mxu0 0.0
        %5024 = vmatpush1.msra.mxu0 0.0
        %5025 = vmatprep.subr.mxu0 0.0
        %5026 = vmatpush1.msra.mxu0 0.0
        %5027 = vmatprep.subr.mxu0 0.0
        %5028 = vmatpush1.msra.mxu0 0.0
        %5029 = vmatprep.subr.mxu0 0.0
        %5030 = vmatpush1.msra.mxu0 0.0
        %5031 = vmatprep.subr.mxu0 0.0
        %5032 = vmatpush1.msra.mxu0 0.0
        %5033 = vmatprep.subr.mxu0 0.0
        %5034 = vmatpush1.msra.mxu0 0.0
        %5035 = vmatprep.subr.mxu0 0.0
        %5036 = vmatpush1.msra.mxu0 0.0
        %5037 = vmatprep.subr.mxu0 0.0
        %5038 = vmatpush1.msra.mxu0 0.0
        %5039 = vmatprep.subr.mxu0 0.0
        %5040 = vmatpush1.msra.mxu0 0.0
        %5041 = vmatprep.subr.mxu0 0.0
        %5042 = vmatpush1.msra.mxu0 0.0
        %5043 = vmatprep.subr.mxu0 0.0
        %5044 = vmatpush1.msra.mxu0 0.0
        %5045 = vmatprep.subr.mxu0 0.0
        %5046 = vmatpush1.msra.mxu0 0.0
        %5047 = vmatprep.subr.mxu0 0.0
        %5048 = vmatpush1.msra.mxu0 0.0
        %5049 = vmatprep.subr.mxu0 0.0
        %5050 = vmatpush1.msra.mxu0 0.0
        %5051 = vmatprep.subr.mxu0 0.0
        %5052 = vmatpush1.msra.mxu0 0.0
        %5053 = vmatprep.subr.mxu0 0.0
        %5054 = vmatpush1.msra.mxu0 0.0
        %5055 = vmatprep.subr.mxu0 0.0
        %5056 = vmatpush1.msra.mxu0 0.0
        %5057 = vmatprep.subr.mxu0 0.0
        %5058 = vmatpush1.msra.mxu0 0.0
        %5059 = vmatprep.subr.mxu0 0.0
        %5060 = vmatpush1.msra.mxu0 0.0
        %5061 = vmatprep.subr.mxu0 0.0
        %5062 = vmatpush1.msra.mxu0 0.0
        %5063 = vmatprep.subr.mxu0 0.0
        %5064 = vmatpush1.msra.mxu0 0.0
        %5065 = vmatprep.subr.mxu0 0.0
        %5066 = vmatpush1.msra.mxu0 0.0
        %5067 = vmatprep.subr.mxu0 0.0
        %5068 = vmatpush1.msra.mxu0 0.0
        %5069 = vmatprep.subr.mxu0 0.0
        %5070 = vmatpush1.msra.mxu0 0.0
        %5071 = vmatprep.subr.mxu0 0.0
        %5072 = vmatpush1.msra.mxu0 0.0
        %5073 = vmatprep.mubr.f32.mxu0 0.0
        %5074 = vmatmul.mubr.f32.gmra.mrb[0].mxu0 %v5007
        %v5075 = vpop.f32.mrb[0].mxu0
        %v5076 = vadd.f32 0.0, %v5075
        %v5077 = vpop.f32.mrb[0].mxu0
        %5078 = vdwg.mxu0
        %v5079 = vsel %vm957, %v4857, 0.0
        %v5080 = vsel %vm957, %v4930, 0.0
        %v5081 = vadd.f32 %v5079, %v5080
        %v5082 = vsel %vm957, %v5003, 0.0
        %v5083 = vadd.f32 %v5081, %v5082
        %v5084 = vsel %vm957, %v5076, 0.0
        %v5085 = vadd.f32 %v5083, %v5084
        %v5086 = vadd.f32 %v3129, %v5085
        %s5087 = scalar_lea.vmem %s17, 1
        %v5088 = vld [vmem:[%s5087] sm:$0x1]
        %v5090 = vlaneseq
        %v5091 = vshrl.u32 %v5090, 7
        %v5092 = vsub.s32 0, %v5091
        %v5093 = vrot.slane %v5088, %v5092
        %v5095 = vadd.f32 %v5086, %v5093
        %s5096 = scalar_lea.vmem %s18, 1
        %v5097 = vld [vmem:[%s5096] sm:$0x1]
        %s5098 = scalar_lea.vmem %s19, 1
        %v5099 = vld [vmem:[%s5098] sm:$0x1]
        %v5100 = vsel %vm957, %v5095, 0.0
        %5101 = vadd.xlane.f32.xlu0 %v5100
        %v5102 = vpop.xlane.xlu0 %5101
        %v5103 = vmul.f32 %v5102, %v961
        %v5104 = vsub.f32 %v5095, %v5103
        %v5105 = vmul.f32 %v5104, %v5104
        %v5106 = vsel %vm957, %v5105, 0.0
        %5107 = vadd.xlane.f32.xlu0 %v5106
        %v5108 = vpop.xlane.xlu0 %5107
        %v5109 = vmul.f32 %v5108, %v961
        %v5110 = vadd.f32 %v5109, 1e-05
        %v5111 = vrsqrt.pop %v5110
        %v5112 = vmul.f32 %v5104, %v5111
        %v5114 = vlaneseq
        %v5115 = vshrl.u32 %v5114, 7
        %v5116 = vsub.s32 0, %v5115
        %v5117 = vrot.slane %v5097, %v5116
        %v5119 = vmul.f32 %v5112, %v5117
        %v5121 = vlaneseq
        %v5122 = vshrl.u32 %v5121, 7
        %v5123 = vsub.s32 0, %v5122
        %v5124 = vrot.slane %v5099, %v5123
        %v5126 = vadd.f32 %v5119, %v5124
        %s5127 = scalar_lea.vmem %s20, 32
        %v5128 = vld [vmem:[%s5127] sm:$0xff]
        %v5129 = vld [vmem:[%s5127 + $0x8] sm:$0xff]
        %v5130 = vld [vmem:[%s5127 + $0x10] sm:$0xff]
        %v5131 = vld [vmem:[%s5127 + $0x18] sm:$0xff]
        %s5132 = scalar_lea.vmem %s21, 1
        %v5133 = vld [vmem:[%s5132] sm:$0x1]
        %v5135 = vlaneseq
        %v5136 = vshrl.u32 %v5135, 7
        %v5137 = vsub.s32 0, %v5136
        %v5138 = vrot.slane %v5133, %v5137
        %v5141 = vsel %vm957, %v5126, 0
        %5143 = vmatprep.subr.mxu0 0.0
        %5144 = vmatpush1.msra.mxu0 %v5128
        %5145 = vmatprep.subr.mxu0 0.0
        %5146 = vmatpush1.msra.mxu0 %v5129
        %5147 = vmatprep.subr.mxu0 0.0
        %5148 = vmatpush1.msra.mxu0 %v5130
        %5149 = vmatprep.subr.mxu0 0.0
        %5150 = vmatpush1.msra.mxu0 %v5131
        %5151 = vmatprep.subr.mxu0 0.0
        %5152 = vmatpush1.msra.mxu0 0.0
        %5153 = vmatprep.subr.mxu0 0.0
        %5154 = vmatpush1.msra.mxu0 0.0
        %5155 = vmatprep.subr.mxu0 0.0
        %5156 = vmatpush1.msra.mxu0 0.0
        %5157 = vmatprep.subr.mxu0 0.0
        %5158 = vmatpush1.msra.mxu0 0.0
        %5159 = vmatprep.subr.mxu0 0.0
        %5160 = vmatpush1.msra.mxu0 0.0
        %5161 = vmatprep.subr.mxu0 0.0
        %5162 = vmatpush1.msra.mxu0 0.0
        %5163 = vmatprep.subr.mxu0 0.0
        %5164 = vmatpush1.msra.mxu0 0.0
        %5165 = vmatprep.subr.mxu0 0.0
        %5166 = vmatpush1.msra.mxu0 0.0
        %5167 = vmatprep.subr.mxu0 0.0
        %5168 = vmatpush1.msra.mxu0 0.0
        %5169 = vmatprep.subr.mxu0 0.0
        %5170 = vmatpush1.msra.mxu0 0.0
        %5171 = vmatprep.subr.mxu0 0.0
        %5172 = vmatpush1.msra.mxu0 0.0
        %5173 = vmatprep.subr.mxu0 0.0
        %5174 = vmatpush1.msra.mxu0 0.0
        %5175 = vmatprep.subr.mxu0 0.0
        %5176 = vmatpush1.msra.mxu0 0.0
        %5177 = vmatprep.subr.mxu0 0.0
        %5178 = vmatpush1.msra.mxu0 0.0
        %5179 = vmatprep.subr.mxu0 0.0
        %5180 = vmatpush1.msra.mxu0 0.0
        %5181 = vmatprep.subr.mxu0 0.0
        %5182 = vmatpush1.msra.mxu0 0.0
        %5183 = vmatprep.subr.mxu0 0.0
        %5184 = vmatpush1.msra.mxu0 0.0
        %5185 = vmatprep.subr.mxu0 0.0
        %5186 = vmatpush1.msra.mxu0 0.0
        %5187 = vmatprep.subr.mxu0 0.0
        %5188 = vmatpush1.msra.mxu0 0.0
        %5189 = vmatprep.subr.mxu0 0.0
        %5190 = vmatpush1.msra.mxu0 0.0
        %5191 = vmatprep.subr.mxu0 0.0
        %5192 = vmatpush1.msra.mxu0 0.0
        %5193 = vmatprep.subr.mxu0 0.0
        %5194 = vmatpush1.msra.mxu0 0.0
        %5195 = vmatprep.subr.mxu0 0.0
        %5196 = vmatpush1.msra.mxu0 0.0
        %5197 = vmatprep.subr.mxu0 0.0
        %5198 = vmatpush1.msra.mxu0 0.0
        %5199 = vmatprep.subr.mxu0 0.0
        %5200 = vmatpush1.msra.mxu0 0.0
        %5201 = vmatprep.subr.mxu0 0.0
        %5202 = vmatpush1.msra.mxu0 0.0
        %5203 = vmatprep.subr.mxu0 0.0
        %5204 = vmatpush1.msra.mxu0 0.0
        %5205 = vmatprep.subr.mxu0 0.0
        %5206 = vmatpush1.msra.mxu0 0.0
        %5207 = vmatprep.mubr.f32.mxu0 0.0
        %5208 = vmatmul.mubr.f32.gmra.mrb[0].mxu0 %v5141
        %v5209 = vpop.f32.mrb[0].mxu0
        %v5210 = vadd.f32 %v5138, %v5209
        %v5211 = vpop.f32.mrb[0].mxu0
        %5212 = vdwg.mxu0
        %v5213 = vmul.f32 %v5210, %v5210
        %v5214 = vmul.f32 %v5210, %v5213
        %v5215 = vmul.f32 %v5214, 0.044715
        %v5216 = vadd.f32 %v5210, %v5215
        %v5217 = vmul.f32 %v5216, 0.7978846
        %v5218 = vtanh.pop %v5217
        %v5219 = vadd.f32 %v5218, 1.0
        %v5220 = vmul.f32 %v5219, 0.5
        %v5221 = vmul.f32 %v5210, %v5220
        %s5222 = scalar_lea.vmem %s22, 128
        %v5223 = vld [vmem:[%s5222] sm:$0xff]
        %v5224 = vld [vmem:[%s5222 + $0x8] sm:$0xff]
        %v5225 = vld [vmem:[%s5222 + $0x10] sm:$0xff]
        %v5226 = vld [vmem:[%s5222 + $0x18] sm:$0xff]
        %v5227 = vld [vmem:[%s5222 + $0x20] sm:$0xff]
        %v5228 = vld [vmem:[%s5222 + $0x28] sm:$0xff]
        %v5229 = vld [vmem:[%s5222 + $0x30] sm:$0xff]
        %v5230 = vld [vmem:[%s5222 + $0x38] sm:$0xff]
        %v5231 = vld [vmem:[%s5222 + $0x40] sm:$0xff]
        %v5232 = vld [vmem:[%s5222 + $0x48] sm:$0xff]
        %v5233 = vld [vmem:[%s5222 + $0x50] sm:$0xff]
        %v5234 = vld [vmem:[%s5222 + $0x58] sm:$0xff]
        %v5235 = vld [vmem:[%s5222 + $0x60] sm:$0xff]
        %v5236 = vld [vmem:[%s5222 + $0x68] sm:$0xff]
        %v5237 = vld [vmem:[%s5222 + $0x70] sm:$0xff]
        %v5238 = vld [vmem:[%s5222 + $0x78] sm:$0xff]
        %s5239 = scalar_lea.vmem %s23, 1
        %v5240 = vld [vmem:[%s5239] sm:$0x1]
        %v5242 = vlaneseq
        %v5243 = vshrl.u32 %v5242, 7
        %v5244 = vsub.s32 0, %v5243
        %v5245 = vrot.slane %v5240, %v5244
        %5247 = vmatprep.subr.mxu0 0.0
        %5248 = vmatpush1.msra.mxu0 %v5223
        %5249 = vmatprep.subr.mxu0 0.0
        %5250 = vmatpush1.msra.mxu0 %v5224
        %5251 = vmatprep.subr.mxu0 0.0
        %5252 = vmatpush1.msra.mxu0 %v5225
        %5253 = vmatprep.subr.mxu0 0.0
        %5254 = vmatpush1.msra.mxu0 %v5226
        %5255 = vmatprep.subr.mxu0 0.0
        %5256 = vmatpush1.msra.mxu0 %v5227
        %5257 = vmatprep.subr.mxu0 0.0
        %5258 = vmatpush1.msra.mxu0 %v5228
        %5259 = vmatprep.subr.mxu0 0.0
        %5260 = vmatpush1.msra.mxu0 %v5229
        %5261 = vmatprep.subr.mxu0 0.0
        %5262 = vmatpush1.msra.mxu0 %v5230
        %5263 = vmatprep.subr.mxu0 0.0
        %5264 = vmatpush1.msra.mxu0 %v5231
        %5265 = vmatprep.subr.mxu0 0.0
        %5266 = vmatpush1.msra.mxu0 %v5232
        %5267 = vmatprep.subr.mxu0 0.0
        %5268 = vmatpush1.msra.mxu0 %v5233
        %5269 = vmatprep.subr.mxu0 0.0
        %5270 = vmatpush1.msra.mxu0 %v5234
        %5271 = vmatprep.subr.mxu0 0.0
        %5272 = vmatpush1.msra.mxu0 %v5235
        %5273 = vmatprep.subr.mxu0 0.0
        %5274 = vmatpush1.msra.mxu0 %v5236
        %5275 = vmatprep.subr.mxu0 0.0
        %5276 = vmatpush1.msra.mxu0 %v5237
        %5277 = vmatprep.subr.mxu0 0.0
        %5278 = vmatpush1.msra.mxu0 %v5238
        %5279 = vmatprep.subr.mxu0 0.0
        %5280 = vmatpush1.msra.mxu0 0.0
        %5281 = vmatprep.subr.mxu0 0.0
        %5282 = vmatpush1.msra.mxu0 0.0
        %5283 = vmatprep.subr.mxu0 0.0
        %5284 = vmatpush1.msra.mxu0 0.0
        %5285 = vmatprep.subr.mxu0 0.0
        %5286 = vmatpush1.msra.mxu0 0.0
        %5287 = vmatprep.subr.mxu0 0.0
        %5288 = vmatpush1.msra.mxu0 0.0
        %5289 = vmatprep.subr.mxu0 0.0
        %5290 = vmatpush1.msra.mxu0 0.0
        %5291 = vmatprep.subr.mxu0 0.0
        %5292 = vmatpush1.msra.mxu0 0.0
        %5293 = vmatprep.subr.mxu0 0.0
        %5294 = vmatpush1.msra.mxu0 0.0
        %5295 = vmatprep.subr.mxu0 0.0
        %5296 = vmatpush1.msra.mxu0 0.0
        %5297 = vmatprep.subr.mxu0 0.0
        %5298 = vmatpush1.msra.mxu0 0.0
        %5299 = vmatprep.subr.mxu0 0.0
        %5300 = vmatpush1.msra.mxu0 0.0
        %5301 = vmatprep.subr.mxu0 0.0
        %5302 = vmatpush1.msra.mxu0 0.0
        %5303 = vmatprep.subr.mxu0 0.0
        %5304 = vmatpush1.msra.mxu0 0.0
        %5305 = vmatprep.subr.mxu0 0.0
        %5306 = vmatpush1.msra.mxu0 0.0
        %5307 = vmatprep.subr.mxu0 0.0
        %5308 = vmatpush1.msra.mxu0 0.0
        %5309 = vmatprep.subr.mxu0 0.0
        %5310 = vmatpush1.msra.mxu0 0.0
        %5311 = vmatprep.mubr.f32.mxu0 0.0
        %5312 = vmatmul.mubr.f32.gmra.mrb[0].mxu0 %v5221
        %v5313 = vpop.f32.mrb[0].mxu0
        %v5314 = vadd.f32 %v5245, %v5313
        %v5315 = vpop.f32.mrb[0].mxu0
        %5316 = vdwg.mxu0
        %v5317 = vadd.f32 %v5095, %v5314
        %v5318 = vld [vmem:[%s24] sm:$0x1]
        %v5319 = vld [vmem:[%s25] sm:$0x1]
        %v5320 = vsel %vm957, %v5317, 0.0
        %5321 = vadd.xlane.f32.xlu0 %v5320
        %v5322 = vpop.xlane.xlu0 %5321
        %v5323 = vmul.f32 %v5322, %v961
        %v5324 = vsub.f32 %v5317, %v5323
        %v5325 = vmul.f32 %v5324, %v5324
        %v5326 = vsel %vm957, %v5325, 0.0
        %5327 = vadd.xlane.f32.xlu0 %v5326
        %v5328 = vpop.xlane.xlu0 %5327
        %v5329 = vmul.f32 %v5328, %v961
        %v5330 = vadd.f32 %v5329, 1e-05
        %v5331 = vrsqrt.pop %v5330
        %v5332 = vmul.f32 %v5324, %v5331
        %v5334 = vlaneseq
        %v5335 = vshrl.u32 %v5334, 7
        %v5336 = vsub.s32 0, %v5335
        %v5337 = vrot.slane %v5318, %v5336
        %v5339 = vmul.f32 %v5332, %v5337
        %v5341 = vlaneseq
        %v5342 = vshrl.u32 %v5341, 7
        %v5343 = vsub.s32 0, %v5342
        %v5344 = vrot.slane %v5319, %v5343
        %v5346 = vadd.f32 %v5339, %v5344
        %v5347 = vld [vmem:[%s7] sm:$0x1]
        %v5349 = vlaneseq
        %v5350 = vshrl.u32 %v5349, 7
        %v5351 = vsub.s32 0, %v5350
        %v5352 = vrot.slane %v5347, %v5351
        %5354 = vst.msk [vmem:[#allocation3] sm:$0xff] %vm957, %v5352
        %5355 = vst.msk [vmem:[#allocation3 + $0x8] sm:$0xff] %vm957, %v5352
        %vm5356 = vcmask 258049
        %5357 = vst.msk [vmem:[#allocation3 - $0x1] sm:$0x1e] %vm5356, %v5346
        %v5358 = vld [vmem:[%s850] sm:$0xff]
        %v5359 = vld [vmem:[%s850 + $0x8] sm:$0xff]
        %5360 = vset.pattern.permute.xlu0 0
        %5361 = vperm.xlu0 %5360, %v5358
        %v5362 = vpop.permute.xlu0 %5361
        %5363 = vset.pattern.permute.xlu0 0
        %5364 = vperm.xlu0 %5363, %v5359
        %v5365 = vpop.permute.xlu0 %5364
        %vm5366 = vcmp.eq.s32.totalorder %v952, %v5362
        %vm5367 = vcmp.eq.s32.totalorder %v952, %v5365
        %v5368 = vsel %vm5366, 1, 0
        %v5369 = vsel %vm5367, 1, 0
        %v5370 = vcvt.s32.f32 %v5368
        %v5371 = vcvt.s32.f32 %v5369
        %v5372 = vld [vmem:[#allocation3] sm:$0xff]
        %v5373 = vld [vmem:[#allocation3 + $0x8] sm:$0xff]
        %v5374 = vld [vmem:[%s26] sm:$0xff]
        %v5375 = vld [vmem:[%s26 + $0x8] sm:$0xff]
        %vm5376 = vcmask 130048
        %v5378 = vsel %vm5376, %v5370, 0
        %v5381 = vsel %vm5376, %v5371, 0
        %5383 = vmatprep.subr.mxu0 0.0
        %5384 = vmatpush1.msra.mxu0 %v5372
        %5385 = vmatprep.subr.mxu0 0.0
        %5386 = vmatpush1.msra.mxu0 %v5373
        %5387 = vmatprep.subr.mxu0 0.0
        %5388 = vmatpush1.msra.mxu0 0.0
        %5389 = vmatprep.subr.mxu0 0.0
        %5390 = vmatpush1.msra.mxu0 0.0
        %5391 = vmatprep.subr.mxu0 0.0
        %5392 = vmatpush1.msra.mxu0 0.0
        %5393 = vmatprep.subr.mxu0 0.0
        %5394 = vmatpush1.msra.mxu0 0.0
        %5395 = vmatprep.subr.mxu0 0.0
        %5396 = vmatpush1.msra.mxu0 0.0
        %5397 = vmatprep.subr.mxu0 0.0
        %5398 = vmatpush1.msra.mxu0 0.0
        %5399 = vmatprep.subr.mxu0 0.0
        %5400 = vmatpush1.msra.mxu0 0.0
        %5401 = vmatprep.subr.mxu0 0.0
        %5402 = vmatpush1.msra.mxu0 0.0
        %5403 = vmatprep.subr.mxu0 0.0
        %5404 = vmatpush1.msra.mxu0 0.0
        %5405 = vmatprep.subr.mxu0 0.0
        %5406 = vmatpush1.msra.mxu0 0.0
        %5407 = vmatprep.subr.mxu0 0.0
        %5408 = vmatpush1.msra.mxu0 0.0
        %5409 = vmatprep.subr.mxu0 0.0
        %5410 = vmatpush1.msra.mxu0 0.0
        %5411 = vmatprep.subr.mxu0 0.0
        %5412 = vmatpush1.msra.mxu0 0.0
        %5413 = vmatprep.subr.mxu0 0.0
        %5414 = vmatpush1.msra.mxu0 0.0
        %5415 = vmatprep.subr.mxu0 0.0
        %5416 = vmatpush1.msra.mxu0 0.0
        %5417 = vmatprep.subr.mxu0 0.0
        %5418 = vmatpush1.msra.mxu0 0.0
        %5419 = vmatprep.subr.mxu0 0.0
        %5420 = vmatpush1.msra.mxu0 0.0
        %5421 = vmatprep.subr.mxu0 0.0
        %5422 = vmatpush1.msra.mxu0 0.0
        %5423 = vmatprep.subr.mxu0 0.0
        %5424 = vmatpush1.msra.mxu0 0.0
        %5425 = vmatprep.subr.mxu0 0.0
        %5426 = vmatpush1.msra.mxu0 0.0
        %5427 = vmatprep.subr.mxu0 0.0
        %5428 = vmatpush1.msra.mxu0 0.0
        %5429 = vmatprep.subr.mxu0 0.0
        %5430 = vmatpush1.msra.mxu0 0.0
        %5431 = vmatprep.subr.mxu0 0.0
        %5432 = vmatpush1.msra.mxu0 0.0
        %5433 = vmatprep.subr.mxu0 0.0
        %5434 = vmatpush1.msra.mxu0 0.0
        %5435 = vmatprep.subr.mxu0 0.0
        %5436 = vmatpush1.msra.mxu0 0.0
        %5437 = vmatprep.subr.mxu0 0.0
        %5438 = vmatpush1.msra.mxu0 0.0
        %5439 = vmatprep.subr.mxu0 0.0
        %5440 = vmatpush1.msra.mxu0 0.0
        %5441 = vmatprep.subr.mxu0 0.0
        %5442 = vmatpush1.msra.mxu0 0.0
        %5443 = vmatprep.subr.mxu0 0.0
        %5444 = vmatpush1.msra.mxu0 0.0
        %5445 = vmatprep.subr.mxu0 0.0
        %5446 = vmatpush1.msra.mxu0 0.0
        %5447 = vmatprep.mubr.f32.mxu0 0.0
        %5448 = vmatmul.mubr.f32.gmra.mrb[0].mxu0 %v5378
        %v5449 = vpop.f32.mrb[0].mxu0
        %v5450 = vadd.f32 %v5374, %v5449
        %v5451 = vpop.f32.mrb[0].mxu0
        %5452 = vmatprep.mubr.f32.mxu0 0.0
        %5453 = vmatmul.mubr.f32.gmra.mrb[0].mxu0 %v5381
        %v5454 = vpop.f32.mrb[0].mxu0
        %v5455 = vadd.f32 %v5375, %v5454
        %v5456 = vpop.f32.mrb[0].mxu0
        %5457 = vdwg.mxu0
        %5458 = vst.msk [vmem:[%s837] sm:$0xff] %vm957, %v5450
        %5459 = vst.msk [vmem:[%s837 + $0x8] sm:$0xff] %vm957, %v5455
        %s5460 = sand.u32 %s631, 1
        %s5461 = scalar_lea.sflag [#allocation5], %s5460
        %s5462 = sand.u32 %s631, 1
        %s5463 = smul.addr %s5462, 16
        %s5464 = scalar_lea.vmem [#allocation4], %s5463
        // Predicated region
        $region129: #{mae_forward.1} parent=127 // pred_check
          %p5465 = pneg %p641
        $region130: #{mae_forward.1} parent=127 // pred_check_branch
          %5467 = sbr.rel (%p5465) target = $region132
        $region131: #{mae_forward.1} parent=127 // pred_region
          %s5469 = ssub.s32 256, 256
          %5470 = vsyncadd %s5461, %s5469
          %s5471 = smul.addr %s41, 2
          %s5472 = smul.addr %s5471, 128
          %s5473 = scalar_lea.hbm %s27, %s5472
          %s5474 = sshll.u32 %s5464, 4
          %s5475 = int_to_ptr.vmem [resolvable:$true] %s5474
          %5480 = dma.vmem_to_hbm [thread:$0]  %s5475, 256, %s5473, %s5461, 128, 128, 8
        $region132: #{mae_forward.1} parent=127 // pred_fallthru
          _
      $region128: #{mae_forward.1} parent=5 // pred_fallthru
        _
      %p5481 = scmp.le.s32.totalorder 2, %s36
      // Predicated region
      $region133: #{mae_forward.1} parent=5 // pred_check
        %p5482 = pneg %p5481
      $region134: #{mae_forward.1} parent=5 // pred_check_branch
        %5484 = sbr.rel (%p5482) target = $region136
      $region135: #{mae_forward.1} parent=5 // pred_region
        %s5485 = ssub.s32 %s36, 2
        // Predicated region
        $region137: #{mae_forward.1} parent=135 // pred_check
          %p5486 = pneg %p647
        $region138: #{mae_forward.1} parent=135 // pred_check_branch
          %5488 = sbr.rel (%p5486) target = $region140
        $region139: #{mae_forward.1} parent=135 // pred_region
          %s5489 = sand.u32 %s632, 1
          %s5490 = scalar_lea.sflag [#allocation5], %s5489
          %s5491 = sand.u32 %s632, 1
          %s5492 = smul.addr %s5491, 16
          %s5493 = scalar_lea.vmem [#allocation4], %s5492
          %5494 = dma.done %s5490, 256
        $region140: #{mae_forward.1} parent=135 // pred_fallthru
          _
      $region136: #{mae_forward.1} parent=5 // pred_fallthru
        _
    $region6: #{mae_forward.1} parent=1 // loop_footer
      %s40 = sadd.s32 1, %s36
    $region7: #{mae_forward.1} parent=1 // loop_footer_branch
      %35 = sbr.rel target = $region3
    $region8: #{mae_forward.1} parent=1 // loop_exit
      _
    %5495 = vsyncpa [#allocation5], 1
    %s5496 = scalar_lea.sflag [#allocation5], 1
    %5497 = vsyncpa %s5496, 1

</llo_original>
